<compile_context>
chip_gen: v6e
topology: v6e:2x2x1
jax: 0.10.0
libtpu: 0.0.40
codegen_flags: <defaults>
</compile_context>

<pallas_src>
import math
import jax
import jax.numpy as jnp
from jax import lax
from jax.experimental import pallas as pl
from jax.experimental.pallas import tpu as pltpu

KSIZE = 11       # depthwise conv kernel size
PAD = 5          # depthwise conv padding
NUM_HEADS = 8    # self.head in the PyTorch module


def _make_fused_kernel(H, W, C, num_heads, inv_temp):
    HW = H * W
    C3 = 3 * C
    D = C // num_heads
    Hp = H + 2 * PAD           # padded height (one plane per padded row)
    PADW = 8                   # left pad in the scratch width: >= PAD and a multiple of 8
    Wp = W + 2 * PADW          # scratch width; taps only read cols [PADW-PAD, PADW-PAD+W+10)

    def kernel(x_ref, w1t_ref, b1_ref, wd_ref, bd_ref, wlt_ref, bl_ref,
               o_ref, pad_ref, qkv_ref):
        x = x_ref[0]                                                    # (HW, C)

        # ---- 1x1 conv (pointwise): (HW, C) @ (C, 3C) ----
        y1 = jnp.dot(x, w1t_ref[...],
                     preferred_element_type=jnp.float32) + b1_ref[...]  # (HW, 3C)

        # ---- zero-pad into VMEM scratch (no jnp.pad / HBM round trip) ----
        pad_ref[...] = jnp.zeros_like(pad_ref)
        for i in range(H):
            # aligned reads (i*W is a multiple of 8) and aligned interior stores
            pad_ref[PAD + i, PADW:PADW + W, :] = y1[i * W:(i + 1) * W, :]

        # ---- depthwise 11x11 conv, groups = 3C ----
        acc = jnp.zeros((H, W, C3), jnp.float32)
        for dj in range(KSIZE):
            # hoist the W (sublane) shift: one shifted read per dj, reused for all di
            c0 = (PADW - PAD) + dj
            col = pad_ref[:, c0:c0 + W, :]                              # (Hp, W, 3C)
            for di in range(KSIZE):
                w_tap = wd_ref[di * KSIZE + dj]                         # (W, 3C), pre-broadcast
                acc = acc + col[di:di + H] * w_tap                      # (H, W, 3C)
        # assemble (HW, 3C) via aligned row stores (avoids an in-kernel reshape)
        for i in range(H):
            qkv_ref[i * W:(i + 1) * W, :] = acc[i]
        qkv = qkv_ref[...] + bd_ref[...]                                # (HW, 3C)

        # ---- multi-head attention: all heads processed in this invocation ----
        # TODO(synk): at production feature-map sizes (HW >> a few hundred) tile HW
        # with an online-softmax instead of the dense (HW, HW) scores (v7x: 64 MiB VMEM).
        wlt = wlt_ref[...]                                              # (C, C)
        lin = jnp.zeros((HW, C), jnp.float32)
        for h in range(num_heads):
            qh = qkv[:, h * D:(h + 1) * D]                              # (HW, D)
            kh = qkv[:, C + h * D:C + (h + 1) * D]                      # (HW, D)
            vh = qkv[:, 2 * C + h * D:2 * C + (h + 1) * D]              # (HW, D)
            s = lax.dot_general(qh, kh, (((1,), (1,)), ((), ())),
                                preferred_element_type=jnp.float32) * inv_temp
            s = s - jnp.max(s, axis=-1, keepdims=True)
            p = jnp.exp(s)
            denom = jnp.sum(p, axis=-1, keepdims=True)
            inv = pl.reciprocal(denom, approx=True)                     # EUP slot
            inv = inv * (2.0 - denom * inv)                             # one Newton step
            p = p * inv
            o_h = jnp.dot(p, vh, preferred_element_type=jnp.float32)    # (HW, D)
            # fold each head's output straight into the final 1x1 conv so the
            # combined output stays lane-dense (no 4-lane concatenation).
            lin = lin + jnp.dot(o_h, wlt[h * D:(h + 1) * D, :],
                                preferred_element_type=jnp.float32)

        # ---- final 1x1 conv + ReLU + residual ----
        o_ref[0] = jnp.maximum(lin + bl_ref[...], 0.0) + x

    return kernel, Hp, Wp


# ---------------------------------------------------------------------------
def init_params(key, C):
    """Deterministic synthetic parameters matching the nn.Module's shapes."""
    C3 = 3 * C
    ks = jax.random.split(key, 6)
    w1 = jax.random.normal(ks[0], (C3, C), jnp.float32) * 0.1            # Conv2d(C,3C,1)
    b1 = jax.random.normal(ks[1], (C3,), jnp.float32) * 0.05
    wd = jax.random.normal(ks[2], (C3, 1, KSIZE, KSIZE), jnp.float32) * 0.05  # depthwise
    bd = jax.random.normal(ks[3], (C3,), jnp.float32) * 0.05
    wl = jax.random.normal(ks[4], (C, C), jnp.float32) * 0.1             # Conv2d(C,C,1)
    bl = jax.random.normal(ks[5], (C,), jnp.float32) * 0.05
    return {
        "w1t": w1.T,                                                     # (C, 3C)
        "b1": b1.reshape(1, C3),
        "wd": wd[:, 0].transpose(1, 2, 0).reshape(KSIZE * KSIZE, C3),    # [di*11+dj, ch]
        "bd": bd.reshape(1, C3),
        "wlt": wl.T,                                                     # (C, C)
        "bl": bl.reshape(1, C),
    }


def attention_forward(x, params):
    B, C, H, W = x.shape
    HW = H * W
    C3 = 3 * C
    temp = int(math.sqrt(C // NUM_HEADS))        # matches int(math.sqrt(C // head))
    inv_temp = 1.0 / float(temp)

    kernel, Hp, Wp = _make_fused_kernel(H, W, C, NUM_HEADS, inv_temp)

    # NCHW -> (B, HW, C); channels on the lane axis
    x_flat = jnp.transpose(x, (0, 2, 3, 1)).reshape(B, HW, C)
    # depthwise weights pre-replicated across the W sublanes (avoids 121 in-kernel broadcasts)
    wd_b = jnp.broadcast_to(params["wd"][:, None, :], (KSIZE * KSIZE, W, C3))

    out_flat = pl.pallas_call(
        kernel,
        out_shape=jax.ShapeDtypeStruct((B, HW, C), jnp.float32),
        grid=(B,),
        in_specs=[
            pl.BlockSpec((1, HW, C), lambda b: (b, 0, 0)),               # x
            pl.BlockSpec((C, C3), lambda b: (0, 0)),                     # w1t
            pl.BlockSpec((1, C3), lambda b: (0, 0)),                     # b1
            pl.BlockSpec((KSIZE * KSIZE, W, C3), lambda b: (0, 0, 0)),   # wd (sublane-bcast)
            pl.BlockSpec((1, C3), lambda b: (0, 0)),                     # bd
            pl.BlockSpec((C, C), lambda b: (0, 0)),                      # wlt
            pl.BlockSpec((1, C), lambda b: (0, 0)),                      # bl
        ],
        out_specs=pl.BlockSpec((1, HW, C), lambda b: (b, 0, 0)),
        scratch_shapes=[
            pltpu.VMEM((Hp, Wp, C3), jnp.float32),                       # zero-padded image
            pltpu.VMEM((HW, C3), jnp.float32),                           # assembled qkv
        ],
        compiler_params=pltpu.CompilerParams(
            dimension_semantics=("parallel",)),                          # 2 TCs on v7x
    )(x_flat, params["w1t"], params["b1"], wd_b, params["bd"],
      params["wlt"], params["bl"])

    # back to NCHW
    return jnp.transpose(out_flat.reshape(B, H, W, C), (0, 3, 1, 2))


# ---------------------------------------------------------------------------
def reference_forward(x, params):
    """Pure-JAX reference mirroring the PyTorch forward semantics."""
    B, C, H, W = x.shape
    NH, D = NUM_HEADS, C // NUM_HEADS
    temp = int(math.sqrt(C // NUM_HEADS))
    w1t, b1, wd, bd, wlt, bl = (params[k] for k in
                                ("w1t", "b1", "wd", "bd", "wlt", "bl"))
    x_flat = jnp.transpose(x, (0, 2, 3, 1)).reshape(B, H * W, C)
    y1 = (x_flat @ w1t + b1).reshape(B, H, W, 3 * C)
    y1_pad = jnp.pad(y1, ((0, 0), (PAD, PAD), (PAD, PAD), (0, 0)))
    acc = jnp.zeros_like(y1)
    for di in range(KSIZE):
        for dj in range(KSIZE):
            acc = acc + y1_pad[:, di:di + H, dj:dj + W, :] * wd[di * KSIZE + dj]
    qkv = (acc + bd).reshape(B, H * W, 3 * C)
    q = qkv[:, :, :C].reshape(B, H * W, NH, D).transpose(0, 2, 1, 3)
    k = qkv[:, :, C:2 * C].reshape(B, H * W, NH, D).transpose(0, 2, 1, 3)
    v = qkv[:, :, 2 * C:].reshape(B, H * W, NH, D).transpose(0, 2, 1, 3)
    s = jnp.einsum('bhid,bhjd->bhij', q, k) / temp
    p = jax.nn.softmax(s, axis=-1)
    o = jnp.einsum('bhij,bhjd->bhid', p, v)
    new_x = o.transpose(0, 2, 1, 3).reshape(B, H * W, C)
    out = jax.nn.relu(new_x @ wlt + bl) + x_flat
    return jnp.transpose(out.reshape(B, H, W, C), (0, 3, 1, 2))


if __name__ == "__main__":
    B, C, H, W = 2, 32, 8, 8          # in_channels must be divisible by 8 heads
    key = jax.random.PRNGKey(0)
    kx, kp = jax.random.split(key)
    x = jax.random.normal(kx, (B, C, H, W), jnp.float32)
    params = init_params(kp, C)

    fwd = jax.jit(attention_forward)
    out = jax.block_until_ready(fwd(x, params))

    ref = reference_forward(x, params)
    assert out.shape == (B, C, H, W)
    max_err = float(jnp.max(jnp.abs(out - ref)))
    assert max_err < 2e-3, max_err
    print("KERNEL_OK")
</pallas_src>

<mosaic_0001>
module attributes {stable_mosaic.version = 11 : i64} {
  func.func @kernel(%arg0: i32, %arg1: memref<1x64x32xf32, #tpu.memory_space<vmem>>, %arg2: memref<32x96xf32, #tpu.memory_space<vmem>>, %arg3: memref<1x96xf32, #tpu.memory_space<vmem>>, %arg4: memref<121x8x96xf32, #tpu.memory_space<vmem>>, %arg5: memref<1x96xf32, #tpu.memory_space<vmem>>, %arg6: memref<32x32xf32, #tpu.memory_space<vmem>>, %arg7: memref<1x32xf32, #tpu.memory_space<vmem>>, %arg8: memref<1x64x32xf32, #tpu.memory_space<vmem>>, %arg9: memref<18x24x96xf32, #tpu.memory_space<vmem>>, %arg10: memref<64x96xf32, #tpu.memory_space<vmem>>) attributes {dimension_semantics = [#tpu.dimension_semantics<parallel>], iteration_bounds = array<i64: 2>, scalar_prefetch = 0 : i64, scratch_operands = 2 : i64, tpu.core_type = #tpu.core_type<tc>, window_params = [{transform_indices = @transform_0, window_bounds = array<i64: 1, 64, 32>}, {pipeline_mode = #tpu.pipeline_mode<synchronous>, transform_indices = @transform_1, window_bounds = array<i64: 32, 96>}, {pipeline_mode = #tpu.pipeline_mode<synchronous>, transform_indices = @transform_2, window_bounds = array<i64: 1, 96>}, {pipeline_mode = #tpu.pipeline_mode<synchronous>, transform_indices = @transform_3, window_bounds = array<i64: 121, 8, 96>}, {pipeline_mode = #tpu.pipeline_mode<synchronous>, transform_indices = @transform_4, window_bounds = array<i64: 1, 96>}, {pipeline_mode = #tpu.pipeline_mode<synchronous>, transform_indices = @transform_5, window_bounds = array<i64: 32, 32>}, {pipeline_mode = #tpu.pipeline_mode<synchronous>, transform_indices = @transform_6, window_bounds = array<i64: 1, 32>}, {transform_indices = @transform_7, window_bounds = array<i64: 1, 64, 32>}]} {
    %c0 = arith.constant 0 : index
    %c0_0 = arith.constant 0 : index
    %c0_1 = arith.constant 0 : index
    %0 = vector.load %arg1[%c0, %c0_0, %c0_1] : memref<1x64x32xf32, #tpu.memory_space<vmem>>, vector<1x64x32xf32>
    %1 = vector.shape_cast %0 : vector<1x64x32xf32> to vector<64x32xf32>
    %c0_2 = arith.constant 0 : index
    %c0_3 = arith.constant 0 : index
    %2 = vector.load %arg2[%c0_2, %c0_3] : memref<32x96xf32, #tpu.memory_space<vmem>>, vector<32x96xf32>
    %cst = arith.constant dense<0.000000e+00> : vector<64x96xf32>
    %3 = tpu.matmul %1, %2, %cst {dimension_numbers = #tpu.dot_dimension_numbers<[1], [0], [0], [1], [0, 0, 1, 1], [], []>} : vector<64x32xf32>, vector<32x96xf32>, vector<64x96xf32> -> vector<64x96xf32>
    %c0_4 = arith.constant 0 : index
    %c0_5 = arith.constant 0 : index
    %4 = vector.load %arg3[%c0_4, %c0_5] : memref<1x96xf32, #tpu.memory_space<vmem>>, vector<1x96xf32>
    %5 = vector.broadcast %4 : vector<1x96xf32> to vector<64x96xf32>
    %6 = arith.addf %3, %5 : vector<64x96xf32>
    %cst_6 = arith.constant 0.000000e+00 : f32
    %7 = vector.broadcast %cst_6 : f32 to vector<18x24x96xf32>
    %c0_7 = arith.constant 0 : index
    %c0_8 = arith.constant 0 : index
    %c0_9 = arith.constant 0 : index
    %8 = vector.load %arg9[%c0_7, %c0_8, %c0_9] : memref<18x24x96xf32, #tpu.memory_space<vmem>>, vector<18x24x96xf32>
    tpu.vector_store %arg9[%c0_7, %c0_8, %c0_9], %7 {strides = array<i32>} : memref<18x24x96xf32, #tpu.memory_space<vmem>>, vector<18x24x96xf32>,
    %9 = vector.extract_strided_slice %6 {offsets = [0, 0], sizes = [8, 96], strides = [1, 1]} : vector<64x96xf32> to vector<8x96xf32>
    %c5 = arith.constant 5 : index
    %c8 = arith.constant 8 : index
    %c0_10 = arith.constant 0 : index
    %10 = vector.load %arg9[%c5, %c8, %c0_10] : memref<18x24x96xf32, #tpu.memory_space<vmem>>, vector<1x8x96xf32>
    %11 = vector.shape_cast %10 : vector<1x8x96xf32> to vector<8x96xf32>
    %12 = vector.shape_cast %9 : vector<8x96xf32> to vector<1x8x96xf32>
    tpu.vector_store %arg9[%c5, %c8, %c0_10], %12 {strides = array<i32>} : memref<18x24x96xf32, #tpu.memory_space<vmem>>, vector<1x8x96xf32>,
    %13 = vector.extract_strided_slice %6 {offsets = [8, 0], sizes = [8, 96], strides = [1, 1]} : vector<64x96xf32> to vector<8x96xf32>
    %c6 = arith.constant 6 : index
    %c8_11 = arith.constant 8 : index
    %c0_12 = arith.constant 0 : index
    %14 = vector.load %arg9[%c6, %c8_11, %c0_12] : memref<18x24x96xf32, #tpu.memory_space<vmem>>, vector<1x8x96xf32>
    %15 = vector.shape_cast %14 : vector<1x8x96xf32> to vector<8x96xf32>
    %16 = vector.shape_cast %13 : vector<8x96xf32> to vector<1x8x96xf32>
    tpu.vector_store %arg9[%c6, %c8_11, %c0_12], %16 {strides = array<i32>} : memref<18x24x96xf32, #tpu.memory_space<vmem>>, vector<1x8x96xf32>,
    %17 = vector.extract_strided_slice %6 {offsets = [16, 0], sizes = [8, 96], strides = [1, 1]} : vector<64x96xf32> to vector<8x96xf32>
    %c7 = arith.constant 7 : index
    %c8_13 = arith.constant 8 : index
    %c0_14 = arith.constant 0 : index
    %18 = vector.load %arg9[%c7, %c8_13, %c0_14] : memref<18x24x96xf32, #tpu.memory_space<vmem>>, vector<1x8x96xf32>
    %19 = vector.shape_cast %18 : vector<1x8x96xf32> to vector<8x96xf32>
    %20 = vector.shape_cast %17 : vector<8x96xf32> to vector<1x8x96xf32>
    tpu.vector_store %arg9[%c7, %c8_13, %c0_14], %20 {strides = array<i32>} : memref<18x24x96xf32, #tpu.memory_space<vmem>>, vector<1x8x96xf32>,
    %21 = vector.extract_strided_slice %6 {offsets = [24, 0], sizes = [8, 96], strides = [1, 1]} : vector<64x96xf32> to vector<8x96xf32>
    %c8_15 = arith.constant 8 : index
    %c8_16 = arith.constant 8 : index
    %c0_17 = arith.constant 0 : index
    %22 = vector.load %arg9[%c8_15, %c8_16, %c0_17] : memref<18x24x96xf32, #tpu.memory_space<vmem>>, vector<1x8x96xf32>
    %23 = vector.shape_cast %22 : vector<1x8x96xf32> to vector<8x96xf32>
    %24 = vector.shape_cast %21 : vector<8x96xf32> to vector<1x8x96xf32>
    tpu.vector_store %arg9[%c8_15, %c8_16, %c0_17], %24 {strides = array<i32>} : memref<18x24x96xf32, #tpu.memory_space<vmem>>, vector<1x8x96xf32>,
    %25 = vector.extract_strided_slice %6 {offsets = [32, 0], sizes = [8, 96], strides = [1, 1]} : vector<64x96xf32> to vector<8x96xf32>
    %c9 = arith.constant 9 : index
    %c8_18 = arith.constant 8 : index
    %c0_19 = arith.constant 0 : index
    %26 = vector.load %arg9[%c9, %c8_18, %c0_19] : memref<18x24x96xf32, #tpu.memory_space<vmem>>, vector<1x8x96xf32>
    %27 = vector.shape_cast %26 : vector<1x8x96xf32> to vector<8x96xf32>
    %28 = vector.shape_cast %25 : vector<8x96xf32> to vector<1x8x96xf32>
    tpu.vector_store %arg9[%c9, %c8_18, %c0_19], %28 {strides = array<i32>} : memref<18x24x96xf32, #tpu.memory_space<vmem>>, vector<1x8x96xf32>,
    %29 = vector.extract_strided_slice %6 {offsets = [40, 0], sizes = [8, 96], strides = [1, 1]} : vector<64x96xf32> to vector<8x96xf32>
    %c10 = arith.constant 10 : index
    %c8_20 = arith.constant 8 : index
    %c0_21 = arith.constant 0 : index
    %30 = vector.load %arg9[%c10, %c8_20, %c0_21] : memref<18x24x96xf32, #tpu.memory_space<vmem>>, vector<1x8x96xf32>
    %31 = vector.shape_cast %30 : vector<1x8x96xf32> to vector<8x96xf32>
    %32 = vector.shape_cast %29 : vector<8x96xf32> to vector<1x8x96xf32>
    tpu.vector_store %arg9[%c10, %c8_20, %c0_21], %32 {strides = array<i32>} : memref<18x24x96xf32, #tpu.memory_space<vmem>>, vector<1x8x96xf32>,
    %33 = vector.extract_strided_slice %6 {offsets = [48, 0], sizes = [8, 96], strides = [1, 1]} : vector<64x96xf32> to vector<8x96xf32>
    %c11 = arith.constant 11 : index
    %c8_22 = arith.constant 8 : index
    %c0_23 = arith.constant 0 : index
    %34 = vector.load %arg9[%c11, %c8_22, %c0_23] : memref<18x24x96xf32, #tpu.memory_space<vmem>>, vector<1x8x96xf32>
    %35 = vector.shape_cast %34 : vector<1x8x96xf32> to vector<8x96xf32>
    %36 = vector.shape_cast %33 : vector<8x96xf32> to vector<1x8x96xf32>
    tpu.vector_store %arg9[%c11, %c8_22, %c0_23], %36 {strides = array<i32>} : memref<18x24x96xf32, #tpu.memory_space<vmem>>, vector<1x8x96xf32>,
    %37 = vector.extract_strided_slice %6 {offsets = [56, 0], sizes = [8, 96], strides = [1, 1]} : vector<64x96xf32> to vector<8x96xf32>
    %c12 = arith.constant 12 : index
    %c8_24 = arith.constant 8 : index
    %c0_25 = arith.constant 0 : index
    %38 = vector.load %arg9[%c12, %c8_24, %c0_25] : memref<18x24x96xf32, #tpu.memory_space<vmem>>, vector<1x8x96xf32>
    %39 = vector.shape_cast %38 : vector<1x8x96xf32> to vector<8x96xf32>
    %40 = vector.shape_cast %37 : vector<8x96xf32> to vector<1x8x96xf32>
    tpu.vector_store %arg9[%c12, %c8_24, %c0_25], %40 {strides = array<i32>} : memref<18x24x96xf32, #tpu.memory_space<vmem>>, vector<1x8x96xf32>,
    %cst_26 = arith.constant 0.000000e+00 : f32
    %41 = vector.broadcast %cst_26 : f32 to vector<8x8x96xf32>
    %c0_27 = arith.constant 0 : index
    %c3 = arith.constant 3 : index
    %c0_28 = arith.constant 0 : index
    %42 = vector.load %arg9[%c0_27, %c3, %c0_28] : memref<18x24x96xf32, #tpu.memory_space<vmem>>, vector<18x8x96xf32>
    %c0_29 = arith.constant 0 : index
    %c0_30 = arith.constant 0 : index
    %c0_31 = arith.constant 0 : index
    %43 = vector.load %arg4[%c0_29, %c0_30, %c0_31] : memref<121x8x96xf32, #tpu.memory_space<vmem>>, vector<1x8x96xf32>
    %44 = vector.shape_cast %43 : vector<1x8x96xf32> to vector<8x96xf32>
    %45 = vector.extract_strided_slice %42 {offsets = [0, 0, 0], sizes = [8, 8, 96], strides = [1, 1, 1]} : vector<18x8x96xf32> to vector<8x8x96xf32>
    %46 = vector.shape_cast %44 : vector<8x96xf32> to vector<1x8x96xf32>
    %47 = vector.broadcast %46 : vector<1x8x96xf32> to vector<8x8x96xf32>
    %48 = arith.mulf %45, %47 : vector<8x8x96xf32>
    %49 = arith.addf %41, %48 : vector<8x8x96xf32>
    %c11_32 = arith.constant 11 : index
    %c0_33 = arith.constant 0 : index
    %c0_34 = arith.constant 0 : index
    %50 = vector.load %arg4[%c11_32, %c0_33, %c0_34] : memref<121x8x96xf32, #tpu.memory_space<vmem>>, vector<1x8x96xf32>
    %51 = vector.shape_cast %50 : vector<1x8x96xf32> to vector<8x96xf32>
    %52 = vector.extract_strided_slice %42 {offsets = [1, 0, 0], sizes = [8, 8, 96], strides = [1, 1, 1]} : vector<18x8x96xf32> to vector<8x8x96xf32>
    %53 = vector.shape_cast %51 : vector<8x96xf32> to vector<1x8x96xf32>
    %54 = vector.broadcast %53 : vector<1x8x96xf32> to vector<8x8x96xf32>
    %55 = arith.mulf %52, %54 : vector<8x8x96xf32>
    %56 = arith.addf %49, %55 : vector<8x8x96xf32>
    %c22 = arith.constant 22 : index
    %c0_35 = arith.constant 0 : index
    %c0_36 = arith.constant 0 : index
    %57 = vector.load %arg4[%c22, %c0_35, %c0_36] : memref<121x8x96xf32, #tpu.memory_space<vmem>>, vector<1x8x96xf32>
    %58 = vector.shape_cast %57 : vector<1x8x96xf32> to vector<8x96xf32>
    %59 = vector.extract_strided_slice %42 {offsets = [2, 0, 0], sizes = [8, 8, 96], strides = [1, 1, 1]} : vector<18x8x96xf32> to vector<8x8x96xf32>
    %60 = vector.shape_cast %58 : vector<8x96xf32> to vector<1x8x96xf32>
    %61 = vector.broadcast %60 : vector<1x8x96xf32> to vector<8x8x96xf32>
    %62 = arith.mulf %59, %61 : vector<8x8x96xf32>
    %63 = arith.addf %56, %62 : vector<8x8x96xf32>
    %c33 = arith.constant 33 : index
    %c0_37 = arith.constant 0 : index
    %c0_38 = arith.constant 0 : index
    %64 = vector.load %arg4[%c33, %c0_37, %c0_38] : memref<121x8x96xf32, #tpu.memory_space<vmem>>, vector<1x8x96xf32>
    %65 = vector.shape_cast %64 : vector<1x8x96xf32> to vector<8x96xf32>
    %66 = vector.extract_strided_slice %42 {offsets = [3, 0, 0], sizes = [8, 8, 96], strides = [1, 1, 1]} : vector<18x8x96xf32> to vector<8x8x96xf32>
    %67 = vector.shape_cast %65 : vector<8x96xf32> to vector<1x8x96xf32>
    %68 = vector.broadcast %67 : vector<1x8x96xf32> to vector<8x8x96xf32>
    %69 = arith.mulf %66, %68 : vector<8x8x96xf32>
    %70 = arith.addf %63, %69 : vector<8x8x96xf32>
    %c44 = arith.constant 44 : index
    %c0_39 = arith.constant 0 : index
    %c0_40 = arith.constant 0 : index
    %71 = vector.load %arg4[%c44, %c0_39, %c0_40] : memref<121x8x96xf32, #tpu.memory_space<vmem>>, vector<1x8x96xf32>
    %72 = vector.shape_cast %71 : vector<1x8x96xf32> to vector<8x96xf32>
    %73 = vector.extract_strided_slice %42 {offsets = [4, 0, 0], sizes = [8, 8, 96], strides = [1, 1, 1]} : vector<18x8x96xf32> to vector<8x8x96xf32>
    %74 = vector.shape_cast %72 : vector<8x96xf32> to vector<1x8x96xf32>
    %75 = vector.broadcast %74 : vector<1x8x96xf32> to vector<8x8x96xf32>
    %76 = arith.mulf %73, %75 : vector<8x8x96xf32>
    %77 = arith.addf %70, %76 : vector<8x8x96xf32>
    %c55 = arith.constant 55 : index
    %c0_41 = arith.constant 0 : index
    %c0_42 = arith.constant 0 : index
    %78 = vector.load %arg4[%c55, %c0_41, %c0_42] : memref<121x8x96xf32, #tpu.memory_space<vmem>>, vector<1x8x96xf32>
    %79 = vector.shape_cast %78 : vector<1x8x96xf32> to vector<8x96xf32>
    %80 = vector.extract_strided_slice %42 {offsets = [5, 0, 0], sizes = [8, 8, 96], strides = [1, 1, 1]} : vector<18x8x96xf32> to vector<8x8x96xf32>
    %81 = vector.shape_cast %79 : vector<8x96xf32> to vector<1x8x96xf32>
    %82 = vector.broadcast %81 : vector<1x8x96xf32> to vector<8x8x96xf32>
    %83 = arith.mulf %80, %82 : vector<8x8x96xf32>
    %84 = arith.addf %77, %83 : vector<8x8x96xf32>
    %c66 = arith.constant 66 : index
    %c0_43 = arith.constant 0 : index
    %c0_44 = arith.constant 0 : index
    %85 = vector.load %arg4[%c66, %c0_43, %c0_44] : memref<121x8x96xf32, #tpu.memory_space<vmem>>, vector<1x8x96xf32>
    %86 = vector.shape_cast %85 : vector<1x8x96xf32> to vector<8x96xf32>
    %87 = vector.extract_strided_slice %42 {offsets = [6, 0, 0], sizes = [8, 8, 96], strides = [1, 1, 1]} : vector<18x8x96xf32> to vector<8x8x96xf32>
    %88 = vector.shape_cast %86 : vector<8x96xf32> to vector<1x8x96xf32>
    %89 = vector.broadcast %88 : vector<1x8x96xf32> to vector<8x8x96xf32>
    %90 = arith.mulf %87, %89 : vector<8x8x96xf32>
    %91 = arith.addf %84, %90 : vector<8x8x96xf32>
    %c77 = arith.constant 77 : index
    %c0_45 = arith.constant 0 : index
    %c0_46 = arith.constant 0 : index
    %92 = vector.load %arg4[%c77, %c0_45, %c0_46] : memref<121x8x96xf32, #tpu.memory_space<vmem>>, vector<1x8x96xf32>
    %93 = vector.shape_cast %92 : vector<1x8x96xf32> to vector<8x96xf32>
    %94 = vector.extract_strided_slice %42 {offsets = [7, 0, 0], sizes = [8, 8, 96], strides = [1, 1, 1]} : vector<18x8x96xf32> to vector<8x8x96xf32>
    %95 = vector.shape_cast %93 : vector<8x96xf32> to vector<1x8x96xf32>
    %96 = vector.broadcast %95 : vector<1x8x96xf32> to vector<8x8x96xf32>
    %97 = arith.mulf %94, %96 : vector<8x8x96xf32>
    %98 = arith.addf %91, %97 : vector<8x8x96xf32>
    %c88 = arith.constant 88 : index
    %c0_47 = arith.constant 0 : index
    %c0_48 = arith.constant 0 : index
    %99 = vector.load %arg4[%c88, %c0_47, %c0_48] : memref<121x8x96xf32, #tpu.memory_space<vmem>>, vector<1x8x96xf32>
    %100 = vector.shape_cast %99 : vector<1x8x96xf32> to vector<8x96xf32>
    %101 = vector.extract_strided_slice %42 {offsets = [8, 0, 0], sizes = [8, 8, 96], strides = [1, 1, 1]} : vector<18x8x96xf32> to vector<8x8x96xf32>
    %102 = vector.shape_cast %100 : vector<8x96xf32> to vector<1x8x96xf32>
    %103 = vector.broadcast %102 : vector<1x8x96xf32> to vector<8x8x96xf32>
    %104 = arith.mulf %101, %103 : vector<8x8x96xf32>
    %105 = arith.addf %98, %104 : vector<8x8x96xf32>
    %c99 = arith.constant 99 : index
    %c0_49 = arith.constant 0 : index
    %c0_50 = arith.constant 0 : index
    %106 = vector.load %arg4[%c99, %c0_49, %c0_50] : memref<121x8x96xf32, #tpu.memory_space<vmem>>, vector<1x8x96xf32>
    %107 = vector.shape_cast %106 : vector<1x8x96xf32> to vector<8x96xf32>
    %108 = vector.extract_strided_slice %42 {offsets = [9, 0, 0], sizes = [8, 8, 96], strides = [1, 1, 1]} : vector<18x8x96xf32> to vector<8x8x96xf32>
    %109 = vector.shape_cast %107 : vector<8x96xf32> to vector<1x8x96xf32>
    %110 = vector.broadcast %109 : vector<1x8x96xf32> to vector<8x8x96xf32>
    %111 = arith.mulf %108, %110 : vector<8x8x96xf32>
    %112 = arith.addf %105, %111 : vector<8x8x96xf32>
    %c110 = arith.constant 110 : index
    %c0_51 = arith.constant 0 : index
    %c0_52 = arith.constant 0 : index
    %113 = vector.load %arg4[%c110, %c0_51, %c0_52] : memref<121x8x96xf32, #tpu.memory_space<vmem>>, vector<1x8x96xf32>
    %114 = vector.shape_cast %113 : vector<1x8x96xf32> to vector<8x96xf32>
    %115 = vector.extract_strided_slice %42 {offsets = [10, 0, 0], sizes = [8, 8, 96], strides = [1, 1, 1]} : vector<18x8x96xf32> to vector<8x8x96xf32>
    %116 = vector.shape_cast %114 : vector<8x96xf32> to vector<1x8x96xf32>
    %117 = vector.broadcast %116 : vector<1x8x96xf32> to vector<8x8x96xf32>
    %118 = arith.mulf %115, %117 : vector<8x8x96xf32>
    %119 = arith.addf %112, %118 : vector<8x8x96xf32>
    %c0_53 = arith.constant 0 : index
    %c4 = arith.constant 4 : index
    %c0_54 = arith.constant 0 : index
    %120 = vector.load %arg9[%c0_53, %c4, %c0_54] : memref<18x24x96xf32, #tpu.memory_space<vmem>>, vector<18x8x96xf32>
    %c1 = arith.constant 1 : index
    %c0_55 = arith.constant 0 : index
    %c0_56 = arith.constant 0 : index
    %121 = vector.load %arg4[%c1, %c0_55, %c0_56] : memref<121x8x96xf32, #tpu.memory_space<vmem>>, vector<1x8x96xf32>
    %122 = vector.shape_cast %121 : vector<1x8x96xf32> to vector<8x96xf32>
    %123 = vector.extract_strided_slice %120 {offsets = [0, 0, 0], sizes = [8, 8, 96], strides = [1, 1, 1]} : vector<18x8x96xf32> to vector<8x8x96xf32>
    %124 = vector.shape_cast %122 : vector<8x96xf32> to vector<1x8x96xf32>
    %125 = vector.broadcast %124 : vector<1x8x96xf32> to vector<8x8x96xf32>
    %126 = arith.mulf %123, %125 : vector<8x8x96xf32>
    %127 = arith.addf %119, %126 : vector<8x8x96xf32>
    %c12_57 = arith.constant 12 : index
    %c0_58 = arith.constant 0 : index
    %c0_59 = arith.constant 0 : index
    %128 = vector.load %arg4[%c12_57, %c0_58, %c0_59] : memref<121x8x96xf32, #tpu.memory_space<vmem>>, vector<1x8x96xf32>
    %129 = vector.shape_cast %128 : vector<1x8x96xf32> to vector<8x96xf32>
    %130 = vector.extract_strided_slice %120 {offsets = [1, 0, 0], sizes = [8, 8, 96], strides = [1, 1, 1]} : vector<18x8x96xf32> to vector<8x8x96xf32>
    %131 = vector.shape_cast %129 : vector<8x96xf32> to vector<1x8x96xf32>
    %132 = vector.broadcast %131 : vector<1x8x96xf32> to vector<8x8x96xf32>
    %133 = arith.mulf %130, %132 : vector<8x8x96xf32>
    %134 = arith.addf %127, %133 : vector<8x8x96xf32>
    %c23 = arith.constant 23 : index
    %c0_60 = arith.constant 0 : index
    %c0_61 = arith.constant 0 : index
    %135 = vector.load %arg4[%c23, %c0_60, %c0_61] : memref<121x8x96xf32, #tpu.memory_space<vmem>>, vector<1x8x96xf32>
    %136 = vector.shape_cast %135 : vector<1x8x96xf32> to vector<8x96xf32>
    %137 = vector.extract_strided_slice %120 {offsets = [2, 0, 0], sizes = [8, 8, 96], strides = [1, 1, 1]} : vector<18x8x96xf32> to vector<8x8x96xf32>
    %138 = vector.shape_cast %136 : vector<8x96xf32> to vector<1x8x96xf32>
    %139 = vector.broadcast %138 : vector<1x8x96xf32> to vector<8x8x96xf32>
    %140 = arith.mulf %137, %139 : vector<8x8x96xf32>
    %141 = arith.addf %134, %140 : vector<8x8x96xf32>
    %c34 = arith.constant 34 : index
    %c0_62 = arith.constant 0 : index
    %c0_63 = arith.constant 0 : index
    %142 = vector.load %arg4[%c34, %c0_62, %c0_63] : memref<121x8x96xf32, #tpu.memory_space<vmem>>, vector<1x8x96xf32>
    %143 = vector.shape_cast %142 : vector<1x8x96xf32> to vector<8x96xf32>
    %144 = vector.extract_strided_slice %120 {offsets = [3, 0, 0], sizes = [8, 8, 96], strides = [1, 1, 1]} : vector<18x8x96xf32> to vector<8x8x96xf32>
    %145 = vector.shape_cast %143 : vector<8x96xf32> to vector<1x8x96xf32>
    %146 = vector.broadcast %145 : vector<1x8x96xf32> to vector<8x8x96xf32>
    %147 = arith.mulf %144, %146 : vector<8x8x96xf32>
    %148 = arith.addf %141, %147 : vector<8x8x96xf32>
    %c45 = arith.constant 45 : index
    %c0_64 = arith.constant 0 : index
    %c0_65 = arith.constant 0 : index
    %149 = vector.load %arg4[%c45, %c0_64, %c0_65] : memref<121x8x96xf32, #tpu.memory_space<vmem>>, vector<1x8x96xf32>
    %150 = vector.shape_cast %149 : vector<1x8x96xf32> to vector<8x96xf32>
    %151 = vector.extract_strided_slice %120 {offsets = [4, 0, 0], sizes = [8, 8, 96], strides = [1, 1, 1]} : vector<18x8x96xf32> to vector<8x8x96xf32>
    %152 = vector.shape_cast %150 : vector<8x96xf32> to vector<1x8x96xf32>
    %153 = vector.broadcast %152 : vector<1x8x96xf32> to vector<8x8x96xf32>
    %154 = arith.mulf %151, %153 : vector<8x8x96xf32>
    %155 = arith.addf %148, %154 : vector<8x8x96xf32>
    %c56 = arith.constant 56 : index
    %c0_66 = arith.constant 0 : index
    %c0_67 = arith.constant 0 : index
    %156 = vector.load %arg4[%c56, %c0_66, %c0_67] : memref<121x8x96xf32, #tpu.memory_space<vmem>>, vector<1x8x96xf32>
    %157 = vector.shape_cast %156 : vector<1x8x96xf32> to vector<8x96xf32>
    %158 = vector.extract_strided_slice %120 {offsets = [5, 0, 0], sizes = [8, 8, 96], strides = [1, 1, 1]} : vector<18x8x96xf32> to vector<8x8x96xf32>
    %159 = vector.shape_cast %157 : vector<8x96xf32> to vector<1x8x96xf32>
    %160 = vector.broadcast %159 : vector<1x8x96xf32> to vector<8x8x96xf32>
    %161 = arith.mulf %158, %160 : vector<8x8x96xf32>
    %162 = arith.addf %155, %161 : vector<8x8x96xf32>
    %c67 = arith.constant 67 : index
    %c0_68 = arith.constant 0 : index
    %c0_69 = arith.constant 0 : index
    %163 = vector.load %arg4[%c67, %c0_68, %c0_69] : memref<121x8x96xf32, #tpu.memory_space<vmem>>, vector<1x8x96xf32>
    %164 = vector.shape_cast %163 : vector<1x8x96xf32> to vector<8x96xf32>
    %165 = vector.extract_strided_slice %120 {offsets = [6, 0, 0], sizes = [8, 8, 96], strides = [1, 1, 1]} : vector<18x8x96xf32> to vector<8x8x96xf32>
    %166 = vector.shape_cast %164 : vector<8x96xf32> to vector<1x8x96xf32>
    %167 = vector.broadcast %166 : vector<1x8x96xf32> to vector<8x8x96xf32>
    %168 = arith.mulf %165, %167 : vector<8x8x96xf32>
    %169 = arith.addf %162, %168 : vector<8x8x96xf32>
    %c78 = arith.constant 78 : index
    %c0_70 = arith.constant 0 : index
    %c0_71 = arith.constant 0 : index
    %170 = vector.load %arg4[%c78, %c0_70, %c0_71] : memref<121x8x96xf32, #tpu.memory_space<vmem>>, vector<1x8x96xf32>
    %171 = vector.shape_cast %170 : vector<1x8x96xf32> to vector<8x96xf32>
    %172 = vector.extract_strided_slice %120 {offsets = [7, 0, 0], sizes = [8, 8, 96], strides = [1, 1, 1]} : vector<18x8x96xf32> to vector<8x8x96xf32>
    %173 = vector.shape_cast %171 : vector<8x96xf32> to vector<1x8x96xf32>
    %174 = vector.broadcast %173 : vector<1x8x96xf32> to vector<8x8x96xf32>
    %175 = arith.mulf %172, %174 : vector<8x8x96xf32>
    %176 = arith.addf %169, %175 : vector<8x8x96xf32>
    %c89 = arith.constant 89 : index
    %c0_72 = arith.constant 0 : index
    %c0_73 = arith.constant 0 : index
    %177 = vector.load %arg4[%c89, %c0_72, %c0_73] : memref<121x8x96xf32, #tpu.memory_space<vmem>>, vector<1x8x96xf32>
    %178 = vector.shape_cast %177 : vector<1x8x96xf32> to vector<8x96xf32>
    %179 = vector.extract_strided_slice %120 {offsets = [8, 0, 0], sizes = [8, 8, 96], strides = [1, 1, 1]} : vector<18x8x96xf32> to vector<8x8x96xf32>
    %180 = vector.shape_cast %178 : vector<8x96xf32> to vector<1x8x96xf32>
    %181 = vector.broadcast %180 : vector<1x8x96xf32> to vector<8x8x96xf32>
    %182 = arith.mulf %179, %181 : vector<8x8x96xf32>
    %183 = arith.addf %176, %182 : vector<8x8x96xf32>
    %c100 = arith.constant 100 : index
    %c0_74 = arith.constant 0 : index
    %c0_75 = arith.constant 0 : index
    %184 = vector.load %arg4[%c100, %c0_74, %c0_75] : memref<121x8x96xf32, #tpu.memory_space<vmem>>, vector<1x8x96xf32>
    %185 = vector.shape_cast %184 : vector<1x8x96xf32> to vector<8x96xf32>
    %186 = vector.extract_strided_slice %120 {offsets = [9, 0, 0], sizes = [8, 8, 96], strides = [1, 1, 1]} : vector<18x8x96xf32> to vector<8x8x96xf32>
    %187 = vector.shape_cast %185 : vector<8x96xf32> to vector<1x8x96xf32>
    %188 = vector.broadcast %187 : vector<1x8x96xf32> to vector<8x8x96xf32>
    %189 = arith.mulf %186, %188 : vector<8x8x96xf32>
    %190 = arith.addf %183, %189 : vector<8x8x96xf32>
    %c111 = arith.constant 111 : index
    %c0_76 = arith.constant 0 : index
    %c0_77 = arith.constant 0 : index
    %191 = vector.load %arg4[%c111, %c0_76, %c0_77] : memref<121x8x96xf32, #tpu.memory_space<vmem>>, vector<1x8x96xf32>
    %192 = vector.shape_cast %191 : vector<1x8x96xf32> to vector<8x96xf32>
    %193 = vector.extract_strided_slice %120 {offsets = [10, 0, 0], sizes = [8, 8, 96], strides = [1, 1, 1]} : vector<18x8x96xf32> to vector<8x8x96xf32>
    %194 = vector.shape_cast %192 : vector<8x96xf32> to vector<1x8x96xf32>
    %195 = vector.broadcast %194 : vector<1x8x96xf32> to vector<8x8x96xf32>
    %196 = arith.mulf %193, %195 : vector<8x8x96xf32>
    %197 = arith.addf %190, %196 : vector<8x8x96xf32>
    %c0_78 = arith.constant 0 : index
    %c5_79 = arith.constant 5 : index
    %c0_80 = arith.constant 0 : index
    %198 = vector.load %arg9[%c0_78, %c5_79, %c0_80] : memref<18x24x96xf32, #tpu.memory_space<vmem>>, vector<18x8x96xf32>
    %c2 = arith.constant 2 : index
    %c0_81 = arith.constant 0 : index
    %c0_82 = arith.constant 0 : index
    %199 = vector.load %arg4[%c2, %c0_81, %c0_82] : memref<121x8x96xf32, #tpu.memory_space<vmem>>, vector<1x8x96xf32>
    %200 = vector.shape_cast %199 : vector<1x8x96xf32> to vector<8x96xf32>
    %201 = vector.extract_strided_slice %198 {offsets = [0, 0, 0], sizes = [8, 8, 96], strides = [1, 1, 1]} : vector<18x8x96xf32> to vector<8x8x96xf32>
    %202 = vector.shape_cast %200 : vector<8x96xf32> to vector<1x8x96xf32>
    %203 = vector.broadcast %202 : vector<1x8x96xf32> to vector<8x8x96xf32>
    %204 = arith.mulf %201, %203 : vector<8x8x96xf32>
    %205 = arith.addf %197, %204 : vector<8x8x96xf32>
    %c13 = arith.constant 13 : index
    %c0_83 = arith.constant 0 : index
    %c0_84 = arith.constant 0 : index
    %206 = vector.load %arg4[%c13, %c0_83, %c0_84] : memref<121x8x96xf32, #tpu.memory_space<vmem>>, vector<1x8x96xf32>
    %207 = vector.shape_cast %206 : vector<1x8x96xf32> to vector<8x96xf32>
    %208 = vector.extract_strided_slice %198 {offsets = [1, 0, 0], sizes = [8, 8, 96], strides = [1, 1, 1]} : vector<18x8x96xf32> to vector<8x8x96xf32>
    %209 = vector.shape_cast %207 : vector<8x96xf32> to vector<1x8x96xf32>
    %210 = vector.broadcast %209 : vector<1x8x96xf32> to vector<8x8x96xf32>
    %211 = arith.mulf %208, %210 : vector<8x8x96xf32>
    %212 = arith.addf %205, %211 : vector<8x8x96xf32>
    %c24 = arith.constant 24 : index
    %c0_85 = arith.constant 0 : index
    %c0_86 = arith.constant 0 : index
    %213 = vector.load %arg4[%c24, %c0_85, %c0_86] : memref<121x8x96xf32, #tpu.memory_space<vmem>>, vector<1x8x96xf32>
    %214 = vector.shape_cast %213 : vector<1x8x96xf32> to vector<8x96xf32>
    %215 = vector.extract_strided_slice %198 {offsets = [2, 0, 0], sizes = [8, 8, 96], strides = [1, 1, 1]} : vector<18x8x96xf32> to vector<8x8x96xf32>
    %216 = vector.shape_cast %214 : vector<8x96xf32> to vector<1x8x96xf32>
    %217 = vector.broadcast %216 : vector<1x8x96xf32> to vector<8x8x96xf32>
    %218 = arith.mulf %215, %217 : vector<8x8x96xf32>
    %219 = arith.addf %212, %218 : vector<8x8x96xf32>
    %c35 = arith.constant 35 : index
    %c0_87 = arith.constant 0 : index
    %c0_88 = arith.constant 0 : index
    %220 = vector.load %arg4[%c35, %c0_87, %c0_88] : memref<121x8x96xf32, #tpu.memory_space<vmem>>, vector<1x8x96xf32>
    %221 = vector.shape_cast %220 : vector<1x8x96xf32> to vector<8x96xf32>
    %222 = vector.extract_strided_slice %198 {offsets = [3, 0, 0], sizes = [8, 8, 96], strides = [1, 1, 1]} : vector<18x8x96xf32> to vector<8x8x96xf32>
    %223 = vector.shape_cast %221 : vector<8x96xf32> to vector<1x8x96xf32>
    %224 = vector.broadcast %223 : vector<1x8x96xf32> to vector<8x8x96xf32>
    %225 = arith.mulf %222, %224 : vector<8x8x96xf32>
    %226 = arith.addf %219, %225 : vector<8x8x96xf32>
    %c46 = arith.constant 46 : index
    %c0_89 = arith.constant 0 : index
    %c0_90 = arith.constant 0 : index
    %227 = vector.load %arg4[%c46, %c0_89, %c0_90] : memref<121x8x96xf32, #tpu.memory_space<vmem>>, vector<1x8x96xf32>
    %228 = vector.shape_cast %227 : vector<1x8x96xf32> to vector<8x96xf32>
    %229 = vector.extract_strided_slice %198 {offsets = [4, 0, 0], sizes = [8, 8, 96], strides = [1, 1, 1]} : vector<18x8x96xf32> to vector<8x8x96xf32>
    %230 = vector.shape_cast %228 : vector<8x96xf32> to vector<1x8x96xf32>
    %231 = vector.broadcast %230 : vector<1x8x96xf32> to vector<8x8x96xf32>
    %232 = arith.mulf %229, %231 : vector<8x8x96xf32>
    %233 = arith.addf %226, %232 : vector<8x8x96xf32>
    %c57 = arith.constant 57 : index
    %c0_91 = arith.constant 0 : index
    %c0_92 = arith.constant 0 : index
    %234 = vector.load %arg4[%c57, %c0_91, %c0_92] : memref<121x8x96xf32, #tpu.memory_space<vmem>>, vector<1x8x96xf32>
    %235 = vector.shape_cast %234 : vector<1x8x96xf32> to vector<8x96xf32>
    %236 = vector.extract_strided_slice %198 {offsets = [5, 0, 0], sizes = [8, 8, 96], strides = [1, 1, 1]} : vector<18x8x96xf32> to vector<8x8x96xf32>
    %237 = vector.shape_cast %235 : vector<8x96xf32> to vector<1x8x96xf32>
    %238 = vector.broadcast %237 : vector<1x8x96xf32> to vector<8x8x96xf32>
    %239 = arith.mulf %236, %238 : vector<8x8x96xf32>
    %240 = arith.addf %233, %239 : vector<8x8x96xf32>
    %c68 = arith.constant 68 : index
    %c0_93 = arith.constant 0 : index
    %c0_94 = arith.constant 0 : index
    %241 = vector.load %arg4[%c68, %c0_93, %c0_94] : memref<121x8x96xf32, #tpu.memory_space<vmem>>, vector<1x8x96xf32>
    %242 = vector.shape_cast %241 : vector<1x8x96xf32> to vector<8x96xf32>
    %243 = vector.extract_strided_slice %198 {offsets = [6, 0, 0], sizes = [8, 8, 96], strides = [1, 1, 1]} : vector<18x8x96xf32> to vector<8x8x96xf32>
    %244 = vector.shape_cast %242 : vector<8x96xf32> to vector<1x8x96xf32>
    %245 = vector.broadcast %244 : vector<1x8x96xf32> to vector<8x8x96xf32>
    %246 = arith.mulf %243, %245 : vector<8x8x96xf32>
    %247 = arith.addf %240, %246 : vector<8x8x96xf32>
    %c79 = arith.constant 79 : index
    %c0_95 = arith.constant 0 : index
    %c0_96 = arith.constant 0 : index
    %248 = vector.load %arg4[%c79, %c0_95, %c0_96] : memref<121x8x96xf32, #tpu.memory_space<vmem>>, vector<1x8x96xf32>
    %249 = vector.shape_cast %248 : vector<1x8x96xf32> to vector<8x96xf32>
    %250 = vector.extract_strided_slice %198 {offsets = [7, 0, 0], sizes = [8, 8, 96], strides = [1, 1, 1]} : vector<18x8x96xf32> to vector<8x8x96xf32>
    %251 = vector.shape_cast %249 : vector<8x96xf32> to vector<1x8x96xf32>
    %252 = vector.broadcast %251 : vector<1x8x96xf32> to vector<8x8x96xf32>
    %253 = arith.mulf %250, %252 : vector<8x8x96xf32>
    %254 = arith.addf %247, %253 : vector<8x8x96xf32>
    %c90 = arith.constant 90 : index
    %c0_97 = arith.constant 0 : index
    %c0_98 = arith.constant 0 : index
    %255 = vector.load %arg4[%c90, %c0_97, %c0_98] : memref<121x8x96xf32, #tpu.memory_space<vmem>>, vector<1x8x96xf32>
    %256 = vector.shape_cast %255 : vector<1x8x96xf32> to vector<8x96xf32>
    %257 = vector.extract_strided_slice %198 {offsets = [8, 0, 0], sizes = [8, 8, 96], strides = [1, 1, 1]} : vector<18x8x96xf32> to vector<8x8x96xf32>
    %258 = vector.shape_cast %256 : vector<8x96xf32> to vector<1x8x96xf32>
    %259 = vector.broadcast %258 : vector<1x8x96xf32> to vector<8x8x96xf32>
    %260 = arith.mulf %257, %259 : vector<8x8x96xf32>
    %261 = arith.addf %254, %260 : vector<8x8x96xf32>
    %c101 = arith.constant 101 : index
    %c0_99 = arith.constant 0 : index
    %c0_100 = arith.constant 0 : index
    %262 = vector.load %arg4[%c101, %c0_99, %c0_100] : memref<121x8x96xf32, #tpu.memory_space<vmem>>, vector<1x8x96xf32>
    %263 = vector.shape_cast %262 : vector<1x8x96xf32> to vector<8x96xf32>
    %264 = vector.extract_strided_slice %198 {offsets = [9, 0, 0], sizes = [8, 8, 96], strides = [1, 1, 1]} : vector<18x8x96xf32> to vector<8x8x96xf32>
    %265 = vector.shape_cast %263 : vector<8x96xf32> to vector<1x8x96xf32>
    %266 = vector.broadcast %265 : vector<1x8x96xf32> to vector<8x8x96xf32>
    %267 = arith.mulf %264, %266 : vector<8x8x96xf32>
    %268 = arith.addf %261, %267 : vector<8x8x96xf32>
    %c112 = arith.constant 112 : index
    %c0_101 = arith.constant 0 : index
    %c0_102 = arith.constant 0 : index
    %269 = vector.load %arg4[%c112, %c0_101, %c0_102] : memref<121x8x96xf32, #tpu.memory_space<vmem>>, vector<1x8x96xf32>
    %270 = vector.shape_cast %269 : vector<1x8x96xf32> to vector<8x96xf32>
    %271 = vector.extract_strided_slice %198 {offsets = [10, 0, 0], sizes = [8, 8, 96], strides = [1, 1, 1]} : vector<18x8x96xf32> to vector<8x8x96xf32>
    %272 = vector.shape_cast %270 : vector<8x96xf32> to vector<1x8x96xf32>
    %273 = vector.broadcast %272 : vector<1x8x96xf32> to vector<8x8x96xf32>
    %274 = arith.mulf %271, %273 : vector<8x8x96xf32>
    %275 = arith.addf %268, %274 : vector<8x8x96xf32>
    %c0_103 = arith.constant 0 : index
    %c6_104 = arith.constant 6 : index
    %c0_105 = arith.constant 0 : index
    %276 = vector.load %arg9[%c0_103, %c6_104, %c0_105] : memref<18x24x96xf32, #tpu.memory_space<vmem>>, vector<18x8x96xf32>
    %c3_106 = arith.constant 3 : index
    %c0_107 = arith.constant 0 : index
    %c0_108 = arith.constant 0 : index
    %277 = vector.load %arg4[%c3_106, %c0_107, %c0_108] : memref<121x8x96xf32, #tpu.memory_space<vmem>>, vector<1x8x96xf32>
    %278 = vector.shape_cast %277 : vector<1x8x96xf32> to vector<8x96xf32>
    %279 = vector.extract_strided_slice %276 {offsets = [0, 0, 0], sizes = [8, 8, 96], strides = [1, 1, 1]} : vector<18x8x96xf32> to vector<8x8x96xf32>
    %280 = vector.shape_cast %278 : vector<8x96xf32> to vector<1x8x96xf32>
    %281 = vector.broadcast %280 : vector<1x8x96xf32> to vector<8x8x96xf32>
    %282 = arith.mulf %279, %281 : vector<8x8x96xf32>
    %283 = arith.addf %275, %282 : vector<8x8x96xf32>
    %c14 = arith.constant 14 : index
    %c0_109 = arith.constant 0 : index
    %c0_110 = arith.constant 0 : index
    %284 = vector.load %arg4[%c14, %c0_109, %c0_110] : memref<121x8x96xf32, #tpu.memory_space<vmem>>, vector<1x8x96xf32>
    %285 = vector.shape_cast %284 : vector<1x8x96xf32> to vector<8x96xf32>
    %286 = vector.extract_strided_slice %276 {offsets = [1, 0, 0], sizes = [8, 8, 96], strides = [1, 1, 1]} : vector<18x8x96xf32> to vector<8x8x96xf32>
    %287 = vector.shape_cast %285 : vector<8x96xf32> to vector<1x8x96xf32>
    %288 = vector.broadcast %287 : vector<1x8x96xf32> to vector<8x8x96xf32>
    %289 = arith.mulf %286, %288 : vector<8x8x96xf32>
    %290 = arith.addf %283, %289 : vector<8x8x96xf32>
    %c25 = arith.constant 25 : index
    %c0_111 = arith.constant 0 : index
    %c0_112 = arith.constant 0 : index
    %291 = vector.load %arg4[%c25, %c0_111, %c0_112] : memref<121x8x96xf32, #tpu.memory_space<vmem>>, vector<1x8x96xf32>
    %292 = vector.shape_cast %291 : vector<1x8x96xf32> to vector<8x96xf32>
    %293 = vector.extract_strided_slice %276 {offsets = [2, 0, 0], sizes = [8, 8, 96], strides = [1, 1, 1]} : vector<18x8x96xf32> to vector<8x8x96xf32>
    %294 = vector.shape_cast %292 : vector<8x96xf32> to vector<1x8x96xf32>
    %295 = vector.broadcast %294 : vector<1x8x96xf32> to vector<8x8x96xf32>
    %296 = arith.mulf %293, %295 : vector<8x8x96xf32>
    %297 = arith.addf %290, %296 : vector<8x8x96xf32>
    %c36 = arith.constant 36 : index
    %c0_113 = arith.constant 0 : index
    %c0_114 = arith.constant 0 : index
    %298 = vector.load %arg4[%c36, %c0_113, %c0_114] : memref<121x8x96xf32, #tpu.memory_space<vmem>>, vector<1x8x96xf32>
    %299 = vector.shape_cast %298 : vector<1x8x96xf32> to vector<8x96xf32>
    %300 = vector.extract_strided_slice %276 {offsets = [3, 0, 0], sizes = [8, 8, 96], strides = [1, 1, 1]} : vector<18x8x96xf32> to vector<8x8x96xf32>
    %301 = vector.shape_cast %299 : vector<8x96xf32> to vector<1x8x96xf32>
    %302 = vector.broadcast %301 : vector<1x8x96xf32> to vector<8x8x96xf32>
    %303 = arith.mulf %300, %302 : vector<8x8x96xf32>
    %304 = arith.addf %297, %303 : vector<8x8x96xf32>
    %c47 = arith.constant 47 : index
    %c0_115 = arith.constant 0 : index
    %c0_116 = arith.constant 0 : index
    %305 = vector.load %arg4[%c47, %c0_115, %c0_116] : memref<121x8x96xf32, #tpu.memory_space<vmem>>, vector<1x8x96xf32>
    %306 = vector.shape_cast %305 : vector<1x8x96xf32> to vector<8x96xf32>
    %307 = vector.extract_strided_slice %276 {offsets = [4, 0, 0], sizes = [8, 8, 96], strides = [1, 1, 1]} : vector<18x8x96xf32> to vector<8x8x96xf32>
    %308 = vector.shape_cast %306 : vector<8x96xf32> to vector<1x8x96xf32>
    %309 = vector.broadcast %308 : vector<1x8x96xf32> to vector<8x8x96xf32>
    %310 = arith.mulf %307, %309 : vector<8x8x96xf32>
    %311 = arith.addf %304, %310 : vector<8x8x96xf32>
    %c58 = arith.constant 58 : index
    %c0_117 = arith.constant 0 : index
    %c0_118 = arith.constant 0 : index
    %312 = vector.load %arg4[%c58, %c0_117, %c0_118] : memref<121x8x96xf32, #tpu.memory_space<vmem>>, vector<1x8x96xf32>
    %313 = vector.shape_cast %312 : vector<1x8x96xf32> to vector<8x96xf32>
    %314 = vector.extract_strided_slice %276 {offsets = [5, 0, 0], sizes = [8, 8, 96], strides = [1, 1, 1]} : vector<18x8x96xf32> to vector<8x8x96xf32>
    %315 = vector.shape_cast %313 : vector<8x96xf32> to vector<1x8x96xf32>
    %316 = vector.broadcast %315 : vector<1x8x96xf32> to vector<8x8x96xf32>
    %317 = arith.mulf %314, %316 : vector<8x8x96xf32>
    %318 = arith.addf %311, %317 : vector<8x8x96xf32>
    %c69 = arith.constant 69 : index
    %c0_119 = arith.constant 0 : index
    %c0_120 = arith.constant 0 : index
    %319 = vector.load %arg4[%c69, %c0_119, %c0_120] : memref<121x8x96xf32, #tpu.memory_space<vmem>>, vector<1x8x96xf32>
    %320 = vector.shape_cast %319 : vector<1x8x96xf32> to vector<8x96xf32>
    %321 = vector.extract_strided_slice %276 {offsets = [6, 0, 0], sizes = [8, 8, 96], strides = [1, 1, 1]} : vector<18x8x96xf32> to vector<8x8x96xf32>
    %322 = vector.shape_cast %320 : vector<8x96xf32> to vector<1x8x96xf32>
    %323 = vector.broadcast %322 : vector<1x8x96xf32> to vector<8x8x96xf32>
    %324 = arith.mulf %321, %323 : vector<8x8x96xf32>
    %325 = arith.addf %318, %324 : vector<8x8x96xf32>
    %c80 = arith.constant 80 : index
    %c0_121 = arith.constant 0 : index
    %c0_122 = arith.constant 0 : index
    %326 = vector.load %arg4[%c80, %c0_121, %c0_122] : memref<121x8x96xf32, #tpu.memory_space<vmem>>, vector<1x8x96xf32>
    %327 = vector.shape_cast %326 : vector<1x8x96xf32> to vector<8x96xf32>
    %328 = vector.extract_strided_slice %276 {offsets = [7, 0, 0], sizes = [8, 8, 96], strides = [1, 1, 1]} : vector<18x8x96xf32> to vector<8x8x96xf32>
    %329 = vector.shape_cast %327 : vector<8x96xf32> to vector<1x8x96xf32>
    %330 = vector.broadcast %329 : vector<1x8x96xf32> to vector<8x8x96xf32>
    %331 = arith.mulf %328, %330 : vector<8x8x96xf32>
    %332 = arith.addf %325, %331 : vector<8x8x96xf32>
    %c91 = arith.constant 91 : index
    %c0_123 = arith.constant 0 : index
    %c0_124 = arith.constant 0 : index
    %333 = vector.load %arg4[%c91, %c0_123, %c0_124] : memref<121x8x96xf32, #tpu.memory_space<vmem>>, vector<1x8x96xf32>
    %334 = vector.shape_cast %333 : vector<1x8x96xf32> to vector<8x96xf32>
    %335 = vector.extract_strided_slice %276 {offsets = [8, 0, 0], sizes = [8, 8, 96], strides = [1, 1, 1]} : vector<18x8x96xf32> to vector<8x8x96xf32>
    %336 = vector.shape_cast %334 : vector<8x96xf32> to vector<1x8x96xf32>
    %337 = vector.broadcast %336 : vector<1x8x96xf32> to vector<8x8x96xf32>
    %338 = arith.mulf %335, %337 : vector<8x8x96xf32>
    %339 = arith.addf %332, %338 : vector<8x8x96xf32>
    %c102 = arith.constant 102 : index
    %c0_125 = arith.constant 0 : index
    %c0_126 = arith.constant 0 : index
    %340 = vector.load %arg4[%c102, %c0_125, %c0_126] : memref<121x8x96xf32, #tpu.memory_space<vmem>>, vector<1x8x96xf32>
    %341 = vector.shape_cast %340 : vector<1x8x96xf32> to vector<8x96xf32>
    %342 = vector.extract_strided_slice %276 {offsets = [9, 0, 0], sizes = [8, 8, 96], strides = [1, 1, 1]} : vector<18x8x96xf32> to vector<8x8x96xf32>
    %343 = vector.shape_cast %341 : vector<8x96xf32> to vector<1x8x96xf32>
    %344 = vector.broadcast %343 : vector<1x8x96xf32> to vector<8x8x96xf32>
    %345 = arith.mulf %342, %344 : vector<8x8x96xf32>
    %346 = arith.addf %339, %345 : vector<8x8x96xf32>
    %c113 = arith.constant 113 : index
    %c0_127 = arith.constant 0 : index
    %c0_128 = arith.constant 0 : index
    %347 = vector.load %arg4[%c113, %c0_127, %c0_128] : memref<121x8x96xf32, #tpu.memory_space<vmem>>, vector<1x8x96xf32>
    %348 = vector.shape_cast %347 : vector<1x8x96xf32> to vector<8x96xf32>
    %349 = vector.extract_strided_slice %276 {offsets = [10, 0, 0], sizes = [8, 8, 96], strides = [1, 1, 1]} : vector<18x8x96xf32> to vector<8x8x96xf32>
    %350 = vector.shape_cast %348 : vector<8x96xf32> to vector<1x8x96xf32>
    %351 = vector.broadcast %350 : vector<1x8x96xf32> to vector<8x8x96xf32>
    %352 = arith.mulf %349, %351 : vector<8x8x96xf32>
    %353 = arith.addf %346, %352 : vector<8x8x96xf32>
    %c0_129 = arith.constant 0 : index
    %c7_130 = arith.constant 7 : index
    %c0_131 = arith.constant 0 : index
    %354 = vector.load %arg9[%c0_129, %c7_130, %c0_131] : memref<18x24x96xf32, #tpu.memory_space<vmem>>, vector<18x8x96xf32>
    %c4_132 = arith.constant 4 : index
    %c0_133 = arith.constant 0 : index
    %c0_134 = arith.constant 0 : index
    %355 = vector.load %arg4[%c4_132, %c0_133, %c0_134] : memref<121x8x96xf32, #tpu.memory_space<vmem>>, vector<1x8x96xf32>
    %356 = vector.shape_cast %355 : vector<1x8x96xf32> to vector<8x96xf32>
    %357 = vector.extract_strided_slice %354 {offsets = [0, 0, 0], sizes = [8, 8, 96], strides = [1, 1, 1]} : vector<18x8x96xf32> to vector<8x8x96xf32>
    %358 = vector.shape_cast %356 : vector<8x96xf32> to vector<1x8x96xf32>
    %359 = vector.broadcast %358 : vector<1x8x96xf32> to vector<8x8x96xf32>
    %360 = arith.mulf %357, %359 : vector<8x8x96xf32>
    %361 = arith.addf %353, %360 : vector<8x8x96xf32>
    %c15 = arith.constant 15 : index
    %c0_135 = arith.constant 0 : index
    %c0_136 = arith.constant 0 : index
    %362 = vector.load %arg4[%c15, %c0_135, %c0_136] : memref<121x8x96xf32, #tpu.memory_space<vmem>>, vector<1x8x96xf32>
    %363 = vector.shape_cast %362 : vector<1x8x96xf32> to vector<8x96xf32>
    %364 = vector.extract_strided_slice %354 {offsets = [1, 0, 0], sizes = [8, 8, 96], strides = [1, 1, 1]} : vector<18x8x96xf32> to vector<8x8x96xf32>
    %365 = vector.shape_cast %363 : vector<8x96xf32> to vector<1x8x96xf32>
    %366 = vector.broadcast %365 : vector<1x8x96xf32> to vector<8x8x96xf32>
    %367 = arith.mulf %364, %366 : vector<8x8x96xf32>
    %368 = arith.addf %361, %367 : vector<8x8x96xf32>
    %c26 = arith.constant 26 : index
    %c0_137 = arith.constant 0 : index
    %c0_138 = arith.constant 0 : index
    %369 = vector.load %arg4[%c26, %c0_137, %c0_138] : memref<121x8x96xf32, #tpu.memory_space<vmem>>, vector<1x8x96xf32>
    %370 = vector.shape_cast %369 : vector<1x8x96xf32> to vector<8x96xf32>
    %371 = vector.extract_strided_slice %354 {offsets = [2, 0, 0], sizes = [8, 8, 96], strides = [1, 1, 1]} : vector<18x8x96xf32> to vector<8x8x96xf32>
    %372 = vector.shape_cast %370 : vector<8x96xf32> to vector<1x8x96xf32>
    %373 = vector.broadcast %372 : vector<1x8x96xf32> to vector<8x8x96xf32>
    %374 = arith.mulf %371, %373 : vector<8x8x96xf32>
    %375 = arith.addf %368, %374 : vector<8x8x96xf32>
    %c37 = arith.constant 37 : index
    %c0_139 = arith.constant 0 : index
    %c0_140 = arith.constant 0 : index
    %376 = vector.load %arg4[%c37, %c0_139, %c0_140] : memref<121x8x96xf32, #tpu.memory_space<vmem>>, vector<1x8x96xf32>
    %377 = vector.shape_cast %376 : vector<1x8x96xf32> to vector<8x96xf32>
    %378 = vector.extract_strided_slice %354 {offsets = [3, 0, 0], sizes = [8, 8, 96], strides = [1, 1, 1]} : vector<18x8x96xf32> to vector<8x8x96xf32>
    %379 = vector.shape_cast %377 : vector<8x96xf32> to vector<1x8x96xf32>
    %380 = vector.broadcast %379 : vector<1x8x96xf32> to vector<8x8x96xf32>
    %381 = arith.mulf %378, %380 : vector<8x8x96xf32>
    %382 = arith.addf %375, %381 : vector<8x8x96xf32>
    %c48 = arith.constant 48 : index
    %c0_141 = arith.constant 0 : index
    %c0_142 = arith.constant 0 : index
    %383 = vector.load %arg4[%c48, %c0_141, %c0_142] : memref<121x8x96xf32, #tpu.memory_space<vmem>>, vector<1x8x96xf32>
    %384 = vector.shape_cast %383 : vector<1x8x96xf32> to vector<8x96xf32>
    %385 = vector.extract_strided_slice %354 {offsets = [4, 0, 0], sizes = [8, 8, 96], strides = [1, 1, 1]} : vector<18x8x96xf32> to vector<8x8x96xf32>
    %386 = vector.shape_cast %384 : vector<8x96xf32> to vector<1x8x96xf32>
    %387 = vector.broadcast %386 : vector<1x8x96xf32> to vector<8x8x96xf32>
    %388 = arith.mulf %385, %387 : vector<8x8x96xf32>
    %389 = arith.addf %382, %388 : vector<8x8x96xf32>
    %c59 = arith.constant 59 : index
    %c0_143 = arith.constant 0 : index
    %c0_144 = arith.constant 0 : index
    %390 = vector.load %arg4[%c59, %c0_143, %c0_144] : memref<121x8x96xf32, #tpu.memory_space<vmem>>, vector<1x8x96xf32>
    %391 = vector.shape_cast %390 : vector<1x8x96xf32> to vector<8x96xf32>
    %392 = vector.extract_strided_slice %354 {offsets = [5, 0, 0], sizes = [8, 8, 96], strides = [1, 1, 1]} : vector<18x8x96xf32> to vector<8x8x96xf32>
    %393 = vector.shape_cast %391 : vector<8x96xf32> to vector<1x8x96xf32>
    %394 = vector.broadcast %393 : vector<1x8x96xf32> to vector<8x8x96xf32>
    %395 = arith.mulf %392, %394 : vector<8x8x96xf32>
    %396 = arith.addf %389, %395 : vector<8x8x96xf32>
    %c70 = arith.constant 70 : index
    %c0_145 = arith.constant 0 : index
    %c0_146 = arith.constant 0 : index
    %397 = vector.load %arg4[%c70, %c0_145, %c0_146] : memref<121x8x96xf32, #tpu.memory_space<vmem>>, vector<1x8x96xf32>
    %398 = vector.shape_cast %397 : vector<1x8x96xf32> to vector<8x96xf32>
    %399 = vector.extract_strided_slice %354 {offsets = [6, 0, 0], sizes = [8, 8, 96], strides = [1, 1, 1]} : vector<18x8x96xf32> to vector<8x8x96xf32>
    %400 = vector.shape_cast %398 : vector<8x96xf32> to vector<1x8x96xf32>
    %401 = vector.broadcast %400 : vector<1x8x96xf32> to vector<8x8x96xf32>
    %402 = arith.mulf %399, %401 : vector<8x8x96xf32>
    %403 = arith.addf %396, %402 : vector<8x8x96xf32>
    %c81 = arith.constant 81 : index
    %c0_147 = arith.constant 0 : index
    %c0_148 = arith.constant 0 : index
    %404 = vector.load %arg4[%c81, %c0_147, %c0_148] : memref<121x8x96xf32, #tpu.memory_space<vmem>>, vector<1x8x96xf32>
    %405 = vector.shape_cast %404 : vector<1x8x96xf32> to vector<8x96xf32>
    %406 = vector.extract_strided_slice %354 {offsets = [7, 0, 0], sizes = [8, 8, 96], strides = [1, 1, 1]} : vector<18x8x96xf32> to vector<8x8x96xf32>
    %407 = vector.shape_cast %405 : vector<8x96xf32> to vector<1x8x96xf32>
    %408 = vector.broadcast %407 : vector<1x8x96xf32> to vector<8x8x96xf32>
    %409 = arith.mulf %406, %408 : vector<8x8x96xf32>
    %410 = arith.addf %403, %409 : vector<8x8x96xf32>
    %c92 = arith.constant 92 : index
    %c0_149 = arith.constant 0 : index
    %c0_150 = arith.constant 0 : index
    %411 = vector.load %arg4[%c92, %c0_149, %c0_150] : memref<121x8x96xf32, #tpu.memory_space<vmem>>, vector<1x8x96xf32>
    %412 = vector.shape_cast %411 : vector<1x8x96xf32> to vector<8x96xf32>
    %413 = vector.extract_strided_slice %354 {offsets = [8, 0, 0], sizes = [8, 8, 96], strides = [1, 1, 1]} : vector<18x8x96xf32> to vector<8x8x96xf32>
    %414 = vector.shape_cast %412 : vector<8x96xf32> to vector<1x8x96xf32>
    %415 = vector.broadcast %414 : vector<1x8x96xf32> to vector<8x8x96xf32>
    %416 = arith.mulf %413, %415 : vector<8x8x96xf32>
    %417 = arith.addf %410, %416 : vector<8x8x96xf32>
    %c103 = arith.constant 103 : index
    %c0_151 = arith.constant 0 : index
    %c0_152 = arith.constant 0 : index
    %418 = vector.load %arg4[%c103, %c0_151, %c0_152] : memref<121x8x96xf32, #tpu.memory_space<vmem>>, vector<1x8x96xf32>
    %419 = vector.shape_cast %418 : vector<1x8x96xf32> to vector<8x96xf32>
    %420 = vector.extract_strided_slice %354 {offsets = [9, 0, 0], sizes = [8, 8, 96], strides = [1, 1, 1]} : vector<18x8x96xf32> to vector<8x8x96xf32>
    %421 = vector.shape_cast %419 : vector<8x96xf32> to vector<1x8x96xf32>
    %422 = vector.broadcast %421 : vector<1x8x96xf32> to vector<8x8x96xf32>
    %423 = arith.mulf %420, %422 : vector<8x8x96xf32>
    %424 = arith.addf %417, %423 : vector<8x8x96xf32>
    %c114 = arith.constant 114 : index
    %c0_153 = arith.constant 0 : index
    %c0_154 = arith.constant 0 : index
    %425 = vector.load %arg4[%c114, %c0_153, %c0_154] : memref<121x8x96xf32, #tpu.memory_space<vmem>>, vector<1x8x96xf32>
    %426 = vector.shape_cast %425 : vector<1x8x96xf32> to vector<8x96xf32>
    %427 = vector.extract_strided_slice %354 {offsets = [10, 0, 0], sizes = [8, 8, 96], strides = [1, 1, 1]} : vector<18x8x96xf32> to vector<8x8x96xf32>
    %428 = vector.shape_cast %426 : vector<8x96xf32> to vector<1x8x96xf32>
    %429 = vector.broadcast %428 : vector<1x8x96xf32> to vector<8x8x96xf32>
    %430 = arith.mulf %427, %429 : vector<8x8x96xf32>
    %431 = arith.addf %424, %430 : vector<8x8x96xf32>
    %c0_155 = arith.constant 0 : index
    %c8_156 = arith.constant 8 : index
    %c0_157 = arith.constant 0 : index
    %432 = vector.load %arg9[%c0_155, %c8_156, %c0_157] : memref<18x24x96xf32, #tpu.memory_space<vmem>>, vector<18x8x96xf32>
    %c5_158 = arith.constant 5 : index
    %c0_159 = arith.constant 0 : index
    %c0_160 = arith.constant 0 : index
    %433 = vector.load %arg4[%c5_158, %c0_159, %c0_160] : memref<121x8x96xf32, #tpu.memory_space<vmem>>, vector<1x8x96xf32>
    %434 = vector.shape_cast %433 : vector<1x8x96xf32> to vector<8x96xf32>
    %435 = vector.extract_strided_slice %432 {offsets = [0, 0, 0], sizes = [8, 8, 96], strides = [1, 1, 1]} : vector<18x8x96xf32> to vector<8x8x96xf32>
    %436 = vector.shape_cast %434 : vector<8x96xf32> to vector<1x8x96xf32>
    %437 = vector.broadcast %436 : vector<1x8x96xf32> to vector<8x8x96xf32>
    %438 = arith.mulf %435, %437 : vector<8x8x96xf32>
    %439 = arith.addf %431, %438 : vector<8x8x96xf32>
    %c16 = arith.constant 16 : index
    %c0_161 = arith.constant 0 : index
    %c0_162 = arith.constant 0 : index
    %440 = vector.load %arg4[%c16, %c0_161, %c0_162] : memref<121x8x96xf32, #tpu.memory_space<vmem>>, vector<1x8x96xf32>
    %441 = vector.shape_cast %440 : vector<1x8x96xf32> to vector<8x96xf32>
    %442 = vector.extract_strided_slice %432 {offsets = [1, 0, 0], sizes = [8, 8, 96], strides = [1, 1, 1]} : vector<18x8x96xf32> to vector<8x8x96xf32>
    %443 = vector.shape_cast %441 : vector<8x96xf32> to vector<1x8x96xf32>
    %444 = vector.broadcast %443 : vector<1x8x96xf32> to vector<8x8x96xf32>
    %445 = arith.mulf %442, %444 : vector<8x8x96xf32>
    %446 = arith.addf %439, %445 : vector<8x8x96xf32>
    %c27 = arith.constant 27 : index
    %c0_163 = arith.constant 0 : index
    %c0_164 = arith.constant 0 : index
    %447 = vector.load %arg4[%c27, %c0_163, %c0_164] : memref<121x8x96xf32, #tpu.memory_space<vmem>>, vector<1x8x96xf32>
    %448 = vector.shape_cast %447 : vector<1x8x96xf32> to vector<8x96xf32>
    %449 = vector.extract_strided_slice %432 {offsets = [2, 0, 0], sizes = [8, 8, 96], strides = [1, 1, 1]} : vector<18x8x96xf32> to vector<8x8x96xf32>
    %450 = vector.shape_cast %448 : vector<8x96xf32> to vector<1x8x96xf32>
    %451 = vector.broadcast %450 : vector<1x8x96xf32> to vector<8x8x96xf32>
    %452 = arith.mulf %449, %451 : vector<8x8x96xf32>
    %453 = arith.addf %446, %452 : vector<8x8x96xf32>
    %c38 = arith.constant 38 : index
    %c0_165 = arith.constant 0 : index
    %c0_166 = arith.constant 0 : index
    %454 = vector.load %arg4[%c38, %c0_165, %c0_166] : memref<121x8x96xf32, #tpu.memory_space<vmem>>, vector<1x8x96xf32>
    %455 = vector.shape_cast %454 : vector<1x8x96xf32> to vector<8x96xf32>
    %456 = vector.extract_strided_slice %432 {offsets = [3, 0, 0], sizes = [8, 8, 96], strides = [1, 1, 1]} : vector<18x8x96xf32> to vector<8x8x96xf32>
    %457 = vector.shape_cast %455 : vector<8x96xf32> to vector<1x8x96xf32>
    %458 = vector.broadcast %457 : vector<1x8x96xf32> to vector<8x8x96xf32>
    %459 = arith.mulf %456, %458 : vector<8x8x96xf32>
    %460 = arith.addf %453, %459 : vector<8x8x96xf32>
    %c49 = arith.constant 49 : index
    %c0_167 = arith.constant 0 : index
    %c0_168 = arith.constant 0 : index
    %461 = vector.load %arg4[%c49, %c0_167, %c0_168] : memref<121x8x96xf32, #tpu.memory_space<vmem>>, vector<1x8x96xf32>
    %462 = vector.shape_cast %461 : vector<1x8x96xf32> to vector<8x96xf32>
    %463 = vector.extract_strided_slice %432 {offsets = [4, 0, 0], sizes = [8, 8, 96], strides = [1, 1, 1]} : vector<18x8x96xf32> to vector<8x8x96xf32>
    %464 = vector.shape_cast %462 : vector<8x96xf32> to vector<1x8x96xf32>
    %465 = vector.broadcast %464 : vector<1x8x96xf32> to vector<8x8x96xf32>
    %466 = arith.mulf %463, %465 : vector<8x8x96xf32>
    %467 = arith.addf %460, %466 : vector<8x8x96xf32>
    %c60 = arith.constant 60 : index
    %c0_169 = arith.constant 0 : index
    %c0_170 = arith.constant 0 : index
    %468 = vector.load %arg4[%c60, %c0_169, %c0_170] : memref<121x8x96xf32, #tpu.memory_space<vmem>>, vector<1x8x96xf32>
    %469 = vector.shape_cast %468 : vector<1x8x96xf32> to vector<8x96xf32>
    %470 = vector.extract_strided_slice %432 {offsets = [5, 0, 0], sizes = [8, 8, 96], strides = [1, 1, 1]} : vector<18x8x96xf32> to vector<8x8x96xf32>
    %471 = vector.shape_cast %469 : vector<8x96xf32> to vector<1x8x96xf32>
    %472 = vector.broadcast %471 : vector<1x8x96xf32> to vector<8x8x96xf32>
    %473 = arith.mulf %470, %472 : vector<8x8x96xf32>
    %474 = arith.addf %467, %473 : vector<8x8x96xf32>
    %c71 = arith.constant 71 : index
    %c0_171 = arith.constant 0 : index
    %c0_172 = arith.constant 0 : index
    %475 = vector.load %arg4[%c71, %c0_171, %c0_172] : memref<121x8x96xf32, #tpu.memory_space<vmem>>, vector<1x8x96xf32>
    %476 = vector.shape_cast %475 : vector<1x8x96xf32> to vector<8x96xf32>
    %477 = vector.extract_strided_slice %432 {offsets = [6, 0, 0], sizes = [8, 8, 96], strides = [1, 1, 1]} : vector<18x8x96xf32> to vector<8x8x96xf32>
    %478 = vector.shape_cast %476 : vector<8x96xf32> to vector<1x8x96xf32>
    %479 = vector.broadcast %478 : vector<1x8x96xf32> to vector<8x8x96xf32>
    %480 = arith.mulf %477, %479 : vector<8x8x96xf32>
    %481 = arith.addf %474, %480 : vector<8x8x96xf32>
    %c82 = arith.constant 82 : index
    %c0_173 = arith.constant 0 : index
    %c0_174 = arith.constant 0 : index
    %482 = vector.load %arg4[%c82, %c0_173, %c0_174] : memref<121x8x96xf32, #tpu.memory_space<vmem>>, vector<1x8x96xf32>
    %483 = vector.shape_cast %482 : vector<1x8x96xf32> to vector<8x96xf32>
    %484 = vector.extract_strided_slice %432 {offsets = [7, 0, 0], sizes = [8, 8, 96], strides = [1, 1, 1]} : vector<18x8x96xf32> to vector<8x8x96xf32>
    %485 = vector.shape_cast %483 : vector<8x96xf32> to vector<1x8x96xf32>
    %486 = vector.broadcast %485 : vector<1x8x96xf32> to vector<8x8x96xf32>
    %487 = arith.mulf %484, %486 : vector<8x8x96xf32>
    %488 = arith.addf %481, %487 : vector<8x8x96xf32>
    %c93 = arith.constant 93 : index
    %c0_175 = arith.constant 0 : index
    %c0_176 = arith.constant 0 : index
    %489 = vector.load %arg4[%c93, %c0_175, %c0_176] : memref<121x8x96xf32, #tpu.memory_space<vmem>>, vector<1x8x96xf32>
    %490 = vector.shape_cast %489 : vector<1x8x96xf32> to vector<8x96xf32>
    %491 = vector.extract_strided_slice %432 {offsets = [8, 0, 0], sizes = [8, 8, 96], strides = [1, 1, 1]} : vector<18x8x96xf32> to vector<8x8x96xf32>
    %492 = vector.shape_cast %490 : vector<8x96xf32> to vector<1x8x96xf32>
    %493 = vector.broadcast %492 : vector<1x8x96xf32> to vector<8x8x96xf32>
    %494 = arith.mulf %491, %493 : vector<8x8x96xf32>
    %495 = arith.addf %488, %494 : vector<8x8x96xf32>
    %c104 = arith.constant 104 : index
    %c0_177 = arith.constant 0 : index
    %c0_178 = arith.constant 0 : index
    %496 = vector.load %arg4[%c104, %c0_177, %c0_178] : memref<121x8x96xf32, #tpu.memory_space<vmem>>, vector<1x8x96xf32>
    %497 = vector.shape_cast %496 : vector<1x8x96xf32> to vector<8x96xf32>
    %498 = vector.extract_strided_slice %432 {offsets = [9, 0, 0], sizes = [8, 8, 96], strides = [1, 1, 1]} : vector<18x8x96xf32> to vector<8x8x96xf32>
    %499 = vector.shape_cast %497 : vector<8x96xf32> to vector<1x8x96xf32>
    %500 = vector.broadcast %499 : vector<1x8x96xf32> to vector<8x8x96xf32>
    %501 = arith.mulf %498, %500 : vector<8x8x96xf32>
    %502 = arith.addf %495, %501 : vector<8x8x96xf32>
    %c115 = arith.constant 115 : index
    %c0_179 = arith.constant 0 : index
    %c0_180 = arith.constant 0 : index
    %503 = vector.load %arg4[%c115, %c0_179, %c0_180] : memref<121x8x96xf32, #tpu.memory_space<vmem>>, vector<1x8x96xf32>
    %504 = vector.shape_cast %503 : vector<1x8x96xf32> to vector<8x96xf32>
    %505 = vector.extract_strided_slice %432 {offsets = [10, 0, 0], sizes = [8, 8, 96], strides = [1, 1, 1]} : vector<18x8x96xf32> to vector<8x8x96xf32>
    %506 = vector.shape_cast %504 : vector<8x96xf32> to vector<1x8x96xf32>
    %507 = vector.broadcast %506 : vector<1x8x96xf32> to vector<8x8x96xf32>
    %508 = arith.mulf %505, %507 : vector<8x8x96xf32>
    %509 = arith.addf %502, %508 : vector<8x8x96xf32>
    %c0_181 = arith.constant 0 : index
    %c9_182 = arith.constant 9 : index
    %c0_183 = arith.constant 0 : index
    %510 = vector.load %arg9[%c0_181, %c9_182, %c0_183] : memref<18x24x96xf32, #tpu.memory_space<vmem>>, vector<18x8x96xf32>
    %c6_184 = arith.constant 6 : index
    %c0_185 = arith.constant 0 : index
    %c0_186 = arith.constant 0 : index
    %511 = vector.load %arg4[%c6_184, %c0_185, %c0_186] : memref<121x8x96xf32, #tpu.memory_space<vmem>>, vector<1x8x96xf32>
    %512 = vector.shape_cast %511 : vector<1x8x96xf32> to vector<8x96xf32>
    %513 = vector.extract_strided_slice %510 {offsets = [0, 0, 0], sizes = [8, 8, 96], strides = [1, 1, 1]} : vector<18x8x96xf32> to vector<8x8x96xf32>
    %514 = vector.shape_cast %512 : vector<8x96xf32> to vector<1x8x96xf32>
    %515 = vector.broadcast %514 : vector<1x8x96xf32> to vector<8x8x96xf32>
    %516 = arith.mulf %513, %515 : vector<8x8x96xf32>
    %517 = arith.addf %509, %516 : vector<8x8x96xf32>
    %c17 = arith.constant 17 : index
    %c0_187 = arith.constant 0 : index
    %c0_188 = arith.constant 0 : index
    %518 = vector.load %arg4[%c17, %c0_187, %c0_188] : memref<121x8x96xf32, #tpu.memory_space<vmem>>, vector<1x8x96xf32>
    %519 = vector.shape_cast %518 : vector<1x8x96xf32> to vector<8x96xf32>
    %520 = vector.extract_strided_slice %510 {offsets = [1, 0, 0], sizes = [8, 8, 96], strides = [1, 1, 1]} : vector<18x8x96xf32> to vector<8x8x96xf32>
    %521 = vector.shape_cast %519 : vector<8x96xf32> to vector<1x8x96xf32>
    %522 = vector.broadcast %521 : vector<1x8x96xf32> to vector<8x8x96xf32>
    %523 = arith.mulf %520, %522 : vector<8x8x96xf32>
    %524 = arith.addf %517, %523 : vector<8x8x96xf32>
    %c28 = arith.constant 28 : index
    %c0_189 = arith.constant 0 : index
    %c0_190 = arith.constant 0 : index
    %525 = vector.load %arg4[%c28, %c0_189, %c0_190] : memref<121x8x96xf32, #tpu.memory_space<vmem>>, vector<1x8x96xf32>
    %526 = vector.shape_cast %525 : vector<1x8x96xf32> to vector<8x96xf32>
    %527 = vector.extract_strided_slice %510 {offsets = [2, 0, 0], sizes = [8, 8, 96], strides = [1, 1, 1]} : vector<18x8x96xf32> to vector<8x8x96xf32>
    %528 = vector.shape_cast %526 : vector<8x96xf32> to vector<1x8x96xf32>
    %529 = vector.broadcast %528 : vector<1x8x96xf32> to vector<8x8x96xf32>
    %530 = arith.mulf %527, %529 : vector<8x8x96xf32>
    %531 = arith.addf %524, %530 : vector<8x8x96xf32>
    %c39 = arith.constant 39 : index
    %c0_191 = arith.constant 0 : index
    %c0_192 = arith.constant 0 : index
    %532 = vector.load %arg4[%c39, %c0_191, %c0_192] : memref<121x8x96xf32, #tpu.memory_space<vmem>>, vector<1x8x96xf32>
    %533 = vector.shape_cast %532 : vector<1x8x96xf32> to vector<8x96xf32>
    %534 = vector.extract_strided_slice %510 {offsets = [3, 0, 0], sizes = [8, 8, 96], strides = [1, 1, 1]} : vector<18x8x96xf32> to vector<8x8x96xf32>
    %535 = vector.shape_cast %533 : vector<8x96xf32> to vector<1x8x96xf32>
    %536 = vector.broadcast %535 : vector<1x8x96xf32> to vector<8x8x96xf32>
    %537 = arith.mulf %534, %536 : vector<8x8x96xf32>
    %538 = arith.addf %531, %537 : vector<8x8x96xf32>
    %c50 = arith.constant 50 : index
    %c0_193 = arith.constant 0 : index
    %c0_194 = arith.constant 0 : index
    %539 = vector.load %arg4[%c50, %c0_193, %c0_194] : memref<121x8x96xf32, #tpu.memory_space<vmem>>, vector<1x8x96xf32>
    %540 = vector.shape_cast %539 : vector<1x8x96xf32> to vector<8x96xf32>
    %541 = vector.extract_strided_slice %510 {offsets = [4, 0, 0], sizes = [8, 8, 96], strides = [1, 1, 1]} : vector<18x8x96xf32> to vector<8x8x96xf32>
    %542 = vector.shape_cast %540 : vector<8x96xf32> to vector<1x8x96xf32>
    %543 = vector.broadcast %542 : vector<1x8x96xf32> to vector<8x8x96xf32>
    %544 = arith.mulf %541, %543 : vector<8x8x96xf32>
    %545 = arith.addf %538, %544 : vector<8x8x96xf32>
    %c61 = arith.constant 61 : index
    %c0_195 = arith.constant 0 : index
    %c0_196 = arith.constant 0 : index
    %546 = vector.load %arg4[%c61, %c0_195, %c0_196] : memref<121x8x96xf32, #tpu.memory_space<vmem>>, vector<1x8x96xf32>
    %547 = vector.shape_cast %546 : vector<1x8x96xf32> to vector<8x96xf32>
    %548 = vector.extract_strided_slice %510 {offsets = [5, 0, 0], sizes = [8, 8, 96], strides = [1, 1, 1]} : vector<18x8x96xf32> to vector<8x8x96xf32>
    %549 = vector.shape_cast %547 : vector<8x96xf32> to vector<1x8x96xf32>
    %550 = vector.broadcast %549 : vector<1x8x96xf32> to vector<8x8x96xf32>
    %551 = arith.mulf %548, %550 : vector<8x8x96xf32>
    %552 = arith.addf %545, %551 : vector<8x8x96xf32>
    %c72 = arith.constant 72 : index
    %c0_197 = arith.constant 0 : index
    %c0_198 = arith.constant 0 : index
    %553 = vector.load %arg4[%c72, %c0_197, %c0_198] : memref<121x8x96xf32, #tpu.memory_space<vmem>>, vector<1x8x96xf32>
    %554 = vector.shape_cast %553 : vector<1x8x96xf32> to vector<8x96xf32>
    %555 = vector.extract_strided_slice %510 {offsets = [6, 0, 0], sizes = [8, 8, 96], strides = [1, 1, 1]} : vector<18x8x96xf32> to vector<8x8x96xf32>
    %556 = vector.shape_cast %554 : vector<8x96xf32> to vector<1x8x96xf32>
    %557 = vector.broadcast %556 : vector<1x8x96xf32> to vector<8x8x96xf32>
    %558 = arith.mulf %555, %557 : vector<8x8x96xf32>
    %559 = arith.addf %552, %558 : vector<8x8x96xf32>
    %c83 = arith.constant 83 : index
    %c0_199 = arith.constant 0 : index
    %c0_200 = arith.constant 0 : index
    %560 = vector.load %arg4[%c83, %c0_199, %c0_200] : memref<121x8x96xf32, #tpu.memory_space<vmem>>, vector<1x8x96xf32>
    %561 = vector.shape_cast %560 : vector<1x8x96xf32> to vector<8x96xf32>
    %562 = vector.extract_strided_slice %510 {offsets = [7, 0, 0], sizes = [8, 8, 96], strides = [1, 1, 1]} : vector<18x8x96xf32> to vector<8x8x96xf32>
    %563 = vector.shape_cast %561 : vector<8x96xf32> to vector<1x8x96xf32>
    %564 = vector.broadcast %563 : vector<1x8x96xf32> to vector<8x8x96xf32>
    %565 = arith.mulf %562, %564 : vector<8x8x96xf32>
    %566 = arith.addf %559, %565 : vector<8x8x96xf32>
    %c94 = arith.constant 94 : index
    %c0_201 = arith.constant 0 : index
    %c0_202 = arith.constant 0 : index
    %567 = vector.load %arg4[%c94, %c0_201, %c0_202] : memref<121x8x96xf32, #tpu.memory_space<vmem>>, vector<1x8x96xf32>
    %568 = vector.shape_cast %567 : vector<1x8x96xf32> to vector<8x96xf32>
    %569 = vector.extract_strided_slice %510 {offsets = [8, 0, 0], sizes = [8, 8, 96], strides = [1, 1, 1]} : vector<18x8x96xf32> to vector<8x8x96xf32>
    %570 = vector.shape_cast %568 : vector<8x96xf32> to vector<1x8x96xf32>
    %571 = vector.broadcast %570 : vector<1x8x96xf32> to vector<8x8x96xf32>
    %572 = arith.mulf %569, %571 : vector<8x8x96xf32>
    %573 = arith.addf %566, %572 : vector<8x8x96xf32>
    %c105 = arith.constant 105 : index
    %c0_203 = arith.constant 0 : index
    %c0_204 = arith.constant 0 : index
    %574 = vector.load %arg4[%c105, %c0_203, %c0_204] : memref<121x8x96xf32, #tpu.memory_space<vmem>>, vector<1x8x96xf32>
    %575 = vector.shape_cast %574 : vector<1x8x96xf32> to vector<8x96xf32>
    %576 = vector.extract_strided_slice %510 {offsets = [9, 0, 0], sizes = [8, 8, 96], strides = [1, 1, 1]} : vector<18x8x96xf32> to vector<8x8x96xf32>
    %577 = vector.shape_cast %575 : vector<8x96xf32> to vector<1x8x96xf32>
    %578 = vector.broadcast %577 : vector<1x8x96xf32> to vector<8x8x96xf32>
    %579 = arith.mulf %576, %578 : vector<8x8x96xf32>
    %580 = arith.addf %573, %579 : vector<8x8x96xf32>
    %c116 = arith.constant 116 : index
    %c0_205 = arith.constant 0 : index
    %c0_206 = arith.constant 0 : index
    %581 = vector.load %arg4[%c116, %c0_205, %c0_206] : memref<121x8x96xf32, #tpu.memory_space<vmem>>, vector<1x8x96xf32>
    %582 = vector.shape_cast %581 : vector<1x8x96xf32> to vector<8x96xf32>
    %583 = vector.extract_strided_slice %510 {offsets = [10, 0, 0], sizes = [8, 8, 96], strides = [1, 1, 1]} : vector<18x8x96xf32> to vector<8x8x96xf32>
    %584 = vector.shape_cast %582 : vector<8x96xf32> to vector<1x8x96xf32>
    %585 = vector.broadcast %584 : vector<1x8x96xf32> to vector<8x8x96xf32>
    %586 = arith.mulf %583, %585 : vector<8x8x96xf32>
    %587 = arith.addf %580, %586 : vector<8x8x96xf32>
    %c0_207 = arith.constant 0 : index
    %c10_208 = arith.constant 10 : index
    %c0_209 = arith.constant 0 : index
    %588 = vector.load %arg9[%c0_207, %c10_208, %c0_209] : memref<18x24x96xf32, #tpu.memory_space<vmem>>, vector<18x8x96xf32>
    %c7_210 = arith.constant 7 : index
    %c0_211 = arith.constant 0 : index
    %c0_212 = arith.constant 0 : index
    %589 = vector.load %arg4[%c7_210, %c0_211, %c0_212] : memref<121x8x96xf32, #tpu.memory_space<vmem>>, vector<1x8x96xf32>
    %590 = vector.shape_cast %589 : vector<1x8x96xf32> to vector<8x96xf32>
    %591 = vector.extract_strided_slice %588 {offsets = [0, 0, 0], sizes = [8, 8, 96], strides = [1, 1, 1]} : vector<18x8x96xf32> to vector<8x8x96xf32>
    %592 = vector.shape_cast %590 : vector<8x96xf32> to vector<1x8x96xf32>
    %593 = vector.broadcast %592 : vector<1x8x96xf32> to vector<8x8x96xf32>
    %594 = arith.mulf %591, %593 : vector<8x8x96xf32>
    %595 = arith.addf %587, %594 : vector<8x8x96xf32>
    %c18 = arith.constant 18 : index
    %c0_213 = arith.constant 0 : index
    %c0_214 = arith.constant 0 : index
    %596 = vector.load %arg4[%c18, %c0_213, %c0_214] : memref<121x8x96xf32, #tpu.memory_space<vmem>>, vector<1x8x96xf32>
    %597 = vector.shape_cast %596 : vector<1x8x96xf32> to vector<8x96xf32>
    %598 = vector.extract_strided_slice %588 {offsets = [1, 0, 0], sizes = [8, 8, 96], strides = [1, 1, 1]} : vector<18x8x96xf32> to vector<8x8x96xf32>
    %599 = vector.shape_cast %597 : vector<8x96xf32> to vector<1x8x96xf32>
    %600 = vector.broadcast %599 : vector<1x8x96xf32> to vector<8x8x96xf32>
    %601 = arith.mulf %598, %600 : vector<8x8x96xf32>
    %602 = arith.addf %595, %601 : vector<8x8x96xf32>
    %c29 = arith.constant 29 : index
    %c0_215 = arith.constant 0 : index
    %c0_216 = arith.constant 0 : index
    %603 = vector.load %arg4[%c29, %c0_215, %c0_216] : memref<121x8x96xf32, #tpu.memory_space<vmem>>, vector<1x8x96xf32>
    %604 = vector.shape_cast %603 : vector<1x8x96xf32> to vector<8x96xf32>
    %605 = vector.extract_strided_slice %588 {offsets = [2, 0, 0], sizes = [8, 8, 96], strides = [1, 1, 1]} : vector<18x8x96xf32> to vector<8x8x96xf32>
    %606 = vector.shape_cast %604 : vector<8x96xf32> to vector<1x8x96xf32>
    %607 = vector.broadcast %606 : vector<1x8x96xf32> to vector<8x8x96xf32>
    %608 = arith.mulf %605, %607 : vector<8x8x96xf32>
    %609 = arith.addf %602, %608 : vector<8x8x96xf32>
    %c40 = arith.constant 40 : index
    %c0_217 = arith.constant 0 : index
    %c0_218 = arith.constant 0 : index
    %610 = vector.load %arg4[%c40, %c0_217, %c0_218] : memref<121x8x96xf32, #tpu.memory_space<vmem>>, vector<1x8x96xf32>
    %611 = vector.shape_cast %610 : vector<1x8x96xf32> to vector<8x96xf32>
    %612 = vector.extract_strided_slice %588 {offsets = [3, 0, 0], sizes = [8, 8, 96], strides = [1, 1, 1]} : vector<18x8x96xf32> to vector<8x8x96xf32>
    %613 = vector.shape_cast %611 : vector<8x96xf32> to vector<1x8x96xf32>
    %614 = vector.broadcast %613 : vector<1x8x96xf32> to vector<8x8x96xf32>
    %615 = arith.mulf %612, %614 : vector<8x8x96xf32>
    %616 = arith.addf %609, %615 : vector<8x8x96xf32>
    %c51 = arith.constant 51 : index
    %c0_219 = arith.constant 0 : index
    %c0_220 = arith.constant 0 : index
    %617 = vector.load %arg4[%c51, %c0_219, %c0_220] : memref<121x8x96xf32, #tpu.memory_space<vmem>>, vector<1x8x96xf32>
    %618 = vector.shape_cast %617 : vector<1x8x96xf32> to vector<8x96xf32>
    %619 = vector.extract_strided_slice %588 {offsets = [4, 0, 0], sizes = [8, 8, 96], strides = [1, 1, 1]} : vector<18x8x96xf32> to vector<8x8x96xf32>
    %620 = vector.shape_cast %618 : vector<8x96xf32> to vector<1x8x96xf32>
    %621 = vector.broadcast %620 : vector<1x8x96xf32> to vector<8x8x96xf32>
    %622 = arith.mulf %619, %621 : vector<8x8x96xf32>
    %623 = arith.addf %616, %622 : vector<8x8x96xf32>
    %c62 = arith.constant 62 : index
    %c0_221 = arith.constant 0 : index
    %c0_222 = arith.constant 0 : index
    %624 = vector.load %arg4[%c62, %c0_221, %c0_222] : memref<121x8x96xf32, #tpu.memory_space<vmem>>, vector<1x8x96xf32>
    %625 = vector.shape_cast %624 : vector<1x8x96xf32> to vector<8x96xf32>
    %626 = vector.extract_strided_slice %588 {offsets = [5, 0, 0], sizes = [8, 8, 96], strides = [1, 1, 1]} : vector<18x8x96xf32> to vector<8x8x96xf32>
    %627 = vector.shape_cast %625 : vector<8x96xf32> to vector<1x8x96xf32>
    %628 = vector.broadcast %627 : vector<1x8x96xf32> to vector<8x8x96xf32>
    %629 = arith.mulf %626, %628 : vector<8x8x96xf32>
    %630 = arith.addf %623, %629 : vector<8x8x96xf32>
    %c73 = arith.constant 73 : index
    %c0_223 = arith.constant 0 : index
    %c0_224 = arith.constant 0 : index
    %631 = vector.load %arg4[%c73, %c0_223, %c0_224] : memref<121x8x96xf32, #tpu.memory_space<vmem>>, vector<1x8x96xf32>
    %632 = vector.shape_cast %631 : vector<1x8x96xf32> to vector<8x96xf32>
    %633 = vector.extract_strided_slice %588 {offsets = [6, 0, 0], sizes = [8, 8, 96], strides = [1, 1, 1]} : vector<18x8x96xf32> to vector<8x8x96xf32>
    %634 = vector.shape_cast %632 : vector<8x96xf32> to vector<1x8x96xf32>
    %635 = vector.broadcast %634 : vector<1x8x96xf32> to vector<8x8x96xf32>
    %636 = arith.mulf %633, %635 : vector<8x8x96xf32>
    %637 = arith.addf %630, %636 : vector<8x8x96xf32>
    %c84 = arith.constant 84 : index
    %c0_225 = arith.constant 0 : index
    %c0_226 = arith.constant 0 : index
    %638 = vector.load %arg4[%c84, %c0_225, %c0_226] : memref<121x8x96xf32, #tpu.memory_space<vmem>>, vector<1x8x96xf32>
    %639 = vector.shape_cast %638 : vector<1x8x96xf32> to vector<8x96xf32>
    %640 = vector.extract_strided_slice %588 {offsets = [7, 0, 0], sizes = [8, 8, 96], strides = [1, 1, 1]} : vector<18x8x96xf32> to vector<8x8x96xf32>
    %641 = vector.shape_cast %639 : vector<8x96xf32> to vector<1x8x96xf32>
    %642 = vector.broadcast %641 : vector<1x8x96xf32> to vector<8x8x96xf32>
    %643 = arith.mulf %640, %642 : vector<8x8x96xf32>
    %644 = arith.addf %637, %643 : vector<8x8x96xf32>
    %c95 = arith.constant 95 : index
    %c0_227 = arith.constant 0 : index
    %c0_228 = arith.constant 0 : index
    %645 = vector.load %arg4[%c95, %c0_227, %c0_228] : memref<121x8x96xf32, #tpu.memory_space<vmem>>, vector<1x8x96xf32>
    %646 = vector.shape_cast %645 : vector<1x8x96xf32> to vector<8x96xf32>
    %647 = vector.extract_strided_slice %588 {offsets = [8, 0, 0], sizes = [8, 8, 96], strides = [1, 1, 1]} : vector<18x8x96xf32> to vector<8x8x96xf32>
    %648 = vector.shape_cast %646 : vector<8x96xf32> to vector<1x8x96xf32>
    %649 = vector.broadcast %648 : vector<1x8x96xf32> to vector<8x8x96xf32>
    %650 = arith.mulf %647, %649 : vector<8x8x96xf32>
    %651 = arith.addf %644, %650 : vector<8x8x96xf32>
    %c106 = arith.constant 106 : index
    %c0_229 = arith.constant 0 : index
    %c0_230 = arith.constant 0 : index
    %652 = vector.load %arg4[%c106, %c0_229, %c0_230] : memref<121x8x96xf32, #tpu.memory_space<vmem>>, vector<1x8x96xf32>
    %653 = vector.shape_cast %652 : vector<1x8x96xf32> to vector<8x96xf32>
    %654 = vector.extract_strided_slice %588 {offsets = [9, 0, 0], sizes = [8, 8, 96], strides = [1, 1, 1]} : vector<18x8x96xf32> to vector<8x8x96xf32>
    %655 = vector.shape_cast %653 : vector<8x96xf32> to vector<1x8x96xf32>
    %656 = vector.broadcast %655 : vector<1x8x96xf32> to vector<8x8x96xf32>
    %657 = arith.mulf %654, %656 : vector<8x8x96xf32>
    %658 = arith.addf %651, %657 : vector<8x8x96xf32>
    %c117 = arith.constant 117 : index
    %c0_231 = arith.constant 0 : index
    %c0_232 = arith.constant 0 : index
    %659 = vector.load %arg4[%c117, %c0_231, %c0_232] : memref<121x8x96xf32, #tpu.memory_space<vmem>>, vector<1x8x96xf32>
    %660 = vector.shape_cast %659 : vector<1x8x96xf32> to vector<8x96xf32>
    %661 = vector.extract_strided_slice %588 {offsets = [10, 0, 0], sizes = [8, 8, 96], strides = [1, 1, 1]} : vector<18x8x96xf32> to vector<8x8x96xf32>
    %662 = vector.shape_cast %660 : vector<8x96xf32> to vector<1x8x96xf32>
    %663 = vector.broadcast %662 : vector<1x8x96xf32> to vector<8x8x96xf32>
    %664 = arith.mulf %661, %663 : vector<8x8x96xf32>
    %665 = arith.addf %658, %664 : vector<8x8x96xf32>
    %c0_233 = arith.constant 0 : index
    %c11_234 = arith.constant 11 : index
    %c0_235 = arith.constant 0 : index
    %666 = vector.load %arg9[%c0_233, %c11_234, %c0_235] : memref<18x24x96xf32, #tpu.memory_space<vmem>>, vector<18x8x96xf32>
    %c8_236 = arith.constant 8 : index
    %c0_237 = arith.constant 0 : index
    %c0_238 = arith.constant 0 : index
    %667 = vector.load %arg4[%c8_236, %c0_237, %c0_238] : memref<121x8x96xf32, #tpu.memory_space<vmem>>, vector<1x8x96xf32>
    %668 = vector.shape_cast %667 : vector<1x8x96xf32> to vector<8x96xf32>
    %669 = vector.extract_strided_slice %666 {offsets = [0, 0, 0], sizes = [8, 8, 96], strides = [1, 1, 1]} : vector<18x8x96xf32> to vector<8x8x96xf32>
    %670 = vector.shape_cast %668 : vector<8x96xf32> to vector<1x8x96xf32>
    %671 = vector.broadcast %670 : vector<1x8x96xf32> to vector<8x8x96xf32>
    %672 = arith.mulf %669, %671 : vector<8x8x96xf32>
    %673 = arith.addf %665, %672 : vector<8x8x96xf32>
    %c19 = arith.constant 19 : index
    %c0_239 = arith.constant 0 : index
    %c0_240 = arith.constant 0 : index
    %674 = vector.load %arg4[%c19, %c0_239, %c0_240] : memref<121x8x96xf32, #tpu.memory_space<vmem>>, vector<1x8x96xf32>
    %675 = vector.shape_cast %674 : vector<1x8x96xf32> to vector<8x96xf32>
    %676 = vector.extract_strided_slice %666 {offsets = [1, 0, 0], sizes = [8, 8, 96], strides = [1, 1, 1]} : vector<18x8x96xf32> to vector<8x8x96xf32>
    %677 = vector.shape_cast %675 : vector<8x96xf32> to vector<1x8x96xf32>
    %678 = vector.broadcast %677 : vector<1x8x96xf32> to vector<8x8x96xf32>
    %679 = arith.mulf %676, %678 : vector<8x8x96xf32>
    %680 = arith.addf %673, %679 : vector<8x8x96xf32>
    %c30 = arith.constant 30 : index
    %c0_241 = arith.constant 0 : index
    %c0_242 = arith.constant 0 : index
    %681 = vector.load %arg4[%c30, %c0_241, %c0_242] : memref<121x8x96xf32, #tpu.memory_space<vmem>>, vector<1x8x96xf32>
    %682 = vector.shape_cast %681 : vector<1x8x96xf32> to vector<8x96xf32>
    %683 = vector.extract_strided_slice %666 {offsets = [2, 0, 0], sizes = [8, 8, 96], strides = [1, 1, 1]} : vector<18x8x96xf32> to vector<8x8x96xf32>
    %684 = vector.shape_cast %682 : vector<8x96xf32> to vector<1x8x96xf32>
    %685 = vector.broadcast %684 : vector<1x8x96xf32> to vector<8x8x96xf32>
    %686 = arith.mulf %683, %685 : vector<8x8x96xf32>
    %687 = arith.addf %680, %686 : vector<8x8x96xf32>
    %c41 = arith.constant 41 : index
    %c0_243 = arith.constant 0 : index
    %c0_244 = arith.constant 0 : index
    %688 = vector.load %arg4[%c41, %c0_243, %c0_244] : memref<121x8x96xf32, #tpu.memory_space<vmem>>, vector<1x8x96xf32>
    %689 = vector.shape_cast %688 : vector<1x8x96xf32> to vector<8x96xf32>
    %690 = vector.extract_strided_slice %666 {offsets = [3, 0, 0], sizes = [8, 8, 96], strides = [1, 1, 1]} : vector<18x8x96xf32> to vector<8x8x96xf32>
    %691 = vector.shape_cast %689 : vector<8x96xf32> to vector<1x8x96xf32>
    %692 = vector.broadcast %691 : vector<1x8x96xf32> to vector<8x8x96xf32>
    %693 = arith.mulf %690, %692 : vector<8x8x96xf32>
    %694 = arith.addf %687, %693 : vector<8x8x96xf32>
    %c52 = arith.constant 52 : index
    %c0_245 = arith.constant 0 : index
    %c0_246 = arith.constant 0 : index
    %695 = vector.load %arg4[%c52, %c0_245, %c0_246] : memref<121x8x96xf32, #tpu.memory_space<vmem>>, vector<1x8x96xf32>
    %696 = vector.shape_cast %695 : vector<1x8x96xf32> to vector<8x96xf32>
    %697 = vector.extract_strided_slice %666 {offsets = [4, 0, 0], sizes = [8, 8, 96], strides = [1, 1, 1]} : vector<18x8x96xf32> to vector<8x8x96xf32>
    %698 = vector.shape_cast %696 : vector<8x96xf32> to vector<1x8x96xf32>
    %699 = vector.broadcast %698 : vector<1x8x96xf32> to vector<8x8x96xf32>
    %700 = arith.mulf %697, %699 : vector<8x8x96xf32>
    %701 = arith.addf %694, %700 : vector<8x8x96xf32>
    %c63 = arith.constant 63 : index
    %c0_247 = arith.constant 0 : index
    %c0_248 = arith.constant 0 : index
    %702 = vector.load %arg4[%c63, %c0_247, %c0_248] : memref<121x8x96xf32, #tpu.memory_space<vmem>>, vector<1x8x96xf32>
    %703 = vector.shape_cast %702 : vector<1x8x96xf32> to vector<8x96xf32>
    %704 = vector.extract_strided_slice %666 {offsets = [5, 0, 0], sizes = [8, 8, 96], strides = [1, 1, 1]} : vector<18x8x96xf32> to vector<8x8x96xf32>
    %705 = vector.shape_cast %703 : vector<8x96xf32> to vector<1x8x96xf32>
    %706 = vector.broadcast %705 : vector<1x8x96xf32> to vector<8x8x96xf32>
    %707 = arith.mulf %704, %706 : vector<8x8x96xf32>
    %708 = arith.addf %701, %707 : vector<8x8x96xf32>
    %c74 = arith.constant 74 : index
    %c0_249 = arith.constant 0 : index
    %c0_250 = arith.constant 0 : index
    %709 = vector.load %arg4[%c74, %c0_249, %c0_250] : memref<121x8x96xf32, #tpu.memory_space<vmem>>, vector<1x8x96xf32>
    %710 = vector.shape_cast %709 : vector<1x8x96xf32> to vector<8x96xf32>
    %711 = vector.extract_strided_slice %666 {offsets = [6, 0, 0], sizes = [8, 8, 96], strides = [1, 1, 1]} : vector<18x8x96xf32> to vector<8x8x96xf32>
    %712 = vector.shape_cast %710 : vector<8x96xf32> to vector<1x8x96xf32>
    %713 = vector.broadcast %712 : vector<1x8x96xf32> to vector<8x8x96xf32>
    %714 = arith.mulf %711, %713 : vector<8x8x96xf32>
    %715 = arith.addf %708, %714 : vector<8x8x96xf32>
    %c85 = arith.constant 85 : index
    %c0_251 = arith.constant 0 : index
    %c0_252 = arith.constant 0 : index
    %716 = vector.load %arg4[%c85, %c0_251, %c0_252] : memref<121x8x96xf32, #tpu.memory_space<vmem>>, vector<1x8x96xf32>
    %717 = vector.shape_cast %716 : vector<1x8x96xf32> to vector<8x96xf32>
    %718 = vector.extract_strided_slice %666 {offsets = [7, 0, 0], sizes = [8, 8, 96], strides = [1, 1, 1]} : vector<18x8x96xf32> to vector<8x8x96xf32>
    %719 = vector.shape_cast %717 : vector<8x96xf32> to vector<1x8x96xf32>
    %720 = vector.broadcast %719 : vector<1x8x96xf32> to vector<8x8x96xf32>
    %721 = arith.mulf %718, %720 : vector<8x8x96xf32>
    %722 = arith.addf %715, %721 : vector<8x8x96xf32>
    %c96 = arith.constant 96 : index
    %c0_253 = arith.constant 0 : index
    %c0_254 = arith.constant 0 : index
    %723 = vector.load %arg4[%c96, %c0_253, %c0_254] : memref<121x8x96xf32, #tpu.memory_space<vmem>>, vector<1x8x96xf32>
    %724 = vector.shape_cast %723 : vector<1x8x96xf32> to vector<8x96xf32>
    %725 = vector.extract_strided_slice %666 {offsets = [8, 0, 0], sizes = [8, 8, 96], strides = [1, 1, 1]} : vector<18x8x96xf32> to vector<8x8x96xf32>
    %726 = vector.shape_cast %724 : vector<8x96xf32> to vector<1x8x96xf32>
    %727 = vector.broadcast %726 : vector<1x8x96xf32> to vector<8x8x96xf32>
    %728 = arith.mulf %725, %727 : vector<8x8x96xf32>
    %729 = arith.addf %722, %728 : vector<8x8x96xf32>
    %c107 = arith.constant 107 : index
    %c0_255 = arith.constant 0 : index
    %c0_256 = arith.constant 0 : index
    %730 = vector.load %arg4[%c107, %c0_255, %c0_256] : memref<121x8x96xf32, #tpu.memory_space<vmem>>, vector<1x8x96xf32>
    %731 = vector.shape_cast %730 : vector<1x8x96xf32> to vector<8x96xf32>
    %732 = vector.extract_strided_slice %666 {offsets = [9, 0, 0], sizes = [8, 8, 96], strides = [1, 1, 1]} : vector<18x8x96xf32> to vector<8x8x96xf32>
    %733 = vector.shape_cast %731 : vector<8x96xf32> to vector<1x8x96xf32>
    %734 = vector.broadcast %733 : vector<1x8x96xf32> to vector<8x8x96xf32>
    %735 = arith.mulf %732, %734 : vector<8x8x96xf32>
    %736 = arith.addf %729, %735 : vector<8x8x96xf32>
    %c118 = arith.constant 118 : index
    %c0_257 = arith.constant 0 : index
    %c0_258 = arith.constant 0 : index
    %737 = vector.load %arg4[%c118, %c0_257, %c0_258] : memref<121x8x96xf32, #tpu.memory_space<vmem>>, vector<1x8x96xf32>
    %738 = vector.shape_cast %737 : vector<1x8x96xf32> to vector<8x96xf32>
    %739 = vector.extract_strided_slice %666 {offsets = [10, 0, 0], sizes = [8, 8, 96], strides = [1, 1, 1]} : vector<18x8x96xf32> to vector<8x8x96xf32>
    %740 = vector.shape_cast %738 : vector<8x96xf32> to vector<1x8x96xf32>
    %741 = vector.broadcast %740 : vector<1x8x96xf32> to vector<8x8x96xf32>
    %742 = arith.mulf %739, %741 : vector<8x8x96xf32>
    %743 = arith.addf %736, %742 : vector<8x8x96xf32>
    %c0_259 = arith.constant 0 : index
    %c12_260 = arith.constant 12 : index
    %c0_261 = arith.constant 0 : index
    %744 = vector.load %arg9[%c0_259, %c12_260, %c0_261] : memref<18x24x96xf32, #tpu.memory_space<vmem>>, vector<18x8x96xf32>
    %c9_262 = arith.constant 9 : index
    %c0_263 = arith.constant 0 : index
    %c0_264 = arith.constant 0 : index
    %745 = vector.load %arg4[%c9_262, %c0_263, %c0_264] : memref<121x8x96xf32, #tpu.memory_space<vmem>>, vector<1x8x96xf32>
    %746 = vector.shape_cast %745 : vector<1x8x96xf32> to vector<8x96xf32>
    %747 = vector.extract_strided_slice %744 {offsets = [0, 0, 0], sizes = [8, 8, 96], strides = [1, 1, 1]} : vector<18x8x96xf32> to vector<8x8x96xf32>
    %748 = vector.shape_cast %746 : vector<8x96xf32> to vector<1x8x96xf32>
    %749 = vector.broadcast %748 : vector<1x8x96xf32> to vector<8x8x96xf32>
    %750 = arith.mulf %747, %749 : vector<8x8x96xf32>
    %751 = arith.addf %743, %750 : vector<8x8x96xf32>
    %c20 = arith.constant 20 : index
    %c0_265 = arith.constant 0 : index
    %c0_266 = arith.constant 0 : index
    %752 = vector.load %arg4[%c20, %c0_265, %c0_266] : memref<121x8x96xf32, #tpu.memory_space<vmem>>, vector<1x8x96xf32>
    %753 = vector.shape_cast %752 : vector<1x8x96xf32> to vector<8x96xf32>
    %754 = vector.extract_strided_slice %744 {offsets = [1, 0, 0], sizes = [8, 8, 96], strides = [1, 1, 1]} : vector<18x8x96xf32> to vector<8x8x96xf32>
    %755 = vector.shape_cast %753 : vector<8x96xf32> to vector<1x8x96xf32>
    %756 = vector.broadcast %755 : vector<1x8x96xf32> to vector<8x8x96xf32>
    %757 = arith.mulf %754, %756 : vector<8x8x96xf32>
    %758 = arith.addf %751, %757 : vector<8x8x96xf32>
    %c31 = arith.constant 31 : index
    %c0_267 = arith.constant 0 : index
    %c0_268 = arith.constant 0 : index
    %759 = vector.load %arg4[%c31, %c0_267, %c0_268] : memref<121x8x96xf32, #tpu.memory_space<vmem>>, vector<1x8x96xf32>
    %760 = vector.shape_cast %759 : vector<1x8x96xf32> to vector<8x96xf32>
    %761 = vector.extract_strided_slice %744 {offsets = [2, 0, 0], sizes = [8, 8, 96], strides = [1, 1, 1]} : vector<18x8x96xf32> to vector<8x8x96xf32>
    %762 = vector.shape_cast %760 : vector<8x96xf32> to vector<1x8x96xf32>
    %763 = vector.broadcast %762 : vector<1x8x96xf32> to vector<8x8x96xf32>
    %764 = arith.mulf %761, %763 : vector<8x8x96xf32>
    %765 = arith.addf %758, %764 : vector<8x8x96xf32>
    %c42 = arith.constant 42 : index
    %c0_269 = arith.constant 0 : index
    %c0_270 = arith.constant 0 : index
    %766 = vector.load %arg4[%c42, %c0_269, %c0_270] : memref<121x8x96xf32, #tpu.memory_space<vmem>>, vector<1x8x96xf32>
    %767 = vector.shape_cast %766 : vector<1x8x96xf32> to vector<8x96xf32>
    %768 = vector.extract_strided_slice %744 {offsets = [3, 0, 0], sizes = [8, 8, 96], strides = [1, 1, 1]} : vector<18x8x96xf32> to vector<8x8x96xf32>
    %769 = vector.shape_cast %767 : vector<8x96xf32> to vector<1x8x96xf32>
    %770 = vector.broadcast %769 : vector<1x8x96xf32> to vector<8x8x96xf32>
    %771 = arith.mulf %768, %770 : vector<8x8x96xf32>
    %772 = arith.addf %765, %771 : vector<8x8x96xf32>
    %c53 = arith.constant 53 : index
    %c0_271 = arith.constant 0 : index
    %c0_272 = arith.constant 0 : index
    %773 = vector.load %arg4[%c53, %c0_271, %c0_272] : memref<121x8x96xf32, #tpu.memory_space<vmem>>, vector<1x8x96xf32>
    %774 = vector.shape_cast %773 : vector<1x8x96xf32> to vector<8x96xf32>
    %775 = vector.extract_strided_slice %744 {offsets = [4, 0, 0], sizes = [8, 8, 96], strides = [1, 1, 1]} : vector<18x8x96xf32> to vector<8x8x96xf32>
    %776 = vector.shape_cast %774 : vector<8x96xf32> to vector<1x8x96xf32>
    %777 = vector.broadcast %776 : vector<1x8x96xf32> to vector<8x8x96xf32>
    %778 = arith.mulf %775, %777 : vector<8x8x96xf32>
    %779 = arith.addf %772, %778 : vector<8x8x96xf32>
    %c64 = arith.constant 64 : index
    %c0_273 = arith.constant 0 : index
    %c0_274 = arith.constant 0 : index
    %780 = vector.load %arg4[%c64, %c0_273, %c0_274] : memref<121x8x96xf32, #tpu.memory_space<vmem>>, vector<1x8x96xf32>
    %781 = vector.shape_cast %780 : vector<1x8x96xf32> to vector<8x96xf32>
    %782 = vector.extract_strided_slice %744 {offsets = [5, 0, 0], sizes = [8, 8, 96], strides = [1, 1, 1]} : vector<18x8x96xf32> to vector<8x8x96xf32>
    %783 = vector.shape_cast %781 : vector<8x96xf32> to vector<1x8x96xf32>
    %784 = vector.broadcast %783 : vector<1x8x96xf32> to vector<8x8x96xf32>
    %785 = arith.mulf %782, %784 : vector<8x8x96xf32>
    %786 = arith.addf %779, %785 : vector<8x8x96xf32>
    %c75 = arith.constant 75 : index
    %c0_275 = arith.constant 0 : index
    %c0_276 = arith.constant 0 : index
    %787 = vector.load %arg4[%c75, %c0_275, %c0_276] : memref<121x8x96xf32, #tpu.memory_space<vmem>>, vector<1x8x96xf32>
    %788 = vector.shape_cast %787 : vector<1x8x96xf32> to vector<8x96xf32>
    %789 = vector.extract_strided_slice %744 {offsets = [6, 0, 0], sizes = [8, 8, 96], strides = [1, 1, 1]} : vector<18x8x96xf32> to vector<8x8x96xf32>
    %790 = vector.shape_cast %788 : vector<8x96xf32> to vector<1x8x96xf32>
    %791 = vector.broadcast %790 : vector<1x8x96xf32> to vector<8x8x96xf32>
    %792 = arith.mulf %789, %791 : vector<8x8x96xf32>
    %793 = arith.addf %786, %792 : vector<8x8x96xf32>
    %c86 = arith.constant 86 : index
    %c0_277 = arith.constant 0 : index
    %c0_278 = arith.constant 0 : index
    %794 = vector.load %arg4[%c86, %c0_277, %c0_278] : memref<121x8x96xf32, #tpu.memory_space<vmem>>, vector<1x8x96xf32>
    %795 = vector.shape_cast %794 : vector<1x8x96xf32> to vector<8x96xf32>
    %796 = vector.extract_strided_slice %744 {offsets = [7, 0, 0], sizes = [8, 8, 96], strides = [1, 1, 1]} : vector<18x8x96xf32> to vector<8x8x96xf32>
    %797 = vector.shape_cast %795 : vector<8x96xf32> to vector<1x8x96xf32>
    %798 = vector.broadcast %797 : vector<1x8x96xf32> to vector<8x8x96xf32>
    %799 = arith.mulf %796, %798 : vector<8x8x96xf32>
    %800 = arith.addf %793, %799 : vector<8x8x96xf32>
    %c97 = arith.constant 97 : index
    %c0_279 = arith.constant 0 : index
    %c0_280 = arith.constant 0 : index
    %801 = vector.load %arg4[%c97, %c0_279, %c0_280] : memref<121x8x96xf32, #tpu.memory_space<vmem>>, vector<1x8x96xf32>
    %802 = vector.shape_cast %801 : vector<1x8x96xf32> to vector<8x96xf32>
    %803 = vector.extract_strided_slice %744 {offsets = [8, 0, 0], sizes = [8, 8, 96], strides = [1, 1, 1]} : vector<18x8x96xf32> to vector<8x8x96xf32>
    %804 = vector.shape_cast %802 : vector<8x96xf32> to vector<1x8x96xf32>
    %805 = vector.broadcast %804 : vector<1x8x96xf32> to vector<8x8x96xf32>
    %806 = arith.mulf %803, %805 : vector<8x8x96xf32>
    %807 = arith.addf %800, %806 : vector<8x8x96xf32>
    %c108 = arith.constant 108 : index
    %c0_281 = arith.constant 0 : index
    %c0_282 = arith.constant 0 : index
    %808 = vector.load %arg4[%c108, %c0_281, %c0_282] : memref<121x8x96xf32, #tpu.memory_space<vmem>>, vector<1x8x96xf32>
    %809 = vector.shape_cast %808 : vector<1x8x96xf32> to vector<8x96xf32>
    %810 = vector.extract_strided_slice %744 {offsets = [9, 0, 0], sizes = [8, 8, 96], strides = [1, 1, 1]} : vector<18x8x96xf32> to vector<8x8x96xf32>
    %811 = vector.shape_cast %809 : vector<8x96xf32> to vector<1x8x96xf32>
    %812 = vector.broadcast %811 : vector<1x8x96xf32> to vector<8x8x96xf32>
    %813 = arith.mulf %810, %812 : vector<8x8x96xf32>
    %814 = arith.addf %807, %813 : vector<8x8x96xf32>
    %c119 = arith.constant 119 : index
    %c0_283 = arith.constant 0 : index
    %c0_284 = arith.constant 0 : index
    %815 = vector.load %arg4[%c119, %c0_283, %c0_284] : memref<121x8x96xf32, #tpu.memory_space<vmem>>, vector<1x8x96xf32>
    %816 = vector.shape_cast %815 : vector<1x8x96xf32> to vector<8x96xf32>
    %817 = vector.extract_strided_slice %744 {offsets = [10, 0, 0], sizes = [8, 8, 96], strides = [1, 1, 1]} : vector<18x8x96xf32> to vector<8x8x96xf32>
    %818 = vector.shape_cast %816 : vector<8x96xf32> to vector<1x8x96xf32>
    %819 = vector.broadcast %818 : vector<1x8x96xf32> to vector<8x8x96xf32>
    %820 = arith.mulf %817, %819 : vector<8x8x96xf32>
    %821 = arith.addf %814, %820 : vector<8x8x96xf32>
    %c0_285 = arith.constant 0 : index
    %c13_286 = arith.constant 13 : index
    %c0_287 = arith.constant 0 : index
    %822 = vector.load %arg9[%c0_285, %c13_286, %c0_287] : memref<18x24x96xf32, #tpu.memory_space<vmem>>, vector<18x8x96xf32>
    %c10_288 = arith.constant 10 : index
    %c0_289 = arith.constant 0 : index
    %c0_290 = arith.constant 0 : index
    %823 = vector.load %arg4[%c10_288, %c0_289, %c0_290] : memref<121x8x96xf32, #tpu.memory_space<vmem>>, vector<1x8x96xf32>
    %824 = vector.shape_cast %823 : vector<1x8x96xf32> to vector<8x96xf32>
    %825 = vector.extract_strided_slice %822 {offsets = [0, 0, 0], sizes = [8, 8, 96], strides = [1, 1, 1]} : vector<18x8x96xf32> to vector<8x8x96xf32>
    %826 = vector.shape_cast %824 : vector<8x96xf32> to vector<1x8x96xf32>
    %827 = vector.broadcast %826 : vector<1x8x96xf32> to vector<8x8x96xf32>
    %828 = arith.mulf %825, %827 : vector<8x8x96xf32>
    %829 = arith.addf %821, %828 : vector<8x8x96xf32>
    %c21 = arith.constant 21 : index
    %c0_291 = arith.constant 0 : index
    %c0_292 = arith.constant 0 : index
    %830 = vector.load %arg4[%c21, %c0_291, %c0_292] : memref<121x8x96xf32, #tpu.memory_space<vmem>>, vector<1x8x96xf32>
    %831 = vector.shape_cast %830 : vector<1x8x96xf32> to vector<8x96xf32>
    %832 = vector.extract_strided_slice %822 {offsets = [1, 0, 0], sizes = [8, 8, 96], strides = [1, 1, 1]} : vector<18x8x96xf32> to vector<8x8x96xf32>
    %833 = vector.shape_cast %831 : vector<8x96xf32> to vector<1x8x96xf32>
    %834 = vector.broadcast %833 : vector<1x8x96xf32> to vector<8x8x96xf32>
    %835 = arith.mulf %832, %834 : vector<8x8x96xf32>
    %836 = arith.addf %829, %835 : vector<8x8x96xf32>
    %c32 = arith.constant 32 : index
    %c0_293 = arith.constant 0 : index
    %c0_294 = arith.constant 0 : index
    %837 = vector.load %arg4[%c32, %c0_293, %c0_294] : memref<121x8x96xf32, #tpu.memory_space<vmem>>, vector<1x8x96xf32>
    %838 = vector.shape_cast %837 : vector<1x8x96xf32> to vector<8x96xf32>
    %839 = vector.extract_strided_slice %822 {offsets = [2, 0, 0], sizes = [8, 8, 96], strides = [1, 1, 1]} : vector<18x8x96xf32> to vector<8x8x96xf32>
    %840 = vector.shape_cast %838 : vector<8x96xf32> to vector<1x8x96xf32>
    %841 = vector.broadcast %840 : vector<1x8x96xf32> to vector<8x8x96xf32>
    %842 = arith.mulf %839, %841 : vector<8x8x96xf32>
    %843 = arith.addf %836, %842 : vector<8x8x96xf32>
    %c43 = arith.constant 43 : index
    %c0_295 = arith.constant 0 : index
    %c0_296 = arith.constant 0 : index
    %844 = vector.load %arg4[%c43, %c0_295, %c0_296] : memref<121x8x96xf32, #tpu.memory_space<vmem>>, vector<1x8x96xf32>
    %845 = vector.shape_cast %844 : vector<1x8x96xf32> to vector<8x96xf32>
    %846 = vector.extract_strided_slice %822 {offsets = [3, 0, 0], sizes = [8, 8, 96], strides = [1, 1, 1]} : vector<18x8x96xf32> to vector<8x8x96xf32>
    %847 = vector.shape_cast %845 : vector<8x96xf32> to vector<1x8x96xf32>
    %848 = vector.broadcast %847 : vector<1x8x96xf32> to vector<8x8x96xf32>
    %849 = arith.mulf %846, %848 : vector<8x8x96xf32>
    %850 = arith.addf %843, %849 : vector<8x8x96xf32>
    %c54 = arith.constant 54 : index
    %c0_297 = arith.constant 0 : index
    %c0_298 = arith.constant 0 : index
    %851 = vector.load %arg4[%c54, %c0_297, %c0_298] : memref<121x8x96xf32, #tpu.memory_space<vmem>>, vector<1x8x96xf32>
    %852 = vector.shape_cast %851 : vector<1x8x96xf32> to vector<8x96xf32>
    %853 = vector.extract_strided_slice %822 {offsets = [4, 0, 0], sizes = [8, 8, 96], strides = [1, 1, 1]} : vector<18x8x96xf32> to vector<8x8x96xf32>
    %854 = vector.shape_cast %852 : vector<8x96xf32> to vector<1x8x96xf32>
    %855 = vector.broadcast %854 : vector<1x8x96xf32> to vector<8x8x96xf32>
    %856 = arith.mulf %853, %855 : vector<8x8x96xf32>
    %857 = arith.addf %850, %856 : vector<8x8x96xf32>
    %c65 = arith.constant 65 : index
    %c0_299 = arith.constant 0 : index
    %c0_300 = arith.constant 0 : index
    %858 = vector.load %arg4[%c65, %c0_299, %c0_300] : memref<121x8x96xf32, #tpu.memory_space<vmem>>, vector<1x8x96xf32>
    %859 = vector.shape_cast %858 : vector<1x8x96xf32> to vector<8x96xf32>
    %860 = vector.extract_strided_slice %822 {offsets = [5, 0, 0], sizes = [8, 8, 96], strides = [1, 1, 1]} : vector<18x8x96xf32> to vector<8x8x96xf32>
    %861 = vector.shape_cast %859 : vector<8x96xf32> to vector<1x8x96xf32>
    %862 = vector.broadcast %861 : vector<1x8x96xf32> to vector<8x8x96xf32>
    %863 = arith.mulf %860, %862 : vector<8x8x96xf32>
    %864 = arith.addf %857, %863 : vector<8x8x96xf32>
    %c76 = arith.constant 76 : index
    %c0_301 = arith.constant 0 : index
    %c0_302 = arith.constant 0 : index
    %865 = vector.load %arg4[%c76, %c0_301, %c0_302] : memref<121x8x96xf32, #tpu.memory_space<vmem>>, vector<1x8x96xf32>
    %866 = vector.shape_cast %865 : vector<1x8x96xf32> to vector<8x96xf32>
    %867 = vector.extract_strided_slice %822 {offsets = [6, 0, 0], sizes = [8, 8, 96], strides = [1, 1, 1]} : vector<18x8x96xf32> to vector<8x8x96xf32>
    %868 = vector.shape_cast %866 : vector<8x96xf32> to vector<1x8x96xf32>
    %869 = vector.broadcast %868 : vector<1x8x96xf32> to vector<8x8x96xf32>
    %870 = arith.mulf %867, %869 : vector<8x8x96xf32>
    %871 = arith.addf %864, %870 : vector<8x8x96xf32>
    %c87 = arith.constant 87 : index
    %c0_303 = arith.constant 0 : index
    %c0_304 = arith.constant 0 : index
    %872 = vector.load %arg4[%c87, %c0_303, %c0_304] : memref<121x8x96xf32, #tpu.memory_space<vmem>>, vector<1x8x96xf32>
    %873 = vector.shape_cast %872 : vector<1x8x96xf32> to vector<8x96xf32>
    %874 = vector.extract_strided_slice %822 {offsets = [7, 0, 0], sizes = [8, 8, 96], strides = [1, 1, 1]} : vector<18x8x96xf32> to vector<8x8x96xf32>
    %875 = vector.shape_cast %873 : vector<8x96xf32> to vector<1x8x96xf32>
    %876 = vector.broadcast %875 : vector<1x8x96xf32> to vector<8x8x96xf32>
    %877 = arith.mulf %874, %876 : vector<8x8x96xf32>
    %878 = arith.addf %871, %877 : vector<8x8x96xf32>
    %c98 = arith.constant 98 : index
    %c0_305 = arith.constant 0 : index
    %c0_306 = arith.constant 0 : index
    %879 = vector.load %arg4[%c98, %c0_305, %c0_306] : memref<121x8x96xf32, #tpu.memory_space<vmem>>, vector<1x8x96xf32>
    %880 = vector.shape_cast %879 : vector<1x8x96xf32> to vector<8x96xf32>
    %881 = vector.extract_strided_slice %822 {offsets = [8, 0, 0], sizes = [8, 8, 96], strides = [1, 1, 1]} : vector<18x8x96xf32> to vector<8x8x96xf32>
    %882 = vector.shape_cast %880 : vector<8x96xf32> to vector<1x8x96xf32>
    %883 = vector.broadcast %882 : vector<1x8x96xf32> to vector<8x8x96xf32>
    %884 = arith.mulf %881, %883 : vector<8x8x96xf32>
    %885 = arith.addf %878, %884 : vector<8x8x96xf32>
    %c109 = arith.constant 109 : index
    %c0_307 = arith.constant 0 : index
    %c0_308 = arith.constant 0 : index
    %886 = vector.load %arg4[%c109, %c0_307, %c0_308] : memref<121x8x96xf32, #tpu.memory_space<vmem>>, vector<1x8x96xf32>
    %887 = vector.shape_cast %886 : vector<1x8x96xf32> to vector<8x96xf32>
    %888 = vector.extract_strided_slice %822 {offsets = [9, 0, 0], sizes = [8, 8, 96], strides = [1, 1, 1]} : vector<18x8x96xf32> to vector<8x8x96xf32>
    %889 = vector.shape_cast %887 : vector<8x96xf32> to vector<1x8x96xf32>
    %890 = vector.broadcast %889 : vector<1x8x96xf32> to vector<8x8x96xf32>
    %891 = arith.mulf %888, %890 : vector<8x8x96xf32>
    %892 = arith.addf %885, %891 : vector<8x8x96xf32>
    %c120 = arith.constant 120 : index
    %c0_309 = arith.constant 0 : index
    %c0_310 = arith.constant 0 : index
    %893 = vector.load %arg4[%c120, %c0_309, %c0_310] : memref<121x8x96xf32, #tpu.memory_space<vmem>>, vector<1x8x96xf32>
    %894 = vector.shape_cast %893 : vector<1x8x96xf32> to vector<8x96xf32>
    %895 = vector.extract_strided_slice %822 {offsets = [10, 0, 0], sizes = [8, 8, 96], strides = [1, 1, 1]} : vector<18x8x96xf32> to vector<8x8x96xf32>
    %896 = vector.shape_cast %894 : vector<8x96xf32> to vector<1x8x96xf32>
    %897 = vector.broadcast %896 : vector<1x8x96xf32> to vector<8x8x96xf32>
    %898 = arith.mulf %895, %897 : vector<8x8x96xf32>
    %899 = arith.addf %892, %898 : vector<8x8x96xf32>
    %900 = vector.extract_strided_slice %899 {offsets = [0, 0, 0], sizes = [1, 8, 96], strides = [1, 1, 1]} : vector<8x8x96xf32> to vector<1x8x96xf32>
    %901 = vector.shape_cast %900 : vector<1x8x96xf32> to vector<8x96xf32>
    %c0_311 = arith.constant 0 : index
    %c0_312 = arith.constant 0 : index
    %902 = vector.load %arg10[%c0_311, %c0_312] : memref<64x96xf32, #tpu.memory_space<vmem>>, vector<8x96xf32>
    tpu.vector_store %arg10[%c0_311, %c0_312], %901 {strides = array<i32>} : memref<64x96xf32, #tpu.memory_space<vmem>>, vector<8x96xf32>,
    %903 = vector.extract_strided_slice %899 {offsets = [1, 0, 0], sizes = [1, 8, 96], strides = [1, 1, 1]} : vector<8x8x96xf32> to vector<1x8x96xf32>
    %904 = vector.shape_cast %903 : vector<1x8x96xf32> to vector<8x96xf32>
    %c8_313 = arith.constant 8 : index
    %c0_314 = arith.constant 0 : index
    %905 = vector.load %arg10[%c8_313, %c0_314] : memref<64x96xf32, #tpu.memory_space<vmem>>, vector<8x96xf32>
    tpu.vector_store %arg10[%c8_313, %c0_314], %904 {strides = array<i32>} : memref<64x96xf32, #tpu.memory_space<vmem>>, vector<8x96xf32>,
    %906 = vector.extract_strided_slice %899 {offsets = [2, 0, 0], sizes = [1, 8, 96], strides = [1, 1, 1]} : vector<8x8x96xf32> to vector<1x8x96xf32>
    %907 = vector.shape_cast %906 : vector<1x8x96xf32> to vector<8x96xf32>
    %c16_315 = arith.constant 16 : index
    %c0_316 = arith.constant 0 : index
    %908 = vector.load %arg10[%c16_315, %c0_316] : memref<64x96xf32, #tpu.memory_space<vmem>>, vector<8x96xf32>
    tpu.vector_store %arg10[%c16_315, %c0_316], %907 {strides = array<i32>} : memref<64x96xf32, #tpu.memory_space<vmem>>, vector<8x96xf32>,
    %909 = vector.extract_strided_slice %899 {offsets = [3, 0, 0], sizes = [1, 8, 96], strides = [1, 1, 1]} : vector<8x8x96xf32> to vector<1x8x96xf32>
    %910 = vector.shape_cast %909 : vector<1x8x96xf32> to vector<8x96xf32>
    %c24_317 = arith.constant 24 : index
    %c0_318 = arith.constant 0 : index
    %911 = vector.load %arg10[%c24_317, %c0_318] : memref<64x96xf32, #tpu.memory_space<vmem>>, vector<8x96xf32>
    tpu.vector_store %arg10[%c24_317, %c0_318], %910 {strides = array<i32>} : memref<64x96xf32, #tpu.memory_space<vmem>>, vector<8x96xf32>,
    %912 = vector.extract_strided_slice %899 {offsets = [4, 0, 0], sizes = [1, 8, 96], strides = [1, 1, 1]} : vector<8x8x96xf32> to vector<1x8x96xf32>
    %913 = vector.shape_cast %912 : vector<1x8x96xf32> to vector<8x96xf32>
    %c32_319 = arith.constant 32 : index
    %c0_320 = arith.constant 0 : index
    %914 = vector.load %arg10[%c32_319, %c0_320] : memref<64x96xf32, #tpu.memory_space<vmem>>, vector<8x96xf32>
    tpu.vector_store %arg10[%c32_319, %c0_320], %913 {strides = array<i32>} : memref<64x96xf32, #tpu.memory_space<vmem>>, vector<8x96xf32>,
    %915 = vector.extract_strided_slice %899 {offsets = [5, 0, 0], sizes = [1, 8, 96], strides = [1, 1, 1]} : vector<8x8x96xf32> to vector<1x8x96xf32>
    %916 = vector.shape_cast %915 : vector<1x8x96xf32> to vector<8x96xf32>
    %c40_321 = arith.constant 40 : index
    %c0_322 = arith.constant 0 : index
    %917 = vector.load %arg10[%c40_321, %c0_322] : memref<64x96xf32, #tpu.memory_space<vmem>>, vector<8x96xf32>
    tpu.vector_store %arg10[%c40_321, %c0_322], %916 {strides = array<i32>} : memref<64x96xf32, #tpu.memory_space<vmem>>, vector<8x96xf32>,
    %918 = vector.extract_strided_slice %899 {offsets = [6, 0, 0], sizes = [1, 8, 96], strides = [1, 1, 1]} : vector<8x8x96xf32> to vector<1x8x96xf32>
    %919 = vector.shape_cast %918 : vector<1x8x96xf32> to vector<8x96xf32>
    %c48_323 = arith.constant 48 : index
    %c0_324 = arith.constant 0 : index
    %920 = vector.load %arg10[%c48_323, %c0_324] : memref<64x96xf32, #tpu.memory_space<vmem>>, vector<8x96xf32>
    tpu.vector_store %arg10[%c48_323, %c0_324], %919 {strides = array<i32>} : memref<64x96xf32, #tpu.memory_space<vmem>>, vector<8x96xf32>,
    %921 = vector.extract_strided_slice %899 {offsets = [7, 0, 0], sizes = [1, 8, 96], strides = [1, 1, 1]} : vector<8x8x96xf32> to vector<1x8x96xf32>
    %922 = vector.shape_cast %921 : vector<1x8x96xf32> to vector<8x96xf32>
    %c56_325 = arith.constant 56 : index
    %c0_326 = arith.constant 0 : index
    %923 = vector.load %arg10[%c56_325, %c0_326] : memref<64x96xf32, #tpu.memory_space<vmem>>, vector<8x96xf32>
    tpu.vector_store %arg10[%c56_325, %c0_326], %922 {strides = array<i32>} : memref<64x96xf32, #tpu.memory_space<vmem>>, vector<8x96xf32>,
    %c0_327 = arith.constant 0 : index
    %c0_328 = arith.constant 0 : index
    %924 = vector.load %arg10[%c0_327, %c0_328] : memref<64x96xf32, #tpu.memory_space<vmem>>, vector<64x96xf32>
    %c0_329 = arith.constant 0 : index
    %c0_330 = arith.constant 0 : index
    %925 = vector.load %arg5[%c0_329, %c0_330] : memref<1x96xf32, #tpu.memory_space<vmem>>, vector<1x96xf32>
    %926 = vector.broadcast %925 : vector<1x96xf32> to vector<64x96xf32>
    %927 = arith.addf %924, %926 : vector<64x96xf32>
    %c0_331 = arith.constant 0 : index
    %c0_332 = arith.constant 0 : index
    %928 = vector.load %arg6[%c0_331, %c0_332] : memref<32x32xf32, #tpu.memory_space<vmem>>, vector<32x32xf32>
    %cst_333 = arith.constant 0.000000e+00 : f32
    %929 = vector.broadcast %cst_333 : f32 to vector<64x32xf32>
    %930 = vector.extract_strided_slice %927 {offsets = [0, 0], sizes = [64, 4], strides = [1, 1]} : vector<64x96xf32> to vector<64x4xf32>
    %931 = vector.extract_strided_slice %927 {offsets = [0, 32], sizes = [64, 4], strides = [1, 1]} : vector<64x96xf32> to vector<64x4xf32>
    %932 = vector.extract_strided_slice %927 {offsets = [0, 64], sizes = [64, 4], strides = [1, 1]} : vector<64x96xf32> to vector<64x4xf32>
    %cst_334 = arith.constant dense<0.000000e+00> : vector<64x64xf32>
    %933 = tpu.matmul %930, %931, %cst_334 {dimension_numbers = #tpu.dot_dimension_numbers<[1], [1], [0], [0], [0, 0, 1, 0], [], []>} : vector<64x4xf32>, vector<64x4xf32>, vector<64x64xf32> -> vector<64x64xf32>
    %cst_335 = arith.constant 5.000000e-01 : f32
    %934 = vector.broadcast %cst_335 : f32 to vector<64x64xf32>
    %935 = arith.mulf %933, %934 : vector<64x64xf32>
    %cst_336 = arith.constant dense<0xFF800000> : vector<64xf32>
    %936 = vector.multi_reduction <maximumf>, %935, %cst_336 [1] : vector<64x64xf32> to vector<64xf32>
    %937 = vector.shape_cast %936 : vector<64xf32> to vector<64x1xf32>
    %938 = vector.broadcast %937 : vector<64x1xf32> to vector<64x64xf32>
    %939 = arith.subf %935, %938 : vector<64x64xf32>
    %940 = math.exp %939 : vector<64x64xf32>
    %cst_337 = arith.constant dense<0.000000e+00> : vector<64xf32>
    %941 = vector.multi_reduction <add>, %940, %cst_337 [1] : vector<64x64xf32> to vector<64xf32>
    %942 = vector.shape_cast %941 : vector<64xf32> to vector<64x1xf32>
    %943 = tpu.reciprocal %942 {approx = true} : vector<64x1xf32> -> vector<64x1xf32>
    %944 = arith.mulf %942, %943 : vector<64x1xf32>
    %cst_338 = arith.constant 2.000000e+00 : f32
    %945 = vector.broadcast %cst_338 : f32 to vector<64x1xf32>
    %946 = arith.subf %945, %944 : vector<64x1xf32>
    %947 = arith.mulf %943, %946 : vector<64x1xf32>
    %948 = vector.broadcast %947 : vector<64x1xf32> to vector<64x64xf32>
    %949 = arith.mulf %940, %948 : vector<64x64xf32>
    %cst_339 = arith.constant dense<0.000000e+00> : vector<64x4xf32>
    %950 = tpu.matmul %949, %932, %cst_339 {dimension_numbers = #tpu.dot_dimension_numbers<[1], [0], [0], [1], [0, 0, 1, 1], [], []>} : vector<64x64xf32>, vector<64x4xf32>, vector<64x4xf32> -> vector<64x4xf32>
    %951 = vector.extract_strided_slice %928 {offsets = [0, 0], sizes = [4, 32], strides = [1, 1]} : vector<32x32xf32> to vector<4x32xf32>
    %cst_340 = arith.constant dense<0.000000e+00> : vector<64x32xf32>
    %952 = tpu.matmul %950, %951, %cst_340 {dimension_numbers = #tpu.dot_dimension_numbers<[1], [0], [0], [1], [0, 0, 1, 1], [], []>} : vector<64x4xf32>, vector<4x32xf32>, vector<64x32xf32> -> vector<64x32xf32>
    %953 = arith.addf %929, %952 : vector<64x32xf32>
    %954 = vector.extract_strided_slice %927 {offsets = [0, 4], sizes = [64, 4], strides = [1, 1]} : vector<64x96xf32> to vector<64x4xf32>
    %955 = vector.extract_strided_slice %927 {offsets = [0, 36], sizes = [64, 4], strides = [1, 1]} : vector<64x96xf32> to vector<64x4xf32>
    %956 = vector.extract_strided_slice %927 {offsets = [0, 68], sizes = [64, 4], strides = [1, 1]} : vector<64x96xf32> to vector<64x4xf32>
    %cst_341 = arith.constant dense<0.000000e+00> : vector<64x64xf32>
    %957 = tpu.matmul %954, %955, %cst_341 {dimension_numbers = #tpu.dot_dimension_numbers<[1], [1], [0], [0], [0, 0, 1, 0], [], []>} : vector<64x4xf32>, vector<64x4xf32>, vector<64x64xf32> -> vector<64x64xf32>
    %cst_342 = arith.constant 5.000000e-01 : f32
    %958 = vector.broadcast %cst_342 : f32 to vector<64x64xf32>
    %959 = arith.mulf %957, %958 : vector<64x64xf32>
    %cst_343 = arith.constant dense<0xFF800000> : vector<64xf32>
    %960 = vector.multi_reduction <maximumf>, %959, %cst_343 [1] : vector<64x64xf32> to vector<64xf32>
    %961 = vector.shape_cast %960 : vector<64xf32> to vector<64x1xf32>
    %962 = vector.broadcast %961 : vector<64x1xf32> to vector<64x64xf32>
    %963 = arith.subf %959, %962 : vector<64x64xf32>
    %964 = math.exp %963 : vector<64x64xf32>
    %cst_344 = arith.constant dense<0.000000e+00> : vector<64xf32>
    %965 = vector.multi_reduction <add>, %964, %cst_344 [1] : vector<64x64xf32> to vector<64xf32>
    %966 = vector.shape_cast %965 : vector<64xf32> to vector<64x1xf32>
    %967 = tpu.reciprocal %966 {approx = true} : vector<64x1xf32> -> vector<64x1xf32>
    %968 = arith.mulf %966, %967 : vector<64x1xf32>
    %cst_345 = arith.constant 2.000000e+00 : f32
    %969 = vector.broadcast %cst_345 : f32 to vector<64x1xf32>
    %970 = arith.subf %969, %968 : vector<64x1xf32>
    %971 = arith.mulf %967, %970 : vector<64x1xf32>
    %972 = vector.broadcast %971 : vector<64x1xf32> to vector<64x64xf32>
    %973 = arith.mulf %964, %972 : vector<64x64xf32>
    %cst_346 = arith.constant dense<0.000000e+00> : vector<64x4xf32>
    %974 = tpu.matmul %973, %956, %cst_346 {dimension_numbers = #tpu.dot_dimension_numbers<[1], [0], [0], [1], [0, 0, 1, 1], [], []>} : vector<64x64xf32>, vector<64x4xf32>, vector<64x4xf32> -> vector<64x4xf32>
    %975 = vector.extract_strided_slice %928 {offsets = [4, 0], sizes = [4, 32], strides = [1, 1]} : vector<32x32xf32> to vector<4x32xf32>
    %cst_347 = arith.constant dense<0.000000e+00> : vector<64x32xf32>
    %976 = tpu.matmul %974, %975, %cst_347 {dimension_numbers = #tpu.dot_dimension_numbers<[1], [0], [0], [1], [0, 0, 1, 1], [], []>} : vector<64x4xf32>, vector<4x32xf32>, vector<64x32xf32> -> vector<64x32xf32>
    %977 = arith.addf %953, %976 : vector<64x32xf32>
    %978 = vector.extract_strided_slice %927 {offsets = [0, 8], sizes = [64, 4], strides = [1, 1]} : vector<64x96xf32> to vector<64x4xf32>
    %979 = vector.extract_strided_slice %927 {offsets = [0, 40], sizes = [64, 4], strides = [1, 1]} : vector<64x96xf32> to vector<64x4xf32>
    %980 = vector.extract_strided_slice %927 {offsets = [0, 72], sizes = [64, 4], strides = [1, 1]} : vector<64x96xf32> to vector<64x4xf32>
    %cst_348 = arith.constant dense<0.000000e+00> : vector<64x64xf32>
    %981 = tpu.matmul %978, %979, %cst_348 {dimension_numbers = #tpu.dot_dimension_numbers<[1], [1], [0], [0], [0, 0, 1, 0], [], []>} : vector<64x4xf32>, vector<64x4xf32>, vector<64x64xf32> -> vector<64x64xf32>
    %cst_349 = arith.constant 5.000000e-01 : f32
    %982 = vector.broadcast %cst_349 : f32 to vector<64x64xf32>
    %983 = arith.mulf %981, %982 : vector<64x64xf32>
    %cst_350 = arith.constant dense<0xFF800000> : vector<64xf32>
    %984 = vector.multi_reduction <maximumf>, %983, %cst_350 [1] : vector<64x64xf32> to vector<64xf32>
    %985 = vector.shape_cast %984 : vector<64xf32> to vector<64x1xf32>
    %986 = vector.broadcast %985 : vector<64x1xf32> to vector<64x64xf32>
    %987 = arith.subf %983, %986 : vector<64x64xf32>
    %988 = math.exp %987 : vector<64x64xf32>
    %cst_351 = arith.constant dense<0.000000e+00> : vector<64xf32>
    %989 = vector.multi_reduction <add>, %988, %cst_351 [1] : vector<64x64xf32> to vector<64xf32>
    %990 = vector.shape_cast %989 : vector<64xf32> to vector<64x1xf32>
    %991 = tpu.reciprocal %990 {approx = true} : vector<64x1xf32> -> vector<64x1xf32>
    %992 = arith.mulf %990, %991 : vector<64x1xf32>
    %cst_352 = arith.constant 2.000000e+00 : f32
    %993 = vector.broadcast %cst_352 : f32 to vector<64x1xf32>
    %994 = arith.subf %993, %992 : vector<64x1xf32>
    %995 = arith.mulf %991, %994 : vector<64x1xf32>
    %996 = vector.broadcast %995 : vector<64x1xf32> to vector<64x64xf32>
    %997 = arith.mulf %988, %996 : vector<64x64xf32>
    %cst_353 = arith.constant dense<0.000000e+00> : vector<64x4xf32>
    %998 = tpu.matmul %997, %980, %cst_353 {dimension_numbers = #tpu.dot_dimension_numbers<[1], [0], [0], [1], [0, 0, 1, 1], [], []>} : vector<64x64xf32>, vector<64x4xf32>, vector<64x4xf32> -> vector<64x4xf32>
    %999 = vector.extract_strided_slice %928 {offsets = [8, 0], sizes = [4, 32], strides = [1, 1]} : vector<32x32xf32> to vector<4x32xf32>
    %cst_354 = arith.constant dense<0.000000e+00> : vector<64x32xf32>
    %1000 = tpu.matmul %998, %999, %cst_354 {dimension_numbers = #tpu.dot_dimension_numbers<[1], [0], [0], [1], [0, 0, 1, 1], [], []>} : vector<64x4xf32>, vector<4x32xf32>, vector<64x32xf32> -> vector<64x32xf32>
    %1001 = arith.addf %977, %1000 : vector<64x32xf32>
    %1002 = vector.extract_strided_slice %927 {offsets = [0, 12], sizes = [64, 4], strides = [1, 1]} : vector<64x96xf32> to vector<64x4xf32>
    %1003 = vector.extract_strided_slice %927 {offsets = [0, 44], sizes = [64, 4], strides = [1, 1]} : vector<64x96xf32> to vector<64x4xf32>
    %1004 = vector.extract_strided_slice %927 {offsets = [0, 76], sizes = [64, 4], strides = [1, 1]} : vector<64x96xf32> to vector<64x4xf32>
    %cst_355 = arith.constant dense<0.000000e+00> : vector<64x64xf32>
    %1005 = tpu.matmul %1002, %1003, %cst_355 {dimension_numbers = #tpu.dot_dimension_numbers<[1], [1], [0], [0], [0, 0, 1, 0], [], []>} : vector<64x4xf32>, vector<64x4xf32>, vector<64x64xf32> -> vector<64x64xf32>
    %cst_356 = arith.constant 5.000000e-01 : f32
    %1006 = vector.broadcast %cst_356 : f32 to vector<64x64xf32>
    %1007 = arith.mulf %1005, %1006 : vector<64x64xf32>
    %cst_357 = arith.constant dense<0xFF800000> : vector<64xf32>
    %1008 = vector.multi_reduction <maximumf>, %1007, %cst_357 [1] : vector<64x64xf32> to vector<64xf32>
    %1009 = vector.shape_cast %1008 : vector<64xf32> to vector<64x1xf32>
    %1010 = vector.broadcast %1009 : vector<64x1xf32> to vector<64x64xf32>
    %1011 = arith.subf %1007, %1010 : vector<64x64xf32>
    %1012 = math.exp %1011 : vector<64x64xf32>
    %cst_358 = arith.constant dense<0.000000e+00> : vector<64xf32>
    %1013 = vector.multi_reduction <add>, %1012, %cst_358 [1] : vector<64x64xf32> to vector<64xf32>
    %1014 = vector.shape_cast %1013 : vector<64xf32> to vector<64x1xf32>
    %1015 = tpu.reciprocal %1014 {approx = true} : vector<64x1xf32> -> vector<64x1xf32>
    %1016 = arith.mulf %1014, %1015 : vector<64x1xf32>
    %cst_359 = arith.constant 2.000000e+00 : f32
    %1017 = vector.broadcast %cst_359 : f32 to vector<64x1xf32>
    %1018 = arith.subf %1017, %1016 : vector<64x1xf32>
    %1019 = arith.mulf %1015, %1018 : vector<64x1xf32>
    %1020 = vector.broadcast %1019 : vector<64x1xf32> to vector<64x64xf32>
    %1021 = arith.mulf %1012, %1020 : vector<64x64xf32>
    %cst_360 = arith.constant dense<0.000000e+00> : vector<64x4xf32>
    %1022 = tpu.matmul %1021, %1004, %cst_360 {dimension_numbers = #tpu.dot_dimension_numbers<[1], [0], [0], [1], [0, 0, 1, 1], [], []>} : vector<64x64xf32>, vector<64x4xf32>, vector<64x4xf32> -> vector<64x4xf32>
    %1023 = vector.extract_strided_slice %928 {offsets = [12, 0], sizes = [4, 32], strides = [1, 1]} : vector<32x32xf32> to vector<4x32xf32>
    %cst_361 = arith.constant dense<0.000000e+00> : vector<64x32xf32>
    %1024 = tpu.matmul %1022, %1023, %cst_361 {dimension_numbers = #tpu.dot_dimension_numbers<[1], [0], [0], [1], [0, 0, 1, 1], [], []>} : vector<64x4xf32>, vector<4x32xf32>, vector<64x32xf32> -> vector<64x32xf32>
    %1025 = arith.addf %1001, %1024 : vector<64x32xf32>
    %1026 = vector.extract_strided_slice %927 {offsets = [0, 16], sizes = [64, 4], strides = [1, 1]} : vector<64x96xf32> to vector<64x4xf32>
    %1027 = vector.extract_strided_slice %927 {offsets = [0, 48], sizes = [64, 4], strides = [1, 1]} : vector<64x96xf32> to vector<64x4xf32>
    %1028 = vector.extract_strided_slice %927 {offsets = [0, 80], sizes = [64, 4], strides = [1, 1]} : vector<64x96xf32> to vector<64x4xf32>
    %cst_362 = arith.constant dense<0.000000e+00> : vector<64x64xf32>
    %1029 = tpu.matmul %1026, %1027, %cst_362 {dimension_numbers = #tpu.dot_dimension_numbers<[1], [1], [0], [0], [0, 0, 1, 0], [], []>} : vector<64x4xf32>, vector<64x4xf32>, vector<64x64xf32> -> vector<64x64xf32>
    %cst_363 = arith.constant 5.000000e-01 : f32
    %1030 = vector.broadcast %cst_363 : f32 to vector<64x64xf32>
    %1031 = arith.mulf %1029, %1030 : vector<64x64xf32>
    %cst_364 = arith.constant dense<0xFF800000> : vector<64xf32>
    %1032 = vector.multi_reduction <maximumf>, %1031, %cst_364 [1] : vector<64x64xf32> to vector<64xf32>
    %1033 = vector.shape_cast %1032 : vector<64xf32> to vector<64x1xf32>
    %1034 = vector.broadcast %1033 : vector<64x1xf32> to vector<64x64xf32>
    %1035 = arith.subf %1031, %1034 : vector<64x64xf32>
    %1036 = math.exp %1035 : vector<64x64xf32>
    %cst_365 = arith.constant dense<0.000000e+00> : vector<64xf32>
    %1037 = vector.multi_reduction <add>, %1036, %cst_365 [1] : vector<64x64xf32> to vector<64xf32>
    %1038 = vector.shape_cast %1037 : vector<64xf32> to vector<64x1xf32>
    %1039 = tpu.reciprocal %1038 {approx = true} : vector<64x1xf32> -> vector<64x1xf32>
    %1040 = arith.mulf %1038, %1039 : vector<64x1xf32>
    %cst_366 = arith.constant 2.000000e+00 : f32
    %1041 = vector.broadcast %cst_366 : f32 to vector<64x1xf32>
    %1042 = arith.subf %1041, %1040 : vector<64x1xf32>
    %1043 = arith.mulf %1039, %1042 : vector<64x1xf32>
    %1044 = vector.broadcast %1043 : vector<64x1xf32> to vector<64x64xf32>
    %1045 = arith.mulf %1036, %1044 : vector<64x64xf32>
    %cst_367 = arith.constant dense<0.000000e+00> : vector<64x4xf32>
    %1046 = tpu.matmul %1045, %1028, %cst_367 {dimension_numbers = #tpu.dot_dimension_numbers<[1], [0], [0], [1], [0, 0, 1, 1], [], []>} : vector<64x64xf32>, vector<64x4xf32>, vector<64x4xf32> -> vector<64x4xf32>
    %1047 = vector.extract_strided_slice %928 {offsets = [16, 0], sizes = [4, 32], strides = [1, 1]} : vector<32x32xf32> to vector<4x32xf32>
    %cst_368 = arith.constant dense<0.000000e+00> : vector<64x32xf32>
    %1048 = tpu.matmul %1046, %1047, %cst_368 {dimension_numbers = #tpu.dot_dimension_numbers<[1], [0], [0], [1], [0, 0, 1, 1], [], []>} : vector<64x4xf32>, vector<4x32xf32>, vector<64x32xf32> -> vector<64x32xf32>
    %1049 = arith.addf %1025, %1048 : vector<64x32xf32>
    %1050 = vector.extract_strided_slice %927 {offsets = [0, 20], sizes = [64, 4], strides = [1, 1]} : vector<64x96xf32> to vector<64x4xf32>
    %1051 = vector.extract_strided_slice %927 {offsets = [0, 52], sizes = [64, 4], strides = [1, 1]} : vector<64x96xf32> to vector<64x4xf32>
    %1052 = vector.extract_strided_slice %927 {offsets = [0, 84], sizes = [64, 4], strides = [1, 1]} : vector<64x96xf32> to vector<64x4xf32>
    %cst_369 = arith.constant dense<0.000000e+00> : vector<64x64xf32>
    %1053 = tpu.matmul %1050, %1051, %cst_369 {dimension_numbers = #tpu.dot_dimension_numbers<[1], [1], [0], [0], [0, 0, 1, 0], [], []>} : vector<64x4xf32>, vector<64x4xf32>, vector<64x64xf32> -> vector<64x64xf32>
    %cst_370 = arith.constant 5.000000e-01 : f32
    %1054 = vector.broadcast %cst_370 : f32 to vector<64x64xf32>
    %1055 = arith.mulf %1053, %1054 : vector<64x64xf32>
    %cst_371 = arith.constant dense<0xFF800000> : vector<64xf32>
    %1056 = vector.multi_reduction <maximumf>, %1055, %cst_371 [1] : vector<64x64xf32> to vector<64xf32>
    %1057 = vector.shape_cast %1056 : vector<64xf32> to vector<64x1xf32>
    %1058 = vector.broadcast %1057 : vector<64x1xf32> to vector<64x64xf32>
    %1059 = arith.subf %1055, %1058 : vector<64x64xf32>
    %1060 = math.exp %1059 : vector<64x64xf32>
    %cst_372 = arith.constant dense<0.000000e+00> : vector<64xf32>
    %1061 = vector.multi_reduction <add>, %1060, %cst_372 [1] : vector<64x64xf32> to vector<64xf32>
    %1062 = vector.shape_cast %1061 : vector<64xf32> to vector<64x1xf32>
    %1063 = tpu.reciprocal %1062 {approx = true} : vector<64x1xf32> -> vector<64x1xf32>
    %1064 = arith.mulf %1062, %1063 : vector<64x1xf32>
    %cst_373 = arith.constant 2.000000e+00 : f32
    %1065 = vector.broadcast %cst_373 : f32 to vector<64x1xf32>
    %1066 = arith.subf %1065, %1064 : vector<64x1xf32>
    %1067 = arith.mulf %1063, %1066 : vector<64x1xf32>
    %1068 = vector.broadcast %1067 : vector<64x1xf32> to vector<64x64xf32>
    %1069 = arith.mulf %1060, %1068 : vector<64x64xf32>
    %cst_374 = arith.constant dense<0.000000e+00> : vector<64x4xf32>
    %1070 = tpu.matmul %1069, %1052, %cst_374 {dimension_numbers = #tpu.dot_dimension_numbers<[1], [0], [0], [1], [0, 0, 1, 1], [], []>} : vector<64x64xf32>, vector<64x4xf32>, vector<64x4xf32> -> vector<64x4xf32>
    %1071 = vector.extract_strided_slice %928 {offsets = [20, 0], sizes = [4, 32], strides = [1, 1]} : vector<32x32xf32> to vector<4x32xf32>
    %cst_375 = arith.constant dense<0.000000e+00> : vector<64x32xf32>
    %1072 = tpu.matmul %1070, %1071, %cst_375 {dimension_numbers = #tpu.dot_dimension_numbers<[1], [0], [0], [1], [0, 0, 1, 1], [], []>} : vector<64x4xf32>, vector<4x32xf32>, vector<64x32xf32> -> vector<64x32xf32>
    %1073 = arith.addf %1049, %1072 : vector<64x32xf32>
    %1074 = vector.extract_strided_slice %927 {offsets = [0, 24], sizes = [64, 4], strides = [1, 1]} : vector<64x96xf32> to vector<64x4xf32>
    %1075 = vector.extract_strided_slice %927 {offsets = [0, 56], sizes = [64, 4], strides = [1, 1]} : vector<64x96xf32> to vector<64x4xf32>
    %1076 = vector.extract_strided_slice %927 {offsets = [0, 88], sizes = [64, 4], strides = [1, 1]} : vector<64x96xf32> to vector<64x4xf32>
    %cst_376 = arith.constant dense<0.000000e+00> : vector<64x64xf32>
    %1077 = tpu.matmul %1074, %1075, %cst_376 {dimension_numbers = #tpu.dot_dimension_numbers<[1], [1], [0], [0], [0, 0, 1, 0], [], []>} : vector<64x4xf32>, vector<64x4xf32>, vector<64x64xf32> -> vector<64x64xf32>
    %cst_377 = arith.constant 5.000000e-01 : f32
    %1078 = vector.broadcast %cst_377 : f32 to vector<64x64xf32>
    %1079 = arith.mulf %1077, %1078 : vector<64x64xf32>
    %cst_378 = arith.constant dense<0xFF800000> : vector<64xf32>
    %1080 = vector.multi_reduction <maximumf>, %1079, %cst_378 [1] : vector<64x64xf32> to vector<64xf32>
    %1081 = vector.shape_cast %1080 : vector<64xf32> to vector<64x1xf32>
    %1082 = vector.broadcast %1081 : vector<64x1xf32> to vector<64x64xf32>
    %1083 = arith.subf %1079, %1082 : vector<64x64xf32>
    %1084 = math.exp %1083 : vector<64x64xf32>
    %cst_379 = arith.constant dense<0.000000e+00> : vector<64xf32>
    %1085 = vector.multi_reduction <add>, %1084, %cst_379 [1] : vector<64x64xf32> to vector<64xf32>
    %1086 = vector.shape_cast %1085 : vector<64xf32> to vector<64x1xf32>
    %1087 = tpu.reciprocal %1086 {approx = true} : vector<64x1xf32> -> vector<64x1xf32>
    %1088 = arith.mulf %1086, %1087 : vector<64x1xf32>
    %cst_380 = arith.constant 2.000000e+00 : f32
    %1089 = vector.broadcast %cst_380 : f32 to vector<64x1xf32>
    %1090 = arith.subf %1089, %1088 : vector<64x1xf32>
    %1091 = arith.mulf %1087, %1090 : vector<64x1xf32>
    %1092 = vector.broadcast %1091 : vector<64x1xf32> to vector<64x64xf32>
    %1093 = arith.mulf %1084, %1092 : vector<64x64xf32>
    %cst_381 = arith.constant dense<0.000000e+00> : vector<64x4xf32>
    %1094 = tpu.matmul %1093, %1076, %cst_381 {dimension_numbers = #tpu.dot_dimension_numbers<[1], [0], [0], [1], [0, 0, 1, 1], [], []>} : vector<64x64xf32>, vector<64x4xf32>, vector<64x4xf32> -> vector<64x4xf32>
    %1095 = vector.extract_strided_slice %928 {offsets = [24, 0], sizes = [4, 32], strides = [1, 1]} : vector<32x32xf32> to vector<4x32xf32>
    %cst_382 = arith.constant dense<0.000000e+00> : vector<64x32xf32>
    %1096 = tpu.matmul %1094, %1095, %cst_382 {dimension_numbers = #tpu.dot_dimension_numbers<[1], [0], [0], [1], [0, 0, 1, 1], [], []>} : vector<64x4xf32>, vector<4x32xf32>, vector<64x32xf32> -> vector<64x32xf32>
    %1097 = arith.addf %1073, %1096 : vector<64x32xf32>
    %1098 = vector.extract_strided_slice %927 {offsets = [0, 28], sizes = [64, 4], strides = [1, 1]} : vector<64x96xf32> to vector<64x4xf32>
    %1099 = vector.extract_strided_slice %927 {offsets = [0, 60], sizes = [64, 4], strides = [1, 1]} : vector<64x96xf32> to vector<64x4xf32>
    %1100 = vector.extract_strided_slice %927 {offsets = [0, 92], sizes = [64, 4], strides = [1, 1]} : vector<64x96xf32> to vector<64x4xf32>
    %cst_383 = arith.constant dense<0.000000e+00> : vector<64x64xf32>
    %1101 = tpu.matmul %1098, %1099, %cst_383 {dimension_numbers = #tpu.dot_dimension_numbers<[1], [1], [0], [0], [0, 0, 1, 0], [], []>} : vector<64x4xf32>, vector<64x4xf32>, vector<64x64xf32> -> vector<64x64xf32>
    %cst_384 = arith.constant 5.000000e-01 : f32
    %1102 = vector.broadcast %cst_384 : f32 to vector<64x64xf32>
    %1103 = arith.mulf %1101, %1102 : vector<64x64xf32>
    %cst_385 = arith.constant dense<0xFF800000> : vector<64xf32>
    %1104 = vector.multi_reduction <maximumf>, %1103, %cst_385 [1] : vector<64x64xf32> to vector<64xf32>
    %1105 = vector.shape_cast %1104 : vector<64xf32> to vector<64x1xf32>
    %1106 = vector.broadcast %1105 : vector<64x1xf32> to vector<64x64xf32>
    %1107 = arith.subf %1103, %1106 : vector<64x64xf32>
    %1108 = math.exp %1107 : vector<64x64xf32>
    %cst_386 = arith.constant dense<0.000000e+00> : vector<64xf32>
    %1109 = vector.multi_reduction <add>, %1108, %cst_386 [1] : vector<64x64xf32> to vector<64xf32>
    %1110 = vector.shape_cast %1109 : vector<64xf32> to vector<64x1xf32>
    %1111 = tpu.reciprocal %1110 {approx = true} : vector<64x1xf32> -> vector<64x1xf32>
    %1112 = arith.mulf %1110, %1111 : vector<64x1xf32>
    %cst_387 = arith.constant 2.000000e+00 : f32
    %1113 = vector.broadcast %cst_387 : f32 to vector<64x1xf32>
    %1114 = arith.subf %1113, %1112 : vector<64x1xf32>
    %1115 = arith.mulf %1111, %1114 : vector<64x1xf32>
    %1116 = vector.broadcast %1115 : vector<64x1xf32> to vector<64x64xf32>
    %1117 = arith.mulf %1108, %1116 : vector<64x64xf32>
    %cst_388 = arith.constant dense<0.000000e+00> : vector<64x4xf32>
    %1118 = tpu.matmul %1117, %1100, %cst_388 {dimension_numbers = #tpu.dot_dimension_numbers<[1], [0], [0], [1], [0, 0, 1, 1], [], []>} : vector<64x64xf32>, vector<64x4xf32>, vector<64x4xf32> -> vector<64x4xf32>
    %1119 = vector.extract_strided_slice %928 {offsets = [28, 0], sizes = [4, 32], strides = [1, 1]} : vector<32x32xf32> to vector<4x32xf32>
    %cst_389 = arith.constant dense<0.000000e+00> : vector<64x32xf32>
    %1120 = tpu.matmul %1118, %1119, %cst_389 {dimension_numbers = #tpu.dot_dimension_numbers<[1], [0], [0], [1], [0, 0, 1, 1], [], []>} : vector<64x4xf32>, vector<4x32xf32>, vector<64x32xf32> -> vector<64x32xf32>
    %1121 = arith.addf %1097, %1120 : vector<64x32xf32>
    %c0_390 = arith.constant 0 : index
    %c0_391 = arith.constant 0 : index
    %1122 = vector.load %arg7[%c0_390, %c0_391] : memref<1x32xf32, #tpu.memory_space<vmem>>, vector<1x32xf32>
    %1123 = vector.broadcast %1122 : vector<1x32xf32> to vector<64x32xf32>
    %1124 = arith.addf %1121, %1123 : vector<64x32xf32>
    %cst_392 = arith.constant 0.000000e+00 : f32
    %1125 = vector.broadcast %cst_392 : f32 to vector<64x32xf32>
    %1126 = arith.maximumf %1124, %1125 : vector<64x32xf32>
    %1127 = arith.addf %1126, %1 : vector<64x32xf32>
    %c0_393 = arith.constant 0 : index
    %c0_394 = arith.constant 0 : index
    %c0_395 = arith.constant 0 : index
    %1128 = vector.load %arg8[%c0_393, %c0_394, %c0_395] : memref<1x64x32xf32, #tpu.memory_space<vmem>>, vector<1x64x32xf32>
    %1129 = vector.shape_cast %1128 : vector<1x64x32xf32> to vector<64x32xf32>
    %1130 = vector.shape_cast %1127 : vector<64x32xf32> to vector<1x64x32xf32>
    tpu.vector_store %arg8[%c0_393, %c0_394, %c0_395], %1130 {strides = array<i32>} : memref<1x64x32xf32, #tpu.memory_space<vmem>>, vector<1x64x32xf32>,
    return
  }
  func.func @transform_0(%arg0: i32) -> (i32, i32, i32) {
    %c0_i32 = arith.constant 0 : i32
    %c0_i32_0 = arith.constant 0 : i32
    %c0_i32_1 = arith.constant 0 : i32
    return %arg0, %c0_i32, %c0_i32_0 : i32, i32, i32
  }
  func.func @transform_1(%arg0: i32) -> (i32, i32) {
    %c0_i32 = arith.constant 0 : i32
    %c0_i32_0 = arith.constant 0 : i32
    %c0_i32_1 = arith.constant 0 : i32
    return %c0_i32, %c0_i32_0 : i32, i32
  }
  func.func @transform_2(%arg0: i32) -> (i32, i32) {
    %c0_i32 = arith.constant 0 : i32
    %c0_i32_0 = arith.constant 0 : i32
    %c0_i32_1 = arith.constant 0 : i32
    return %c0_i32, %c0_i32_0 : i32, i32
  }
  func.func @transform_3(%arg0: i32) -> (i32, i32, i32) {
    %c0_i32 = arith.constant 0 : i32
    %c0_i32_0 = arith.constant 0 : i32
    %c0_i32_1 = arith.constant 0 : i32
    %c0_i32_2 = arith.constant 0 : i32
    return %c0_i32, %c0_i32_0, %c0_i32_1 : i32, i32, i32
  }
  func.func @transform_4(%arg0: i32) -> (i32, i32) {
    %c0_i32 = arith.constant 0 : i32
    %c0_i32_0 = arith.constant 0 : i32
    %c0_i32_1 = arith.constant 0 : i32
    return %c0_i32, %c0_i32_0 : i32, i32
  }
  func.func @transform_5(%arg0: i32) -> (i32, i32) {
    %c0_i32 = arith.constant 0 : i32
    %c0_i32_0 = arith.constant 0 : i32
    %c0_i32_1 = arith.constant 0 : i32
    return %c0_i32, %c0_i32_0 : i32, i32
  }
  func.func @transform_6(%arg0: i32) -> (i32, i32) {
    %c0_i32 = arith.constant 0 : i32
    %c0_i32_0 = arith.constant 0 : i32
    %c0_i32_1 = arith.constant 0 : i32
    return %c0_i32, %c0_i32_0 : i32, i32
  }
  func.func @transform_7(%arg0: i32) -> (i32, i32, i32) {
    %c0_i32 = arith.constant 0 : i32
    %c0_i32_0 = arith.constant 0 : i32
    %c0_i32_1 = arith.constant 0 : i32
    return %arg0, %c0_i32, %c0_i32_0 : i32, i32, i32
  }
}

</mosaic_0001>

<llo_original>
// kernel: attention_forward.1
$region0: #{attention_forward.1}
  #allocation0 [shape = 'u32[]', space=smem, size = 0x4, offset = 0x4, fixed_abs, tag = 'smem constant byte address 0x4 - core index']
  #allocation1 [shape = 'u32[144,128]{1,0:T(1,128)}', space=vmem, size = 0x12000, scoped, tag = 'internal scratch']
  #allocation2 [shape = 'f32[18,24,96]{2,1,0:T(8,128)}', space=vmem, size = 0x36000, scoped, tag = 'scratch operand']
  #allocation3 [shape = 'f32[64,96]{1,0:T(8,128)}', space=vmem, size = 0x8000, scoped, tag = 'scratch operand']
  %s0 = inlined_call_operand.vmem [shape: f32[2,64,32], index: 0, kind: input, shape index: {}]
  %s1 = inlined_call_operand.vmem [shape: f32[32,96], index: 1, kind: input, shape index: {}]
  %s2 = inlined_call_operand.vmem [shape: f32[1,96], index: 2, kind: input, shape index: {}]
  %s3 = inlined_call_operand.vmem [shape: f32[121,8,96], index: 3, kind: input, shape index: {}]
  %s4 = inlined_call_operand.vmem [shape: f32[1,96], index: 4, kind: input, shape index: {}]
  %s5 = inlined_call_operand.vmem [shape: f32[32,32], index: 5, kind: input, shape index: {}]
  %s6 = inlined_call_operand.vmem [shape: f32[1,32], index: 6, kind: input, shape index: {}]
  %s7 = inlined_call_operand.hbm [shape: f32[2,64,32], index: 7, kind: output, shape index: {}]
  %s8 = sld [smem:[#allocation0]]
  $region61: #{attention_forward.1} parent=0
    _
  %s10 = ssub.s32 1, %s8
  %s11 = scalar_select 0, %s10, %s8
  $region1: #{attention_forward.1} parent=0
    #allocation4 [shape = 'u8[65536]{0}', space=vmem, size = 0x10000, scoped, tag = 'output window, operand 0']
    #allocation5 [shape = 's32[2]{0}', space=sflag, size = 0x8, scoped, tag = 'scoped memory for attention_forward.1']
    %12 = vsyncpa [#allocation5], 0
    %s13 = scalar_lea.sflag [#allocation5], 1
    %14 = vsyncpa %s13, 0
    loop: start=0, step=1, limit=4
    $region2: #{attention_forward.1} parent=1 // loop_pre_header
      _
    $region3: #{attention_forward.1} parent=1 // loop_header
      %s16 = sphi 0, %s20
      %p17 = scmp.ge.s32.totalorder %s16, 4
      %s26 = sphi 0, %s28
      %s29 = sphi 0, %s26
      %s30 = sphi 0, %s29
      %s46 = sphi 0, %s30
      %s50 = sphi 0, %s50
      %s52 = sphi 0, %s50
      %s53 = sphi 0, %s52
      %s67 = sphi 0, %s53
      %s71 = sphi 0, %s71
      %s73 = sphi 0, %s71
      %s74 = sphi 0, %s73
      %s88 = sphi 0, %s74
      %s92 = sphi 0, %s92
      %s94 = sphi 0, %s92
      %s95 = sphi 0, %s94
      %s109 = sphi 0, %s95
      %s113 = sphi 0, %s113
      %s115 = sphi 0, %s113
      %s116 = sphi 0, %s115
      %s130 = sphi 0, %s116
      %s134 = sphi 0, %s134
      %s136 = sphi 0, %s134
      %s137 = sphi 0, %s136
      %s151 = sphi 0, %s137
      %s155 = sphi 0, %s155
      %s157 = sphi 0, %s155
      %s158 = sphi 0, %s157
      %s172 = sphi 0, %s158
      %s178 = sphi 0, %s180
      %s181 = sphi 0, %s178
      %s182 = sphi 0, %s181
      %s198 = sphi 0, %s182
    $region4: #{attention_forward.1} parent=1 // loop_header_branch
      %19 = sbr.rel (%p17) target = $region8
    $region5: #{attention_forward.1} parent=1 // loop_body
      %s21 = ssub.s32 %s16, 1
      %s22 = ssub.s32 %s16, 2
      %s23 = sadd.s32 %s16, 1
      %s24 = ssub.s32 %s16, %s23
      %p25 = scmp.eq.s32.totalorder %s24, 0
      %s27 = sadd.s32 %s26, 1
      %s28 = scalar_select %p25, %s26, %s27
      %p31 = pneg %p25
      %p32 = scmp.eq.s32.totalorder %s16, 1
      %p33 = por %p31, %p32
      %p34 = scmp.ne.s32.totalorder %s26, %s29
      %p35 = scmp.eq.s32.totalorder %s16, 0
      %p36 = por %p34, %p35
      %p37 = scmp.ne.s32.totalorder %s26, %s29
      %p38 = scmp.eq.s32.totalorder %s21, 1
      %p39 = por %p37, %p38
      %p40 = scmp.ne.s32.totalorder %s29, %s30
      %p41 = scmp.eq.s32.totalorder %s21, 0
      %p42 = por %p40, %p41
      %p43 = scmp.ne.s32.totalorder %s29, %s30
      %p44 = scmp.eq.s32.totalorder %s22, 1
      %p45 = por %p43, %p44
      %p47 = scmp.ne.s32.totalorder %s30, %s46
      %p48 = scmp.eq.s32.totalorder %s22, 0
      %p49 = por %p47, %p48
      %s51 = sadd.s32 %s50, 1
      %p54 = scmp.eq.s32.totalorder %s16, 1
      %p55 = scmp.ne.s32.totalorder %s50, %s52
      %p56 = scmp.eq.s32.totalorder %s16, 0
      %p57 = por %p55, %p56
      %p58 = scmp.ne.s32.totalorder %s50, %s52
      %p59 = scmp.eq.s32.totalorder %s21, 1
      %p60 = por %p58, %p59
      %p61 = scmp.ne.s32.totalorder %s52, %s53
      %p62 = scmp.eq.s32.totalorder %s21, 0
      %p63 = por %p61, %p62
      %p64 = scmp.ne.s32.totalorder %s52, %s53
      %p65 = scmp.eq.s32.totalorder %s22, 1
      %p66 = por %p64, %p65
      %p68 = scmp.ne.s32.totalorder %s53, %s67
      %p69 = scmp.eq.s32.totalorder %s22, 0
      %p70 = por %p68, %p69
      %s72 = sadd.s32 %s71, 1
      %p75 = scmp.eq.s32.totalorder %s16, 1
      %p76 = scmp.ne.s32.totalorder %s71, %s73
      %p77 = scmp.eq.s32.totalorder %s16, 0
      %p78 = por %p76, %p77
      %p79 = scmp.ne.s32.totalorder %s71, %s73
      %p80 = scmp.eq.s32.totalorder %s21, 1
      %p81 = por %p79, %p80
      %p82 = scmp.ne.s32.totalorder %s73, %s74
      %p83 = scmp.eq.s32.totalorder %s21, 0
      %p84 = por %p82, %p83
      %p85 = scmp.ne.s32.totalorder %s73, %s74
      %p86 = scmp.eq.s32.totalorder %s22, 1
      %p87 = por %p85, %p86
      %p89 = scmp.ne.s32.totalorder %s74, %s88
      %p90 = scmp.eq.s32.totalorder %s22, 0
      %p91 = por %p89, %p90
      %s93 = sadd.s32 %s92, 1
      %p96 = scmp.eq.s32.totalorder %s16, 1
      %p97 = scmp.ne.s32.totalorder %s92, %s94
      %p98 = scmp.eq.s32.totalorder %s16, 0
      %p99 = por %p97, %p98
      %p100 = scmp.ne.s32.totalorder %s92, %s94
      %p101 = scmp.eq.s32.totalorder %s21, 1
      %p102 = por %p100, %p101
      %p103 = scmp.ne.s32.totalorder %s94, %s95
      %p104 = scmp.eq.s32.totalorder %s21, 0
      %p105 = por %p103, %p104
      %p106 = scmp.ne.s32.totalorder %s94, %s95
      %p107 = scmp.eq.s32.totalorder %s22, 1
      %p108 = por %p106, %p107
      %p110 = scmp.ne.s32.totalorder %s95, %s109
      %p111 = scmp.eq.s32.totalorder %s22, 0
      %p112 = por %p110, %p111
      %s114 = sadd.s32 %s113, 1
      %p117 = scmp.eq.s32.totalorder %s16, 1
      %p118 = scmp.ne.s32.totalorder %s113, %s115
      %p119 = scmp.eq.s32.totalorder %s16, 0
      %p120 = por %p118, %p119
      %p121 = scmp.ne.s32.totalorder %s113, %s115
      %p122 = scmp.eq.s32.totalorder %s21, 1
      %p123 = por %p121, %p122
      %p124 = scmp.ne.s32.totalorder %s115, %s116
      %p125 = scmp.eq.s32.totalorder %s21, 0
      %p126 = por %p124, %p125
      %p127 = scmp.ne.s32.totalorder %s115, %s116
      %p128 = scmp.eq.s32.totalorder %s22, 1
      %p129 = por %p127, %p128
      %p131 = scmp.ne.s32.totalorder %s116, %s130
      %p132 = scmp.eq.s32.totalorder %s22, 0
      %p133 = por %p131, %p132
      %s135 = sadd.s32 %s134, 1
      %p138 = scmp.eq.s32.totalorder %s16, 1
      %p139 = scmp.ne.s32.totalorder %s134, %s136
      %p140 = scmp.eq.s32.totalorder %s16, 0
      %p141 = por %p139, %p140
      %p142 = scmp.ne.s32.totalorder %s134, %s136
      %p143 = scmp.eq.s32.totalorder %s21, 1
      %p144 = por %p142, %p143
      %p145 = scmp.ne.s32.totalorder %s136, %s137
      %p146 = scmp.eq.s32.totalorder %s21, 0
      %p147 = por %p145, %p146
      %p148 = scmp.ne.s32.totalorder %s136, %s137
      %p149 = scmp.eq.s32.totalorder %s22, 1
      %p150 = por %p148, %p149
      %p152 = scmp.ne.s32.totalorder %s137, %s151
      %p153 = scmp.eq.s32.totalorder %s22, 0
      %p154 = por %p152, %p153
      %s156 = sadd.s32 %s155, 1
      %p159 = scmp.eq.s32.totalorder %s16, 1
      %p160 = scmp.ne.s32.totalorder %s155, %s157
      %p161 = scmp.eq.s32.totalorder %s16, 0
      %p162 = por %p160, %p161
      %p163 = scmp.ne.s32.totalorder %s155, %s157
      %p164 = scmp.eq.s32.totalorder %s21, 1
      %p165 = por %p163, %p164
      %p166 = scmp.ne.s32.totalorder %s157, %s158
      %p167 = scmp.eq.s32.totalorder %s21, 0
      %p168 = por %p166, %p167
      %p169 = scmp.ne.s32.totalorder %s157, %s158
      %p170 = scmp.eq.s32.totalorder %s22, 1
      %p171 = por %p169, %p170
      %p173 = scmp.ne.s32.totalorder %s158, %s172
      %p174 = scmp.eq.s32.totalorder %s22, 0
      %p175 = por %p173, %p174
      %s176 = ssub.s32 %s16, %s23
      %p177 = scmp.eq.s32.totalorder %s176, 0
      %s179 = sadd.s32 %s178, 1
      %s180 = scalar_select %p177, %s178, %s179
      %p183 = pneg %p177
      %p184 = scmp.eq.s32.totalorder %s16, 1
      %p185 = por %p183, %p184
      %p186 = scmp.ne.s32.totalorder %s178, %s181
      %p187 = scmp.eq.s32.totalorder %s16, 0
      %p188 = por %p186, %p187
      %p189 = scmp.ne.s32.totalorder %s178, %s181
      %p190 = scmp.eq.s32.totalorder %s21, 1
      %p191 = por %p189, %p190
      %p192 = scmp.ne.s32.totalorder %s181, %s182
      %p193 = scmp.eq.s32.totalorder %s21, 0
      %p194 = por %p192, %p193
      %p195 = scmp.ne.s32.totalorder %s181, %s182
      %p196 = scmp.eq.s32.totalorder %s22, 1
      %p197 = por %p195, %p196
      %p199 = scmp.ne.s32.totalorder %s182, %s198
      %p200 = scmp.eq.s32.totalorder %s22, 0
      %p201 = por %p199, %p200
      %p202 = scmp.le.s32.totalorder 1, %s16
      %p203 = scmp.lt.s32.totalorder %s16, 3
      %p204 = pnand %p202, %p203
      %p205 = pneg %p204
      // Predicated region
      $region9: #{attention_forward.1} parent=5 // pred_check
        _
      $region10: #{attention_forward.1} parent=5 // pred_check_branch
        %207 = sbr.rel (%p204) target = $region12
      $region11: #{attention_forward.1} parent=5 // pred_region
        %s208 = ssub.s32 %s16, 1
        // Predicated region
        $region13: #{attention_forward.1} parent=11 // pred_check
          %p209 = pneg %p63
        $region14: #{attention_forward.1} parent=11 // pred_check_branch
          %211 = sbr.rel (%p209) target = $region16
        $region15: #{attention_forward.1} parent=11 // pred_region
          _
        $region16: #{attention_forward.1} parent=11 // pred_fallthru
          _
        // Predicated region
        $region17: #{attention_forward.1} parent=11 // pred_check
          %p212 = pneg %p84
        $region18: #{attention_forward.1} parent=11 // pred_check_branch
          %214 = sbr.rel (%p212) target = $region20
        $region19: #{attention_forward.1} parent=11 // pred_region
          _
        $region20: #{attention_forward.1} parent=11 // pred_fallthru
          _
        // Predicated region
        $region21: #{attention_forward.1} parent=11 // pred_check
          %p215 = pneg %p105
        $region22: #{attention_forward.1} parent=11 // pred_check_branch
          %217 = sbr.rel (%p215) target = $region24
        $region23: #{attention_forward.1} parent=11 // pred_region
          _
        $region24: #{attention_forward.1} parent=11 // pred_fallthru
          _
        // Predicated region
        $region25: #{attention_forward.1} parent=11 // pred_check
          %p218 = pneg %p126
        $region26: #{attention_forward.1} parent=11 // pred_check_branch
          %220 = sbr.rel (%p218) target = $region28
        $region27: #{attention_forward.1} parent=11 // pred_region
          _
        $region28: #{attention_forward.1} parent=11 // pred_fallthru
          _
        // Predicated region
        $region29: #{attention_forward.1} parent=11 // pred_check
          %p221 = pneg %p147
        $region30: #{attention_forward.1} parent=11 // pred_check_branch
          %223 = sbr.rel (%p221) target = $region32
        $region31: #{attention_forward.1} parent=11 // pred_region
          _
        $region32: #{attention_forward.1} parent=11 // pred_fallthru
          _
        // Predicated region
        $region33: #{attention_forward.1} parent=11 // pred_check
          %p224 = pneg %p168
        $region34: #{attention_forward.1} parent=11 // pred_check_branch
          %226 = sbr.rel (%p224) target = $region36
        $region35: #{attention_forward.1} parent=11 // pred_region
          _
        $region36: #{attention_forward.1} parent=11 // pred_fallthru
          _
      $region12: #{attention_forward.1} parent=5 // pred_fallthru
        _
      %p227 = scmp.lt.s32.totalorder %s16, 2
      // Predicated region
      $region37: #{attention_forward.1} parent=5 // pred_check
        %p228 = pneg %p227
      $region38: #{attention_forward.1} parent=5 // pred_check_branch
        %230 = sbr.rel (%p228) target = $region40
      $region39: #{attention_forward.1} parent=5 // pred_region
        // Predicated region
        $region41: #{attention_forward.1} parent=39 // pred_check
          %p231 = pneg %p36
        $region42: #{attention_forward.1} parent=39 // pred_check_branch
          %233 = sbr.rel (%p231) target = $region44
        $region43: #{attention_forward.1} parent=39 // pred_region
          %p234 = scmp.lt.s32.totalorder %s16, 1
          %s235 = scalar_select %p234, %s16, 1
          %s236 = smul.addr %s235, 8
          %s237 = smul.addr %s236, 8
          %s238 = scalar_lea.vmem %s0, %s237
        $region44: #{attention_forward.1} parent=39 // pred_fallthru
          _
      $region40: #{attention_forward.1} parent=5 // pred_fallthru
        _
      %p239 = scmp.le.s32.totalorder 1, %s16
      %p240 = scmp.lt.s32.totalorder %s16, 3
      %p241 = pnand %p239, %p240
      %p242 = pneg %p241
      // Predicated region
      $region45: #{attention_forward.1} parent=5 // pred_check
        _
      $region46: #{attention_forward.1} parent=5 // pred_check_branch
        %244 = sbr.rel (%p241) target = $region48
      $region47: #{attention_forward.1} parent=5 // pred_region
        %s245 = ssub.s32 %s16, 1
        %p246 = scmp.lt.s32.totalorder %s21, 1
        %s247 = scalar_select %p246, %s21, 1
        %s248 = smul.addr %s247, 8
        %s249 = smul.addr %s248, 8
        %s250 = scalar_lea.vmem %s0, %s249
        %p251 = pneg %p42
        %p252 = pneg %p39
        %p253 = pneg %p63
        %p254 = pneg %p60
        %p255 = pneg %p84
        %p256 = pneg %p81
        %p257 = pneg %p105
        %p258 = pneg %p102
        %p259 = pneg %p126
        %p260 = pneg %p123
        %p261 = pneg %p147
        %p262 = pneg %p144
        %p263 = pneg %p168
        %p264 = pneg %p165
        %p265 = pneg %p194
        %p266 = pneg %p191
        %s267 = sand.u32 %s181, 1
        %s268 = scalar_lea.sflag [#allocation5], %s267
        %s269 = sand.u32 %s181, 1
        %s270 = smul.addr %s269, 64
        %s271 = scalar_lea.vmem [#allocation4], %s270
        %p272 = scmp.lt.s32.totalorder %s21, 1
        %s273 = scalar_select %p272, %s21, 1
        %s274 = smul.addr %s273, 8
        %s275 = smul.addr %s274, 8
        %s276 = scalar_lea.vmem %s0, %s275
        %v277 = vld [vmem:[%s276] sm:$0xff]
        %v278 = vld [vmem:[%s276 + $0x8] sm:$0xff]
        %v279 = vld [vmem:[%s276 + $0x10] sm:$0xff]
        %v280 = vld [vmem:[%s276 + $0x18] sm:$0xff]
        %v281 = vld [vmem:[%s276 + $0x20] sm:$0xff]
        %v282 = vld [vmem:[%s276 + $0x28] sm:$0xff]
        %v283 = vld [vmem:[%s276 + $0x30] sm:$0xff]
        %v284 = vld [vmem:[%s276 + $0x38] sm:$0xff]
        %v285 = vld [vmem:[%s1] sm:$0xff]
        %v286 = vld [vmem:[%s1 + $0x8] sm:$0xff]
        %v287 = vld [vmem:[%s1 + $0x10] sm:$0xff]
        %v288 = vld [vmem:[%s1 + $0x18] sm:$0xff]
        %v289 = vld [vmem:[%s2] sm:$0x1]
        %v291 = vlaneseq
        %v292 = vshrl.u32 %v291, 7
        %v293 = vsub.s32 0, %v292
        %v294 = vrot.slane %v289, %v293
        %vm296 = vcmask 261120
        %v298 = vsel %vm296, %v277, 0
        %v301 = vsel %vm296, %v278, 0
        %v304 = vsel %vm296, %v279, 0
        %v307 = vsel %vm296, %v280, 0
        %v310 = vsel %vm296, %v281, 0
        %v313 = vsel %vm296, %v282, 0
        %v316 = vsel %vm296, %v283, 0
        %v319 = vsel %vm296, %v284, 0
        %321 = vmatprep.subr.mxu0 0.0
        %322 = vmatpush1.msra.mxu0 0.0
        %323 = vmatprep.subr.mxu0 0.0
        %324 = vmatpush1.msra.mxu0 0.0
        %325 = vmatprep.subr.mxu0 0.0
        %326 = vmatpush1.msra.mxu0 0.0
        %327 = vmatprep.subr.mxu0 0.0
        %328 = vmatpush1.msra.mxu0 0.0
        %329 = vmatprep.subr.mxu0 0.0
        %330 = vmatpush1.msra.mxu0 0.0
        %331 = vmatprep.subr.mxu0 0.0
        %332 = vmatpush1.msra.mxu0 0.0
        %333 = vmatprep.subr.mxu0 0.0
        %334 = vmatpush1.msra.mxu0 0.0
        %335 = vmatprep.subr.mxu0 0.0
        %336 = vmatpush1.msra.mxu0 0.0
        %337 = vmatprep.subr.mxu0 0.0
        %338 = vmatpush1.msra.mxu0 0.0
        %339 = vmatprep.subr.mxu0 0.0
        %340 = vmatpush1.msra.mxu0 0.0
        %341 = vmatprep.subr.mxu0 0.0
        %342 = vmatpush1.msra.mxu0 0.0
        %343 = vmatprep.subr.mxu0 0.0
        %344 = vmatpush1.msra.mxu0 0.0
        %345 = vmatprep.subr.mxu0 0.0
        %346 = vmatpush1.msra.mxu0 %v288
        %347 = vmatprep.subr.mxu0 0.0
        %348 = vmatpush1.msra.mxu0 %v287
        %349 = vmatprep.subr.mxu0 0.0
        %350 = vmatpush1.msra.mxu0 %v286
        %351 = vmatprep.subr.mxu0 0.0
        %352 = vmatpush1.msra.mxu0 %v285
        %353 = vmatprep.subr.mxu0 0.0
        %354 = vmatpush2.msra.mxu0 0.0
        %355 = vmatprep.subr.mxu0 0.0
        %356 = vmatpush2.msra.mxu0 0.0
        %357 = vmatprep.subr.mxu0 0.0
        %358 = vmatpush2.msra.mxu0 0.0
        %359 = vmatprep.subr.mxu0 0.0
        %360 = vmatpush2.msra.mxu0 0.0
        %361 = vmatprep.subr.mxu0 0.0
        %362 = vmatpush2.msra.mxu0 0.0
        %363 = vmatprep.subr.mxu0 0.0
        %364 = vmatpush2.msra.mxu0 0.0
        %365 = vmatprep.subr.mxu0 0.0
        %366 = vmatpush2.msra.mxu0 0.0
        %367 = vmatprep.subr.mxu0 0.0
        %368 = vmatpush2.msra.mxu0 0.0
        %369 = vmatprep.subr.mxu0 0.0
        %370 = vmatpush2.msra.mxu0 0.0
        %371 = vmatprep.subr.mxu0 0.0
        %372 = vmatpush2.msra.mxu0 0.0
        %373 = vmatprep.subr.mxu0 0.0
        %374 = vmatpush2.msra.mxu0 0.0
        %375 = vmatprep.subr.mxu0 0.0
        %376 = vmatpush2.msra.mxu0 0.0
        %377 = vmatprep.subr.mxu0 0.0
        %378 = vmatpush2.msra.mxu0 0.0
        %379 = vmatprep.subr.mxu0 0.0
        %380 = vmatpush2.msra.mxu0 0.0
        %381 = vmatprep.subr.mxu0 0.0
        %382 = vmatpush2.msra.mxu0 0.0
        %383 = vmatprep.subr.mxu0 0.0
        %384 = vmatpush2.msra.mxu0 0.0
        %385 = vmatprep.mubr.f32.mxu0 0.0
        %386 = vmatmul.mubr.f32.gmra.mxu0 %v298
        %v387 = vpop.f32.mrf.mxu0
        %v388 = vadd.f32 %v294, %v387
        %v389 = vpop.f32.mrf.mxu0
        %390 = vmatprep.mubr.f32.mxu0 0.0
        %391 = vmatmul.mubr.f32.gmra.mxu0 %v301
        %v392 = vpop.f32.mrf.mxu0
        %v393 = vadd.f32 %v294, %v392
        %v394 = vpop.f32.mrf.mxu0
        %395 = vmatprep.mubr.f32.mxu0 0.0
        %396 = vmatmul.mubr.f32.gmra.mxu0 %v304
        %v397 = vpop.f32.mrf.mxu0
        %v398 = vadd.f32 %v294, %v397
        %v399 = vpop.f32.mrf.mxu0
        %400 = vmatprep.mubr.f32.mxu0 0.0
        %401 = vmatmul.mubr.f32.gmra.mxu0 %v307
        %v402 = vpop.f32.mrf.mxu0
        %v403 = vadd.f32 %v294, %v402
        %v404 = vpop.f32.mrf.mxu0
        %405 = vmatprep.mubr.f32.mxu0 0.0
        %406 = vmatmul.mubr.f32.gmra.mxu0 %v310
        %v407 = vpop.f32.mrf.mxu0
        %v408 = vadd.f32 %v294, %v407
        %v409 = vpop.f32.mrf.mxu0
        %410 = vmatprep.mubr.f32.mxu0 0.0
        %411 = vmatmul.mubr.f32.gmra.mxu0 %v313
        %v412 = vpop.f32.mrf.mxu0
        %v413 = vadd.f32 %v294, %v412
        %v414 = vpop.f32.mrf.mxu0
        %415 = vmatprep.mubr.f32.mxu0 0.0
        %416 = vmatmul.mubr.f32.gmra.mxu0 %v316
        %v417 = vpop.f32.mrf.mxu0
        %v418 = vadd.f32 %v294, %v417
        %v419 = vpop.f32.mrf.mxu0
        %420 = vmatprep.mubr.f32.mxu0 0.0
        %421 = vmatmul.mubr.f32.gmra.mxu0 %v319
        %v422 = vpop.f32.mrf.mxu0
        %v423 = vadd.f32 %v294, %v422
        %v424 = vpop.f32.mrf.mxu0
        %425 = vdwg.mxu0
        %vm426 = vcmask 785408
        %427 = vst.msk [vmem:[#allocation2] sm:$0xff] %vm426, 0.0
        %428 = vst.msk [vmem:[#allocation2 + $0x8] sm:$0xff] %vm426, 0.0
        %429 = vst.msk [vmem:[#allocation2 + $0x10] sm:$0xff] %vm426, 0.0
        %430 = vst.msk [vmem:[#allocation2 + $0x18] sm:$0xff] %vm426, 0.0
        %431 = vst.msk [vmem:[#allocation2 + $0x20] sm:$0xff] %vm426, 0.0
        %432 = vst.msk [vmem:[#allocation2 + $0x28] sm:$0xff] %vm426, 0.0
        %433 = vst.msk [vmem:[#allocation2 + $0x30] sm:$0xff] %vm426, 0.0
        %434 = vst.msk [vmem:[#allocation2 + $0x38] sm:$0xff] %vm426, 0.0
        %435 = vst.msk [vmem:[#allocation2 + $0x40] sm:$0xff] %vm426, 0.0
        %436 = vst.msk [vmem:[#allocation2 + $0x48] sm:$0xff] %vm426, 0.0
        %437 = vst.msk [vmem:[#allocation2 + $0x50] sm:$0xff] %vm426, 0.0
        %438 = vst.msk [vmem:[#allocation2 + $0x58] sm:$0xff] %vm426, 0.0
        %439 = vst.msk [vmem:[#allocation2 + $0x60] sm:$0xff] %vm426, 0.0
        %440 = vst.msk [vmem:[#allocation2 + $0x68] sm:$0xff] %vm426, 0.0
        %441 = vst.msk [vmem:[#allocation2 + $0x70] sm:$0xff] %vm426, 0.0
        %442 = vst.msk [vmem:[#allocation2 + $0x78] sm:$0xff] %vm426, 0.0
        %443 = vst.msk [vmem:[#allocation2 + $0x80] sm:$0xff] %vm426, 0.0
        %444 = vst.msk [vmem:[#allocation2 + $0x88] sm:$0xff] %vm426, 0.0
        %445 = vst.msk [vmem:[#allocation2 + $0x90] sm:$0xff] %vm426, 0.0
        %446 = vst.msk [vmem:[#allocation2 + $0x98] sm:$0xff] %vm426, 0.0
        %447 = vst.msk [vmem:[#allocation2 + $0xa0] sm:$0xff] %vm426, 0.0
        %448 = vst.msk [vmem:[#allocation2 + $0xa8] sm:$0xff] %vm426, 0.0
        %449 = vst.msk [vmem:[#allocation2 + $0xb0] sm:$0xff] %vm426, 0.0
        %450 = vst.msk [vmem:[#allocation2 + $0xb8] sm:$0xff] %vm426, 0.0
        %451 = vst.msk [vmem:[#allocation2 + $0xc0] sm:$0xff] %vm426, 0.0
        %452 = vst.msk [vmem:[#allocation2 + $0xc8] sm:$0xff] %vm426, 0.0
        %453 = vst.msk [vmem:[#allocation2 + $0xd0] sm:$0xff] %vm426, 0.0
        %454 = vst.msk [vmem:[#allocation2 + $0xd8] sm:$0xff] %vm426, 0.0
        %455 = vst.msk [vmem:[#allocation2 + $0xe0] sm:$0xff] %vm426, 0.0
        %456 = vst.msk [vmem:[#allocation2 + $0xe8] sm:$0xff] %vm426, 0.0
        %457 = vst.msk [vmem:[#allocation2 + $0xf0] sm:$0xff] %vm426, 0.0
        %458 = vst.msk [vmem:[#allocation2 + $0xf8] sm:$0xff] %vm426, 0.0
        %459 = vst.msk [vmem:[#allocation2 + $0x100] sm:$0xff] %vm426, 0.0
        %460 = vst.msk [vmem:[#allocation2 + $0x108] sm:$0xff] %vm426, 0.0
        %461 = vst.msk [vmem:[#allocation2 + $0x110] sm:$0xff] %vm426, 0.0
        %462 = vst.msk [vmem:[#allocation2 + $0x118] sm:$0xff] %vm426, 0.0
        %463 = vst.msk [vmem:[#allocation2 + $0x120] sm:$0xff] %vm426, 0.0
        %464 = vst.msk [vmem:[#allocation2 + $0x128] sm:$0xff] %vm426, 0.0
        %465 = vst.msk [vmem:[#allocation2 + $0x130] sm:$0xff] %vm426, 0.0
        %466 = vst.msk [vmem:[#allocation2 + $0x138] sm:$0xff] %vm426, 0.0
        %467 = vst.msk [vmem:[#allocation2 + $0x140] sm:$0xff] %vm426, 0.0
        %468 = vst.msk [vmem:[#allocation2 + $0x148] sm:$0xff] %vm426, 0.0
        %469 = vst.msk [vmem:[#allocation2 + $0x150] sm:$0xff] %vm426, 0.0
        %470 = vst.msk [vmem:[#allocation2 + $0x158] sm:$0xff] %vm426, 0.0
        %471 = vst.msk [vmem:[#allocation2 + $0x160] sm:$0xff] %vm426, 0.0
        %472 = vst.msk [vmem:[#allocation2 + $0x168] sm:$0xff] %vm426, 0.0
        %473 = vst.msk [vmem:[#allocation2 + $0x170] sm:$0xff] %vm426, 0.0
        %474 = vst.msk [vmem:[#allocation2 + $0x178] sm:$0xff] %vm426, 0.0
        %475 = vst.msk [vmem:[#allocation2 + $0x180] sm:$0xff] %vm426, 0.0
        %476 = vst.msk [vmem:[#allocation2 + $0x188] sm:$0xff] %vm426, 0.0
        %477 = vst.msk [vmem:[#allocation2 + $0x190] sm:$0xff] %vm426, 0.0
        %478 = vst.msk [vmem:[#allocation2 + $0x198] sm:$0xff] %vm426, 0.0
        %479 = vst.msk [vmem:[#allocation2 + $0x1a0] sm:$0xff] %vm426, 0.0
        %480 = vst.msk [vmem:[#allocation2 + $0x1a8] sm:$0xff] %vm426, 0.0
        %s481 = scalar_lea.vmem [#allocation2], 120
        %482 = vst.msk [vmem:[%s481 + $0x8] sm:$0xff] %vm426, %v388
        %s483 = scalar_lea.vmem [#allocation2], 144
        %484 = vst.msk [vmem:[%s483 + $0x8] sm:$0xff] %vm426, %v393
        %s485 = scalar_lea.vmem [#allocation2], 168
        %486 = vst.msk [vmem:[%s485 + $0x8] sm:$0xff] %vm426, %v398
        %s487 = scalar_lea.vmem [#allocation2], 192
        %488 = vst.msk [vmem:[%s487 + $0x8] sm:$0xff] %vm426, %v403
        %s489 = scalar_lea.vmem [#allocation2], 216
        %490 = vst.msk [vmem:[%s489 + $0x8] sm:$0xff] %vm426, %v408
        %s491 = scalar_lea.vmem [#allocation2], 240
        %492 = vst.msk [vmem:[%s491 + $0x8] sm:$0xff] %vm426, %v413
        %s493 = scalar_lea.vmem [#allocation2], 264
        %494 = vst.msk [vmem:[%s493 + $0x8] sm:$0xff] %vm426, %v418
        %s495 = scalar_lea.vmem [#allocation2], 288
        %496 = vst.msk [vmem:[%s495 + $0x8] sm:$0xff] %vm426, %v423
        %v497 = vld [vmem:[#allocation2 + $0x3] sm:$0xff]
        %v498 = vld [vmem:[#allocation2 + $0x1b] sm:$0xff]
        %v499 = vld [vmem:[#allocation2 + $0x33] sm:$0xff]
        %v500 = vld [vmem:[#allocation2 + $0x4b] sm:$0xff]
        %v501 = vld [vmem:[#allocation2 + $0x63] sm:$0xff]
        %v502 = vld [vmem:[#allocation2 + $0x7b] sm:$0xff]
        %v503 = vld [vmem:[#allocation2 + $0x93] sm:$0xff]
        %v504 = vld [vmem:[#allocation2 + $0xab] sm:$0xff]
        %v505 = vld [vmem:[#allocation2 + $0xc3] sm:$0xff]
        %v506 = vld [vmem:[#allocation2 + $0xdb] sm:$0xff]
        %v507 = vld [vmem:[#allocation2 + $0xf3] sm:$0xff]
        %v508 = vld [vmem:[#allocation2 + $0x10b] sm:$0xff]
        %v509 = vld [vmem:[#allocation2 + $0x123] sm:$0xff]
        %v510 = vld [vmem:[#allocation2 + $0x13b] sm:$0xff]
        %v511 = vld [vmem:[#allocation2 + $0x153] sm:$0xff]
        %v512 = vld [vmem:[#allocation2 + $0x16b] sm:$0xff]
        %v513 = vld [vmem:[#allocation2 + $0x183] sm:$0xff]
        %v514 = vld [vmem:[#allocation2 + $0x19b] sm:$0xff]
        %v515 = vld [vmem:[%s3] sm:$0xff]
        %v516 = vmul.f32 %v497, %v515
        %v517 = vmul.f32 %v498, %v515
        %v518 = vmul.f32 %v499, %v515
        %v519 = vmul.f32 %v500, %v515
        %v520 = vmul.f32 %v501, %v515
        %v521 = vmul.f32 %v502, %v515
        %v522 = vmul.f32 %v503, %v515
        %v523 = vmul.f32 %v504, %v515
        %v524 = vadd.f32 %v516, 0.0
        %v525 = vadd.f32 %v517, 0.0
        %v526 = vadd.f32 %v518, 0.0
        %v527 = vadd.f32 %v519, 0.0
        %v528 = vadd.f32 %v520, 0.0
        %v529 = vadd.f32 %v521, 0.0
        %v530 = vadd.f32 %v522, 0.0
        %v531 = vadd.f32 %v523, 0.0
        %s532 = scalar_lea.vmem %s3, 88
        %v533 = vld [vmem:[%s532] sm:$0xff]
        %v534 = vmul.f32 %v498, %v533
        %v535 = vmul.f32 %v499, %v533
        %v536 = vmul.f32 %v500, %v533
        %v537 = vmul.f32 %v501, %v533
        %v538 = vmul.f32 %v502, %v533
        %v539 = vmul.f32 %v503, %v533
        %v540 = vmul.f32 %v504, %v533
        %v541 = vmul.f32 %v505, %v533
        %v542 = vadd.f32 %v524, %v534
        %v543 = vadd.f32 %v525, %v535
        %v544 = vadd.f32 %v526, %v536
        %v545 = vadd.f32 %v527, %v537
        %v546 = vadd.f32 %v528, %v538
        %v547 = vadd.f32 %v529, %v539
        %v548 = vadd.f32 %v530, %v540
        %v549 = vadd.f32 %v531, %v541
        %s550 = scalar_lea.vmem %s3, 176
        %v551 = vld [vmem:[%s550] sm:$0xff]
        %v552 = vmul.f32 %v499, %v551
        %v553 = vmul.f32 %v500, %v551
        %v554 = vmul.f32 %v501, %v551
        %v555 = vmul.f32 %v502, %v551
        %v556 = vmul.f32 %v503, %v551
        %v557 = vmul.f32 %v504, %v551
        %v558 = vmul.f32 %v505, %v551
        %v559 = vmul.f32 %v506, %v551
        %v560 = vadd.f32 %v542, %v552
        %v561 = vadd.f32 %v543, %v553
        %v562 = vadd.f32 %v544, %v554
        %v563 = vadd.f32 %v545, %v555
        %v564 = vadd.f32 %v546, %v556
        %v565 = vadd.f32 %v547, %v557
        %v566 = vadd.f32 %v548, %v558
        %v567 = vadd.f32 %v549, %v559
        %s568 = scalar_lea.vmem %s3, 264
        %v569 = vld [vmem:[%s568] sm:$0xff]
        %v570 = vmul.f32 %v500, %v569
        %v571 = vmul.f32 %v501, %v569
        %v572 = vmul.f32 %v502, %v569
        %v573 = vmul.f32 %v503, %v569
        %v574 = vmul.f32 %v504, %v569
        %v575 = vmul.f32 %v505, %v569
        %v576 = vmul.f32 %v506, %v569
        %v577 = vmul.f32 %v507, %v569
        %v578 = vadd.f32 %v560, %v570
        %v579 = vadd.f32 %v561, %v571
        %v580 = vadd.f32 %v562, %v572
        %v581 = vadd.f32 %v563, %v573
        %v582 = vadd.f32 %v564, %v574
        %v583 = vadd.f32 %v565, %v575
        %v584 = vadd.f32 %v566, %v576
        %v585 = vadd.f32 %v567, %v577
        %s586 = scalar_lea.vmem %s3, 352
        %v587 = vld [vmem:[%s586] sm:$0xff]
        %v588 = vmul.f32 %v501, %v587
        %v589 = vmul.f32 %v502, %v587
        %v590 = vmul.f32 %v503, %v587
        %v591 = vmul.f32 %v504, %v587
        %v592 = vmul.f32 %v505, %v587
        %v593 = vmul.f32 %v506, %v587
        %v594 = vmul.f32 %v507, %v587
        %v595 = vmul.f32 %v508, %v587
        %v596 = vadd.f32 %v578, %v588
        %v597 = vadd.f32 %v579, %v589
        %v598 = vadd.f32 %v580, %v590
        %v599 = vadd.f32 %v581, %v591
        %v600 = vadd.f32 %v582, %v592
        %v601 = vadd.f32 %v583, %v593
        %v602 = vadd.f32 %v584, %v594
        %v603 = vadd.f32 %v585, %v595
        %s604 = scalar_lea.vmem %s3, 440
        %v605 = vld [vmem:[%s604] sm:$0xff]
        %v606 = vmul.f32 %v502, %v605
        %v607 = vmul.f32 %v503, %v605
        %v608 = vmul.f32 %v504, %v605
        %v609 = vmul.f32 %v505, %v605
        %v610 = vmul.f32 %v506, %v605
        %v611 = vmul.f32 %v507, %v605
        %v612 = vmul.f32 %v508, %v605
        %v613 = vmul.f32 %v509, %v605
        %v614 = vadd.f32 %v596, %v606
        %v615 = vadd.f32 %v597, %v607
        %v616 = vadd.f32 %v598, %v608
        %v617 = vadd.f32 %v599, %v609
        %v618 = vadd.f32 %v600, %v610
        %v619 = vadd.f32 %v601, %v611
        %v620 = vadd.f32 %v602, %v612
        %v621 = vadd.f32 %v603, %v613
        %s622 = scalar_lea.vmem %s3, 528
        %v623 = vld [vmem:[%s622] sm:$0xff]
        %v624 = vmul.f32 %v503, %v623
        %v625 = vmul.f32 %v504, %v623
        %v626 = vmul.f32 %v505, %v623
        %v627 = vmul.f32 %v506, %v623
        %v628 = vmul.f32 %v507, %v623
        %v629 = vmul.f32 %v508, %v623
        %v630 = vmul.f32 %v509, %v623
        %v631 = vmul.f32 %v510, %v623
        %v632 = vadd.f32 %v614, %v624
        %v633 = vadd.f32 %v615, %v625
        %v634 = vadd.f32 %v616, %v626
        %v635 = vadd.f32 %v617, %v627
        %v636 = vadd.f32 %v618, %v628
        %v637 = vadd.f32 %v619, %v629
        %v638 = vadd.f32 %v620, %v630
        %v639 = vadd.f32 %v621, %v631
        %s640 = scalar_lea.vmem %s3, 616
        %v641 = vld [vmem:[%s640] sm:$0xff]
        %v642 = vmul.f32 %v504, %v641
        %v643 = vmul.f32 %v505, %v641
        %v644 = vmul.f32 %v506, %v641
        %v645 = vmul.f32 %v507, %v641
        %v646 = vmul.f32 %v508, %v641
        %v647 = vmul.f32 %v509, %v641
        %v648 = vmul.f32 %v510, %v641
        %v649 = vmul.f32 %v511, %v641
        %v650 = vadd.f32 %v632, %v642
        %v651 = vadd.f32 %v633, %v643
        %v652 = vadd.f32 %v634, %v644
        %v653 = vadd.f32 %v635, %v645
        %v654 = vadd.f32 %v636, %v646
        %v655 = vadd.f32 %v637, %v647
        %v656 = vadd.f32 %v638, %v648
        %v657 = vadd.f32 %v639, %v649
        %s658 = scalar_lea.vmem %s3, 704
        %v659 = vld [vmem:[%s658] sm:$0xff]
        %v660 = vmul.f32 %v505, %v659
        %v661 = vmul.f32 %v506, %v659
        %v662 = vmul.f32 %v507, %v659
        %v663 = vmul.f32 %v508, %v659
        %v664 = vmul.f32 %v509, %v659
        %v665 = vmul.f32 %v510, %v659
        %v666 = vmul.f32 %v511, %v659
        %v667 = vmul.f32 %v512, %v659
        %v668 = vadd.f32 %v650, %v660
        %v669 = vadd.f32 %v651, %v661
        %v670 = vadd.f32 %v652, %v662
        %v671 = vadd.f32 %v653, %v663
        %v672 = vadd.f32 %v654, %v664
        %v673 = vadd.f32 %v655, %v665
        %v674 = vadd.f32 %v656, %v666
        %v675 = vadd.f32 %v657, %v667
        %s676 = scalar_lea.vmem %s3, 792
        %v677 = vld [vmem:[%s676] sm:$0xff]
        %v678 = vmul.f32 %v506, %v677
        %v679 = vmul.f32 %v507, %v677
        %v680 = vmul.f32 %v508, %v677
        %v681 = vmul.f32 %v509, %v677
        %v682 = vmul.f32 %v510, %v677
        %v683 = vmul.f32 %v511, %v677
        %v684 = vmul.f32 %v512, %v677
        %v685 = vmul.f32 %v513, %v677
        %v686 = vadd.f32 %v668, %v678
        %v687 = vadd.f32 %v669, %v679
        %v688 = vadd.f32 %v670, %v680
        %v689 = vadd.f32 %v671, %v681
        %v690 = vadd.f32 %v672, %v682
        %v691 = vadd.f32 %v673, %v683
        %v692 = vadd.f32 %v674, %v684
        %v693 = vadd.f32 %v675, %v685
        %s694 = scalar_lea.vmem %s3, 880
        %v695 = vld [vmem:[%s694] sm:$0xff]
        %v696 = vmul.f32 %v507, %v695
        %v697 = vmul.f32 %v508, %v695
        %v698 = vmul.f32 %v509, %v695
        %v699 = vmul.f32 %v510, %v695
        %v700 = vmul.f32 %v511, %v695
        %v701 = vmul.f32 %v512, %v695
        %v702 = vmul.f32 %v513, %v695
        %v703 = vmul.f32 %v514, %v695
        %v704 = vadd.f32 %v686, %v696
        %v705 = vadd.f32 %v687, %v697
        %v706 = vadd.f32 %v688, %v698
        %v707 = vadd.f32 %v689, %v699
        %v708 = vadd.f32 %v690, %v700
        %v709 = vadd.f32 %v691, %v701
        %v710 = vadd.f32 %v692, %v702
        %v711 = vadd.f32 %v693, %v703
        %v712 = vld [vmem:[#allocation2 + $0x4] sm:$0xff]
        %v713 = vld [vmem:[#allocation2 + $0x1c] sm:$0xff]
        %v714 = vld [vmem:[#allocation2 + $0x34] sm:$0xff]
        %v715 = vld [vmem:[#allocation2 + $0x4c] sm:$0xff]
        %v716 = vld [vmem:[#allocation2 + $0x64] sm:$0xff]
        %v717 = vld [vmem:[#allocation2 + $0x7c] sm:$0xff]
        %v718 = vld [vmem:[#allocation2 + $0x94] sm:$0xff]
        %v719 = vld [vmem:[#allocation2 + $0xac] sm:$0xff]
        %v720 = vld [vmem:[#allocation2 + $0xc4] sm:$0xff]
        %v721 = vld [vmem:[#allocation2 + $0xdc] sm:$0xff]
        %v722 = vld [vmem:[#allocation2 + $0xf4] sm:$0xff]
        %v723 = vld [vmem:[#allocation2 + $0x10c] sm:$0xff]
        %v724 = vld [vmem:[#allocation2 + $0x124] sm:$0xff]
        %v725 = vld [vmem:[#allocation2 + $0x13c] sm:$0xff]
        %v726 = vld [vmem:[#allocation2 + $0x154] sm:$0xff]
        %v727 = vld [vmem:[#allocation2 + $0x16c] sm:$0xff]
        %v728 = vld [vmem:[#allocation2 + $0x184] sm:$0xff]
        %v729 = vld [vmem:[#allocation2 + $0x19c] sm:$0xff]
        %s730 = scalar_lea.vmem %s3, 8
        %v731 = vld [vmem:[%s730] sm:$0xff]
        %v732 = vmul.f32 %v712, %v731
        %v733 = vmul.f32 %v713, %v731
        %v734 = vmul.f32 %v714, %v731
        %v735 = vmul.f32 %v715, %v731
        %v736 = vmul.f32 %v716, %v731
        %v737 = vmul.f32 %v717, %v731
        %v738 = vmul.f32 %v718, %v731
        %v739 = vmul.f32 %v719, %v731
        %v740 = vadd.f32 %v704, %v732
        %v741 = vadd.f32 %v705, %v733
        %v742 = vadd.f32 %v706, %v734
        %v743 = vadd.f32 %v707, %v735
        %v744 = vadd.f32 %v708, %v736
        %v745 = vadd.f32 %v709, %v737
        %v746 = vadd.f32 %v710, %v738
        %v747 = vadd.f32 %v711, %v739
        %s748 = scalar_lea.vmem %s3, 96
        %v749 = vld [vmem:[%s748] sm:$0xff]
        %v750 = vmul.f32 %v713, %v749
        %v751 = vmul.f32 %v714, %v749
        %v752 = vmul.f32 %v715, %v749
        %v753 = vmul.f32 %v716, %v749
        %v754 = vmul.f32 %v717, %v749
        %v755 = vmul.f32 %v718, %v749
        %v756 = vmul.f32 %v719, %v749
        %v757 = vmul.f32 %v720, %v749
        %v758 = vadd.f32 %v740, %v750
        %v759 = vadd.f32 %v741, %v751
        %v760 = vadd.f32 %v742, %v752
        %v761 = vadd.f32 %v743, %v753
        %v762 = vadd.f32 %v744, %v754
        %v763 = vadd.f32 %v745, %v755
        %v764 = vadd.f32 %v746, %v756
        %v765 = vadd.f32 %v747, %v757
        %s766 = scalar_lea.vmem %s3, 184
        %v767 = vld [vmem:[%s766] sm:$0xff]
        %v768 = vmul.f32 %v714, %v767
        %v769 = vmul.f32 %v715, %v767
        %v770 = vmul.f32 %v716, %v767
        %v771 = vmul.f32 %v717, %v767
        %v772 = vmul.f32 %v718, %v767
        %v773 = vmul.f32 %v719, %v767
        %v774 = vmul.f32 %v720, %v767
        %v775 = vmul.f32 %v721, %v767
        %v776 = vadd.f32 %v758, %v768
        %v777 = vadd.f32 %v759, %v769
        %v778 = vadd.f32 %v760, %v770
        %v779 = vadd.f32 %v761, %v771
        %v780 = vadd.f32 %v762, %v772
        %v781 = vadd.f32 %v763, %v773
        %v782 = vadd.f32 %v764, %v774
        %v783 = vadd.f32 %v765, %v775
        %s784 = scalar_lea.vmem %s3, 272
        %v785 = vld [vmem:[%s784] sm:$0xff]
        %v786 = vmul.f32 %v715, %v785
        %v787 = vmul.f32 %v716, %v785
        %v788 = vmul.f32 %v717, %v785
        %v789 = vmul.f32 %v718, %v785
        %v790 = vmul.f32 %v719, %v785
        %v791 = vmul.f32 %v720, %v785
        %v792 = vmul.f32 %v721, %v785
        %v793 = vmul.f32 %v722, %v785
        %v794 = vadd.f32 %v776, %v786
        %v795 = vadd.f32 %v777, %v787
        %v796 = vadd.f32 %v778, %v788
        %v797 = vadd.f32 %v779, %v789
        %v798 = vadd.f32 %v780, %v790
        %v799 = vadd.f32 %v781, %v791
        %v800 = vadd.f32 %v782, %v792
        %v801 = vadd.f32 %v783, %v793
        %s802 = scalar_lea.vmem %s3, 360
        %v803 = vld [vmem:[%s802] sm:$0xff]
        %v804 = vmul.f32 %v716, %v803
        %v805 = vmul.f32 %v717, %v803
        %v806 = vmul.f32 %v718, %v803
        %v807 = vmul.f32 %v719, %v803
        %v808 = vmul.f32 %v720, %v803
        %v809 = vmul.f32 %v721, %v803
        %v810 = vmul.f32 %v722, %v803
        %v811 = vmul.f32 %v723, %v803
        %v812 = vadd.f32 %v794, %v804
        %v813 = vadd.f32 %v795, %v805
        %v814 = vadd.f32 %v796, %v806
        %v815 = vadd.f32 %v797, %v807
        %v816 = vadd.f32 %v798, %v808
        %v817 = vadd.f32 %v799, %v809
        %v818 = vadd.f32 %v800, %v810
        %v819 = vadd.f32 %v801, %v811
        %s820 = scalar_lea.vmem %s3, 448
        %v821 = vld [vmem:[%s820] sm:$0xff]
        %v822 = vmul.f32 %v717, %v821
        %v823 = vmul.f32 %v718, %v821
        %v824 = vmul.f32 %v719, %v821
        %v825 = vmul.f32 %v720, %v821
        %v826 = vmul.f32 %v721, %v821
        %v827 = vmul.f32 %v722, %v821
        %v828 = vmul.f32 %v723, %v821
        %v829 = vmul.f32 %v724, %v821
        %v830 = vadd.f32 %v812, %v822
        %v831 = vadd.f32 %v813, %v823
        %v832 = vadd.f32 %v814, %v824
        %v833 = vadd.f32 %v815, %v825
        %v834 = vadd.f32 %v816, %v826
        %v835 = vadd.f32 %v817, %v827
        %v836 = vadd.f32 %v818, %v828
        %v837 = vadd.f32 %v819, %v829
        %s838 = scalar_lea.vmem %s3, 536
        %v839 = vld [vmem:[%s838] sm:$0xff]
        %v840 = vmul.f32 %v718, %v839
        %v841 = vmul.f32 %v719, %v839
        %v842 = vmul.f32 %v720, %v839
        %v843 = vmul.f32 %v721, %v839
        %v844 = vmul.f32 %v722, %v839
        %v845 = vmul.f32 %v723, %v839
        %v846 = vmul.f32 %v724, %v839
        %v847 = vmul.f32 %v725, %v839
        %v848 = vadd.f32 %v830, %v840
        %v849 = vadd.f32 %v831, %v841
        %v850 = vadd.f32 %v832, %v842
        %v851 = vadd.f32 %v833, %v843
        %v852 = vadd.f32 %v834, %v844
        %v853 = vadd.f32 %v835, %v845
        %v854 = vadd.f32 %v836, %v846
        %v855 = vadd.f32 %v837, %v847
        %s856 = scalar_lea.vmem %s3, 624
        %v857 = vld [vmem:[%s856] sm:$0xff]
        %v858 = vmul.f32 %v719, %v857
        %v859 = vmul.f32 %v720, %v857
        %v860 = vmul.f32 %v721, %v857
        %v861 = vmul.f32 %v722, %v857
        %v862 = vmul.f32 %v723, %v857
        %v863 = vmul.f32 %v724, %v857
        %v864 = vmul.f32 %v725, %v857
        %v865 = vmul.f32 %v726, %v857
        %v866 = vadd.f32 %v848, %v858
        %v867 = vadd.f32 %v849, %v859
        %v868 = vadd.f32 %v850, %v860
        %v869 = vadd.f32 %v851, %v861
        %v870 = vadd.f32 %v852, %v862
        %v871 = vadd.f32 %v853, %v863
        %v872 = vadd.f32 %v854, %v864
        %v873 = vadd.f32 %v855, %v865
        %s874 = scalar_lea.vmem %s3, 712
        %v875 = vld [vmem:[%s874] sm:$0xff]
        %v876 = vmul.f32 %v720, %v875
        %v877 = vmul.f32 %v721, %v875
        %v878 = vmul.f32 %v722, %v875
        %v879 = vmul.f32 %v723, %v875
        %v880 = vmul.f32 %v724, %v875
        %v881 = vmul.f32 %v725, %v875
        %v882 = vmul.f32 %v726, %v875
        %v883 = vmul.f32 %v727, %v875
        %v884 = vadd.f32 %v866, %v876
        %v885 = vadd.f32 %v867, %v877
        %v886 = vadd.f32 %v868, %v878
        %v887 = vadd.f32 %v869, %v879
        %v888 = vadd.f32 %v870, %v880
        %v889 = vadd.f32 %v871, %v881
        %v890 = vadd.f32 %v872, %v882
        %v891 = vadd.f32 %v873, %v883
        %s892 = scalar_lea.vmem %s3, 800
        %v893 = vld [vmem:[%s892] sm:$0xff]
        %v894 = vmul.f32 %v721, %v893
        %v895 = vmul.f32 %v722, %v893
        %v896 = vmul.f32 %v723, %v893
        %v897 = vmul.f32 %v724, %v893
        %v898 = vmul.f32 %v725, %v893
        %v899 = vmul.f32 %v726, %v893
        %v900 = vmul.f32 %v727, %v893
        %v901 = vmul.f32 %v728, %v893
        %v902 = vadd.f32 %v884, %v894
        %v903 = vadd.f32 %v885, %v895
        %v904 = vadd.f32 %v886, %v896
        %v905 = vadd.f32 %v887, %v897
        %v906 = vadd.f32 %v888, %v898
        %v907 = vadd.f32 %v889, %v899
        %v908 = vadd.f32 %v890, %v900
        %v909 = vadd.f32 %v891, %v901
        %s910 = scalar_lea.vmem %s3, 888
        %v911 = vld [vmem:[%s910] sm:$0xff]
        %v912 = vmul.f32 %v722, %v911
        %v913 = vmul.f32 %v723, %v911
        %v914 = vmul.f32 %v724, %v911
        %v915 = vmul.f32 %v725, %v911
        %v916 = vmul.f32 %v726, %v911
        %v917 = vmul.f32 %v727, %v911
        %v918 = vmul.f32 %v728, %v911
        %v919 = vmul.f32 %v729, %v911
        %v920 = vadd.f32 %v902, %v912
        %v921 = vadd.f32 %v903, %v913
        %v922 = vadd.f32 %v904, %v914
        %v923 = vadd.f32 %v905, %v915
        %v924 = vadd.f32 %v906, %v916
        %v925 = vadd.f32 %v907, %v917
        %v926 = vadd.f32 %v908, %v918
        %v927 = vadd.f32 %v909, %v919
        %v928 = vld [vmem:[#allocation2 + $0x5] sm:$0xff]
        %v929 = vld [vmem:[#allocation2 + $0x1d] sm:$0xff]
        %v930 = vld [vmem:[#allocation2 + $0x35] sm:$0xff]
        %v931 = vld [vmem:[#allocation2 + $0x4d] sm:$0xff]
        %v932 = vld [vmem:[#allocation2 + $0x65] sm:$0xff]
        %v933 = vld [vmem:[#allocation2 + $0x7d] sm:$0xff]
        %v934 = vld [vmem:[#allocation2 + $0x95] sm:$0xff]
        %v935 = vld [vmem:[#allocation2 + $0xad] sm:$0xff]
        %v936 = vld [vmem:[#allocation2 + $0xc5] sm:$0xff]
        %v937 = vld [vmem:[#allocation2 + $0xdd] sm:$0xff]
        %v938 = vld [vmem:[#allocation2 + $0xf5] sm:$0xff]
        %v939 = vld [vmem:[#allocation2 + $0x10d] sm:$0xff]
        %v940 = vld [vmem:[#allocation2 + $0x125] sm:$0xff]
        %v941 = vld [vmem:[#allocation2 + $0x13d] sm:$0xff]
        %v942 = vld [vmem:[#allocation2 + $0x155] sm:$0xff]
        %v943 = vld [vmem:[#allocation2 + $0x16d] sm:$0xff]
        %v944 = vld [vmem:[#allocation2 + $0x185] sm:$0xff]
        %v945 = vld [vmem:[#allocation2 + $0x19d] sm:$0xff]
        %s946 = scalar_lea.vmem %s3, 16
        %v947 = vld [vmem:[%s946] sm:$0xff]
        %v948 = vmul.f32 %v928, %v947
        %v949 = vmul.f32 %v929, %v947
        %v950 = vmul.f32 %v930, %v947
        %v951 = vmul.f32 %v931, %v947
        %v952 = vmul.f32 %v932, %v947
        %v953 = vmul.f32 %v933, %v947
        %v954 = vmul.f32 %v934, %v947
        %v955 = vmul.f32 %v935, %v947
        %v956 = vadd.f32 %v920, %v948
        %v957 = vadd.f32 %v921, %v949
        %v958 = vadd.f32 %v922, %v950
        %v959 = vadd.f32 %v923, %v951
        %v960 = vadd.f32 %v924, %v952
        %v961 = vadd.f32 %v925, %v953
        %v962 = vadd.f32 %v926, %v954
        %v963 = vadd.f32 %v927, %v955
        %s964 = scalar_lea.vmem %s3, 104
        %v965 = vld [vmem:[%s964] sm:$0xff]
        %v966 = vmul.f32 %v929, %v965
        %v967 = vmul.f32 %v930, %v965
        %v968 = vmul.f32 %v931, %v965
        %v969 = vmul.f32 %v932, %v965
        %v970 = vmul.f32 %v933, %v965
        %v971 = vmul.f32 %v934, %v965
        %v972 = vmul.f32 %v935, %v965
        %v973 = vmul.f32 %v936, %v965
        %v974 = vadd.f32 %v956, %v966
        %v975 = vadd.f32 %v957, %v967
        %v976 = vadd.f32 %v958, %v968
        %v977 = vadd.f32 %v959, %v969
        %v978 = vadd.f32 %v960, %v970
        %v979 = vadd.f32 %v961, %v971
        %v980 = vadd.f32 %v962, %v972
        %v981 = vadd.f32 %v963, %v973
        %s982 = scalar_lea.vmem %s3, 192
        %v983 = vld [vmem:[%s982] sm:$0xff]
        %v984 = vmul.f32 %v930, %v983
        %v985 = vmul.f32 %v931, %v983
        %v986 = vmul.f32 %v932, %v983
        %v987 = vmul.f32 %v933, %v983
        %v988 = vmul.f32 %v934, %v983
        %v989 = vmul.f32 %v935, %v983
        %v990 = vmul.f32 %v936, %v983
        %v991 = vmul.f32 %v937, %v983
        %v992 = vadd.f32 %v974, %v984
        %v993 = vadd.f32 %v975, %v985
        %v994 = vadd.f32 %v976, %v986
        %v995 = vadd.f32 %v977, %v987
        %v996 = vadd.f32 %v978, %v988
        %v997 = vadd.f32 %v979, %v989
        %v998 = vadd.f32 %v980, %v990
        %v999 = vadd.f32 %v981, %v991
        %s1000 = scalar_lea.vmem %s3, 280
        %v1001 = vld [vmem:[%s1000] sm:$0xff]
        %v1002 = vmul.f32 %v931, %v1001
        %v1003 = vmul.f32 %v932, %v1001
        %v1004 = vmul.f32 %v933, %v1001
        %v1005 = vmul.f32 %v934, %v1001
        %v1006 = vmul.f32 %v935, %v1001
        %v1007 = vmul.f32 %v936, %v1001
        %v1008 = vmul.f32 %v937, %v1001
        %v1009 = vmul.f32 %v938, %v1001
        %v1010 = vadd.f32 %v992, %v1002
        %v1011 = vadd.f32 %v993, %v1003
        %v1012 = vadd.f32 %v994, %v1004
        %v1013 = vadd.f32 %v995, %v1005
        %v1014 = vadd.f32 %v996, %v1006
        %v1015 = vadd.f32 %v997, %v1007
        %v1016 = vadd.f32 %v998, %v1008
        %v1017 = vadd.f32 %v999, %v1009
        %s1018 = scalar_lea.vmem %s3, 368
        %v1019 = vld [vmem:[%s1018] sm:$0xff]
        %v1020 = vmul.f32 %v932, %v1019
        %v1021 = vmul.f32 %v933, %v1019
        %v1022 = vmul.f32 %v934, %v1019
        %v1023 = vmul.f32 %v935, %v1019
        %v1024 = vmul.f32 %v936, %v1019
        %v1025 = vmul.f32 %v937, %v1019
        %v1026 = vmul.f32 %v938, %v1019
        %v1027 = vmul.f32 %v939, %v1019
        %v1028 = vadd.f32 %v1010, %v1020
        %v1029 = vadd.f32 %v1011, %v1021
        %v1030 = vadd.f32 %v1012, %v1022
        %v1031 = vadd.f32 %v1013, %v1023
        %v1032 = vadd.f32 %v1014, %v1024
        %v1033 = vadd.f32 %v1015, %v1025
        %v1034 = vadd.f32 %v1016, %v1026
        %v1035 = vadd.f32 %v1017, %v1027
        %s1036 = scalar_lea.vmem %s3, 456
        %v1037 = vld [vmem:[%s1036] sm:$0xff]
        %v1038 = vmul.f32 %v933, %v1037
        %v1039 = vmul.f32 %v934, %v1037
        %v1040 = vmul.f32 %v935, %v1037
        %v1041 = vmul.f32 %v936, %v1037
        %v1042 = vmul.f32 %v937, %v1037
        %v1043 = vmul.f32 %v938, %v1037
        %v1044 = vmul.f32 %v939, %v1037
        %v1045 = vmul.f32 %v940, %v1037
        %v1046 = vadd.f32 %v1028, %v1038
        %v1047 = vadd.f32 %v1029, %v1039
        %v1048 = vadd.f32 %v1030, %v1040
        %v1049 = vadd.f32 %v1031, %v1041
        %v1050 = vadd.f32 %v1032, %v1042
        %v1051 = vadd.f32 %v1033, %v1043
        %v1052 = vadd.f32 %v1034, %v1044
        %v1053 = vadd.f32 %v1035, %v1045
        %s1054 = scalar_lea.vmem %s3, 544
        %v1055 = vld [vmem:[%s1054] sm:$0xff]
        %v1056 = vmul.f32 %v934, %v1055
        %v1057 = vmul.f32 %v935, %v1055
        %v1058 = vmul.f32 %v936, %v1055
        %v1059 = vmul.f32 %v937, %v1055
        %v1060 = vmul.f32 %v938, %v1055
        %v1061 = vmul.f32 %v939, %v1055
        %v1062 = vmul.f32 %v940, %v1055
        %v1063 = vmul.f32 %v941, %v1055
        %v1064 = vadd.f32 %v1046, %v1056
        %v1065 = vadd.f32 %v1047, %v1057
        %v1066 = vadd.f32 %v1048, %v1058
        %v1067 = vadd.f32 %v1049, %v1059
        %v1068 = vadd.f32 %v1050, %v1060
        %v1069 = vadd.f32 %v1051, %v1061
        %v1070 = vadd.f32 %v1052, %v1062
        %v1071 = vadd.f32 %v1053, %v1063
        %s1072 = scalar_lea.vmem %s3, 632
        %v1073 = vld [vmem:[%s1072] sm:$0xff]
        %v1074 = vmul.f32 %v935, %v1073
        %v1075 = vmul.f32 %v936, %v1073
        %v1076 = vmul.f32 %v937, %v1073
        %v1077 = vmul.f32 %v938, %v1073
        %v1078 = vmul.f32 %v939, %v1073
        %v1079 = vmul.f32 %v940, %v1073
        %v1080 = vmul.f32 %v941, %v1073
        %v1081 = vmul.f32 %v942, %v1073
        %v1082 = vadd.f32 %v1064, %v1074
        %v1083 = vadd.f32 %v1065, %v1075
        %v1084 = vadd.f32 %v1066, %v1076
        %v1085 = vadd.f32 %v1067, %v1077
        %v1086 = vadd.f32 %v1068, %v1078
        %v1087 = vadd.f32 %v1069, %v1079
        %v1088 = vadd.f32 %v1070, %v1080
        %v1089 = vadd.f32 %v1071, %v1081
        %s1090 = scalar_lea.vmem %s3, 720
        %v1091 = vld [vmem:[%s1090] sm:$0xff]
        %v1092 = vmul.f32 %v936, %v1091
        %v1093 = vmul.f32 %v937, %v1091
        %v1094 = vmul.f32 %v938, %v1091
        %v1095 = vmul.f32 %v939, %v1091
        %v1096 = vmul.f32 %v940, %v1091
        %v1097 = vmul.f32 %v941, %v1091
        %v1098 = vmul.f32 %v942, %v1091
        %v1099 = vmul.f32 %v943, %v1091
        %v1100 = vadd.f32 %v1082, %v1092
        %v1101 = vadd.f32 %v1083, %v1093
        %v1102 = vadd.f32 %v1084, %v1094
        %v1103 = vadd.f32 %v1085, %v1095
        %v1104 = vadd.f32 %v1086, %v1096
        %v1105 = vadd.f32 %v1087, %v1097
        %v1106 = vadd.f32 %v1088, %v1098
        %v1107 = vadd.f32 %v1089, %v1099
        %s1108 = scalar_lea.vmem %s3, 808
        %v1109 = vld [vmem:[%s1108] sm:$0xff]
        %v1110 = vmul.f32 %v937, %v1109
        %v1111 = vmul.f32 %v938, %v1109
        %v1112 = vmul.f32 %v939, %v1109
        %v1113 = vmul.f32 %v940, %v1109
        %v1114 = vmul.f32 %v941, %v1109
        %v1115 = vmul.f32 %v942, %v1109
        %v1116 = vmul.f32 %v943, %v1109
        %v1117 = vmul.f32 %v944, %v1109
        %v1118 = vadd.f32 %v1100, %v1110
        %v1119 = vadd.f32 %v1101, %v1111
        %v1120 = vadd.f32 %v1102, %v1112
        %v1121 = vadd.f32 %v1103, %v1113
        %v1122 = vadd.f32 %v1104, %v1114
        %v1123 = vadd.f32 %v1105, %v1115
        %v1124 = vadd.f32 %v1106, %v1116
        %v1125 = vadd.f32 %v1107, %v1117
        %s1126 = scalar_lea.vmem %s3, 896
        %v1127 = vld [vmem:[%s1126] sm:$0xff]
        %v1128 = vmul.f32 %v938, %v1127
        %v1129 = vmul.f32 %v939, %v1127
        %v1130 = vmul.f32 %v940, %v1127
        %v1131 = vmul.f32 %v941, %v1127
        %v1132 = vmul.f32 %v942, %v1127
        %v1133 = vmul.f32 %v943, %v1127
        %v1134 = vmul.f32 %v944, %v1127
        %v1135 = vmul.f32 %v945, %v1127
        %v1136 = vadd.f32 %v1118, %v1128
        %v1137 = vadd.f32 %v1119, %v1129
        %v1138 = vadd.f32 %v1120, %v1130
        %v1139 = vadd.f32 %v1121, %v1131
        %v1140 = vadd.f32 %v1122, %v1132
        %v1141 = vadd.f32 %v1123, %v1133
        %v1142 = vadd.f32 %v1124, %v1134
        %v1143 = vadd.f32 %v1125, %v1135
        %v1144 = vld [vmem:[#allocation2 + $0x6] sm:$0xff]
        %v1145 = vld [vmem:[#allocation2 + $0x1e] sm:$0xff]
        %v1146 = vld [vmem:[#allocation2 + $0x36] sm:$0xff]
        %v1147 = vld [vmem:[#allocation2 + $0x4e] sm:$0xff]
        %v1148 = vld [vmem:[#allocation2 + $0x66] sm:$0xff]
        %v1149 = vld [vmem:[#allocation2 + $0x7e] sm:$0xff]
        %v1150 = vld [vmem:[#allocation2 + $0x96] sm:$0xff]
        %v1151 = vld [vmem:[#allocation2 + $0xae] sm:$0xff]
        %v1152 = vld [vmem:[#allocation2 + $0xc6] sm:$0xff]
        %v1153 = vld [vmem:[#allocation2 + $0xde] sm:$0xff]
        %v1154 = vld [vmem:[#allocation2 + $0xf6] sm:$0xff]
        %v1155 = vld [vmem:[#allocation2 + $0x10e] sm:$0xff]
        %v1156 = vld [vmem:[#allocation2 + $0x126] sm:$0xff]
        %v1157 = vld [vmem:[#allocation2 + $0x13e] sm:$0xff]
        %v1158 = vld [vmem:[#allocation2 + $0x156] sm:$0xff]
        %v1159 = vld [vmem:[#allocation2 + $0x16e] sm:$0xff]
        %v1160 = vld [vmem:[#allocation2 + $0x186] sm:$0xff]
        %v1161 = vld [vmem:[#allocation2 + $0x19e] sm:$0xff]
        %s1162 = scalar_lea.vmem %s3, 24
        %v1163 = vld [vmem:[%s1162] sm:$0xff]
        %v1164 = vmul.f32 %v1144, %v1163
        %v1165 = vmul.f32 %v1145, %v1163
        %v1166 = vmul.f32 %v1146, %v1163
        %v1167 = vmul.f32 %v1147, %v1163
        %v1168 = vmul.f32 %v1148, %v1163
        %v1169 = vmul.f32 %v1149, %v1163
        %v1170 = vmul.f32 %v1150, %v1163
        %v1171 = vmul.f32 %v1151, %v1163
        %v1172 = vadd.f32 %v1136, %v1164
        %v1173 = vadd.f32 %v1137, %v1165
        %v1174 = vadd.f32 %v1138, %v1166
        %v1175 = vadd.f32 %v1139, %v1167
        %v1176 = vadd.f32 %v1140, %v1168
        %v1177 = vadd.f32 %v1141, %v1169
        %v1178 = vadd.f32 %v1142, %v1170
        %v1179 = vadd.f32 %v1143, %v1171
        %s1180 = scalar_lea.vmem %s3, 112
        %v1181 = vld [vmem:[%s1180] sm:$0xff]
        %v1182 = vmul.f32 %v1145, %v1181
        %v1183 = vmul.f32 %v1146, %v1181
        %v1184 = vmul.f32 %v1147, %v1181
        %v1185 = vmul.f32 %v1148, %v1181
        %v1186 = vmul.f32 %v1149, %v1181
        %v1187 = vmul.f32 %v1150, %v1181
        %v1188 = vmul.f32 %v1151, %v1181
        %v1189 = vmul.f32 %v1152, %v1181
        %v1190 = vadd.f32 %v1172, %v1182
        %v1191 = vadd.f32 %v1173, %v1183
        %v1192 = vadd.f32 %v1174, %v1184
        %v1193 = vadd.f32 %v1175, %v1185
        %v1194 = vadd.f32 %v1176, %v1186
        %v1195 = vadd.f32 %v1177, %v1187
        %v1196 = vadd.f32 %v1178, %v1188
        %v1197 = vadd.f32 %v1179, %v1189
        %s1198 = scalar_lea.vmem %s3, 200
        %v1199 = vld [vmem:[%s1198] sm:$0xff]
        %v1200 = vmul.f32 %v1146, %v1199
        %v1201 = vmul.f32 %v1147, %v1199
        %v1202 = vmul.f32 %v1148, %v1199
        %v1203 = vmul.f32 %v1149, %v1199
        %v1204 = vmul.f32 %v1150, %v1199
        %v1205 = vmul.f32 %v1151, %v1199
        %v1206 = vmul.f32 %v1152, %v1199
        %v1207 = vmul.f32 %v1153, %v1199
        %v1208 = vadd.f32 %v1190, %v1200
        %v1209 = vadd.f32 %v1191, %v1201
        %v1210 = vadd.f32 %v1192, %v1202
        %v1211 = vadd.f32 %v1193, %v1203
        %v1212 = vadd.f32 %v1194, %v1204
        %v1213 = vadd.f32 %v1195, %v1205
        %v1214 = vadd.f32 %v1196, %v1206
        %v1215 = vadd.f32 %v1197, %v1207
        %s1216 = scalar_lea.vmem %s3, 288
        %v1217 = vld [vmem:[%s1216] sm:$0xff]
        %v1218 = vmul.f32 %v1147, %v1217
        %v1219 = vmul.f32 %v1148, %v1217
        %v1220 = vmul.f32 %v1149, %v1217
        %v1221 = vmul.f32 %v1150, %v1217
        %v1222 = vmul.f32 %v1151, %v1217
        %v1223 = vmul.f32 %v1152, %v1217
        %v1224 = vmul.f32 %v1153, %v1217
        %v1225 = vmul.f32 %v1154, %v1217
        %v1226 = vadd.f32 %v1208, %v1218
        %v1227 = vadd.f32 %v1209, %v1219
        %v1228 = vadd.f32 %v1210, %v1220
        %v1229 = vadd.f32 %v1211, %v1221
        %v1230 = vadd.f32 %v1212, %v1222
        %v1231 = vadd.f32 %v1213, %v1223
        %v1232 = vadd.f32 %v1214, %v1224
        %v1233 = vadd.f32 %v1215, %v1225
        %s1234 = scalar_lea.vmem %s3, 376
        %v1235 = vld [vmem:[%s1234] sm:$0xff]
        %v1236 = vmul.f32 %v1148, %v1235
        %v1237 = vmul.f32 %v1149, %v1235
        %v1238 = vmul.f32 %v1150, %v1235
        %v1239 = vmul.f32 %v1151, %v1235
        %v1240 = vmul.f32 %v1152, %v1235
        %v1241 = vmul.f32 %v1153, %v1235
        %v1242 = vmul.f32 %v1154, %v1235
        %v1243 = vmul.f32 %v1155, %v1235
        %v1244 = vadd.f32 %v1226, %v1236
        %v1245 = vadd.f32 %v1227, %v1237
        %v1246 = vadd.f32 %v1228, %v1238
        %v1247 = vadd.f32 %v1229, %v1239
        %v1248 = vadd.f32 %v1230, %v1240
        %v1249 = vadd.f32 %v1231, %v1241
        %v1250 = vadd.f32 %v1232, %v1242
        %v1251 = vadd.f32 %v1233, %v1243
        %s1252 = scalar_lea.vmem %s3, 464
        %v1253 = vld [vmem:[%s1252] sm:$0xff]
        %v1254 = vmul.f32 %v1149, %v1253
        %v1255 = vmul.f32 %v1150, %v1253
        %v1256 = vmul.f32 %v1151, %v1253
        %v1257 = vmul.f32 %v1152, %v1253
        %v1258 = vmul.f32 %v1153, %v1253
        %v1259 = vmul.f32 %v1154, %v1253
        %v1260 = vmul.f32 %v1155, %v1253
        %v1261 = vmul.f32 %v1156, %v1253
        %v1262 = vadd.f32 %v1244, %v1254
        %v1263 = vadd.f32 %v1245, %v1255
        %v1264 = vadd.f32 %v1246, %v1256
        %v1265 = vadd.f32 %v1247, %v1257
        %v1266 = vadd.f32 %v1248, %v1258
        %v1267 = vadd.f32 %v1249, %v1259
        %v1268 = vadd.f32 %v1250, %v1260
        %v1269 = vadd.f32 %v1251, %v1261
        %s1270 = scalar_lea.vmem %s3, 552
        %v1271 = vld [vmem:[%s1270] sm:$0xff]
        %v1272 = vmul.f32 %v1150, %v1271
        %v1273 = vmul.f32 %v1151, %v1271
        %v1274 = vmul.f32 %v1152, %v1271
        %v1275 = vmul.f32 %v1153, %v1271
        %v1276 = vmul.f32 %v1154, %v1271
        %v1277 = vmul.f32 %v1155, %v1271
        %v1278 = vmul.f32 %v1156, %v1271
        %v1279 = vmul.f32 %v1157, %v1271
        %v1280 = vadd.f32 %v1262, %v1272
        %v1281 = vadd.f32 %v1263, %v1273
        %v1282 = vadd.f32 %v1264, %v1274
        %v1283 = vadd.f32 %v1265, %v1275
        %v1284 = vadd.f32 %v1266, %v1276
        %v1285 = vadd.f32 %v1267, %v1277
        %v1286 = vadd.f32 %v1268, %v1278
        %v1287 = vadd.f32 %v1269, %v1279
        %s1288 = scalar_lea.vmem %s3, 640
        %v1289 = vld [vmem:[%s1288] sm:$0xff]
        %v1290 = vmul.f32 %v1151, %v1289
        %v1291 = vmul.f32 %v1152, %v1289
        %v1292 = vmul.f32 %v1153, %v1289
        %v1293 = vmul.f32 %v1154, %v1289
        %v1294 = vmul.f32 %v1155, %v1289
        %v1295 = vmul.f32 %v1156, %v1289
        %v1296 = vmul.f32 %v1157, %v1289
        %v1297 = vmul.f32 %v1158, %v1289
        %v1298 = vadd.f32 %v1280, %v1290
        %v1299 = vadd.f32 %v1281, %v1291
        %v1300 = vadd.f32 %v1282, %v1292
        %v1301 = vadd.f32 %v1283, %v1293
        %v1302 = vadd.f32 %v1284, %v1294
        %v1303 = vadd.f32 %v1285, %v1295
        %v1304 = vadd.f32 %v1286, %v1296
        %v1305 = vadd.f32 %v1287, %v1297
        %s1306 = scalar_lea.vmem %s3, 728
        %v1307 = vld [vmem:[%s1306] sm:$0xff]
        %v1308 = vmul.f32 %v1152, %v1307
        %v1309 = vmul.f32 %v1153, %v1307
        %v1310 = vmul.f32 %v1154, %v1307
        %v1311 = vmul.f32 %v1155, %v1307
        %v1312 = vmul.f32 %v1156, %v1307
        %v1313 = vmul.f32 %v1157, %v1307
        %v1314 = vmul.f32 %v1158, %v1307
        %v1315 = vmul.f32 %v1159, %v1307
        %v1316 = vadd.f32 %v1298, %v1308
        %v1317 = vadd.f32 %v1299, %v1309
        %v1318 = vadd.f32 %v1300, %v1310
        %v1319 = vadd.f32 %v1301, %v1311
        %v1320 = vadd.f32 %v1302, %v1312
        %v1321 = vadd.f32 %v1303, %v1313
        %v1322 = vadd.f32 %v1304, %v1314
        %v1323 = vadd.f32 %v1305, %v1315
        %s1324 = scalar_lea.vmem %s3, 816
        %v1325 = vld [vmem:[%s1324] sm:$0xff]
        %v1326 = vmul.f32 %v1153, %v1325
        %v1327 = vmul.f32 %v1154, %v1325
        %v1328 = vmul.f32 %v1155, %v1325
        %v1329 = vmul.f32 %v1156, %v1325
        %v1330 = vmul.f32 %v1157, %v1325
        %v1331 = vmul.f32 %v1158, %v1325
        %v1332 = vmul.f32 %v1159, %v1325
        %v1333 = vmul.f32 %v1160, %v1325
        %v1334 = vadd.f32 %v1316, %v1326
        %v1335 = vadd.f32 %v1317, %v1327
        %v1336 = vadd.f32 %v1318, %v1328
        %v1337 = vadd.f32 %v1319, %v1329
        %v1338 = vadd.f32 %v1320, %v1330
        %v1339 = vadd.f32 %v1321, %v1331
        %v1340 = vadd.f32 %v1322, %v1332
        %v1341 = vadd.f32 %v1323, %v1333
        %s1342 = scalar_lea.vmem %s3, 904
        %v1343 = vld [vmem:[%s1342] sm:$0xff]
        %v1344 = vmul.f32 %v1154, %v1343
        %v1345 = vmul.f32 %v1155, %v1343
        %v1346 = vmul.f32 %v1156, %v1343
        %v1347 = vmul.f32 %v1157, %v1343
        %v1348 = vmul.f32 %v1158, %v1343
        %v1349 = vmul.f32 %v1159, %v1343
        %v1350 = vmul.f32 %v1160, %v1343
        %v1351 = vmul.f32 %v1161, %v1343
        %v1352 = vadd.f32 %v1334, %v1344
        %v1353 = vadd.f32 %v1335, %v1345
        %v1354 = vadd.f32 %v1336, %v1346
        %v1355 = vadd.f32 %v1337, %v1347
        %v1356 = vadd.f32 %v1338, %v1348
        %v1357 = vadd.f32 %v1339, %v1349
        %v1358 = vadd.f32 %v1340, %v1350
        %v1359 = vadd.f32 %v1341, %v1351
        %v1360 = vld [vmem:[#allocation2 + $0x7] sm:$0xff]
        %v1361 = vld [vmem:[#allocation2 + $0x1f] sm:$0xff]
        %v1362 = vld [vmem:[#allocation2 + $0x37] sm:$0xff]
        %v1363 = vld [vmem:[#allocation2 + $0x4f] sm:$0xff]
        %v1364 = vld [vmem:[#allocation2 + $0x67] sm:$0xff]
        %v1365 = vld [vmem:[#allocation2 + $0x7f] sm:$0xff]
        %v1366 = vld [vmem:[#allocation2 + $0x97] sm:$0xff]
        %v1367 = vld [vmem:[#allocation2 + $0xaf] sm:$0xff]
        %v1368 = vld [vmem:[#allocation2 + $0xc7] sm:$0xff]
        %v1369 = vld [vmem:[#allocation2 + $0xdf] sm:$0xff]
        %v1370 = vld [vmem:[#allocation2 + $0xf7] sm:$0xff]
        %v1371 = vld [vmem:[#allocation2 + $0x10f] sm:$0xff]
        %v1372 = vld [vmem:[#allocation2 + $0x127] sm:$0xff]
        %v1373 = vld [vmem:[#allocation2 + $0x13f] sm:$0xff]
        %v1374 = vld [vmem:[#allocation2 + $0x157] sm:$0xff]
        %v1375 = vld [vmem:[#allocation2 + $0x16f] sm:$0xff]
        %v1376 = vld [vmem:[#allocation2 + $0x187] sm:$0xff]
        %v1377 = vld [vmem:[#allocation2 + $0x19f] sm:$0xff]
        %s1378 = scalar_lea.vmem %s3, 32
        %v1379 = vld [vmem:[%s1378] sm:$0xff]
        %v1380 = vmul.f32 %v1360, %v1379
        %v1381 = vmul.f32 %v1361, %v1379
        %v1382 = vmul.f32 %v1362, %v1379
        %v1383 = vmul.f32 %v1363, %v1379
        %v1384 = vmul.f32 %v1364, %v1379
        %v1385 = vmul.f32 %v1365, %v1379
        %v1386 = vmul.f32 %v1366, %v1379
        %v1387 = vmul.f32 %v1367, %v1379
        %v1388 = vadd.f32 %v1352, %v1380
        %v1389 = vadd.f32 %v1353, %v1381
        %v1390 = vadd.f32 %v1354, %v1382
        %v1391 = vadd.f32 %v1355, %v1383
        %v1392 = vadd.f32 %v1356, %v1384
        %v1393 = vadd.f32 %v1357, %v1385
        %v1394 = vadd.f32 %v1358, %v1386
        %v1395 = vadd.f32 %v1359, %v1387
        %s1396 = scalar_lea.vmem %s3, 120
        %v1397 = vld [vmem:[%s1396] sm:$0xff]
        %v1398 = vmul.f32 %v1361, %v1397
        %v1399 = vmul.f32 %v1362, %v1397
        %v1400 = vmul.f32 %v1363, %v1397
        %v1401 = vmul.f32 %v1364, %v1397
        %v1402 = vmul.f32 %v1365, %v1397
        %v1403 = vmul.f32 %v1366, %v1397
        %v1404 = vmul.f32 %v1367, %v1397
        %v1405 = vmul.f32 %v1368, %v1397
        %v1406 = vadd.f32 %v1388, %v1398
        %v1407 = vadd.f32 %v1389, %v1399
        %v1408 = vadd.f32 %v1390, %v1400
        %v1409 = vadd.f32 %v1391, %v1401
        %v1410 = vadd.f32 %v1392, %v1402
        %v1411 = vadd.f32 %v1393, %v1403
        %v1412 = vadd.f32 %v1394, %v1404
        %v1413 = vadd.f32 %v1395, %v1405
        %s1414 = scalar_lea.vmem %s3, 208
        %v1415 = vld [vmem:[%s1414] sm:$0xff]
        %v1416 = vmul.f32 %v1362, %v1415
        %v1417 = vmul.f32 %v1363, %v1415
        %v1418 = vmul.f32 %v1364, %v1415
        %v1419 = vmul.f32 %v1365, %v1415
        %v1420 = vmul.f32 %v1366, %v1415
        %v1421 = vmul.f32 %v1367, %v1415
        %v1422 = vmul.f32 %v1368, %v1415
        %v1423 = vmul.f32 %v1369, %v1415
        %v1424 = vadd.f32 %v1406, %v1416
        %v1425 = vadd.f32 %v1407, %v1417
        %v1426 = vadd.f32 %v1408, %v1418
        %v1427 = vadd.f32 %v1409, %v1419
        %v1428 = vadd.f32 %v1410, %v1420
        %v1429 = vadd.f32 %v1411, %v1421
        %v1430 = vadd.f32 %v1412, %v1422
        %v1431 = vadd.f32 %v1413, %v1423
        %s1432 = scalar_lea.vmem %s3, 296
        %v1433 = vld [vmem:[%s1432] sm:$0xff]
        %v1434 = vmul.f32 %v1363, %v1433
        %v1435 = vmul.f32 %v1364, %v1433
        %v1436 = vmul.f32 %v1365, %v1433
        %v1437 = vmul.f32 %v1366, %v1433
        %v1438 = vmul.f32 %v1367, %v1433
        %v1439 = vmul.f32 %v1368, %v1433
        %v1440 = vmul.f32 %v1369, %v1433
        %v1441 = vmul.f32 %v1370, %v1433
        %v1442 = vadd.f32 %v1424, %v1434
        %v1443 = vadd.f32 %v1425, %v1435
        %v1444 = vadd.f32 %v1426, %v1436
        %v1445 = vadd.f32 %v1427, %v1437
        %v1446 = vadd.f32 %v1428, %v1438
        %v1447 = vadd.f32 %v1429, %v1439
        %v1448 = vadd.f32 %v1430, %v1440
        %v1449 = vadd.f32 %v1431, %v1441
        %s1450 = scalar_lea.vmem %s3, 384
        %v1451 = vld [vmem:[%s1450] sm:$0xff]
        %v1452 = vmul.f32 %v1364, %v1451
        %v1453 = vmul.f32 %v1365, %v1451
        %v1454 = vmul.f32 %v1366, %v1451
        %v1455 = vmul.f32 %v1367, %v1451
        %v1456 = vmul.f32 %v1368, %v1451
        %v1457 = vmul.f32 %v1369, %v1451
        %v1458 = vmul.f32 %v1370, %v1451
        %v1459 = vmul.f32 %v1371, %v1451
        %v1460 = vadd.f32 %v1442, %v1452
        %v1461 = vadd.f32 %v1443, %v1453
        %v1462 = vadd.f32 %v1444, %v1454
        %v1463 = vadd.f32 %v1445, %v1455
        %v1464 = vadd.f32 %v1446, %v1456
        %v1465 = vadd.f32 %v1447, %v1457
        %v1466 = vadd.f32 %v1448, %v1458
        %v1467 = vadd.f32 %v1449, %v1459
        %s1468 = scalar_lea.vmem %s3, 472
        %v1469 = vld [vmem:[%s1468] sm:$0xff]
        %v1470 = vmul.f32 %v1365, %v1469
        %v1471 = vmul.f32 %v1366, %v1469
        %v1472 = vmul.f32 %v1367, %v1469
        %v1473 = vmul.f32 %v1368, %v1469
        %v1474 = vmul.f32 %v1369, %v1469
        %v1475 = vmul.f32 %v1370, %v1469
        %v1476 = vmul.f32 %v1371, %v1469
        %v1477 = vmul.f32 %v1372, %v1469
        %v1478 = vadd.f32 %v1460, %v1470
        %v1479 = vadd.f32 %v1461, %v1471
        %v1480 = vadd.f32 %v1462, %v1472
        %v1481 = vadd.f32 %v1463, %v1473
        %v1482 = vadd.f32 %v1464, %v1474
        %v1483 = vadd.f32 %v1465, %v1475
        %v1484 = vadd.f32 %v1466, %v1476
        %v1485 = vadd.f32 %v1467, %v1477
        %s1486 = scalar_lea.vmem %s3, 560
        %v1487 = vld [vmem:[%s1486] sm:$0xff]
        %v1488 = vmul.f32 %v1366, %v1487
        %v1489 = vmul.f32 %v1367, %v1487
        %v1490 = vmul.f32 %v1368, %v1487
        %v1491 = vmul.f32 %v1369, %v1487
        %v1492 = vmul.f32 %v1370, %v1487
        %v1493 = vmul.f32 %v1371, %v1487
        %v1494 = vmul.f32 %v1372, %v1487
        %v1495 = vmul.f32 %v1373, %v1487
        %v1496 = vadd.f32 %v1478, %v1488
        %v1497 = vadd.f32 %v1479, %v1489
        %v1498 = vadd.f32 %v1480, %v1490
        %v1499 = vadd.f32 %v1481, %v1491
        %v1500 = vadd.f32 %v1482, %v1492
        %v1501 = vadd.f32 %v1483, %v1493
        %v1502 = vadd.f32 %v1484, %v1494
        %v1503 = vadd.f32 %v1485, %v1495
        %s1504 = scalar_lea.vmem %s3, 648
        %v1505 = vld [vmem:[%s1504] sm:$0xff]
        %v1506 = vmul.f32 %v1367, %v1505
        %v1507 = vmul.f32 %v1368, %v1505
        %v1508 = vmul.f32 %v1369, %v1505
        %v1509 = vmul.f32 %v1370, %v1505
        %v1510 = vmul.f32 %v1371, %v1505
        %v1511 = vmul.f32 %v1372, %v1505
        %v1512 = vmul.f32 %v1373, %v1505
        %v1513 = vmul.f32 %v1374, %v1505
        %v1514 = vadd.f32 %v1496, %v1506
        %v1515 = vadd.f32 %v1497, %v1507
        %v1516 = vadd.f32 %v1498, %v1508
        %v1517 = vadd.f32 %v1499, %v1509
        %v1518 = vadd.f32 %v1500, %v1510
        %v1519 = vadd.f32 %v1501, %v1511
        %v1520 = vadd.f32 %v1502, %v1512
        %v1521 = vadd.f32 %v1503, %v1513
        %s1522 = scalar_lea.vmem %s3, 736
        %v1523 = vld [vmem:[%s1522] sm:$0xff]
        %v1524 = vmul.f32 %v1368, %v1523
        %v1525 = vmul.f32 %v1369, %v1523
        %v1526 = vmul.f32 %v1370, %v1523
        %v1527 = vmul.f32 %v1371, %v1523
        %v1528 = vmul.f32 %v1372, %v1523
        %v1529 = vmul.f32 %v1373, %v1523
        %v1530 = vmul.f32 %v1374, %v1523
        %v1531 = vmul.f32 %v1375, %v1523
        %v1532 = vadd.f32 %v1514, %v1524
        %v1533 = vadd.f32 %v1515, %v1525
        %v1534 = vadd.f32 %v1516, %v1526
        %v1535 = vadd.f32 %v1517, %v1527
        %v1536 = vadd.f32 %v1518, %v1528
        %v1537 = vadd.f32 %v1519, %v1529
        %v1538 = vadd.f32 %v1520, %v1530
        %v1539 = vadd.f32 %v1521, %v1531
        %s1540 = scalar_lea.vmem %s3, 824
        %v1541 = vld [vmem:[%s1540] sm:$0xff]
        %v1542 = vmul.f32 %v1369, %v1541
        %v1543 = vmul.f32 %v1370, %v1541
        %v1544 = vmul.f32 %v1371, %v1541
        %v1545 = vmul.f32 %v1372, %v1541
        %v1546 = vmul.f32 %v1373, %v1541
        %v1547 = vmul.f32 %v1374, %v1541
        %v1548 = vmul.f32 %v1375, %v1541
        %v1549 = vmul.f32 %v1376, %v1541
        %v1550 = vadd.f32 %v1532, %v1542
        %v1551 = vadd.f32 %v1533, %v1543
        %v1552 = vadd.f32 %v1534, %v1544
        %v1553 = vadd.f32 %v1535, %v1545
        %v1554 = vadd.f32 %v1536, %v1546
        %v1555 = vadd.f32 %v1537, %v1547
        %v1556 = vadd.f32 %v1538, %v1548
        %v1557 = vadd.f32 %v1539, %v1549
        %s1558 = scalar_lea.vmem %s3, 912
        %v1559 = vld [vmem:[%s1558] sm:$0xff]
        %v1560 = vmul.f32 %v1370, %v1559
        %v1561 = vmul.f32 %v1371, %v1559
        %v1562 = vmul.f32 %v1372, %v1559
        %v1563 = vmul.f32 %v1373, %v1559
        %v1564 = vmul.f32 %v1374, %v1559
        %v1565 = vmul.f32 %v1375, %v1559
        %v1566 = vmul.f32 %v1376, %v1559
        %v1567 = vmul.f32 %v1377, %v1559
        %v1568 = vadd.f32 %v1550, %v1560
        %v1569 = vadd.f32 %v1551, %v1561
        %v1570 = vadd.f32 %v1552, %v1562
        %v1571 = vadd.f32 %v1553, %v1563
        %v1572 = vadd.f32 %v1554, %v1564
        %v1573 = vadd.f32 %v1555, %v1565
        %v1574 = vadd.f32 %v1556, %v1566
        %v1575 = vadd.f32 %v1557, %v1567
        %v1576 = vld [vmem:[#allocation2 + $0x8] sm:$0xff]
        %v1577 = vld [vmem:[#allocation2 + $0x20] sm:$0xff]
        %v1578 = vld [vmem:[#allocation2 + $0x38] sm:$0xff]
        %v1579 = vld [vmem:[#allocation2 + $0x50] sm:$0xff]
        %v1580 = vld [vmem:[#allocation2 + $0x68] sm:$0xff]
        %v1581 = vld [vmem:[#allocation2 + $0x80] sm:$0xff]
        %v1582 = vld [vmem:[#allocation2 + $0x98] sm:$0xff]
        %v1583 = vld [vmem:[#allocation2 + $0xb0] sm:$0xff]
        %v1584 = vld [vmem:[#allocation2 + $0xc8] sm:$0xff]
        %v1585 = vld [vmem:[#allocation2 + $0xe0] sm:$0xff]
        %v1586 = vld [vmem:[#allocation2 + $0xf8] sm:$0xff]
        %v1587 = vld [vmem:[#allocation2 + $0x110] sm:$0xff]
        %v1588 = vld [vmem:[#allocation2 + $0x128] sm:$0xff]
        %v1589 = vld [vmem:[#allocation2 + $0x140] sm:$0xff]
        %v1590 = vld [vmem:[#allocation2 + $0x158] sm:$0xff]
        %v1591 = vld [vmem:[#allocation2 + $0x170] sm:$0xff]
        %v1592 = vld [vmem:[#allocation2 + $0x188] sm:$0xff]
        %v1593 = vld [vmem:[#allocation2 + $0x1a0] sm:$0xff]
        %s1594 = scalar_lea.vmem %s3, 40
        %v1595 = vld [vmem:[%s1594] sm:$0xff]
        %v1596 = vmul.f32 %v1576, %v1595
        %v1597 = vmul.f32 %v1577, %v1595
        %v1598 = vmul.f32 %v1578, %v1595
        %v1599 = vmul.f32 %v1579, %v1595
        %v1600 = vmul.f32 %v1580, %v1595
        %v1601 = vmul.f32 %v1581, %v1595
        %v1602 = vmul.f32 %v1582, %v1595
        %v1603 = vmul.f32 %v1583, %v1595
        %v1604 = vadd.f32 %v1568, %v1596
        %v1605 = vadd.f32 %v1569, %v1597
        %v1606 = vadd.f32 %v1570, %v1598
        %v1607 = vadd.f32 %v1571, %v1599
        %v1608 = vadd.f32 %v1572, %v1600
        %v1609 = vadd.f32 %v1573, %v1601
        %v1610 = vadd.f32 %v1574, %v1602
        %v1611 = vadd.f32 %v1575, %v1603
        %s1612 = scalar_lea.vmem %s3, 128
        %v1613 = vld [vmem:[%s1612] sm:$0xff]
        %v1614 = vmul.f32 %v1577, %v1613
        %v1615 = vmul.f32 %v1578, %v1613
        %v1616 = vmul.f32 %v1579, %v1613
        %v1617 = vmul.f32 %v1580, %v1613
        %v1618 = vmul.f32 %v1581, %v1613
        %v1619 = vmul.f32 %v1582, %v1613
        %v1620 = vmul.f32 %v1583, %v1613
        %v1621 = vmul.f32 %v1584, %v1613
        %v1622 = vadd.f32 %v1604, %v1614
        %v1623 = vadd.f32 %v1605, %v1615
        %v1624 = vadd.f32 %v1606, %v1616
        %v1625 = vadd.f32 %v1607, %v1617
        %v1626 = vadd.f32 %v1608, %v1618
        %v1627 = vadd.f32 %v1609, %v1619
        %v1628 = vadd.f32 %v1610, %v1620
        %v1629 = vadd.f32 %v1611, %v1621
        %s1630 = scalar_lea.vmem %s3, 216
        %v1631 = vld [vmem:[%s1630] sm:$0xff]
        %v1632 = vmul.f32 %v1578, %v1631
        %v1633 = vmul.f32 %v1579, %v1631
        %v1634 = vmul.f32 %v1580, %v1631
        %v1635 = vmul.f32 %v1581, %v1631
        %v1636 = vmul.f32 %v1582, %v1631
        %v1637 = vmul.f32 %v1583, %v1631
        %v1638 = vmul.f32 %v1584, %v1631
        %v1639 = vmul.f32 %v1585, %v1631
        %v1640 = vadd.f32 %v1622, %v1632
        %v1641 = vadd.f32 %v1623, %v1633
        %v1642 = vadd.f32 %v1624, %v1634
        %v1643 = vadd.f32 %v1625, %v1635
        %v1644 = vadd.f32 %v1626, %v1636
        %v1645 = vadd.f32 %v1627, %v1637
        %v1646 = vadd.f32 %v1628, %v1638
        %v1647 = vadd.f32 %v1629, %v1639
        %s1648 = scalar_lea.vmem %s3, 304
        %v1649 = vld [vmem:[%s1648] sm:$0xff]
        %v1650 = vmul.f32 %v1579, %v1649
        %v1651 = vmul.f32 %v1580, %v1649
        %v1652 = vmul.f32 %v1581, %v1649
        %v1653 = vmul.f32 %v1582, %v1649
        %v1654 = vmul.f32 %v1583, %v1649
        %v1655 = vmul.f32 %v1584, %v1649
        %v1656 = vmul.f32 %v1585, %v1649
        %v1657 = vmul.f32 %v1586, %v1649
        %v1658 = vadd.f32 %v1640, %v1650
        %v1659 = vadd.f32 %v1641, %v1651
        %v1660 = vadd.f32 %v1642, %v1652
        %v1661 = vadd.f32 %v1643, %v1653
        %v1662 = vadd.f32 %v1644, %v1654
        %v1663 = vadd.f32 %v1645, %v1655
        %v1664 = vadd.f32 %v1646, %v1656
        %v1665 = vadd.f32 %v1647, %v1657
        %s1666 = scalar_lea.vmem %s3, 392
        %v1667 = vld [vmem:[%s1666] sm:$0xff]
        %v1668 = vmul.f32 %v1580, %v1667
        %v1669 = vmul.f32 %v1581, %v1667
        %v1670 = vmul.f32 %v1582, %v1667
        %v1671 = vmul.f32 %v1583, %v1667
        %v1672 = vmul.f32 %v1584, %v1667
        %v1673 = vmul.f32 %v1585, %v1667
        %v1674 = vmul.f32 %v1586, %v1667
        %v1675 = vmul.f32 %v1587, %v1667
        %v1676 = vadd.f32 %v1658, %v1668
        %v1677 = vadd.f32 %v1659, %v1669
        %v1678 = vadd.f32 %v1660, %v1670
        %v1679 = vadd.f32 %v1661, %v1671
        %v1680 = vadd.f32 %v1662, %v1672
        %v1681 = vadd.f32 %v1663, %v1673
        %v1682 = vadd.f32 %v1664, %v1674
        %v1683 = vadd.f32 %v1665, %v1675
        %s1684 = scalar_lea.vmem %s3, 480
        %v1685 = vld [vmem:[%s1684] sm:$0xff]
        %v1686 = vmul.f32 %v1581, %v1685
        %v1687 = vmul.f32 %v1582, %v1685
        %v1688 = vmul.f32 %v1583, %v1685
        %v1689 = vmul.f32 %v1584, %v1685
        %v1690 = vmul.f32 %v1585, %v1685
        %v1691 = vmul.f32 %v1586, %v1685
        %v1692 = vmul.f32 %v1587, %v1685
        %v1693 = vmul.f32 %v1588, %v1685
        %v1694 = vadd.f32 %v1676, %v1686
        %v1695 = vadd.f32 %v1677, %v1687
        %v1696 = vadd.f32 %v1678, %v1688
        %v1697 = vadd.f32 %v1679, %v1689
        %v1698 = vadd.f32 %v1680, %v1690
        %v1699 = vadd.f32 %v1681, %v1691
        %v1700 = vadd.f32 %v1682, %v1692
        %v1701 = vadd.f32 %v1683, %v1693
        %s1702 = scalar_lea.vmem %s3, 568
        %v1703 = vld [vmem:[%s1702] sm:$0xff]
        %v1704 = vmul.f32 %v1582, %v1703
        %v1705 = vmul.f32 %v1583, %v1703
        %v1706 = vmul.f32 %v1584, %v1703
        %v1707 = vmul.f32 %v1585, %v1703
        %v1708 = vmul.f32 %v1586, %v1703
        %v1709 = vmul.f32 %v1587, %v1703
        %v1710 = vmul.f32 %v1588, %v1703
        %v1711 = vmul.f32 %v1589, %v1703
        %v1712 = vadd.f32 %v1694, %v1704
        %v1713 = vadd.f32 %v1695, %v1705
        %v1714 = vadd.f32 %v1696, %v1706
        %v1715 = vadd.f32 %v1697, %v1707
        %v1716 = vadd.f32 %v1698, %v1708
        %v1717 = vadd.f32 %v1699, %v1709
        %v1718 = vadd.f32 %v1700, %v1710
        %v1719 = vadd.f32 %v1701, %v1711
        %s1720 = scalar_lea.vmem %s3, 656
        %v1721 = vld [vmem:[%s1720] sm:$0xff]
        %v1722 = vmul.f32 %v1583, %v1721
        %v1723 = vmul.f32 %v1584, %v1721
        %v1724 = vmul.f32 %v1585, %v1721
        %v1725 = vmul.f32 %v1586, %v1721
        %v1726 = vmul.f32 %v1587, %v1721
        %v1727 = vmul.f32 %v1588, %v1721
        %v1728 = vmul.f32 %v1589, %v1721
        %v1729 = vmul.f32 %v1590, %v1721
        %v1730 = vadd.f32 %v1712, %v1722
        %v1731 = vadd.f32 %v1713, %v1723
        %v1732 = vadd.f32 %v1714, %v1724
        %v1733 = vadd.f32 %v1715, %v1725
        %v1734 = vadd.f32 %v1716, %v1726
        %v1735 = vadd.f32 %v1717, %v1727
        %v1736 = vadd.f32 %v1718, %v1728
        %v1737 = vadd.f32 %v1719, %v1729
        %s1738 = scalar_lea.vmem %s3, 744
        %v1739 = vld [vmem:[%s1738] sm:$0xff]
        %v1740 = vmul.f32 %v1584, %v1739
        %v1741 = vmul.f32 %v1585, %v1739
        %v1742 = vmul.f32 %v1586, %v1739
        %v1743 = vmul.f32 %v1587, %v1739
        %v1744 = vmul.f32 %v1588, %v1739
        %v1745 = vmul.f32 %v1589, %v1739
        %v1746 = vmul.f32 %v1590, %v1739
        %v1747 = vmul.f32 %v1591, %v1739
        %v1748 = vadd.f32 %v1730, %v1740
        %v1749 = vadd.f32 %v1731, %v1741
        %v1750 = vadd.f32 %v1732, %v1742
        %v1751 = vadd.f32 %v1733, %v1743
        %v1752 = vadd.f32 %v1734, %v1744
        %v1753 = vadd.f32 %v1735, %v1745
        %v1754 = vadd.f32 %v1736, %v1746
        %v1755 = vadd.f32 %v1737, %v1747
        %s1756 = scalar_lea.vmem %s3, 832
        %v1757 = vld [vmem:[%s1756] sm:$0xff]
        %v1758 = vmul.f32 %v1585, %v1757
        %v1759 = vmul.f32 %v1586, %v1757
        %v1760 = vmul.f32 %v1587, %v1757
        %v1761 = vmul.f32 %v1588, %v1757
        %v1762 = vmul.f32 %v1589, %v1757
        %v1763 = vmul.f32 %v1590, %v1757
        %v1764 = vmul.f32 %v1591, %v1757
        %v1765 = vmul.f32 %v1592, %v1757
        %v1766 = vadd.f32 %v1748, %v1758
        %v1767 = vadd.f32 %v1749, %v1759
        %v1768 = vadd.f32 %v1750, %v1760
        %v1769 = vadd.f32 %v1751, %v1761
        %v1770 = vadd.f32 %v1752, %v1762
        %v1771 = vadd.f32 %v1753, %v1763
        %v1772 = vadd.f32 %v1754, %v1764
        %v1773 = vadd.f32 %v1755, %v1765
        %s1774 = scalar_lea.vmem %s3, 920
        %v1775 = vld [vmem:[%s1774] sm:$0xff]
        %v1776 = vmul.f32 %v1586, %v1775
        %v1777 = vmul.f32 %v1587, %v1775
        %v1778 = vmul.f32 %v1588, %v1775
        %v1779 = vmul.f32 %v1589, %v1775
        %v1780 = vmul.f32 %v1590, %v1775
        %v1781 = vmul.f32 %v1591, %v1775
        %v1782 = vmul.f32 %v1592, %v1775
        %v1783 = vmul.f32 %v1593, %v1775
        %v1784 = vadd.f32 %v1766, %v1776
        %v1785 = vadd.f32 %v1767, %v1777
        %v1786 = vadd.f32 %v1768, %v1778
        %v1787 = vadd.f32 %v1769, %v1779
        %v1788 = vadd.f32 %v1770, %v1780
        %v1789 = vadd.f32 %v1771, %v1781
        %v1790 = vadd.f32 %v1772, %v1782
        %v1791 = vadd.f32 %v1773, %v1783
        %v1792 = vld [vmem:[#allocation2 + $0x9] sm:$0xff]
        %v1793 = vld [vmem:[#allocation2 + $0x21] sm:$0xff]
        %v1794 = vld [vmem:[#allocation2 + $0x39] sm:$0xff]
        %v1795 = vld [vmem:[#allocation2 + $0x51] sm:$0xff]
        %v1796 = vld [vmem:[#allocation2 + $0x69] sm:$0xff]
        %v1797 = vld [vmem:[#allocation2 + $0x81] sm:$0xff]
        %v1798 = vld [vmem:[#allocation2 + $0x99] sm:$0xff]
        %v1799 = vld [vmem:[#allocation2 + $0xb1] sm:$0xff]
        %v1800 = vld [vmem:[#allocation2 + $0xc9] sm:$0xff]
        %v1801 = vld [vmem:[#allocation2 + $0xe1] sm:$0xff]
        %v1802 = vld [vmem:[#allocation2 + $0xf9] sm:$0xff]
        %v1803 = vld [vmem:[#allocation2 + $0x111] sm:$0xff]
        %v1804 = vld [vmem:[#allocation2 + $0x129] sm:$0xff]
        %v1805 = vld [vmem:[#allocation2 + $0x141] sm:$0xff]
        %v1806 = vld [vmem:[#allocation2 + $0x159] sm:$0xff]
        %v1807 = vld [vmem:[#allocation2 + $0x171] sm:$0xff]
        %v1808 = vld [vmem:[#allocation2 + $0x189] sm:$0xff]
        %v1809 = vld [vmem:[#allocation2 + $0x1a1] sm:$0xff]
        %s1810 = scalar_lea.vmem %s3, 48
        %v1811 = vld [vmem:[%s1810] sm:$0xff]
        %v1812 = vmul.f32 %v1792, %v1811
        %v1813 = vmul.f32 %v1793, %v1811
        %v1814 = vmul.f32 %v1794, %v1811
        %v1815 = vmul.f32 %v1795, %v1811
        %v1816 = vmul.f32 %v1796, %v1811
        %v1817 = vmul.f32 %v1797, %v1811
        %v1818 = vmul.f32 %v1798, %v1811
        %v1819 = vmul.f32 %v1799, %v1811
        %v1820 = vadd.f32 %v1784, %v1812
        %v1821 = vadd.f32 %v1785, %v1813
        %v1822 = vadd.f32 %v1786, %v1814
        %v1823 = vadd.f32 %v1787, %v1815
        %v1824 = vadd.f32 %v1788, %v1816
        %v1825 = vadd.f32 %v1789, %v1817
        %v1826 = vadd.f32 %v1790, %v1818
        %v1827 = vadd.f32 %v1791, %v1819
        %s1828 = scalar_lea.vmem %s3, 136
        %v1829 = vld [vmem:[%s1828] sm:$0xff]
        %v1830 = vmul.f32 %v1793, %v1829
        %v1831 = vmul.f32 %v1794, %v1829
        %v1832 = vmul.f32 %v1795, %v1829
        %v1833 = vmul.f32 %v1796, %v1829
        %v1834 = vmul.f32 %v1797, %v1829
        %v1835 = vmul.f32 %v1798, %v1829
        %v1836 = vmul.f32 %v1799, %v1829
        %v1837 = vmul.f32 %v1800, %v1829
        %v1838 = vadd.f32 %v1820, %v1830
        %v1839 = vadd.f32 %v1821, %v1831
        %v1840 = vadd.f32 %v1822, %v1832
        %v1841 = vadd.f32 %v1823, %v1833
        %v1842 = vadd.f32 %v1824, %v1834
        %v1843 = vadd.f32 %v1825, %v1835
        %v1844 = vadd.f32 %v1826, %v1836
        %v1845 = vadd.f32 %v1827, %v1837
        %s1846 = scalar_lea.vmem %s3, 224
        %v1847 = vld [vmem:[%s1846] sm:$0xff]
        %v1848 = vmul.f32 %v1794, %v1847
        %v1849 = vmul.f32 %v1795, %v1847
        %v1850 = vmul.f32 %v1796, %v1847
        %v1851 = vmul.f32 %v1797, %v1847
        %v1852 = vmul.f32 %v1798, %v1847
        %v1853 = vmul.f32 %v1799, %v1847
        %v1854 = vmul.f32 %v1800, %v1847
        %v1855 = vmul.f32 %v1801, %v1847
        %v1856 = vadd.f32 %v1838, %v1848
        %v1857 = vadd.f32 %v1839, %v1849
        %v1858 = vadd.f32 %v1840, %v1850
        %v1859 = vadd.f32 %v1841, %v1851
        %v1860 = vadd.f32 %v1842, %v1852
        %v1861 = vadd.f32 %v1843, %v1853
        %v1862 = vadd.f32 %v1844, %v1854
        %v1863 = vadd.f32 %v1845, %v1855
        %s1864 = scalar_lea.vmem %s3, 312
        %v1865 = vld [vmem:[%s1864] sm:$0xff]
        %v1866 = vmul.f32 %v1795, %v1865
        %v1867 = vmul.f32 %v1796, %v1865
        %v1868 = vmul.f32 %v1797, %v1865
        %v1869 = vmul.f32 %v1798, %v1865
        %v1870 = vmul.f32 %v1799, %v1865
        %v1871 = vmul.f32 %v1800, %v1865
        %v1872 = vmul.f32 %v1801, %v1865
        %v1873 = vmul.f32 %v1802, %v1865
        %v1874 = vadd.f32 %v1856, %v1866
        %v1875 = vadd.f32 %v1857, %v1867
        %v1876 = vadd.f32 %v1858, %v1868
        %v1877 = vadd.f32 %v1859, %v1869
        %v1878 = vadd.f32 %v1860, %v1870
        %v1879 = vadd.f32 %v1861, %v1871
        %v1880 = vadd.f32 %v1862, %v1872
        %v1881 = vadd.f32 %v1863, %v1873
        %s1882 = scalar_lea.vmem %s3, 400
        %v1883 = vld [vmem:[%s1882] sm:$0xff]
        %v1884 = vmul.f32 %v1796, %v1883
        %v1885 = vmul.f32 %v1797, %v1883
        %v1886 = vmul.f32 %v1798, %v1883
        %v1887 = vmul.f32 %v1799, %v1883
        %v1888 = vmul.f32 %v1800, %v1883
        %v1889 = vmul.f32 %v1801, %v1883
        %v1890 = vmul.f32 %v1802, %v1883
        %v1891 = vmul.f32 %v1803, %v1883
        %v1892 = vadd.f32 %v1874, %v1884
        %v1893 = vadd.f32 %v1875, %v1885
        %v1894 = vadd.f32 %v1876, %v1886
        %v1895 = vadd.f32 %v1877, %v1887
        %v1896 = vadd.f32 %v1878, %v1888
        %v1897 = vadd.f32 %v1879, %v1889
        %v1898 = vadd.f32 %v1880, %v1890
        %v1899 = vadd.f32 %v1881, %v1891
        %s1900 = scalar_lea.vmem %s3, 488
        %v1901 = vld [vmem:[%s1900] sm:$0xff]
        %v1902 = vmul.f32 %v1797, %v1901
        %v1903 = vmul.f32 %v1798, %v1901
        %v1904 = vmul.f32 %v1799, %v1901
        %v1905 = vmul.f32 %v1800, %v1901
        %v1906 = vmul.f32 %v1801, %v1901
        %v1907 = vmul.f32 %v1802, %v1901
        %v1908 = vmul.f32 %v1803, %v1901
        %v1909 = vmul.f32 %v1804, %v1901
        %v1910 = vadd.f32 %v1892, %v1902
        %v1911 = vadd.f32 %v1893, %v1903
        %v1912 = vadd.f32 %v1894, %v1904
        %v1913 = vadd.f32 %v1895, %v1905
        %v1914 = vadd.f32 %v1896, %v1906
        %v1915 = vadd.f32 %v1897, %v1907
        %v1916 = vadd.f32 %v1898, %v1908
        %v1917 = vadd.f32 %v1899, %v1909
        %s1918 = scalar_lea.vmem %s3, 576
        %v1919 = vld [vmem:[%s1918] sm:$0xff]
        %v1920 = vmul.f32 %v1798, %v1919
        %v1921 = vmul.f32 %v1799, %v1919
        %v1922 = vmul.f32 %v1800, %v1919
        %v1923 = vmul.f32 %v1801, %v1919
        %v1924 = vmul.f32 %v1802, %v1919
        %v1925 = vmul.f32 %v1803, %v1919
        %v1926 = vmul.f32 %v1804, %v1919
        %v1927 = vmul.f32 %v1805, %v1919
        %v1928 = vadd.f32 %v1910, %v1920
        %v1929 = vadd.f32 %v1911, %v1921
        %v1930 = vadd.f32 %v1912, %v1922
        %v1931 = vadd.f32 %v1913, %v1923
        %v1932 = vadd.f32 %v1914, %v1924
        %v1933 = vadd.f32 %v1915, %v1925
        %v1934 = vadd.f32 %v1916, %v1926
        %v1935 = vadd.f32 %v1917, %v1927
        %s1936 = scalar_lea.vmem %s3, 664
        %v1937 = vld [vmem:[%s1936] sm:$0xff]
        %v1938 = vmul.f32 %v1799, %v1937
        %v1939 = vmul.f32 %v1800, %v1937
        %v1940 = vmul.f32 %v1801, %v1937
        %v1941 = vmul.f32 %v1802, %v1937
        %v1942 = vmul.f32 %v1803, %v1937
        %v1943 = vmul.f32 %v1804, %v1937
        %v1944 = vmul.f32 %v1805, %v1937
        %v1945 = vmul.f32 %v1806, %v1937
        %v1946 = vadd.f32 %v1928, %v1938
        %v1947 = vadd.f32 %v1929, %v1939
        %v1948 = vadd.f32 %v1930, %v1940
        %v1949 = vadd.f32 %v1931, %v1941
        %v1950 = vadd.f32 %v1932, %v1942
        %v1951 = vadd.f32 %v1933, %v1943
        %v1952 = vadd.f32 %v1934, %v1944
        %v1953 = vadd.f32 %v1935, %v1945
        %s1954 = scalar_lea.vmem %s3, 752
        %v1955 = vld [vmem:[%s1954] sm:$0xff]
        %v1956 = vmul.f32 %v1800, %v1955
        %v1957 = vmul.f32 %v1801, %v1955
        %v1958 = vmul.f32 %v1802, %v1955
        %v1959 = vmul.f32 %v1803, %v1955
        %v1960 = vmul.f32 %v1804, %v1955
        %v1961 = vmul.f32 %v1805, %v1955
        %v1962 = vmul.f32 %v1806, %v1955
        %v1963 = vmul.f32 %v1807, %v1955
        %v1964 = vadd.f32 %v1946, %v1956
        %v1965 = vadd.f32 %v1947, %v1957
        %v1966 = vadd.f32 %v1948, %v1958
        %v1967 = vadd.f32 %v1949, %v1959
        %v1968 = vadd.f32 %v1950, %v1960
        %v1969 = vadd.f32 %v1951, %v1961
        %v1970 = vadd.f32 %v1952, %v1962
        %v1971 = vadd.f32 %v1953, %v1963
        %s1972 = scalar_lea.vmem %s3, 840
        %v1973 = vld [vmem:[%s1972] sm:$0xff]
        %v1974 = vmul.f32 %v1801, %v1973
        %v1975 = vmul.f32 %v1802, %v1973
        %v1976 = vmul.f32 %v1803, %v1973
        %v1977 = vmul.f32 %v1804, %v1973
        %v1978 = vmul.f32 %v1805, %v1973
        %v1979 = vmul.f32 %v1806, %v1973
        %v1980 = vmul.f32 %v1807, %v1973
        %v1981 = vmul.f32 %v1808, %v1973
        %v1982 = vadd.f32 %v1964, %v1974
        %v1983 = vadd.f32 %v1965, %v1975
        %v1984 = vadd.f32 %v1966, %v1976
        %v1985 = vadd.f32 %v1967, %v1977
        %v1986 = vadd.f32 %v1968, %v1978
        %v1987 = vadd.f32 %v1969, %v1979
        %v1988 = vadd.f32 %v1970, %v1980
        %v1989 = vadd.f32 %v1971, %v1981
        %s1990 = scalar_lea.vmem %s3, 928
        %v1991 = vld [vmem:[%s1990] sm:$0xff]
        %v1992 = vmul.f32 %v1802, %v1991
        %v1993 = vmul.f32 %v1803, %v1991
        %v1994 = vmul.f32 %v1804, %v1991
        %v1995 = vmul.f32 %v1805, %v1991
        %v1996 = vmul.f32 %v1806, %v1991
        %v1997 = vmul.f32 %v1807, %v1991
        %v1998 = vmul.f32 %v1808, %v1991
        %v1999 = vmul.f32 %v1809, %v1991
        %v2000 = vadd.f32 %v1982, %v1992
        %v2001 = vadd.f32 %v1983, %v1993
        %v2002 = vadd.f32 %v1984, %v1994
        %v2003 = vadd.f32 %v1985, %v1995
        %v2004 = vadd.f32 %v1986, %v1996
        %v2005 = vadd.f32 %v1987, %v1997
        %v2006 = vadd.f32 %v1988, %v1998
        %v2007 = vadd.f32 %v1989, %v1999
        %v2008 = vld [vmem:[#allocation2 + $0xa] sm:$0xff]
        %v2009 = vld [vmem:[#allocation2 + $0x22] sm:$0xff]
        %v2010 = vld [vmem:[#allocation2 + $0x3a] sm:$0xff]
        %v2011 = vld [vmem:[#allocation2 + $0x52] sm:$0xff]
        %v2012 = vld [vmem:[#allocation2 + $0x6a] sm:$0xff]
        %v2013 = vld [vmem:[#allocation2 + $0x82] sm:$0xff]
        %v2014 = vld [vmem:[#allocation2 + $0x9a] sm:$0xff]
        %v2015 = vld [vmem:[#allocation2 + $0xb2] sm:$0xff]
        %v2016 = vld [vmem:[#allocation2 + $0xca] sm:$0xff]
        %v2017 = vld [vmem:[#allocation2 + $0xe2] sm:$0xff]
        %v2018 = vld [vmem:[#allocation2 + $0xfa] sm:$0xff]
        %v2019 = vld [vmem:[#allocation2 + $0x112] sm:$0xff]
        %v2020 = vld [vmem:[#allocation2 + $0x12a] sm:$0xff]
        %v2021 = vld [vmem:[#allocation2 + $0x142] sm:$0xff]
        %v2022 = vld [vmem:[#allocation2 + $0x15a] sm:$0xff]
        %v2023 = vld [vmem:[#allocation2 + $0x172] sm:$0xff]
        %v2024 = vld [vmem:[#allocation2 + $0x18a] sm:$0xff]
        %v2025 = vld [vmem:[#allocation2 + $0x1a2] sm:$0xff]
        %s2026 = scalar_lea.vmem %s3, 56
        %v2027 = vld [vmem:[%s2026] sm:$0xff]
        %v2028 = vmul.f32 %v2008, %v2027
        %v2029 = vmul.f32 %v2009, %v2027
        %v2030 = vmul.f32 %v2010, %v2027
        %v2031 = vmul.f32 %v2011, %v2027
        %v2032 = vmul.f32 %v2012, %v2027
        %v2033 = vmul.f32 %v2013, %v2027
        %v2034 = vmul.f32 %v2014, %v2027
        %v2035 = vmul.f32 %v2015, %v2027
        %v2036 = vadd.f32 %v2000, %v2028
        %v2037 = vadd.f32 %v2001, %v2029
        %v2038 = vadd.f32 %v2002, %v2030
        %v2039 = vadd.f32 %v2003, %v2031
        %v2040 = vadd.f32 %v2004, %v2032
        %v2041 = vadd.f32 %v2005, %v2033
        %v2042 = vadd.f32 %v2006, %v2034
        %v2043 = vadd.f32 %v2007, %v2035
        %s2044 = scalar_lea.vmem %s3, 144
        %v2045 = vld [vmem:[%s2044] sm:$0xff]
        %v2046 = vmul.f32 %v2009, %v2045
        %v2047 = vmul.f32 %v2010, %v2045
        %v2048 = vmul.f32 %v2011, %v2045
        %v2049 = vmul.f32 %v2012, %v2045
        %v2050 = vmul.f32 %v2013, %v2045
        %v2051 = vmul.f32 %v2014, %v2045
        %v2052 = vmul.f32 %v2015, %v2045
        %v2053 = vmul.f32 %v2016, %v2045
        %v2054 = vadd.f32 %v2036, %v2046
        %v2055 = vadd.f32 %v2037, %v2047
        %v2056 = vadd.f32 %v2038, %v2048
        %v2057 = vadd.f32 %v2039, %v2049
        %v2058 = vadd.f32 %v2040, %v2050
        %v2059 = vadd.f32 %v2041, %v2051
        %v2060 = vadd.f32 %v2042, %v2052
        %v2061 = vadd.f32 %v2043, %v2053
        %s2062 = scalar_lea.vmem %s3, 232
        %v2063 = vld [vmem:[%s2062] sm:$0xff]
        %v2064 = vmul.f32 %v2010, %v2063
        %v2065 = vmul.f32 %v2011, %v2063
        %v2066 = vmul.f32 %v2012, %v2063
        %v2067 = vmul.f32 %v2013, %v2063
        %v2068 = vmul.f32 %v2014, %v2063
        %v2069 = vmul.f32 %v2015, %v2063
        %v2070 = vmul.f32 %v2016, %v2063
        %v2071 = vmul.f32 %v2017, %v2063
        %v2072 = vadd.f32 %v2054, %v2064
        %v2073 = vadd.f32 %v2055, %v2065
        %v2074 = vadd.f32 %v2056, %v2066
        %v2075 = vadd.f32 %v2057, %v2067
        %v2076 = vadd.f32 %v2058, %v2068
        %v2077 = vadd.f32 %v2059, %v2069
        %v2078 = vadd.f32 %v2060, %v2070
        %v2079 = vadd.f32 %v2061, %v2071
        %s2080 = scalar_lea.vmem %s3, 320
        %v2081 = vld [vmem:[%s2080] sm:$0xff]
        %v2082 = vmul.f32 %v2011, %v2081
        %v2083 = vmul.f32 %v2012, %v2081
        %v2084 = vmul.f32 %v2013, %v2081
        %v2085 = vmul.f32 %v2014, %v2081
        %v2086 = vmul.f32 %v2015, %v2081
        %v2087 = vmul.f32 %v2016, %v2081
        %v2088 = vmul.f32 %v2017, %v2081
        %v2089 = vmul.f32 %v2018, %v2081
        %v2090 = vadd.f32 %v2072, %v2082
        %v2091 = vadd.f32 %v2073, %v2083
        %v2092 = vadd.f32 %v2074, %v2084
        %v2093 = vadd.f32 %v2075, %v2085
        %v2094 = vadd.f32 %v2076, %v2086
        %v2095 = vadd.f32 %v2077, %v2087
        %v2096 = vadd.f32 %v2078, %v2088
        %v2097 = vadd.f32 %v2079, %v2089
        %s2098 = scalar_lea.vmem %s3, 408
        %v2099 = vld [vmem:[%s2098] sm:$0xff]
        %v2100 = vmul.f32 %v2012, %v2099
        %v2101 = vmul.f32 %v2013, %v2099
        %v2102 = vmul.f32 %v2014, %v2099
        %v2103 = vmul.f32 %v2015, %v2099
        %v2104 = vmul.f32 %v2016, %v2099
        %v2105 = vmul.f32 %v2017, %v2099
        %v2106 = vmul.f32 %v2018, %v2099
        %v2107 = vmul.f32 %v2019, %v2099
        %v2108 = vadd.f32 %v2090, %v2100
        %v2109 = vadd.f32 %v2091, %v2101
        %v2110 = vadd.f32 %v2092, %v2102
        %v2111 = vadd.f32 %v2093, %v2103
        %v2112 = vadd.f32 %v2094, %v2104
        %v2113 = vadd.f32 %v2095, %v2105
        %v2114 = vadd.f32 %v2096, %v2106
        %v2115 = vadd.f32 %v2097, %v2107
        %s2116 = scalar_lea.vmem %s3, 496
        %v2117 = vld [vmem:[%s2116] sm:$0xff]
        %v2118 = vmul.f32 %v2013, %v2117
        %v2119 = vmul.f32 %v2014, %v2117
        %v2120 = vmul.f32 %v2015, %v2117
        %v2121 = vmul.f32 %v2016, %v2117
        %v2122 = vmul.f32 %v2017, %v2117
        %v2123 = vmul.f32 %v2018, %v2117
        %v2124 = vmul.f32 %v2019, %v2117
        %v2125 = vmul.f32 %v2020, %v2117
        %v2126 = vadd.f32 %v2108, %v2118
        %v2127 = vadd.f32 %v2109, %v2119
        %v2128 = vadd.f32 %v2110, %v2120
        %v2129 = vadd.f32 %v2111, %v2121
        %v2130 = vadd.f32 %v2112, %v2122
        %v2131 = vadd.f32 %v2113, %v2123
        %v2132 = vadd.f32 %v2114, %v2124
        %v2133 = vadd.f32 %v2115, %v2125
        %s2134 = scalar_lea.vmem %s3, 584
        %v2135 = vld [vmem:[%s2134] sm:$0xff]
        %v2136 = vmul.f32 %v2014, %v2135
        %v2137 = vmul.f32 %v2015, %v2135
        %v2138 = vmul.f32 %v2016, %v2135
        %v2139 = vmul.f32 %v2017, %v2135
        %v2140 = vmul.f32 %v2018, %v2135
        %v2141 = vmul.f32 %v2019, %v2135
        %v2142 = vmul.f32 %v2020, %v2135
        %v2143 = vmul.f32 %v2021, %v2135
        %v2144 = vadd.f32 %v2126, %v2136
        %v2145 = vadd.f32 %v2127, %v2137
        %v2146 = vadd.f32 %v2128, %v2138
        %v2147 = vadd.f32 %v2129, %v2139
        %v2148 = vadd.f32 %v2130, %v2140
        %v2149 = vadd.f32 %v2131, %v2141
        %v2150 = vadd.f32 %v2132, %v2142
        %v2151 = vadd.f32 %v2133, %v2143
        %s2152 = scalar_lea.vmem %s3, 672
        %v2153 = vld [vmem:[%s2152] sm:$0xff]
        %v2154 = vmul.f32 %v2015, %v2153
        %v2155 = vmul.f32 %v2016, %v2153
        %v2156 = vmul.f32 %v2017, %v2153
        %v2157 = vmul.f32 %v2018, %v2153
        %v2158 = vmul.f32 %v2019, %v2153
        %v2159 = vmul.f32 %v2020, %v2153
        %v2160 = vmul.f32 %v2021, %v2153
        %v2161 = vmul.f32 %v2022, %v2153
        %v2162 = vadd.f32 %v2144, %v2154
        %v2163 = vadd.f32 %v2145, %v2155
        %v2164 = vadd.f32 %v2146, %v2156
        %v2165 = vadd.f32 %v2147, %v2157
        %v2166 = vadd.f32 %v2148, %v2158
        %v2167 = vadd.f32 %v2149, %v2159
        %v2168 = vadd.f32 %v2150, %v2160
        %v2169 = vadd.f32 %v2151, %v2161
        %s2170 = scalar_lea.vmem %s3, 760
        %v2171 = vld [vmem:[%s2170] sm:$0xff]
        %v2172 = vmul.f32 %v2016, %v2171
        %v2173 = vmul.f32 %v2017, %v2171
        %v2174 = vmul.f32 %v2018, %v2171
        %v2175 = vmul.f32 %v2019, %v2171
        %v2176 = vmul.f32 %v2020, %v2171
        %v2177 = vmul.f32 %v2021, %v2171
        %v2178 = vmul.f32 %v2022, %v2171
        %v2179 = vmul.f32 %v2023, %v2171
        %v2180 = vadd.f32 %v2162, %v2172
        %v2181 = vadd.f32 %v2163, %v2173
        %v2182 = vadd.f32 %v2164, %v2174
        %v2183 = vadd.f32 %v2165, %v2175
        %v2184 = vadd.f32 %v2166, %v2176
        %v2185 = vadd.f32 %v2167, %v2177
        %v2186 = vadd.f32 %v2168, %v2178
        %v2187 = vadd.f32 %v2169, %v2179
        %s2188 = scalar_lea.vmem %s3, 848
        %v2189 = vld [vmem:[%s2188] sm:$0xff]
        %v2190 = vmul.f32 %v2017, %v2189
        %v2191 = vmul.f32 %v2018, %v2189
        %v2192 = vmul.f32 %v2019, %v2189
        %v2193 = vmul.f32 %v2020, %v2189
        %v2194 = vmul.f32 %v2021, %v2189
        %v2195 = vmul.f32 %v2022, %v2189
        %v2196 = vmul.f32 %v2023, %v2189
        %v2197 = vmul.f32 %v2024, %v2189
        %v2198 = vadd.f32 %v2180, %v2190
        %v2199 = vadd.f32 %v2181, %v2191
        %v2200 = vadd.f32 %v2182, %v2192
        %v2201 = vadd.f32 %v2183, %v2193
        %v2202 = vadd.f32 %v2184, %v2194
        %v2203 = vadd.f32 %v2185, %v2195
        %v2204 = vadd.f32 %v2186, %v2196
        %v2205 = vadd.f32 %v2187, %v2197
        %s2206 = scalar_lea.vmem %s3, 936
        %v2207 = vld [vmem:[%s2206] sm:$0xff]
        %v2208 = vmul.f32 %v2018, %v2207
        %v2209 = vmul.f32 %v2019, %v2207
        %v2210 = vmul.f32 %v2020, %v2207
        %v2211 = vmul.f32 %v2021, %v2207
        %v2212 = vmul.f32 %v2022, %v2207
        %v2213 = vmul.f32 %v2023, %v2207
        %v2214 = vmul.f32 %v2024, %v2207
        %v2215 = vmul.f32 %v2025, %v2207
        %v2216 = vadd.f32 %v2198, %v2208
        %v2217 = vadd.f32 %v2199, %v2209
        %v2218 = vadd.f32 %v2200, %v2210
        %v2219 = vadd.f32 %v2201, %v2211
        %v2220 = vadd.f32 %v2202, %v2212
        %v2221 = vadd.f32 %v2203, %v2213
        %v2222 = vadd.f32 %v2204, %v2214
        %v2223 = vadd.f32 %v2205, %v2215
        %v2224 = vld [vmem:[#allocation2 + $0xb] sm:$0xff]
        %v2225 = vld [vmem:[#allocation2 + $0x23] sm:$0xff]
        %v2226 = vld [vmem:[#allocation2 + $0x3b] sm:$0xff]
        %v2227 = vld [vmem:[#allocation2 + $0x53] sm:$0xff]
        %v2228 = vld [vmem:[#allocation2 + $0x6b] sm:$0xff]
        %v2229 = vld [vmem:[#allocation2 + $0x83] sm:$0xff]
        %v2230 = vld [vmem:[#allocation2 + $0x9b] sm:$0xff]
        %v2231 = vld [vmem:[#allocation2 + $0xb3] sm:$0xff]
        %v2232 = vld [vmem:[#allocation2 + $0xcb] sm:$0xff]
        %v2233 = vld [vmem:[#allocation2 + $0xe3] sm:$0xff]
        %v2234 = vld [vmem:[#allocation2 + $0xfb] sm:$0xff]
        %v2235 = vld [vmem:[#allocation2 + $0x113] sm:$0xff]
        %v2236 = vld [vmem:[#allocation2 + $0x12b] sm:$0xff]
        %v2237 = vld [vmem:[#allocation2 + $0x143] sm:$0xff]
        %v2238 = vld [vmem:[#allocation2 + $0x15b] sm:$0xff]
        %v2239 = vld [vmem:[#allocation2 + $0x173] sm:$0xff]
        %v2240 = vld [vmem:[#allocation2 + $0x18b] sm:$0xff]
        %v2241 = vld [vmem:[#allocation2 + $0x1a3] sm:$0xff]
        %s2242 = scalar_lea.vmem %s3, 64
        %v2243 = vld [vmem:[%s2242] sm:$0xff]
        %v2244 = vmul.f32 %v2224, %v2243
        %v2245 = vmul.f32 %v2225, %v2243
        %v2246 = vmul.f32 %v2226, %v2243
        %v2247 = vmul.f32 %v2227, %v2243
        %v2248 = vmul.f32 %v2228, %v2243
        %v2249 = vmul.f32 %v2229, %v2243
        %v2250 = vmul.f32 %v2230, %v2243
        %v2251 = vmul.f32 %v2231, %v2243
        %v2252 = vadd.f32 %v2216, %v2244
        %v2253 = vadd.f32 %v2217, %v2245
        %v2254 = vadd.f32 %v2218, %v2246
        %v2255 = vadd.f32 %v2219, %v2247
        %v2256 = vadd.f32 %v2220, %v2248
        %v2257 = vadd.f32 %v2221, %v2249
        %v2258 = vadd.f32 %v2222, %v2250
        %v2259 = vadd.f32 %v2223, %v2251
        %s2260 = scalar_lea.vmem %s3, 152
        %v2261 = vld [vmem:[%s2260] sm:$0xff]
        %v2262 = vmul.f32 %v2225, %v2261
        %v2263 = vmul.f32 %v2226, %v2261
        %v2264 = vmul.f32 %v2227, %v2261
        %v2265 = vmul.f32 %v2228, %v2261
        %v2266 = vmul.f32 %v2229, %v2261
        %v2267 = vmul.f32 %v2230, %v2261
        %v2268 = vmul.f32 %v2231, %v2261
        %v2269 = vmul.f32 %v2232, %v2261
        %v2270 = vadd.f32 %v2252, %v2262
        %v2271 = vadd.f32 %v2253, %v2263
        %v2272 = vadd.f32 %v2254, %v2264
        %v2273 = vadd.f32 %v2255, %v2265
        %v2274 = vadd.f32 %v2256, %v2266
        %v2275 = vadd.f32 %v2257, %v2267
        %v2276 = vadd.f32 %v2258, %v2268
        %v2277 = vadd.f32 %v2259, %v2269
        %s2278 = scalar_lea.vmem %s3, 240
        %v2279 = vld [vmem:[%s2278] sm:$0xff]
        %v2280 = vmul.f32 %v2226, %v2279
        %v2281 = vmul.f32 %v2227, %v2279
        %v2282 = vmul.f32 %v2228, %v2279
        %v2283 = vmul.f32 %v2229, %v2279
        %v2284 = vmul.f32 %v2230, %v2279
        %v2285 = vmul.f32 %v2231, %v2279
        %v2286 = vmul.f32 %v2232, %v2279
        %v2287 = vmul.f32 %v2233, %v2279
        %v2288 = vadd.f32 %v2270, %v2280
        %v2289 = vadd.f32 %v2271, %v2281
        %v2290 = vadd.f32 %v2272, %v2282
        %v2291 = vadd.f32 %v2273, %v2283
        %v2292 = vadd.f32 %v2274, %v2284
        %v2293 = vadd.f32 %v2275, %v2285
        %v2294 = vadd.f32 %v2276, %v2286
        %v2295 = vadd.f32 %v2277, %v2287
        %s2296 = scalar_lea.vmem %s3, 328
        %v2297 = vld [vmem:[%s2296] sm:$0xff]
        %v2298 = vmul.f32 %v2227, %v2297
        %v2299 = vmul.f32 %v2228, %v2297
        %v2300 = vmul.f32 %v2229, %v2297
        %v2301 = vmul.f32 %v2230, %v2297
        %v2302 = vmul.f32 %v2231, %v2297
        %v2303 = vmul.f32 %v2232, %v2297
        %v2304 = vmul.f32 %v2233, %v2297
        %v2305 = vmul.f32 %v2234, %v2297
        %v2306 = vadd.f32 %v2288, %v2298
        %v2307 = vadd.f32 %v2289, %v2299
        %v2308 = vadd.f32 %v2290, %v2300
        %v2309 = vadd.f32 %v2291, %v2301
        %v2310 = vadd.f32 %v2292, %v2302
        %v2311 = vadd.f32 %v2293, %v2303
        %v2312 = vadd.f32 %v2294, %v2304
        %v2313 = vadd.f32 %v2295, %v2305
        %s2314 = scalar_lea.vmem %s3, 416
        %v2315 = vld [vmem:[%s2314] sm:$0xff]
        %v2316 = vmul.f32 %v2228, %v2315
        %v2317 = vmul.f32 %v2229, %v2315
        %v2318 = vmul.f32 %v2230, %v2315
        %v2319 = vmul.f32 %v2231, %v2315
        %v2320 = vmul.f32 %v2232, %v2315
        %v2321 = vmul.f32 %v2233, %v2315
        %v2322 = vmul.f32 %v2234, %v2315
        %v2323 = vmul.f32 %v2235, %v2315
        %v2324 = vadd.f32 %v2306, %v2316
        %v2325 = vadd.f32 %v2307, %v2317
        %v2326 = vadd.f32 %v2308, %v2318
        %v2327 = vadd.f32 %v2309, %v2319
        %v2328 = vadd.f32 %v2310, %v2320
        %v2329 = vadd.f32 %v2311, %v2321
        %v2330 = vadd.f32 %v2312, %v2322
        %v2331 = vadd.f32 %v2313, %v2323
        %s2332 = scalar_lea.vmem %s3, 504
        %v2333 = vld [vmem:[%s2332] sm:$0xff]
        %v2334 = vmul.f32 %v2229, %v2333
        %v2335 = vmul.f32 %v2230, %v2333
        %v2336 = vmul.f32 %v2231, %v2333
        %v2337 = vmul.f32 %v2232, %v2333
        %v2338 = vmul.f32 %v2233, %v2333
        %v2339 = vmul.f32 %v2234, %v2333
        %v2340 = vmul.f32 %v2235, %v2333
        %v2341 = vmul.f32 %v2236, %v2333
        %v2342 = vadd.f32 %v2324, %v2334
        %v2343 = vadd.f32 %v2325, %v2335
        %v2344 = vadd.f32 %v2326, %v2336
        %v2345 = vadd.f32 %v2327, %v2337
        %v2346 = vadd.f32 %v2328, %v2338
        %v2347 = vadd.f32 %v2329, %v2339
        %v2348 = vadd.f32 %v2330, %v2340
        %v2349 = vadd.f32 %v2331, %v2341
        %s2350 = scalar_lea.vmem %s3, 592
        %v2351 = vld [vmem:[%s2350] sm:$0xff]
        %v2352 = vmul.f32 %v2230, %v2351
        %v2353 = vmul.f32 %v2231, %v2351
        %v2354 = vmul.f32 %v2232, %v2351
        %v2355 = vmul.f32 %v2233, %v2351
        %v2356 = vmul.f32 %v2234, %v2351
        %v2357 = vmul.f32 %v2235, %v2351
        %v2358 = vmul.f32 %v2236, %v2351
        %v2359 = vmul.f32 %v2237, %v2351
        %v2360 = vadd.f32 %v2342, %v2352
        %v2361 = vadd.f32 %v2343, %v2353
        %v2362 = vadd.f32 %v2344, %v2354
        %v2363 = vadd.f32 %v2345, %v2355
        %v2364 = vadd.f32 %v2346, %v2356
        %v2365 = vadd.f32 %v2347, %v2357
        %v2366 = vadd.f32 %v2348, %v2358
        %v2367 = vadd.f32 %v2349, %v2359
        %s2368 = scalar_lea.vmem %s3, 680
        %v2369 = vld [vmem:[%s2368] sm:$0xff]
        %v2370 = vmul.f32 %v2231, %v2369
        %v2371 = vmul.f32 %v2232, %v2369
        %v2372 = vmul.f32 %v2233, %v2369
        %v2373 = vmul.f32 %v2234, %v2369
        %v2374 = vmul.f32 %v2235, %v2369
        %v2375 = vmul.f32 %v2236, %v2369
        %v2376 = vmul.f32 %v2237, %v2369
        %v2377 = vmul.f32 %v2238, %v2369
        %v2378 = vadd.f32 %v2360, %v2370
        %v2379 = vadd.f32 %v2361, %v2371
        %v2380 = vadd.f32 %v2362, %v2372
        %v2381 = vadd.f32 %v2363, %v2373
        %v2382 = vadd.f32 %v2364, %v2374
        %v2383 = vadd.f32 %v2365, %v2375
        %v2384 = vadd.f32 %v2366, %v2376
        %v2385 = vadd.f32 %v2367, %v2377
        %s2386 = scalar_lea.vmem %s3, 768
        %v2387 = vld [vmem:[%s2386] sm:$0xff]
        %v2388 = vmul.f32 %v2232, %v2387
        %v2389 = vmul.f32 %v2233, %v2387
        %v2390 = vmul.f32 %v2234, %v2387
        %v2391 = vmul.f32 %v2235, %v2387
        %v2392 = vmul.f32 %v2236, %v2387
        %v2393 = vmul.f32 %v2237, %v2387
        %v2394 = vmul.f32 %v2238, %v2387
        %v2395 = vmul.f32 %v2239, %v2387
        %v2396 = vadd.f32 %v2378, %v2388
        %v2397 = vadd.f32 %v2379, %v2389
        %v2398 = vadd.f32 %v2380, %v2390
        %v2399 = vadd.f32 %v2381, %v2391
        %v2400 = vadd.f32 %v2382, %v2392
        %v2401 = vadd.f32 %v2383, %v2393
        %v2402 = vadd.f32 %v2384, %v2394
        %v2403 = vadd.f32 %v2385, %v2395
        %s2404 = scalar_lea.vmem %s3, 856
        %v2405 = vld [vmem:[%s2404] sm:$0xff]
        %v2406 = vmul.f32 %v2233, %v2405
        %v2407 = vmul.f32 %v2234, %v2405
        %v2408 = vmul.f32 %v2235, %v2405
        %v2409 = vmul.f32 %v2236, %v2405
        %v2410 = vmul.f32 %v2237, %v2405
        %v2411 = vmul.f32 %v2238, %v2405
        %v2412 = vmul.f32 %v2239, %v2405
        %v2413 = vmul.f32 %v2240, %v2405
        %v2414 = vadd.f32 %v2396, %v2406
        %v2415 = vadd.f32 %v2397, %v2407
        %v2416 = vadd.f32 %v2398, %v2408
        %v2417 = vadd.f32 %v2399, %v2409
        %v2418 = vadd.f32 %v2400, %v2410
        %v2419 = vadd.f32 %v2401, %v2411
        %v2420 = vadd.f32 %v2402, %v2412
        %v2421 = vadd.f32 %v2403, %v2413
        %s2422 = scalar_lea.vmem %s3, 944
        %v2423 = vld [vmem:[%s2422] sm:$0xff]
        %v2424 = vmul.f32 %v2234, %v2423
        %v2425 = vmul.f32 %v2235, %v2423
        %v2426 = vmul.f32 %v2236, %v2423
        %v2427 = vmul.f32 %v2237, %v2423
        %v2428 = vmul.f32 %v2238, %v2423
        %v2429 = vmul.f32 %v2239, %v2423
        %v2430 = vmul.f32 %v2240, %v2423
        %v2431 = vmul.f32 %v2241, %v2423
        %v2432 = vadd.f32 %v2414, %v2424
        %v2433 = vadd.f32 %v2415, %v2425
        %v2434 = vadd.f32 %v2416, %v2426
        %v2435 = vadd.f32 %v2417, %v2427
        %v2436 = vadd.f32 %v2418, %v2428
        %v2437 = vadd.f32 %v2419, %v2429
        %v2438 = vadd.f32 %v2420, %v2430
        %v2439 = vadd.f32 %v2421, %v2431
        %v2440 = vld [vmem:[#allocation2 + $0xc] sm:$0xff]
        %v2441 = vld [vmem:[#allocation2 + $0x24] sm:$0xff]
        %v2442 = vld [vmem:[#allocation2 + $0x3c] sm:$0xff]
        %v2443 = vld [vmem:[#allocation2 + $0x54] sm:$0xff]
        %v2444 = vld [vmem:[#allocation2 + $0x6c] sm:$0xff]
        %v2445 = vld [vmem:[#allocation2 + $0x84] sm:$0xff]
        %v2446 = vld [vmem:[#allocation2 + $0x9c] sm:$0xff]
        %v2447 = vld [vmem:[#allocation2 + $0xb4] sm:$0xff]
        %v2448 = vld [vmem:[#allocation2 + $0xcc] sm:$0xff]
        %v2449 = vld [vmem:[#allocation2 + $0xe4] sm:$0xff]
        %v2450 = vld [vmem:[#allocation2 + $0xfc] sm:$0xff]
        %v2451 = vld [vmem:[#allocation2 + $0x114] sm:$0xff]
        %v2452 = vld [vmem:[#allocation2 + $0x12c] sm:$0xff]
        %v2453 = vld [vmem:[#allocation2 + $0x144] sm:$0xff]
        %v2454 = vld [vmem:[#allocation2 + $0x15c] sm:$0xff]
        %v2455 = vld [vmem:[#allocation2 + $0x174] sm:$0xff]
        %v2456 = vld [vmem:[#allocation2 + $0x18c] sm:$0xff]
        %v2457 = vld [vmem:[#allocation2 + $0x1a4] sm:$0xff]
        %s2458 = scalar_lea.vmem %s3, 72
        %v2459 = vld [vmem:[%s2458] sm:$0xff]
        %v2460 = vmul.f32 %v2440, %v2459
        %v2461 = vmul.f32 %v2441, %v2459
        %v2462 = vmul.f32 %v2442, %v2459
        %v2463 = vmul.f32 %v2443, %v2459
        %v2464 = vmul.f32 %v2444, %v2459
        %v2465 = vmul.f32 %v2445, %v2459
        %v2466 = vmul.f32 %v2446, %v2459
        %v2467 = vmul.f32 %v2447, %v2459
        %v2468 = vadd.f32 %v2432, %v2460
        %v2469 = vadd.f32 %v2433, %v2461
        %v2470 = vadd.f32 %v2434, %v2462
        %v2471 = vadd.f32 %v2435, %v2463
        %v2472 = vadd.f32 %v2436, %v2464
        %v2473 = vadd.f32 %v2437, %v2465
        %v2474 = vadd.f32 %v2438, %v2466
        %v2475 = vadd.f32 %v2439, %v2467
        %s2476 = scalar_lea.vmem %s3, 160
        %v2477 = vld [vmem:[%s2476] sm:$0xff]
        %v2478 = vmul.f32 %v2441, %v2477
        %v2479 = vmul.f32 %v2442, %v2477
        %v2480 = vmul.f32 %v2443, %v2477
        %v2481 = vmul.f32 %v2444, %v2477
        %v2482 = vmul.f32 %v2445, %v2477
        %v2483 = vmul.f32 %v2446, %v2477
        %v2484 = vmul.f32 %v2447, %v2477
        %v2485 = vmul.f32 %v2448, %v2477
        %v2486 = vadd.f32 %v2468, %v2478
        %v2487 = vadd.f32 %v2469, %v2479
        %v2488 = vadd.f32 %v2470, %v2480
        %v2489 = vadd.f32 %v2471, %v2481
        %v2490 = vadd.f32 %v2472, %v2482
        %v2491 = vadd.f32 %v2473, %v2483
        %v2492 = vadd.f32 %v2474, %v2484
        %v2493 = vadd.f32 %v2475, %v2485
        %s2494 = scalar_lea.vmem %s3, 248
        %v2495 = vld [vmem:[%s2494] sm:$0xff]
        %v2496 = vmul.f32 %v2442, %v2495
        %v2497 = vmul.f32 %v2443, %v2495
        %v2498 = vmul.f32 %v2444, %v2495
        %v2499 = vmul.f32 %v2445, %v2495
        %v2500 = vmul.f32 %v2446, %v2495
        %v2501 = vmul.f32 %v2447, %v2495
        %v2502 = vmul.f32 %v2448, %v2495
        %v2503 = vmul.f32 %v2449, %v2495
        %v2504 = vadd.f32 %v2486, %v2496
        %v2505 = vadd.f32 %v2487, %v2497
        %v2506 = vadd.f32 %v2488, %v2498
        %v2507 = vadd.f32 %v2489, %v2499
        %v2508 = vadd.f32 %v2490, %v2500
        %v2509 = vadd.f32 %v2491, %v2501
        %v2510 = vadd.f32 %v2492, %v2502
        %v2511 = vadd.f32 %v2493, %v2503
        %s2512 = scalar_lea.vmem %s3, 336
        %v2513 = vld [vmem:[%s2512] sm:$0xff]
        %v2514 = vmul.f32 %v2443, %v2513
        %v2515 = vmul.f32 %v2444, %v2513
        %v2516 = vmul.f32 %v2445, %v2513
        %v2517 = vmul.f32 %v2446, %v2513
        %v2518 = vmul.f32 %v2447, %v2513
        %v2519 = vmul.f32 %v2448, %v2513
        %v2520 = vmul.f32 %v2449, %v2513
        %v2521 = vmul.f32 %v2450, %v2513
        %v2522 = vadd.f32 %v2504, %v2514
        %v2523 = vadd.f32 %v2505, %v2515
        %v2524 = vadd.f32 %v2506, %v2516
        %v2525 = vadd.f32 %v2507, %v2517
        %v2526 = vadd.f32 %v2508, %v2518
        %v2527 = vadd.f32 %v2509, %v2519
        %v2528 = vadd.f32 %v2510, %v2520
        %v2529 = vadd.f32 %v2511, %v2521
        %s2530 = scalar_lea.vmem %s3, 424
        %v2531 = vld [vmem:[%s2530] sm:$0xff]
        %v2532 = vmul.f32 %v2444, %v2531
        %v2533 = vmul.f32 %v2445, %v2531
        %v2534 = vmul.f32 %v2446, %v2531
        %v2535 = vmul.f32 %v2447, %v2531
        %v2536 = vmul.f32 %v2448, %v2531
        %v2537 = vmul.f32 %v2449, %v2531
        %v2538 = vmul.f32 %v2450, %v2531
        %v2539 = vmul.f32 %v2451, %v2531
        %v2540 = vadd.f32 %v2522, %v2532
        %v2541 = vadd.f32 %v2523, %v2533
        %v2542 = vadd.f32 %v2524, %v2534
        %v2543 = vadd.f32 %v2525, %v2535
        %v2544 = vadd.f32 %v2526, %v2536
        %v2545 = vadd.f32 %v2527, %v2537
        %v2546 = vadd.f32 %v2528, %v2538
        %v2547 = vadd.f32 %v2529, %v2539
        %s2548 = scalar_lea.vmem %s3, 512
        %v2549 = vld [vmem:[%s2548] sm:$0xff]
        %v2550 = vmul.f32 %v2445, %v2549
        %v2551 = vmul.f32 %v2446, %v2549
        %v2552 = vmul.f32 %v2447, %v2549
        %v2553 = vmul.f32 %v2448, %v2549
        %v2554 = vmul.f32 %v2449, %v2549
        %v2555 = vmul.f32 %v2450, %v2549
        %v2556 = vmul.f32 %v2451, %v2549
        %v2557 = vmul.f32 %v2452, %v2549
        %v2558 = vadd.f32 %v2540, %v2550
        %v2559 = vadd.f32 %v2541, %v2551
        %v2560 = vadd.f32 %v2542, %v2552
        %v2561 = vadd.f32 %v2543, %v2553
        %v2562 = vadd.f32 %v2544, %v2554
        %v2563 = vadd.f32 %v2545, %v2555
        %v2564 = vadd.f32 %v2546, %v2556
        %v2565 = vadd.f32 %v2547, %v2557
        %s2566 = scalar_lea.vmem %s3, 600
        %v2567 = vld [vmem:[%s2566] sm:$0xff]
        %v2568 = vmul.f32 %v2446, %v2567
        %v2569 = vmul.f32 %v2447, %v2567
        %v2570 = vmul.f32 %v2448, %v2567
        %v2571 = vmul.f32 %v2449, %v2567
        %v2572 = vmul.f32 %v2450, %v2567
        %v2573 = vmul.f32 %v2451, %v2567
        %v2574 = vmul.f32 %v2452, %v2567
        %v2575 = vmul.f32 %v2453, %v2567
        %v2576 = vadd.f32 %v2558, %v2568
        %v2577 = vadd.f32 %v2559, %v2569
        %v2578 = vadd.f32 %v2560, %v2570
        %v2579 = vadd.f32 %v2561, %v2571
        %v2580 = vadd.f32 %v2562, %v2572
        %v2581 = vadd.f32 %v2563, %v2573
        %v2582 = vadd.f32 %v2564, %v2574
        %v2583 = vadd.f32 %v2565, %v2575
        %s2584 = scalar_lea.vmem %s3, 688
        %v2585 = vld [vmem:[%s2584] sm:$0xff]
        %v2586 = vmul.f32 %v2447, %v2585
        %v2587 = vmul.f32 %v2448, %v2585
        %v2588 = vmul.f32 %v2449, %v2585
        %v2589 = vmul.f32 %v2450, %v2585
        %v2590 = vmul.f32 %v2451, %v2585
        %v2591 = vmul.f32 %v2452, %v2585
        %v2592 = vmul.f32 %v2453, %v2585
        %v2593 = vmul.f32 %v2454, %v2585
        %v2594 = vadd.f32 %v2576, %v2586
        %v2595 = vadd.f32 %v2577, %v2587
        %v2596 = vadd.f32 %v2578, %v2588
        %v2597 = vadd.f32 %v2579, %v2589
        %v2598 = vadd.f32 %v2580, %v2590
        %v2599 = vadd.f32 %v2581, %v2591
        %v2600 = vadd.f32 %v2582, %v2592
        %v2601 = vadd.f32 %v2583, %v2593
        %s2602 = scalar_lea.vmem %s3, 776
        %v2603 = vld [vmem:[%s2602] sm:$0xff]
        %v2604 = vmul.f32 %v2448, %v2603
        %v2605 = vmul.f32 %v2449, %v2603
        %v2606 = vmul.f32 %v2450, %v2603
        %v2607 = vmul.f32 %v2451, %v2603
        %v2608 = vmul.f32 %v2452, %v2603
        %v2609 = vmul.f32 %v2453, %v2603
        %v2610 = vmul.f32 %v2454, %v2603
        %v2611 = vmul.f32 %v2455, %v2603
        %v2612 = vadd.f32 %v2594, %v2604
        %v2613 = vadd.f32 %v2595, %v2605
        %v2614 = vadd.f32 %v2596, %v2606
        %v2615 = vadd.f32 %v2597, %v2607
        %v2616 = vadd.f32 %v2598, %v2608
        %v2617 = vadd.f32 %v2599, %v2609
        %v2618 = vadd.f32 %v2600, %v2610
        %v2619 = vadd.f32 %v2601, %v2611
        %s2620 = scalar_lea.vmem %s3, 864
        %v2621 = vld [vmem:[%s2620] sm:$0xff]
        %v2622 = vmul.f32 %v2449, %v2621
        %v2623 = vmul.f32 %v2450, %v2621
        %v2624 = vmul.f32 %v2451, %v2621
        %v2625 = vmul.f32 %v2452, %v2621
        %v2626 = vmul.f32 %v2453, %v2621
        %v2627 = vmul.f32 %v2454, %v2621
        %v2628 = vmul.f32 %v2455, %v2621
        %v2629 = vmul.f32 %v2456, %v2621
        %v2630 = vadd.f32 %v2612, %v2622
        %v2631 = vadd.f32 %v2613, %v2623
        %v2632 = vadd.f32 %v2614, %v2624
        %v2633 = vadd.f32 %v2615, %v2625
        %v2634 = vadd.f32 %v2616, %v2626
        %v2635 = vadd.f32 %v2617, %v2627
        %v2636 = vadd.f32 %v2618, %v2628
        %v2637 = vadd.f32 %v2619, %v2629
        %s2638 = scalar_lea.vmem %s3, 952
        %v2639 = vld [vmem:[%s2638] sm:$0xff]
        %v2640 = vmul.f32 %v2450, %v2639
        %v2641 = vmul.f32 %v2451, %v2639
        %v2642 = vmul.f32 %v2452, %v2639
        %v2643 = vmul.f32 %v2453, %v2639
        %v2644 = vmul.f32 %v2454, %v2639
        %v2645 = vmul.f32 %v2455, %v2639
        %v2646 = vmul.f32 %v2456, %v2639
        %v2647 = vmul.f32 %v2457, %v2639
        %v2648 = vadd.f32 %v2630, %v2640
        %v2649 = vadd.f32 %v2631, %v2641
        %v2650 = vadd.f32 %v2632, %v2642
        %v2651 = vadd.f32 %v2633, %v2643
        %v2652 = vadd.f32 %v2634, %v2644
        %v2653 = vadd.f32 %v2635, %v2645
        %v2654 = vadd.f32 %v2636, %v2646
        %v2655 = vadd.f32 %v2637, %v2647
        %v2656 = vld [vmem:[#allocation2 + $0xd] sm:$0xff]
        %v2657 = vld [vmem:[#allocation2 + $0x25] sm:$0xff]
        %v2658 = vld [vmem:[#allocation2 + $0x3d] sm:$0xff]
        %v2659 = vld [vmem:[#allocation2 + $0x55] sm:$0xff]
        %v2660 = vld [vmem:[#allocation2 + $0x6d] sm:$0xff]
        %v2661 = vld [vmem:[#allocation2 + $0x85] sm:$0xff]
        %v2662 = vld [vmem:[#allocation2 + $0x9d] sm:$0xff]
        %v2663 = vld [vmem:[#allocation2 + $0xb5] sm:$0xff]
        %v2664 = vld [vmem:[#allocation2 + $0xcd] sm:$0xff]
        %v2665 = vld [vmem:[#allocation2 + $0xe5] sm:$0xff]
        %v2666 = vld [vmem:[#allocation2 + $0xfd] sm:$0xff]
        %v2667 = vld [vmem:[#allocation2 + $0x115] sm:$0xff]
        %v2668 = vld [vmem:[#allocation2 + $0x12d] sm:$0xff]
        %v2669 = vld [vmem:[#allocation2 + $0x145] sm:$0xff]
        %v2670 = vld [vmem:[#allocation2 + $0x15d] sm:$0xff]
        %v2671 = vld [vmem:[#allocation2 + $0x175] sm:$0xff]
        %v2672 = vld [vmem:[#allocation2 + $0x18d] sm:$0xff]
        %v2673 = vld [vmem:[#allocation2 + $0x1a5] sm:$0xff]
        %s2674 = scalar_lea.vmem %s3, 80
        %v2675 = vld [vmem:[%s2674] sm:$0xff]
        %v2676 = vmul.f32 %v2656, %v2675
        %v2677 = vmul.f32 %v2657, %v2675
        %v2678 = vmul.f32 %v2658, %v2675
        %v2679 = vmul.f32 %v2659, %v2675
        %v2680 = vmul.f32 %v2660, %v2675
        %v2681 = vmul.f32 %v2661, %v2675
        %v2682 = vmul.f32 %v2662, %v2675
        %v2683 = vmul.f32 %v2663, %v2675
        %v2684 = vadd.f32 %v2648, %v2676
        %v2685 = vadd.f32 %v2649, %v2677
        %v2686 = vadd.f32 %v2650, %v2678
        %v2687 = vadd.f32 %v2651, %v2679
        %v2688 = vadd.f32 %v2652, %v2680
        %v2689 = vadd.f32 %v2653, %v2681
        %v2690 = vadd.f32 %v2654, %v2682
        %v2691 = vadd.f32 %v2655, %v2683
        %s2692 = scalar_lea.vmem %s3, 168
        %v2693 = vld [vmem:[%s2692] sm:$0xff]
        %v2694 = vmul.f32 %v2657, %v2693
        %v2695 = vmul.f32 %v2658, %v2693
        %v2696 = vmul.f32 %v2659, %v2693
        %v2697 = vmul.f32 %v2660, %v2693
        %v2698 = vmul.f32 %v2661, %v2693
        %v2699 = vmul.f32 %v2662, %v2693
        %v2700 = vmul.f32 %v2663, %v2693
        %v2701 = vmul.f32 %v2664, %v2693
        %v2702 = vadd.f32 %v2684, %v2694
        %v2703 = vadd.f32 %v2685, %v2695
        %v2704 = vadd.f32 %v2686, %v2696
        %v2705 = vadd.f32 %v2687, %v2697
        %v2706 = vadd.f32 %v2688, %v2698
        %v2707 = vadd.f32 %v2689, %v2699
        %v2708 = vadd.f32 %v2690, %v2700
        %v2709 = vadd.f32 %v2691, %v2701
        %s2710 = scalar_lea.vmem %s3, 256
        %v2711 = vld [vmem:[%s2710] sm:$0xff]
        %v2712 = vmul.f32 %v2658, %v2711
        %v2713 = vmul.f32 %v2659, %v2711
        %v2714 = vmul.f32 %v2660, %v2711
        %v2715 = vmul.f32 %v2661, %v2711
        %v2716 = vmul.f32 %v2662, %v2711
        %v2717 = vmul.f32 %v2663, %v2711
        %v2718 = vmul.f32 %v2664, %v2711
        %v2719 = vmul.f32 %v2665, %v2711
        %v2720 = vadd.f32 %v2702, %v2712
        %v2721 = vadd.f32 %v2703, %v2713
        %v2722 = vadd.f32 %v2704, %v2714
        %v2723 = vadd.f32 %v2705, %v2715
        %v2724 = vadd.f32 %v2706, %v2716
        %v2725 = vadd.f32 %v2707, %v2717
        %v2726 = vadd.f32 %v2708, %v2718
        %v2727 = vadd.f32 %v2709, %v2719
        %s2728 = scalar_lea.vmem %s3, 344
        %v2729 = vld [vmem:[%s2728] sm:$0xff]
        %v2730 = vmul.f32 %v2659, %v2729
        %v2731 = vmul.f32 %v2660, %v2729
        %v2732 = vmul.f32 %v2661, %v2729
        %v2733 = vmul.f32 %v2662, %v2729
        %v2734 = vmul.f32 %v2663, %v2729
        %v2735 = vmul.f32 %v2664, %v2729
        %v2736 = vmul.f32 %v2665, %v2729
        %v2737 = vmul.f32 %v2666, %v2729
        %v2738 = vadd.f32 %v2720, %v2730
        %v2739 = vadd.f32 %v2721, %v2731
        %v2740 = vadd.f32 %v2722, %v2732
        %v2741 = vadd.f32 %v2723, %v2733
        %v2742 = vadd.f32 %v2724, %v2734
        %v2743 = vadd.f32 %v2725, %v2735
        %v2744 = vadd.f32 %v2726, %v2736
        %v2745 = vadd.f32 %v2727, %v2737
        %s2746 = scalar_lea.vmem %s3, 432
        %v2747 = vld [vmem:[%s2746] sm:$0xff]
        %v2748 = vmul.f32 %v2660, %v2747
        %v2749 = vmul.f32 %v2661, %v2747
        %v2750 = vmul.f32 %v2662, %v2747
        %v2751 = vmul.f32 %v2663, %v2747
        %v2752 = vmul.f32 %v2664, %v2747
        %v2753 = vmul.f32 %v2665, %v2747
        %v2754 = vmul.f32 %v2666, %v2747
        %v2755 = vmul.f32 %v2667, %v2747
        %v2756 = vadd.f32 %v2738, %v2748
        %v2757 = vadd.f32 %v2739, %v2749
        %v2758 = vadd.f32 %v2740, %v2750
        %v2759 = vadd.f32 %v2741, %v2751
        %v2760 = vadd.f32 %v2742, %v2752
        %v2761 = vadd.f32 %v2743, %v2753
        %v2762 = vadd.f32 %v2744, %v2754
        %v2763 = vadd.f32 %v2745, %v2755
        %s2764 = scalar_lea.vmem %s3, 520
        %v2765 = vld [vmem:[%s2764] sm:$0xff]
        %v2766 = vmul.f32 %v2661, %v2765
        %v2767 = vmul.f32 %v2662, %v2765
        %v2768 = vmul.f32 %v2663, %v2765
        %v2769 = vmul.f32 %v2664, %v2765
        %v2770 = vmul.f32 %v2665, %v2765
        %v2771 = vmul.f32 %v2666, %v2765
        %v2772 = vmul.f32 %v2667, %v2765
        %v2773 = vmul.f32 %v2668, %v2765
        %v2774 = vadd.f32 %v2756, %v2766
        %v2775 = vadd.f32 %v2757, %v2767
        %v2776 = vadd.f32 %v2758, %v2768
        %v2777 = vadd.f32 %v2759, %v2769
        %v2778 = vadd.f32 %v2760, %v2770
        %v2779 = vadd.f32 %v2761, %v2771
        %v2780 = vadd.f32 %v2762, %v2772
        %v2781 = vadd.f32 %v2763, %v2773
        %s2782 = scalar_lea.vmem %s3, 608
        %v2783 = vld [vmem:[%s2782] sm:$0xff]
        %v2784 = vmul.f32 %v2662, %v2783
        %v2785 = vmul.f32 %v2663, %v2783
        %v2786 = vmul.f32 %v2664, %v2783
        %v2787 = vmul.f32 %v2665, %v2783
        %v2788 = vmul.f32 %v2666, %v2783
        %v2789 = vmul.f32 %v2667, %v2783
        %v2790 = vmul.f32 %v2668, %v2783
        %v2791 = vmul.f32 %v2669, %v2783
        %v2792 = vadd.f32 %v2774, %v2784
        %v2793 = vadd.f32 %v2775, %v2785
        %v2794 = vadd.f32 %v2776, %v2786
        %v2795 = vadd.f32 %v2777, %v2787
        %v2796 = vadd.f32 %v2778, %v2788
        %v2797 = vadd.f32 %v2779, %v2789
        %v2798 = vadd.f32 %v2780, %v2790
        %v2799 = vadd.f32 %v2781, %v2791
        %s2800 = scalar_lea.vmem %s3, 696
        %v2801 = vld [vmem:[%s2800] sm:$0xff]
        %v2802 = vmul.f32 %v2663, %v2801
        %v2803 = vmul.f32 %v2664, %v2801
        %v2804 = vmul.f32 %v2665, %v2801
        %v2805 = vmul.f32 %v2666, %v2801
        %v2806 = vmul.f32 %v2667, %v2801
        %v2807 = vmul.f32 %v2668, %v2801
        %v2808 = vmul.f32 %v2669, %v2801
        %v2809 = vmul.f32 %v2670, %v2801
        %v2810 = vadd.f32 %v2792, %v2802
        %v2811 = vadd.f32 %v2793, %v2803
        %v2812 = vadd.f32 %v2794, %v2804
        %v2813 = vadd.f32 %v2795, %v2805
        %v2814 = vadd.f32 %v2796, %v2806
        %v2815 = vadd.f32 %v2797, %v2807
        %v2816 = vadd.f32 %v2798, %v2808
        %v2817 = vadd.f32 %v2799, %v2809
        %s2818 = scalar_lea.vmem %s3, 784
        %v2819 = vld [vmem:[%s2818] sm:$0xff]
        %v2820 = vmul.f32 %v2664, %v2819
        %v2821 = vmul.f32 %v2665, %v2819
        %v2822 = vmul.f32 %v2666, %v2819
        %v2823 = vmul.f32 %v2667, %v2819
        %v2824 = vmul.f32 %v2668, %v2819
        %v2825 = vmul.f32 %v2669, %v2819
        %v2826 = vmul.f32 %v2670, %v2819
        %v2827 = vmul.f32 %v2671, %v2819
        %v2828 = vadd.f32 %v2810, %v2820
        %v2829 = vadd.f32 %v2811, %v2821
        %v2830 = vadd.f32 %v2812, %v2822
        %v2831 = vadd.f32 %v2813, %v2823
        %v2832 = vadd.f32 %v2814, %v2824
        %v2833 = vadd.f32 %v2815, %v2825
        %v2834 = vadd.f32 %v2816, %v2826
        %v2835 = vadd.f32 %v2817, %v2827
        %s2836 = scalar_lea.vmem %s3, 872
        %v2837 = vld [vmem:[%s2836] sm:$0xff]
        %v2838 = vmul.f32 %v2665, %v2837
        %v2839 = vmul.f32 %v2666, %v2837
        %v2840 = vmul.f32 %v2667, %v2837
        %v2841 = vmul.f32 %v2668, %v2837
        %v2842 = vmul.f32 %v2669, %v2837
        %v2843 = vmul.f32 %v2670, %v2837
        %v2844 = vmul.f32 %v2671, %v2837
        %v2845 = vmul.f32 %v2672, %v2837
        %v2846 = vadd.f32 %v2828, %v2838
        %v2847 = vadd.f32 %v2829, %v2839
        %v2848 = vadd.f32 %v2830, %v2840
        %v2849 = vadd.f32 %v2831, %v2841
        %v2850 = vadd.f32 %v2832, %v2842
        %v2851 = vadd.f32 %v2833, %v2843
        %v2852 = vadd.f32 %v2834, %v2844
        %v2853 = vadd.f32 %v2835, %v2845
        %s2854 = scalar_lea.vmem %s3, 960
        %v2855 = vld [vmem:[%s2854] sm:$0xff]
        %v2856 = vmul.f32 %v2666, %v2855
        %v2857 = vmul.f32 %v2667, %v2855
        %v2858 = vmul.f32 %v2668, %v2855
        %v2859 = vmul.f32 %v2669, %v2855
        %v2860 = vmul.f32 %v2670, %v2855
        %v2861 = vmul.f32 %v2671, %v2855
        %v2862 = vmul.f32 %v2672, %v2855
        %v2863 = vmul.f32 %v2673, %v2855
        %v2864 = vadd.f32 %v2846, %v2856
        %v2865 = vadd.f32 %v2847, %v2857
        %v2866 = vadd.f32 %v2848, %v2858
        %v2867 = vadd.f32 %v2849, %v2859
        %v2868 = vadd.f32 %v2850, %v2860
        %v2869 = vadd.f32 %v2851, %v2861
        %v2870 = vadd.f32 %v2852, %v2862
        %v2871 = vadd.f32 %v2853, %v2863
        %2872 = vst.msk [vmem:[#allocation3] sm:$0xff] %vm426, %v2864
        %2873 = vst.msk [vmem:[#allocation3 + $0x8] sm:$0xff] %vm426, %v2865
        %2874 = vst.msk [vmem:[#allocation3 + $0x10] sm:$0xff] %vm426, %v2866
        %2875 = vst.msk [vmem:[#allocation3 + $0x18] sm:$0xff] %vm426, %v2867
        %2876 = vst.msk [vmem:[#allocation3 + $0x20] sm:$0xff] %vm426, %v2868
        %2877 = vst.msk [vmem:[#allocation3 + $0x28] sm:$0xff] %vm426, %v2869
        %2878 = vst.msk [vmem:[#allocation3 + $0x30] sm:$0xff] %vm426, %v2870
        %2879 = vst.msk [vmem:[#allocation3 + $0x38] sm:$0xff] %vm426, %v2871
        %v2880 = vld [vmem:[#allocation3] sm:$0xff]
        %v2881 = vld [vmem:[#allocation3 + $0x8] sm:$0xff]
        %v2882 = vld [vmem:[#allocation3 + $0x10] sm:$0xff]
        %v2883 = vld [vmem:[#allocation3 + $0x18] sm:$0xff]
        %v2884 = vld [vmem:[#allocation3 + $0x20] sm:$0xff]
        %v2885 = vld [vmem:[#allocation3 + $0x28] sm:$0xff]
        %v2886 = vld [vmem:[#allocation3 + $0x30] sm:$0xff]
        %v2887 = vld [vmem:[#allocation3 + $0x38] sm:$0xff]
        %v2888 = vld [vmem:[%s4] sm:$0x1]
        %v2890 = vlaneseq
        %v2891 = vshrl.u32 %v2890, 7
        %v2892 = vsub.s32 0, %v2891
        %v2893 = vrot.slane %v2888, %v2892
        %v2895 = vadd.f32 %v2880, %v2893
        %v2896 = vadd.f32 %v2881, %v2893
        %v2897 = vadd.f32 %v2882, %v2893
        %v2898 = vadd.f32 %v2883, %v2893
        %v2899 = vadd.f32 %v2884, %v2893
        %v2900 = vadd.f32 %v2885, %v2893
        %v2901 = vadd.f32 %v2886, %v2893
        %v2902 = vadd.f32 %v2887, %v2893
        %v2903 = vld [vmem:[%s5] sm:$0xff]
        %v2904 = vld [vmem:[%s5 + $0x8] sm:$0xff]
        %v2905 = vld [vmem:[%s5 + $0x10] sm:$0xff]
        %v2906 = vld [vmem:[%s5 + $0x18] sm:$0xff]
        %2915 = vrot.lane.b32.xlu0 %v2895, 96
        %v2916 = vpop.permute.xlu0 %2915
        %2917 = vrot.lane.b32.xlu0 %v2896, 96
        %v2918 = vpop.permute.xlu0 %2917
        %2919 = vrot.lane.b32.xlu0 %v2897, 96
        %v2920 = vpop.permute.xlu0 %2919
        %2921 = vrot.lane.b32.xlu0 %v2898, 96
        %v2922 = vpop.permute.xlu0 %2921
        %2923 = vrot.lane.b32.xlu0 %v2899, 96
        %v2924 = vpop.permute.xlu0 %2923
        %2925 = vrot.lane.b32.xlu0 %v2900, 96
        %v2926 = vpop.permute.xlu0 %2925
        %2927 = vrot.lane.b32.xlu0 %v2901, 96
        %v2928 = vpop.permute.xlu0 %2927
        %2929 = vrot.lane.b32.xlu0 %v2902, 96
        %v2930 = vpop.permute.xlu0 %2929
        %vm2931 = vcmask 31744
        %v2932 = vsel %vm2931, %v2895, 0
        %v2934 = vsel %vm2931, %v2896, 0
        %v2936 = vsel %vm2931, %v2897, 0
        %v2938 = vsel %vm2931, %v2898, 0
        %v2940 = vsel %vm2931, %v2899, 0
        %v2942 = vsel %vm2931, %v2900, 0
        %v2944 = vsel %vm2931, %v2901, 0
        %v2946 = vsel %vm2931, %v2902, 0
        %v2948 = vsel %vm2931, %v2916, 0
        %v2950 = vsel %vm2931, %v2918, 0
        %v2952 = vsel %vm2931, %v2920, 0
        %v2954 = vsel %vm2931, %v2922, 0
        %v2956 = vsel %vm2931, %v2924, 0
        %v2958 = vsel %vm2931, %v2926, 0
        %v2960 = vsel %vm2931, %v2928, 0
        %v2962 = vsel %vm2931, %v2930, 0
        %2964 = vmatprep.subr.mxu0 0.0
        %2965 = vmatpush1.xpose.msra.mxu0 0.0
        %2966 = vmatprep.subr.mxu0 0.0
        %2967 = vmatpush1.xpose.msra.mxu0 0.0
        %2968 = vmatprep.subr.mxu0 0.0
        %2969 = vmatpush1.xpose.msra.mxu0 0.0
        %2970 = vmatprep.subr.mxu0 0.0
        %2971 = vmatpush1.xpose.msra.mxu0 0.0
        %2972 = vmatprep.subr.mxu0 0.0
        %2973 = vmatpush1.xpose.msra.mxu0 0.0
        %2974 = vmatprep.subr.mxu0 0.0
        %2975 = vmatpush1.xpose.msra.mxu0 0.0
        %2976 = vmatprep.subr.mxu0 0.0
        %2977 = vmatpush1.xpose.msra.mxu0 0.0
        %2978 = vmatprep.subr.mxu0 0.0
        %2979 = vmatpush1.xpose.msra.mxu0 0.0
        %2980 = vmatprep.subr.mxu0 0.0
        %2981 = vmatpush1.xpose.msra.mxu0 %v2962
        %2982 = vmatprep.subr.mxu0 0.0
        %2983 = vmatpush1.xpose.msra.mxu0 %v2960
        %2984 = vmatprep.subr.mxu0 0.0
        %2985 = vmatpush1.xpose.msra.mxu0 %v2958
        %2986 = vmatprep.subr.mxu0 0.0
        %2987 = vmatpush1.xpose.msra.mxu0 %v2956
        %2988 = vmatprep.subr.mxu0 0.0
        %2989 = vmatpush1.xpose.msra.mxu0 %v2954
        %2990 = vmatprep.subr.mxu0 0.0
        %2991 = vmatpush1.xpose.msra.mxu0 %v2952
        %2992 = vmatprep.subr.mxu0 0.0
        %2993 = vmatpush1.xpose.msra.mxu0 %v2950
        %2994 = vmatprep.subr.mxu0 0.0
        %2995 = vmatpush1.xpose.msra.mxu0 %v2948
        %2996 = vmatprep.subr.mxu0 0.0
        %2997 = vmatpush2.xpose.msra.mxu0 0.0
        %2998 = vmatprep.subr.mxu0 0.0
        %2999 = vmatpush2.xpose.msra.mxu0 0.0
        %3000 = vmatprep.subr.mxu0 0.0
        %3001 = vmatpush2.xpose.msra.mxu0 0.0
        %3002 = vmatprep.subr.mxu0 0.0
        %3003 = vmatpush2.xpose.msra.mxu0 0.0
        %3004 = vmatprep.subr.mxu0 0.0
        %3005 = vmatpush2.xpose.msra.mxu0 0.0
        %3006 = vmatprep.subr.mxu0 0.0
        %3007 = vmatpush2.xpose.msra.mxu0 0.0
        %3008 = vmatprep.subr.mxu0 0.0
        %3009 = vmatpush2.xpose.msra.mxu0 0.0
        %3010 = vmatprep.subr.mxu0 0.0
        %3011 = vmatpush2.xpose.msra.mxu0 0.0
        %3012 = vmatprep.subr.mxu0 0.0
        %3013 = vmatpush2.xpose.msra.mxu0 0.0
        %3014 = vmatprep.subr.mxu0 0.0
        %3015 = vmatpush2.xpose.msra.mxu0 0.0
        %3016 = vmatprep.subr.mxu0 0.0
        %3017 = vmatpush2.xpose.msra.mxu0 0.0
        %3018 = vmatprep.subr.mxu0 0.0
        %3019 = vmatpush2.xpose.msra.mxu0 0.0
        %3020 = vmatprep.subr.mxu0 0.0
        %3021 = vmatpush2.xpose.msra.mxu0 0.0
        %3022 = vmatprep.subr.mxu0 0.0
        %3023 = vmatpush2.xpose.msra.mxu0 0.0
        %3024 = vmatprep.subr.mxu0 0.0
        %3025 = vmatpush2.xpose.msra.mxu0 0.0
        %3026 = vmatprep.subr.mxu0 0.0
        %3027 = vmatpush2.xpose.msra.mxu0 0.0
        %3028 = vmatprep.mubr.f32.mxu0 0.0
        %3029 = vmatmul.mubr.f32.gmra.mxu0 %v2932
        %v3030 = vpop.f32.mrf.mxu0
        %v3031 = vadd.f32 0.0, %v3030
        %v3032 = vpop.f32.mrf.mxu0
        %3033 = vmatprep.mubr.f32.mxu0 0.0
        %3034 = vmatmul.mubr.f32.gmra.mxu0 %v2934
        %v3035 = vpop.f32.mrf.mxu0
        %v3036 = vadd.f32 0.0, %v3035
        %v3037 = vpop.f32.mrf.mxu0
        %3038 = vmatprep.mubr.f32.mxu0 0.0
        %3039 = vmatmul.mubr.f32.gmra.mxu0 %v2936
        %v3040 = vpop.f32.mrf.mxu0
        %v3041 = vadd.f32 0.0, %v3040
        %v3042 = vpop.f32.mrf.mxu0
        %3043 = vmatprep.mubr.f32.mxu0 0.0
        %3044 = vmatmul.mubr.f32.gmra.mxu0 %v2938
        %v3045 = vpop.f32.mrf.mxu0
        %v3046 = vadd.f32 0.0, %v3045
        %v3047 = vpop.f32.mrf.mxu0
        %3048 = vmatprep.mubr.f32.mxu0 0.0
        %3049 = vmatmul.mubr.f32.gmra.mxu0 %v2940
        %v3050 = vpop.f32.mrf.mxu0
        %v3051 = vadd.f32 0.0, %v3050
        %v3052 = vpop.f32.mrf.mxu0
        %3053 = vmatprep.mubr.f32.mxu0 0.0
        %3054 = vmatmul.mubr.f32.gmra.mxu0 %v2942
        %v3055 = vpop.f32.mrf.mxu0
        %v3056 = vadd.f32 0.0, %v3055
        %v3057 = vpop.f32.mrf.mxu0
        %3058 = vmatprep.mubr.f32.mxu0 0.0
        %3059 = vmatmul.mubr.f32.gmra.mxu0 %v2944
        %v3060 = vpop.f32.mrf.mxu0
        %v3061 = vadd.f32 0.0, %v3060
        %v3062 = vpop.f32.mrf.mxu0
        %3063 = vmatprep.mubr.f32.mxu0 0.0
        %3064 = vmatmul.mubr.f32.gmra.mxu0 %v2946
        %v3065 = vpop.f32.mrf.mxu0
        %v3066 = vadd.f32 0.0, %v3065
        %v3067 = vpop.f32.mrf.mxu0
        %3068 = vdwg.mxu0
        %v3069 = vmul.f32 %v3031, 0.5
        %v3070 = vmul.f32 %v3036, 0.5
        %v3071 = vmul.f32 %v3041, 0.5
        %v3072 = vmul.f32 %v3046, 0.5
        %v3073 = vmul.f32 %v3051, 0.5
        %v3074 = vmul.f32 %v3056, 0.5
        %v3075 = vmul.f32 %v3061, 0.5
        %v3076 = vmul.f32 %v3066, 0.5
        %vm3077 = vcmask 523264
        %v3078 = vsel %vm3077, %v3069, -inf
        %3079 = vmax.xlane.f32.xlu0 %v3078
        %v3080 = vpop.xlane.xlu0 %3079
        %v3081 = vsel %vm3077, %v3070, -inf
        %3082 = vmax.xlane.f32.xlu0 %v3081
        %v3083 = vpop.xlane.xlu0 %3082
        %v3084 = vsel %vm3077, %v3071, -inf
        %3085 = vmax.xlane.f32.xlu0 %v3084
        %v3086 = vpop.xlane.xlu0 %3085
        %v3087 = vsel %vm3077, %v3072, -inf
        %3088 = vmax.xlane.f32.xlu0 %v3087
        %v3089 = vpop.xlane.xlu0 %3088
        %v3090 = vsel %vm3077, %v3073, -inf
        %3091 = vmax.xlane.f32.xlu0 %v3090
        %v3092 = vpop.xlane.xlu0 %3091
        %v3093 = vsel %vm3077, %v3074, -inf
        %3094 = vmax.xlane.f32.xlu0 %v3093
        %v3095 = vpop.xlane.xlu0 %3094
        %v3096 = vsel %vm3077, %v3075, -inf
        %3097 = vmax.xlane.f32.xlu0 %v3096
        %v3098 = vpop.xlane.xlu0 %3097
        %v3099 = vsel %vm3077, %v3076, -inf
        %3100 = vmax.xlane.f32.xlu0 %v3099
        %v3101 = vpop.xlane.xlu0 %3100
        %v3102 = vsub.f32 %v3069, %v3080
        %v3103 = vsub.f32 %v3070, %v3083
        %v3104 = vsub.f32 %v3071, %v3086
        %v3105 = vsub.f32 %v3072, %v3089
        %v3106 = vsub.f32 %v3073, %v3092
        %v3107 = vsub.f32 %v3074, %v3095
        %v3108 = vsub.f32 %v3075, %v3098
        %v3109 = vsub.f32 %v3076, %v3101
        %v3110 = vmul.f32 %v3102, 1.442695
        %v3111 = vpow.pop %v3110
        %v3112 = vmul.f32 %v3103, 1.442695
        %v3113 = vpow.pop %v3112
        %v3114 = vmul.f32 %v3104, 1.442695
        %v3115 = vpow.pop %v3114
        %v3116 = vmul.f32 %v3105, 1.442695
        %v3117 = vpow.pop %v3116
        %v3118 = vmul.f32 %v3106, 1.442695
        %v3119 = vpow.pop %v3118
        %v3120 = vmul.f32 %v3107, 1.442695
        %v3121 = vpow.pop %v3120
        %v3122 = vmul.f32 %v3108, 1.442695
        %v3123 = vpow.pop %v3122
        %v3124 = vmul.f32 %v3109, 1.442695
        %v3125 = vpow.pop %v3124
        %v3126 = vsel %vm3077, %v3111, 0.0
        %3127 = vadd.xlane.f32.xlu0 %v3126
        %v3128 = vpop.xlane.xlu0 %3127
        %v3129 = vsel %vm3077, %v3113, 0.0
        %3130 = vadd.xlane.f32.xlu0 %v3129
        %v3131 = vpop.xlane.xlu0 %3130
        %v3132 = vsel %vm3077, %v3115, 0.0
        %3133 = vadd.xlane.f32.xlu0 %v3132
        %v3134 = vpop.xlane.xlu0 %3133
        %v3135 = vsel %vm3077, %v3117, 0.0
        %3136 = vadd.xlane.f32.xlu0 %v3135
        %v3137 = vpop.xlane.xlu0 %3136
        %v3138 = vsel %vm3077, %v3119, 0.0
        %3139 = vadd.xlane.f32.xlu0 %v3138
        %v3140 = vpop.xlane.xlu0 %3139
        %v3141 = vsel %vm3077, %v3121, 0.0
        %3142 = vadd.xlane.f32.xlu0 %v3141
        %v3143 = vpop.xlane.xlu0 %3142
        %v3144 = vsel %vm3077, %v3123, 0.0
        %3145 = vadd.xlane.f32.xlu0 %v3144
        %v3146 = vpop.xlane.xlu0 %3145
        %v3147 = vsel %vm3077, %v3125, 0.0
        %3148 = vadd.xlane.f32.xlu0 %v3147
        %v3149 = vpop.xlane.xlu0 %3148
        %v3150 = vrcp.pop %v3128
        %v3151 = vrcp.pop %v3131
        %v3152 = vrcp.pop %v3134
        %v3153 = vrcp.pop %v3137
        %v3154 = vrcp.pop %v3140
        %v3155 = vrcp.pop %v3143
        %v3156 = vrcp.pop %v3146
        %v3157 = vrcp.pop %v3149
        %v3158 = vmul.f32 %v3128, %v3150
        %v3159 = vmul.f32 %v3131, %v3151
        %v3160 = vmul.f32 %v3134, %v3152
        %v3161 = vmul.f32 %v3137, %v3153
        %v3162 = vmul.f32 %v3140, %v3154
        %v3163 = vmul.f32 %v3143, %v3155
        %v3164 = vmul.f32 %v3146, %v3156
        %v3165 = vmul.f32 %v3149, %v3157
        %v3166 = vsub.f32 2.0, %v3158
        %v3167 = vsub.f32 2.0, %v3159
        %v3168 = vsub.f32 2.0, %v3160
        %v3169 = vsub.f32 2.0, %v3161
        %v3170 = vsub.f32 2.0, %v3162
        %v3171 = vsub.f32 2.0, %v3163
        %v3172 = vsub.f32 2.0, %v3164
        %v3173 = vsub.f32 2.0, %v3165
        %v3174 = vmul.f32 %v3150, %v3166
        %v3175 = vmul.f32 %v3151, %v3167
        %v3176 = vmul.f32 %v3152, %v3168
        %v3177 = vmul.f32 %v3153, %v3169
        %v3178 = vmul.f32 %v3154, %v3170
        %v3179 = vmul.f32 %v3155, %v3171
        %v3180 = vmul.f32 %v3156, %v3172
        %v3181 = vmul.f32 %v3157, %v3173
        %v3182 = vmul.f32 %v3111, %v3174
        %v3183 = vmul.f32 %v3113, %v3175
        %v3184 = vmul.f32 %v3115, %v3176
        %v3185 = vmul.f32 %v3117, %v3177
        %v3186 = vmul.f32 %v3119, %v3178
        %v3187 = vmul.f32 %v3121, %v3179
        %v3188 = vmul.f32 %v3123, %v3180
        %v3189 = vmul.f32 %v3125, %v3181
        %3190 = vrot.lane.b32.xlu0 %v2895, 64
        %v3191 = vpop.permute.xlu0 %3190
        %3192 = vrot.lane.b32.xlu0 %v2896, 64
        %v3193 = vpop.permute.xlu0 %3192
        %3194 = vrot.lane.b32.xlu0 %v2897, 64
        %v3195 = vpop.permute.xlu0 %3194
        %3196 = vrot.lane.b32.xlu0 %v2898, 64
        %v3197 = vpop.permute.xlu0 %3196
        %3198 = vrot.lane.b32.xlu0 %v2899, 64
        %v3199 = vpop.permute.xlu0 %3198
        %3200 = vrot.lane.b32.xlu0 %v2900, 64
        %v3201 = vpop.permute.xlu0 %3200
        %3202 = vrot.lane.b32.xlu0 %v2901, 64
        %v3203 = vpop.permute.xlu0 %3202
        %3204 = vrot.lane.b32.xlu0 %v2902, 64
        %v3205 = vpop.permute.xlu0 %3204
        %v3215 = vsel %vm3077, %v3182, 0
        %v3218 = vsel %vm3077, %v3183, 0
        %v3221 = vsel %vm3077, %v3184, 0
        %v3224 = vsel %vm3077, %v3185, 0
        %v3227 = vsel %vm3077, %v3186, 0
        %v3230 = vsel %vm3077, %v3187, 0
        %v3233 = vsel %vm3077, %v3188, 0
        %v3236 = vsel %vm3077, %v3189, 0
        %3238 = vmatprep.subr.mxu0 0.0
        %3239 = vmatpush1.msra.mxu0 0.0
        %3240 = vmatprep.subr.mxu0 0.0
        %3241 = vmatpush1.msra.mxu0 0.0
        %3242 = vmatprep.subr.mxu0 0.0
        %3243 = vmatpush1.msra.mxu0 0.0
        %3244 = vmatprep.subr.mxu0 0.0
        %3245 = vmatpush1.msra.mxu0 0.0
        %3246 = vmatprep.subr.mxu0 0.0
        %3247 = vmatpush1.msra.mxu0 0.0
        %3248 = vmatprep.subr.mxu0 0.0
        %3249 = vmatpush1.msra.mxu0 0.0
        %3250 = vmatprep.subr.mxu0 0.0
        %3251 = vmatpush1.msra.mxu0 0.0
        %3252 = vmatprep.subr.mxu0 0.0
        %3253 = vmatpush1.msra.mxu0 0.0
        %3254 = vmatprep.subr.mxu0 0.0
        %3255 = vmatpush1.msra.mxu0 %v3205
        %3256 = vmatprep.subr.mxu0 0.0
        %3257 = vmatpush1.msra.mxu0 %v3203
        %3258 = vmatprep.subr.mxu0 0.0
        %3259 = vmatpush1.msra.mxu0 %v3201
        %3260 = vmatprep.subr.mxu0 0.0
        %3261 = vmatpush1.msra.mxu0 %v3199
        %3262 = vmatprep.subr.mxu0 0.0
        %3263 = vmatpush1.msra.mxu0 %v3197
        %3264 = vmatprep.subr.mxu0 0.0
        %3265 = vmatpush1.msra.mxu0 %v3195
        %3266 = vmatprep.subr.mxu0 0.0
        %3267 = vmatpush1.msra.mxu0 %v3193
        %3268 = vmatprep.subr.mxu0 0.0
        %3269 = vmatpush1.msra.mxu0 %v3191
        %3270 = vmatprep.subr.mxu0 0.0
        %3271 = vmatpush2.msra.mxu0 0.0
        %3272 = vmatprep.subr.mxu0 0.0
        %3273 = vmatpush2.msra.mxu0 0.0
        %3274 = vmatprep.subr.mxu0 0.0
        %3275 = vmatpush2.msra.mxu0 0.0
        %3276 = vmatprep.subr.mxu0 0.0
        %3277 = vmatpush2.msra.mxu0 0.0
        %3278 = vmatprep.subr.mxu0 0.0
        %3279 = vmatpush2.msra.mxu0 0.0
        %3280 = vmatprep.subr.mxu0 0.0
        %3281 = vmatpush2.msra.mxu0 0.0
        %3282 = vmatprep.subr.mxu0 0.0
        %3283 = vmatpush2.msra.mxu0 0.0
        %3284 = vmatprep.subr.mxu0 0.0
        %3285 = vmatpush2.msra.mxu0 0.0
        %3286 = vmatprep.subr.mxu0 0.0
        %3287 = vmatpush2.msra.mxu0 0.0
        %3288 = vmatprep.subr.mxu0 0.0
        %3289 = vmatpush2.msra.mxu0 0.0
        %3290 = vmatprep.subr.mxu0 0.0
        %3291 = vmatpush2.msra.mxu0 0.0
        %3292 = vmatprep.subr.mxu0 0.0
        %3293 = vmatpush2.msra.mxu0 0.0
        %3294 = vmatprep.subr.mxu0 0.0
        %3295 = vmatpush2.msra.mxu0 0.0
        %3296 = vmatprep.subr.mxu0 0.0
        %3297 = vmatpush2.msra.mxu0 0.0
        %3298 = vmatprep.subr.mxu0 0.0
        %3299 = vmatpush2.msra.mxu0 0.0
        %3300 = vmatprep.subr.mxu0 0.0
        %3301 = vmatpush2.msra.mxu0 0.0
        %3302 = vmatprep.mubr.f32.mxu0 0.0
        %3303 = vmatmul.mubr.f32.gmra.mxu0 %v3215
        %v3304 = vpop.f32.mrf.mxu0
        %v3305 = vadd.f32 0.0, %v3304
        %v3306 = vpop.f32.mrf.mxu0
        %3307 = vmatprep.mubr.f32.mxu0 0.0
        %3308 = vmatmul.mubr.f32.gmra.mxu0 %v3218
        %v3309 = vpop.f32.mrf.mxu0
        %v3310 = vadd.f32 0.0, %v3309
        %v3311 = vpop.f32.mrf.mxu0
        %3312 = vmatprep.mubr.f32.mxu0 0.0
        %3313 = vmatmul.mubr.f32.gmra.mxu0 %v3221
        %v3314 = vpop.f32.mrf.mxu0
        %v3315 = vadd.f32 0.0, %v3314
        %v3316 = vpop.f32.mrf.mxu0
        %3317 = vmatprep.mubr.f32.mxu0 0.0
        %3318 = vmatmul.mubr.f32.gmra.mxu0 %v3224
        %v3319 = vpop.f32.mrf.mxu0
        %v3320 = vadd.f32 0.0, %v3319
        %v3321 = vpop.f32.mrf.mxu0
        %3322 = vmatprep.mubr.f32.mxu0 0.0
        %3323 = vmatmul.mubr.f32.gmra.mxu0 %v3227
        %v3324 = vpop.f32.mrf.mxu0
        %v3325 = vadd.f32 0.0, %v3324
        %v3326 = vpop.f32.mrf.mxu0
        %3327 = vmatprep.mubr.f32.mxu0 0.0
        %3328 = vmatmul.mubr.f32.gmra.mxu0 %v3230
        %v3329 = vpop.f32.mrf.mxu0
        %v3330 = vadd.f32 0.0, %v3329
        %v3331 = vpop.f32.mrf.mxu0
        %3332 = vmatprep.mubr.f32.mxu0 0.0
        %3333 = vmatmul.mubr.f32.gmra.mxu0 %v3233
        %v3334 = vpop.f32.mrf.mxu0
        %v3335 = vadd.f32 0.0, %v3334
        %v3336 = vpop.f32.mrf.mxu0
        %3337 = vmatprep.mubr.f32.mxu0 0.0
        %3338 = vmatmul.mubr.f32.gmra.mxu0 %v3236
        %v3339 = vpop.f32.mrf.mxu0
        %v3340 = vadd.f32 0.0, %v3339
        %v3341 = vpop.f32.mrf.mxu0
        %3342 = vdwg.mxu0
        %3343 = vrot.lane.b32.xlu0 %v2895, 124
        %v3344 = vpop.permute.xlu0 %3343
        %3345 = vrot.lane.b32.xlu0 %v2896, 124
        %v3346 = vpop.permute.xlu0 %3345
        %3347 = vrot.lane.b32.xlu0 %v2897, 124
        %v3348 = vpop.permute.xlu0 %3347
        %3349 = vrot.lane.b32.xlu0 %v2898, 124
        %v3350 = vpop.permute.xlu0 %3349
        %3351 = vrot.lane.b32.xlu0 %v2899, 124
        %v3352 = vpop.permute.xlu0 %3351
        %3353 = vrot.lane.b32.xlu0 %v2900, 124
        %v3354 = vpop.permute.xlu0 %3353
        %3355 = vrot.lane.b32.xlu0 %v2901, 124
        %v3356 = vpop.permute.xlu0 %3355
        %3357 = vrot.lane.b32.xlu0 %v2902, 124
        %v3358 = vpop.permute.xlu0 %3357
        %3359 = vrot.lane.b32.xlu0 %v2895, 92
        %v3360 = vpop.permute.xlu0 %3359
        %3361 = vrot.lane.b32.xlu0 %v2896, 92
        %v3362 = vpop.permute.xlu0 %3361
        %3363 = vrot.lane.b32.xlu0 %v2897, 92
        %v3364 = vpop.permute.xlu0 %3363
        %3365 = vrot.lane.b32.xlu0 %v2898, 92
        %v3366 = vpop.permute.xlu0 %3365
        %3367 = vrot.lane.b32.xlu0 %v2899, 92
        %v3368 = vpop.permute.xlu0 %3367
        %3369 = vrot.lane.b32.xlu0 %v2900, 92
        %v3370 = vpop.permute.xlu0 %3369
        %3371 = vrot.lane.b32.xlu0 %v2901, 92
        %v3372 = vpop.permute.xlu0 %3371
        %3373 = vrot.lane.b32.xlu0 %v2902, 92
        %v3374 = vpop.permute.xlu0 %3373
        %v3375 = vsel %vm2931, %v3344, 0
        %v3377 = vsel %vm2931, %v3346, 0
        %v3379 = vsel %vm2931, %v3348, 0
        %v3381 = vsel %vm2931, %v3350, 0
        %v3383 = vsel %vm2931, %v3352, 0
        %v3385 = vsel %vm2931, %v3354, 0
        %v3387 = vsel %vm2931, %v3356, 0
        %v3389 = vsel %vm2931, %v3358, 0
        %v3391 = vsel %vm2931, %v3360, 0
        %v3393 = vsel %vm2931, %v3362, 0
        %v3395 = vsel %vm2931, %v3364, 0
        %v3397 = vsel %vm2931, %v3366, 0
        %v3399 = vsel %vm2931, %v3368, 0
        %v3401 = vsel %vm2931, %v3370, 0
        %v3403 = vsel %vm2931, %v3372, 0
        %v3405 = vsel %vm2931, %v3374, 0
        %3407 = vmatprep.subr.mxu0 0.0
        %3408 = vmatpush1.xpose.msra.mxu0 0.0
        %3409 = vmatprep.subr.mxu0 0.0
        %3410 = vmatpush1.xpose.msra.mxu0 0.0
        %3411 = vmatprep.subr.mxu0 0.0
        %3412 = vmatpush1.xpose.msra.mxu0 0.0
        %3413 = vmatprep.subr.mxu0 0.0
        %3414 = vmatpush1.xpose.msra.mxu0 0.0
        %3415 = vmatprep.subr.mxu0 0.0
        %3416 = vmatpush1.xpose.msra.mxu0 0.0
        %3417 = vmatprep.subr.mxu0 0.0
        %3418 = vmatpush1.xpose.msra.mxu0 0.0
        %3419 = vmatprep.subr.mxu0 0.0
        %3420 = vmatpush1.xpose.msra.mxu0 0.0
        %3421 = vmatprep.subr.mxu0 0.0
        %3422 = vmatpush1.xpose.msra.mxu0 0.0
        %3423 = vmatprep.subr.mxu0 0.0
        %3424 = vmatpush1.xpose.msra.mxu0 %v3405
        %3425 = vmatprep.subr.mxu0 0.0
        %3426 = vmatpush1.xpose.msra.mxu0 %v3403
        %3427 = vmatprep.subr.mxu0 0.0
        %3428 = vmatpush1.xpose.msra.mxu0 %v3401
        %3429 = vmatprep.subr.mxu0 0.0
        %3430 = vmatpush1.xpose.msra.mxu0 %v3399
        %3431 = vmatprep.subr.mxu0 0.0
        %3432 = vmatpush1.xpose.msra.mxu0 %v3397
        %3433 = vmatprep.subr.mxu0 0.0
        %3434 = vmatpush1.xpose.msra.mxu0 %v3395
        %3435 = vmatprep.subr.mxu0 0.0
        %3436 = vmatpush1.xpose.msra.mxu0 %v3393
        %3437 = vmatprep.subr.mxu0 0.0
        %3438 = vmatpush1.xpose.msra.mxu0 %v3391
        %3439 = vmatprep.subr.mxu0 0.0
        %3440 = vmatpush2.xpose.msra.mxu0 0.0
        %3441 = vmatprep.subr.mxu0 0.0
        %3442 = vmatpush2.xpose.msra.mxu0 0.0
        %3443 = vmatprep.subr.mxu0 0.0
        %3444 = vmatpush2.xpose.msra.mxu0 0.0
        %3445 = vmatprep.subr.mxu0 0.0
        %3446 = vmatpush2.xpose.msra.mxu0 0.0
        %3447 = vmatprep.subr.mxu0 0.0
        %3448 = vmatpush2.xpose.msra.mxu0 0.0
        %3449 = vmatprep.subr.mxu0 0.0
        %3450 = vmatpush2.xpose.msra.mxu0 0.0
        %3451 = vmatprep.subr.mxu0 0.0
        %3452 = vmatpush2.xpose.msra.mxu0 0.0
        %3453 = vmatprep.subr.mxu0 0.0
        %3454 = vmatpush2.xpose.msra.mxu0 0.0
        %3455 = vmatprep.subr.mxu0 0.0
        %3456 = vmatpush2.xpose.msra.mxu0 0.0
        %3457 = vmatprep.subr.mxu0 0.0
        %3458 = vmatpush2.xpose.msra.mxu0 0.0
        %3459 = vmatprep.subr.mxu0 0.0
        %3460 = vmatpush2.xpose.msra.mxu0 0.0
        %3461 = vmatprep.subr.mxu0 0.0
        %3462 = vmatpush2.xpose.msra.mxu0 0.0
        %3463 = vmatprep.subr.mxu0 0.0
        %3464 = vmatpush2.xpose.msra.mxu0 0.0
        %3465 = vmatprep.subr.mxu0 0.0
        %3466 = vmatpush2.xpose.msra.mxu0 0.0
        %3467 = vmatprep.subr.mxu0 0.0
        %3468 = vmatpush2.xpose.msra.mxu0 0.0
        %3469 = vmatprep.subr.mxu0 0.0
        %3470 = vmatpush2.xpose.msra.mxu0 0.0
        %3471 = vmatprep.mubr.f32.mxu0 0.0
        %3472 = vmatmul.mubr.f32.gmra.mxu0 %v3375
        %v3473 = vpop.f32.mrf.mxu0
        %v3474 = vadd.f32 0.0, %v3473
        %v3475 = vpop.f32.mrf.mxu0
        %3476 = vmatprep.mubr.f32.mxu0 0.0
        %3477 = vmatmul.mubr.f32.gmra.mxu0 %v3377
        %v3478 = vpop.f32.mrf.mxu0
        %v3479 = vadd.f32 0.0, %v3478
        %v3480 = vpop.f32.mrf.mxu0
        %3481 = vmatprep.mubr.f32.mxu0 0.0
        %3482 = vmatmul.mubr.f32.gmra.mxu0 %v3379
        %v3483 = vpop.f32.mrf.mxu0
        %v3484 = vadd.f32 0.0, %v3483
        %v3485 = vpop.f32.mrf.mxu0
        %3486 = vmatprep.mubr.f32.mxu0 0.0
        %3487 = vmatmul.mubr.f32.gmra.mxu0 %v3381
        %v3488 = vpop.f32.mrf.mxu0
        %v3489 = vadd.f32 0.0, %v3488
        %v3490 = vpop.f32.mrf.mxu0
        %3491 = vmatprep.mubr.f32.mxu0 0.0
        %3492 = vmatmul.mubr.f32.gmra.mxu0 %v3383
        %v3493 = vpop.f32.mrf.mxu0
        %v3494 = vadd.f32 0.0, %v3493
        %v3495 = vpop.f32.mrf.mxu0
        %3496 = vmatprep.mubr.f32.mxu0 0.0
        %3497 = vmatmul.mubr.f32.gmra.mxu0 %v3385
        %v3498 = vpop.f32.mrf.mxu0
        %v3499 = vadd.f32 0.0, %v3498
        %v3500 = vpop.f32.mrf.mxu0
        %3501 = vmatprep.mubr.f32.mxu0 0.0
        %3502 = vmatmul.mubr.f32.gmra.mxu0 %v3387
        %v3503 = vpop.f32.mrf.mxu0
        %v3504 = vadd.f32 0.0, %v3503
        %v3505 = vpop.f32.mrf.mxu0
        %3506 = vmatprep.mubr.f32.mxu0 0.0
        %3507 = vmatmul.mubr.f32.gmra.mxu0 %v3389
        %v3508 = vpop.f32.mrf.mxu0
        %v3509 = vadd.f32 0.0, %v3508
        %v3510 = vpop.f32.mrf.mxu0
        %3511 = vdwg.mxu0
        %v3512 = vmul.f32 %v3474, 0.5
        %v3513 = vmul.f32 %v3479, 0.5
        %v3514 = vmul.f32 %v3484, 0.5
        %v3515 = vmul.f32 %v3489, 0.5
        %v3516 = vmul.f32 %v3494, 0.5
        %v3517 = vmul.f32 %v3499, 0.5
        %v3518 = vmul.f32 %v3504, 0.5
        %v3519 = vmul.f32 %v3509, 0.5
        %v3520 = vsel %vm3077, %v3512, -inf
        %3521 = vmax.xlane.f32.xlu0 %v3520
        %v3522 = vpop.xlane.xlu0 %3521
        %v3523 = vsel %vm3077, %v3513, -inf
        %3524 = vmax.xlane.f32.xlu0 %v3523
        %v3525 = vpop.xlane.xlu0 %3524
        %v3526 = vsel %vm3077, %v3514, -inf
        %3527 = vmax.xlane.f32.xlu0 %v3526
        %v3528 = vpop.xlane.xlu0 %3527
        %v3529 = vsel %vm3077, %v3515, -inf
        %3530 = vmax.xlane.f32.xlu0 %v3529
        %v3531 = vpop.xlane.xlu0 %3530
        %v3532 = vsel %vm3077, %v3516, -inf
        %3533 = vmax.xlane.f32.xlu0 %v3532
        %v3534 = vpop.xlane.xlu0 %3533
        %v3535 = vsel %vm3077, %v3517, -inf
        %3536 = vmax.xlane.f32.xlu0 %v3535
        %v3537 = vpop.xlane.xlu0 %3536
        %v3538 = vsel %vm3077, %v3518, -inf
        %3539 = vmax.xlane.f32.xlu0 %v3538
        %v3540 = vpop.xlane.xlu0 %3539
        %v3541 = vsel %vm3077, %v3519, -inf
        %3542 = vmax.xlane.f32.xlu0 %v3541
        %v3543 = vpop.xlane.xlu0 %3542
        %v3544 = vsub.f32 %v3512, %v3522
        %v3545 = vsub.f32 %v3513, %v3525
        %v3546 = vsub.f32 %v3514, %v3528
        %v3547 = vsub.f32 %v3515, %v3531
        %v3548 = vsub.f32 %v3516, %v3534
        %v3549 = vsub.f32 %v3517, %v3537
        %v3550 = vsub.f32 %v3518, %v3540
        %v3551 = vsub.f32 %v3519, %v3543
        %v3552 = vmul.f32 %v3544, 1.442695
        %v3553 = vpow.pop %v3552
        %v3554 = vmul.f32 %v3545, 1.442695
        %v3555 = vpow.pop %v3554
        %v3556 = vmul.f32 %v3546, 1.442695
        %v3557 = vpow.pop %v3556
        %v3558 = vmul.f32 %v3547, 1.442695
        %v3559 = vpow.pop %v3558
        %v3560 = vmul.f32 %v3548, 1.442695
        %v3561 = vpow.pop %v3560
        %v3562 = vmul.f32 %v3549, 1.442695
        %v3563 = vpow.pop %v3562
        %v3564 = vmul.f32 %v3550, 1.442695
        %v3565 = vpow.pop %v3564
        %v3566 = vmul.f32 %v3551, 1.442695
        %v3567 = vpow.pop %v3566
        %v3568 = vsel %vm3077, %v3553, 0.0
        %3569 = vadd.xlane.f32.xlu0 %v3568
        %v3570 = vpop.xlane.xlu0 %3569
        %v3571 = vsel %vm3077, %v3555, 0.0
        %3572 = vadd.xlane.f32.xlu0 %v3571
        %v3573 = vpop.xlane.xlu0 %3572
        %v3574 = vsel %vm3077, %v3557, 0.0
        %3575 = vadd.xlane.f32.xlu0 %v3574
        %v3576 = vpop.xlane.xlu0 %3575
        %v3577 = vsel %vm3077, %v3559, 0.0
        %3578 = vadd.xlane.f32.xlu0 %v3577
        %v3579 = vpop.xlane.xlu0 %3578
        %v3580 = vsel %vm3077, %v3561, 0.0
        %3581 = vadd.xlane.f32.xlu0 %v3580
        %v3582 = vpop.xlane.xlu0 %3581
        %v3583 = vsel %vm3077, %v3563, 0.0
        %3584 = vadd.xlane.f32.xlu0 %v3583
        %v3585 = vpop.xlane.xlu0 %3584
        %v3586 = vsel %vm3077, %v3565, 0.0
        %3587 = vadd.xlane.f32.xlu0 %v3586
        %v3588 = vpop.xlane.xlu0 %3587
        %v3589 = vsel %vm3077, %v3567, 0.0
        %3590 = vadd.xlane.f32.xlu0 %v3589
        %v3591 = vpop.xlane.xlu0 %3590
        %v3592 = vrcp.pop %v3570
        %v3593 = vrcp.pop %v3573
        %v3594 = vrcp.pop %v3576
        %v3595 = vrcp.pop %v3579
        %v3596 = vrcp.pop %v3582
        %v3597 = vrcp.pop %v3585
        %v3598 = vrcp.pop %v3588
        %v3599 = vrcp.pop %v3591
        %v3600 = vmul.f32 %v3570, %v3592
        %v3601 = vmul.f32 %v3573, %v3593
        %v3602 = vmul.f32 %v3576, %v3594
        %v3603 = vmul.f32 %v3579, %v3595
        %v3604 = vmul.f32 %v3582, %v3596
        %v3605 = vmul.f32 %v3585, %v3597
        %v3606 = vmul.f32 %v3588, %v3598
        %v3607 = vmul.f32 %v3591, %v3599
        %v3608 = vsub.f32 2.0, %v3600
        %v3609 = vsub.f32 2.0, %v3601
        %v3610 = vsub.f32 2.0, %v3602
        %v3611 = vsub.f32 2.0, %v3603
        %v3612 = vsub.f32 2.0, %v3604
        %v3613 = vsub.f32 2.0, %v3605
        %v3614 = vsub.f32 2.0, %v3606
        %v3615 = vsub.f32 2.0, %v3607
        %v3616 = vmul.f32 %v3592, %v3608
        %v3617 = vmul.f32 %v3593, %v3609
        %v3618 = vmul.f32 %v3594, %v3610
        %v3619 = vmul.f32 %v3595, %v3611
        %v3620 = vmul.f32 %v3596, %v3612
        %v3621 = vmul.f32 %v3597, %v3613
        %v3622 = vmul.f32 %v3598, %v3614
        %v3623 = vmul.f32 %v3599, %v3615
        %v3624 = vmul.f32 %v3553, %v3616
        %v3625 = vmul.f32 %v3555, %v3617
        %v3626 = vmul.f32 %v3557, %v3618
        %v3627 = vmul.f32 %v3559, %v3619
        %v3628 = vmul.f32 %v3561, %v3620
        %v3629 = vmul.f32 %v3563, %v3621
        %v3630 = vmul.f32 %v3565, %v3622
        %v3631 = vmul.f32 %v3567, %v3623
        %3632 = vrot.lane.b32.xlu0 %v2895, 60
        %v3633 = vpop.permute.xlu0 %3632
        %3634 = vrot.lane.b32.xlu0 %v2896, 60
        %v3635 = vpop.permute.xlu0 %3634
        %3636 = vrot.lane.b32.xlu0 %v2897, 60
        %v3637 = vpop.permute.xlu0 %3636
        %3638 = vrot.lane.b32.xlu0 %v2898, 60
        %v3639 = vpop.permute.xlu0 %3638
        %3640 = vrot.lane.b32.xlu0 %v2899, 60
        %v3641 = vpop.permute.xlu0 %3640
        %3642 = vrot.lane.b32.xlu0 %v2900, 60
        %v3643 = vpop.permute.xlu0 %3642
        %3644 = vrot.lane.b32.xlu0 %v2901, 60
        %v3645 = vpop.permute.xlu0 %3644
        %3646 = vrot.lane.b32.xlu0 %v2902, 60
        %v3647 = vpop.permute.xlu0 %3646
        %v3657 = vsel %vm3077, %v3624, 0
        %v3660 = vsel %vm3077, %v3625, 0
        %v3663 = vsel %vm3077, %v3626, 0
        %v3666 = vsel %vm3077, %v3627, 0
        %v3669 = vsel %vm3077, %v3628, 0
        %v3672 = vsel %vm3077, %v3629, 0
        %v3675 = vsel %vm3077, %v3630, 0
        %v3678 = vsel %vm3077, %v3631, 0
        %3680 = vmatprep.subr.mxu0 0.0
        %3681 = vmatpush1.msra.mxu0 0.0
        %3682 = vmatprep.subr.mxu0 0.0
        %3683 = vmatpush1.msra.mxu0 0.0
        %3684 = vmatprep.subr.mxu0 0.0
        %3685 = vmatpush1.msra.mxu0 0.0
        %3686 = vmatprep.subr.mxu0 0.0
        %3687 = vmatpush1.msra.mxu0 0.0
        %3688 = vmatprep.subr.mxu0 0.0
        %3689 = vmatpush1.msra.mxu0 0.0
        %3690 = vmatprep.subr.mxu0 0.0
        %3691 = vmatpush1.msra.mxu0 0.0
        %3692 = vmatprep.subr.mxu0 0.0
        %3693 = vmatpush1.msra.mxu0 0.0
        %3694 = vmatprep.subr.mxu0 0.0
        %3695 = vmatpush1.msra.mxu0 0.0
        %3696 = vmatprep.subr.mxu0 0.0
        %3697 = vmatpush1.msra.mxu0 %v3647
        %3698 = vmatprep.subr.mxu0 0.0
        %3699 = vmatpush1.msra.mxu0 %v3645
        %3700 = vmatprep.subr.mxu0 0.0
        %3701 = vmatpush1.msra.mxu0 %v3643
        %3702 = vmatprep.subr.mxu0 0.0
        %3703 = vmatpush1.msra.mxu0 %v3641
        %3704 = vmatprep.subr.mxu0 0.0
        %3705 = vmatpush1.msra.mxu0 %v3639
        %3706 = vmatprep.subr.mxu0 0.0
        %3707 = vmatpush1.msra.mxu0 %v3637
        %3708 = vmatprep.subr.mxu0 0.0
        %3709 = vmatpush1.msra.mxu0 %v3635
        %3710 = vmatprep.subr.mxu0 0.0
        %3711 = vmatpush1.msra.mxu0 %v3633
        %3712 = vmatprep.subr.mxu0 0.0
        %3713 = vmatpush2.msra.mxu0 0.0
        %3714 = vmatprep.subr.mxu0 0.0
        %3715 = vmatpush2.msra.mxu0 0.0
        %3716 = vmatprep.subr.mxu0 0.0
        %3717 = vmatpush2.msra.mxu0 0.0
        %3718 = vmatprep.subr.mxu0 0.0
        %3719 = vmatpush2.msra.mxu0 0.0
        %3720 = vmatprep.subr.mxu0 0.0
        %3721 = vmatpush2.msra.mxu0 0.0
        %3722 = vmatprep.subr.mxu0 0.0
        %3723 = vmatpush2.msra.mxu0 0.0
        %3724 = vmatprep.subr.mxu0 0.0
        %3725 = vmatpush2.msra.mxu0 0.0
        %3726 = vmatprep.subr.mxu0 0.0
        %3727 = vmatpush2.msra.mxu0 0.0
        %3728 = vmatprep.subr.mxu0 0.0
        %3729 = vmatpush2.msra.mxu0 0.0
        %3730 = vmatprep.subr.mxu0 0.0
        %3731 = vmatpush2.msra.mxu0 0.0
        %3732 = vmatprep.subr.mxu0 0.0
        %3733 = vmatpush2.msra.mxu0 0.0
        %3734 = vmatprep.subr.mxu0 0.0
        %3735 = vmatpush2.msra.mxu0 0.0
        %3736 = vmatprep.subr.mxu0 0.0
        %3737 = vmatpush2.msra.mxu0 0.0
        %3738 = vmatprep.subr.mxu0 0.0
        %3739 = vmatpush2.msra.mxu0 0.0
        %3740 = vmatprep.subr.mxu0 0.0
        %3741 = vmatpush2.msra.mxu0 0.0
        %3742 = vmatprep.subr.mxu0 0.0
        %3743 = vmatpush2.msra.mxu0 0.0
        %3744 = vmatprep.mubr.f32.mxu0 0.0
        %3745 = vmatmul.mubr.f32.gmra.mxu0 %v3657
        %v3746 = vpop.f32.mrf.mxu0
        %v3747 = vadd.f32 0.0, %v3746
        %v3748 = vpop.f32.mrf.mxu0
        %3749 = vmatprep.mubr.f32.mxu0 0.0
        %3750 = vmatmul.mubr.f32.gmra.mxu0 %v3660
        %v3751 = vpop.f32.mrf.mxu0
        %v3752 = vadd.f32 0.0, %v3751
        %v3753 = vpop.f32.mrf.mxu0
        %3754 = vmatprep.mubr.f32.mxu0 0.0
        %3755 = vmatmul.mubr.f32.gmra.mxu0 %v3663
        %v3756 = vpop.f32.mrf.mxu0
        %v3757 = vadd.f32 0.0, %v3756
        %v3758 = vpop.f32.mrf.mxu0
        %3759 = vmatprep.mubr.f32.mxu0 0.0
        %3760 = vmatmul.mubr.f32.gmra.mxu0 %v3666
        %v3761 = vpop.f32.mrf.mxu0
        %v3762 = vadd.f32 0.0, %v3761
        %v3763 = vpop.f32.mrf.mxu0
        %3764 = vmatprep.mubr.f32.mxu0 0.0
        %3765 = vmatmul.mubr.f32.gmra.mxu0 %v3669
        %v3766 = vpop.f32.mrf.mxu0
        %v3767 = vadd.f32 0.0, %v3766
        %v3768 = vpop.f32.mrf.mxu0
        %3769 = vmatprep.mubr.f32.mxu0 0.0
        %3770 = vmatmul.mubr.f32.gmra.mxu0 %v3672
        %v3771 = vpop.f32.mrf.mxu0
        %v3772 = vadd.f32 0.0, %v3771
        %v3773 = vpop.f32.mrf.mxu0
        %3774 = vmatprep.mubr.f32.mxu0 0.0
        %3775 = vmatmul.mubr.f32.gmra.mxu0 %v3675
        %v3776 = vpop.f32.mrf.mxu0
        %v3777 = vadd.f32 0.0, %v3776
        %v3778 = vpop.f32.mrf.mxu0
        %3779 = vmatprep.mubr.f32.mxu0 0.0
        %3780 = vmatmul.mubr.f32.gmra.mxu0 %v3678
        %v3781 = vpop.f32.mrf.mxu0
        %v3782 = vadd.f32 0.0, %v3781
        %v3783 = vpop.f32.mrf.mxu0
        %3784 = vdwg.mxu0
        %v3786 = vrot.slane %v2903, 4
        %v3788 = vsel %vm2931, %v3747, 0
        %v3791 = vsel %vm2931, %v3752, 0
        %v3794 = vsel %vm2931, %v3757, 0
        %v3797 = vsel %vm2931, %v3762, 0
        %v3800 = vsel %vm2931, %v3767, 0
        %v3803 = vsel %vm2931, %v3772, 0
        %v3806 = vsel %vm2931, %v3777, 0
        %v3809 = vsel %vm2931, %v3782, 0
        %vm3811 = vcmask 1043456
        %v3812 = vsel %vm3811, %v3786, 0
        %3814 = vmatprep.subr.mxu0 0.0
        %3815 = vmatpush1.msra.mxu0 0.0
        %3816 = vmatprep.subr.mxu0 0.0
        %3817 = vmatpush1.msra.mxu0 0.0
        %3818 = vmatprep.subr.mxu0 0.0
        %3819 = vmatpush1.msra.mxu0 0.0
        %3820 = vmatprep.subr.mxu0 0.0
        %3821 = vmatpush1.msra.mxu0 0.0
        %3822 = vmatprep.subr.mxu0 0.0
        %3823 = vmatpush1.msra.mxu0 0.0
        %3824 = vmatprep.subr.mxu0 0.0
        %3825 = vmatpush1.msra.mxu0 0.0
        %3826 = vmatprep.subr.mxu0 0.0
        %3827 = vmatpush1.msra.mxu0 0.0
        %3828 = vmatprep.subr.mxu0 0.0
        %3829 = vmatpush1.msra.mxu0 0.0
        %3830 = vmatprep.subr.mxu0 0.0
        %3831 = vmatpush1.msra.mxu0 0.0
        %3832 = vmatprep.subr.mxu0 0.0
        %3833 = vmatpush1.msra.mxu0 0.0
        %3834 = vmatprep.subr.mxu0 0.0
        %3835 = vmatpush1.msra.mxu0 0.0
        %3836 = vmatprep.subr.mxu0 0.0
        %3837 = vmatpush1.msra.mxu0 0.0
        %3838 = vmatprep.subr.mxu0 0.0
        %3839 = vmatpush1.msra.mxu0 0.0
        %3840 = vmatprep.subr.mxu0 0.0
        %3841 = vmatpush1.msra.mxu0 0.0
        %3842 = vmatprep.subr.mxu0 0.0
        %3843 = vmatpush1.msra.mxu0 0.0
        %3844 = vmatprep.subr.mxu0 0.0
        %3845 = vmatpush1.msra.mxu0 %v3812
        %3846 = vmatprep.subr.mxu0 0.0
        %3847 = vmatpush2.msra.mxu0 0.0
        %3848 = vmatprep.subr.mxu0 0.0
        %3849 = vmatpush2.msra.mxu0 0.0
        %3850 = vmatprep.subr.mxu0 0.0
        %3851 = vmatpush2.msra.mxu0 0.0
        %3852 = vmatprep.subr.mxu0 0.0
        %3853 = vmatpush2.msra.mxu0 0.0
        %3854 = vmatprep.subr.mxu0 0.0
        %3855 = vmatpush2.msra.mxu0 0.0
        %3856 = vmatprep.subr.mxu0 0.0
        %3857 = vmatpush2.msra.mxu0 0.0
        %3858 = vmatprep.subr.mxu0 0.0
        %3859 = vmatpush2.msra.mxu0 0.0
        %3860 = vmatprep.subr.mxu0 0.0
        %3861 = vmatpush2.msra.mxu0 0.0
        %3862 = vmatprep.subr.mxu0 0.0
        %3863 = vmatpush2.msra.mxu0 0.0
        %3864 = vmatprep.subr.mxu0 0.0
        %3865 = vmatpush2.msra.mxu0 0.0
        %3866 = vmatprep.subr.mxu0 0.0
        %3867 = vmatpush2.msra.mxu0 0.0
        %3868 = vmatprep.subr.mxu0 0.0
        %3869 = vmatpush2.msra.mxu0 0.0
        %3870 = vmatprep.subr.mxu0 0.0
        %3871 = vmatpush2.msra.mxu0 0.0
        %3872 = vmatprep.subr.mxu0 0.0
        %3873 = vmatpush2.msra.mxu0 0.0
        %3874 = vmatprep.subr.mxu0 0.0
        %3875 = vmatpush2.msra.mxu0 0.0
        %3876 = vmatprep.subr.mxu0 0.0
        %3877 = vmatpush2.msra.mxu0 0.0
        %3878 = vmatprep.mubr.f32.mxu0 0.0
        %3879 = vmatmul.mubr.f32.gmra.mxu0 %v3788
        %v3880 = vpop.f32.mrf.mxu0
        %v3881 = vadd.f32 0.0, %v3880
        %v3882 = vpop.f32.mrf.mxu0
        %3883 = vmatprep.mubr.f32.mxu0 0.0
        %3884 = vmatmul.mubr.f32.gmra.mxu0 %v3791
        %v3885 = vpop.f32.mrf.mxu0
        %v3886 = vadd.f32 0.0, %v3885
        %v3887 = vpop.f32.mrf.mxu0
        %3888 = vmatprep.mubr.f32.mxu0 0.0
        %3889 = vmatmul.mubr.f32.gmra.mxu0 %v3794
        %v3890 = vpop.f32.mrf.mxu0
        %v3891 = vadd.f32 0.0, %v3890
        %v3892 = vpop.f32.mrf.mxu0
        %3893 = vmatprep.mubr.f32.mxu0 0.0
        %3894 = vmatmul.mubr.f32.gmra.mxu0 %v3797
        %v3895 = vpop.f32.mrf.mxu0
        %v3896 = vadd.f32 0.0, %v3895
        %v3897 = vpop.f32.mrf.mxu0
        %3898 = vmatprep.mubr.f32.mxu0 0.0
        %3899 = vmatmul.mubr.f32.gmra.mxu0 %v3800
        %v3900 = vpop.f32.mrf.mxu0
        %v3901 = vadd.f32 0.0, %v3900
        %v3902 = vpop.f32.mrf.mxu0
        %3903 = vmatprep.mubr.f32.mxu0 0.0
        %3904 = vmatmul.mubr.f32.gmra.mxu0 %v3803
        %v3905 = vpop.f32.mrf.mxu0
        %v3906 = vadd.f32 0.0, %v3905
        %v3907 = vpop.f32.mrf.mxu0
        %3908 = vmatprep.mubr.f32.mxu0 0.0
        %3909 = vmatmul.mubr.f32.gmra.mxu0 %v3806
        %v3910 = vpop.f32.mrf.mxu0
        %v3911 = vadd.f32 0.0, %v3910
        %v3912 = vpop.f32.mrf.mxu0
        %3913 = vmatprep.mubr.f32.mxu0 0.0
        %3914 = vmatmul.mubr.f32.gmra.mxu0 %v3809
        %v3915 = vpop.f32.mrf.mxu0
        %v3916 = vadd.f32 0.0, %v3915
        %v3917 = vpop.f32.mrf.mxu0
        %3918 = vdwg.mxu0
        %v3920 = vsel %vm2931, %v3305, 0
        %v3923 = vsel %vm2931, %v3310, 0
        %v3926 = vsel %vm2931, %v3315, 0
        %v3929 = vsel %vm2931, %v3320, 0
        %v3932 = vsel %vm2931, %v3325, 0
        %v3935 = vsel %vm2931, %v3330, 0
        %v3938 = vsel %vm2931, %v3335, 0
        %v3941 = vsel %vm2931, %v3340, 0
        %v3943 = vsel %vm3811, %v2903, 0
        %3945 = vmatprep.subr.mxu0 0.0
        %3946 = vmatpush1.msra.mxu0 0.0
        %3947 = vmatprep.subr.mxu0 0.0
        %3948 = vmatpush1.msra.mxu0 0.0
        %3949 = vmatprep.subr.mxu0 0.0
        %3950 = vmatpush1.msra.mxu0 0.0
        %3951 = vmatprep.subr.mxu0 0.0
        %3952 = vmatpush1.msra.mxu0 0.0
        %3953 = vmatprep.subr.mxu0 0.0
        %3954 = vmatpush1.msra.mxu0 0.0
        %3955 = vmatprep.subr.mxu0 0.0
        %3956 = vmatpush1.msra.mxu0 0.0
        %3957 = vmatprep.subr.mxu0 0.0
        %3958 = vmatpush1.msra.mxu0 0.0
        %3959 = vmatprep.subr.mxu0 0.0
        %3960 = vmatpush1.msra.mxu0 0.0
        %3961 = vmatprep.subr.mxu0 0.0
        %3962 = vmatpush1.msra.mxu0 0.0
        %3963 = vmatprep.subr.mxu0 0.0
        %3964 = vmatpush1.msra.mxu0 0.0
        %3965 = vmatprep.subr.mxu0 0.0
        %3966 = vmatpush1.msra.mxu0 0.0
        %3967 = vmatprep.subr.mxu0 0.0
        %3968 = vmatpush1.msra.mxu0 0.0
        %3969 = vmatprep.subr.mxu0 0.0
        %3970 = vmatpush1.msra.mxu0 0.0
        %3971 = vmatprep.subr.mxu0 0.0
        %3972 = vmatpush1.msra.mxu0 0.0
        %3973 = vmatprep.subr.mxu0 0.0
        %3974 = vmatpush1.msra.mxu0 0.0
        %3975 = vmatprep.subr.mxu0 0.0
        %3976 = vmatpush1.msra.mxu0 %v3943
        %3977 = vmatprep.subr.mxu0 0.0
        %3978 = vmatpush2.msra.mxu0 0.0
        %3979 = vmatprep.subr.mxu0 0.0
        %3980 = vmatpush2.msra.mxu0 0.0
        %3981 = vmatprep.subr.mxu0 0.0
        %3982 = vmatpush2.msra.mxu0 0.0
        %3983 = vmatprep.subr.mxu0 0.0
        %3984 = vmatpush2.msra.mxu0 0.0
        %3985 = vmatprep.subr.mxu0 0.0
        %3986 = vmatpush2.msra.mxu0 0.0
        %3987 = vmatprep.subr.mxu0 0.0
        %3988 = vmatpush2.msra.mxu0 0.0
        %3989 = vmatprep.subr.mxu0 0.0
        %3990 = vmatpush2.msra.mxu0 0.0
        %3991 = vmatprep.subr.mxu0 0.0
        %3992 = vmatpush2.msra.mxu0 0.0
        %3993 = vmatprep.subr.mxu0 0.0
        %3994 = vmatpush2.msra.mxu0 0.0
        %3995 = vmatprep.subr.mxu0 0.0
        %3996 = vmatpush2.msra.mxu0 0.0
        %3997 = vmatprep.subr.mxu0 0.0
        %3998 = vmatpush2.msra.mxu0 0.0
        %3999 = vmatprep.subr.mxu0 0.0
        %4000 = vmatpush2.msra.mxu0 0.0
        %4001 = vmatprep.subr.mxu0 0.0
        %4002 = vmatpush2.msra.mxu0 0.0
        %4003 = vmatprep.subr.mxu0 0.0
        %4004 = vmatpush2.msra.mxu0 0.0
        %4005 = vmatprep.subr.mxu0 0.0
        %4006 = vmatpush2.msra.mxu0 0.0
        %4007 = vmatprep.subr.mxu0 0.0
        %4008 = vmatpush2.msra.mxu0 0.0
        %4009 = vmatprep.mubr.f32.mxu0 0.0
        %4010 = vmatmul.mubr.f32.gmra.mxu0 %v3920
        %v4011 = vpop.f32.mrf.mxu0
        %v4012 = vadd.f32 %v3881, %v4011
        %v4013 = vpop.f32.mrf.mxu0
        %4014 = vmatprep.mubr.f32.mxu0 0.0
        %4015 = vmatmul.mubr.f32.gmra.mxu0 %v3923
        %v4016 = vpop.f32.mrf.mxu0
        %v4017 = vadd.f32 %v3886, %v4016
        %v4018 = vpop.f32.mrf.mxu0
        %4019 = vmatprep.mubr.f32.mxu0 0.0
        %4020 = vmatmul.mubr.f32.gmra.mxu0 %v3926
        %v4021 = vpop.f32.mrf.mxu0
        %v4022 = vadd.f32 %v3891, %v4021
        %v4023 = vpop.f32.mrf.mxu0
        %4024 = vmatprep.mubr.f32.mxu0 0.0
        %4025 = vmatmul.mubr.f32.gmra.mxu0 %v3929
        %v4026 = vpop.f32.mrf.mxu0
        %v4027 = vadd.f32 %v3896, %v4026
        %v4028 = vpop.f32.mrf.mxu0
        %4029 = vmatprep.mubr.f32.mxu0 0.0
        %4030 = vmatmul.mubr.f32.gmra.mxu0 %v3932
        %v4031 = vpop.f32.mrf.mxu0
        %v4032 = vadd.f32 %v3901, %v4031
        %v4033 = vpop.f32.mrf.mxu0
        %4034 = vmatprep.mubr.f32.mxu0 0.0
        %4035 = vmatmul.mubr.f32.gmra.mxu0 %v3935
        %v4036 = vpop.f32.mrf.mxu0
        %v4037 = vadd.f32 %v3906, %v4036
        %v4038 = vpop.f32.mrf.mxu0
        %4039 = vmatprep.mubr.f32.mxu0 0.0
        %4040 = vmatmul.mubr.f32.gmra.mxu0 %v3938
        %v4041 = vpop.f32.mrf.mxu0
        %v4042 = vadd.f32 %v3911, %v4041
        %v4043 = vpop.f32.mrf.mxu0
        %4044 = vmatprep.mubr.f32.mxu0 0.0
        %4045 = vmatmul.mubr.f32.gmra.mxu0 %v3941
        %v4046 = vpop.f32.mrf.mxu0
        %v4047 = vadd.f32 %v3916, %v4046
        %v4048 = vpop.f32.mrf.mxu0
        %4049 = vdwg.mxu0
        %4050 = vrot.lane.b32.xlu0 %v2895, 120
        %v4051 = vpop.permute.xlu0 %4050
        %4052 = vrot.lane.b32.xlu0 %v2896, 120
        %v4053 = vpop.permute.xlu0 %4052
        %4054 = vrot.lane.b32.xlu0 %v2897, 120
        %v4055 = vpop.permute.xlu0 %4054
        %4056 = vrot.lane.b32.xlu0 %v2898, 120
        %v4057 = vpop.permute.xlu0 %4056
        %4058 = vrot.lane.b32.xlu0 %v2899, 120
        %v4059 = vpop.permute.xlu0 %4058
        %4060 = vrot.lane.b32.xlu0 %v2900, 120
        %v4061 = vpop.permute.xlu0 %4060
        %4062 = vrot.lane.b32.xlu0 %v2901, 120
        %v4063 = vpop.permute.xlu0 %4062
        %4064 = vrot.lane.b32.xlu0 %v2902, 120
        %v4065 = vpop.permute.xlu0 %4064
        %4066 = vrot.lane.b32.xlu0 %v2895, 88
        %v4067 = vpop.permute.xlu0 %4066
        %4068 = vrot.lane.b32.xlu0 %v2896, 88
        %v4069 = vpop.permute.xlu0 %4068
        %4070 = vrot.lane.b32.xlu0 %v2897, 88
        %v4071 = vpop.permute.xlu0 %4070
        %4072 = vrot.lane.b32.xlu0 %v2898, 88
        %v4073 = vpop.permute.xlu0 %4072
        %4074 = vrot.lane.b32.xlu0 %v2899, 88
        %v4075 = vpop.permute.xlu0 %4074
        %4076 = vrot.lane.b32.xlu0 %v2900, 88
        %v4077 = vpop.permute.xlu0 %4076
        %4078 = vrot.lane.b32.xlu0 %v2901, 88
        %v4079 = vpop.permute.xlu0 %4078
        %4080 = vrot.lane.b32.xlu0 %v2902, 88
        %v4081 = vpop.permute.xlu0 %4080
        %v4082 = vsel %vm2931, %v4051, 0
        %v4084 = vsel %vm2931, %v4053, 0
        %v4086 = vsel %vm2931, %v4055, 0
        %v4088 = vsel %vm2931, %v4057, 0
        %v4090 = vsel %vm2931, %v4059, 0
        %v4092 = vsel %vm2931, %v4061, 0
        %v4094 = vsel %vm2931, %v4063, 0
        %v4096 = vsel %vm2931, %v4065, 0
        %v4098 = vsel %vm2931, %v4067, 0
        %v4100 = vsel %vm2931, %v4069, 0
        %v4102 = vsel %vm2931, %v4071, 0
        %v4104 = vsel %vm2931, %v4073, 0
        %v4106 = vsel %vm2931, %v4075, 0
        %v4108 = vsel %vm2931, %v4077, 0
        %v4110 = vsel %vm2931, %v4079, 0
        %v4112 = vsel %vm2931, %v4081, 0
        %4114 = vmatprep.subr.mxu0 0.0
        %4115 = vmatpush1.xpose.msra.mxu0 0.0
        %4116 = vmatprep.subr.mxu0 0.0
        %4117 = vmatpush1.xpose.msra.mxu0 0.0
        %4118 = vmatprep.subr.mxu0 0.0
        %4119 = vmatpush1.xpose.msra.mxu0 0.0
        %4120 = vmatprep.subr.mxu0 0.0
        %4121 = vmatpush1.xpose.msra.mxu0 0.0
        %4122 = vmatprep.subr.mxu0 0.0
        %4123 = vmatpush1.xpose.msra.mxu0 0.0
        %4124 = vmatprep.subr.mxu0 0.0
        %4125 = vmatpush1.xpose.msra.mxu0 0.0
        %4126 = vmatprep.subr.mxu0 0.0
        %4127 = vmatpush1.xpose.msra.mxu0 0.0
        %4128 = vmatprep.subr.mxu0 0.0
        %4129 = vmatpush1.xpose.msra.mxu0 0.0
        %4130 = vmatprep.subr.mxu0 0.0
        %4131 = vmatpush1.xpose.msra.mxu0 %v4112
        %4132 = vmatprep.subr.mxu0 0.0
        %4133 = vmatpush1.xpose.msra.mxu0 %v4110
        %4134 = vmatprep.subr.mxu0 0.0
        %4135 = vmatpush1.xpose.msra.mxu0 %v4108
        %4136 = vmatprep.subr.mxu0 0.0
        %4137 = vmatpush1.xpose.msra.mxu0 %v4106
        %4138 = vmatprep.subr.mxu0 0.0
        %4139 = vmatpush1.xpose.msra.mxu0 %v4104
        %4140 = vmatprep.subr.mxu0 0.0
        %4141 = vmatpush1.xpose.msra.mxu0 %v4102
        %4142 = vmatprep.subr.mxu0 0.0
        %4143 = vmatpush1.xpose.msra.mxu0 %v4100
        %4144 = vmatprep.subr.mxu0 0.0
        %4145 = vmatpush1.xpose.msra.mxu0 %v4098
        %4146 = vmatprep.subr.mxu0 0.0
        %4147 = vmatpush2.xpose.msra.mxu0 0.0
        %4148 = vmatprep.subr.mxu0 0.0
        %4149 = vmatpush2.xpose.msra.mxu0 0.0
        %4150 = vmatprep.subr.mxu0 0.0
        %4151 = vmatpush2.xpose.msra.mxu0 0.0
        %4152 = vmatprep.subr.mxu0 0.0
        %4153 = vmatpush2.xpose.msra.mxu0 0.0
        %4154 = vmatprep.subr.mxu0 0.0
        %4155 = vmatpush2.xpose.msra.mxu0 0.0
        %4156 = vmatprep.subr.mxu0 0.0
        %4157 = vmatpush2.xpose.msra.mxu0 0.0
        %4158 = vmatprep.subr.mxu0 0.0
        %4159 = vmatpush2.xpose.msra.mxu0 0.0
        %4160 = vmatprep.subr.mxu0 0.0
        %4161 = vmatpush2.xpose.msra.mxu0 0.0
        %4162 = vmatprep.subr.mxu0 0.0
        %4163 = vmatpush2.xpose.msra.mxu0 0.0
        %4164 = vmatprep.subr.mxu0 0.0
        %4165 = vmatpush2.xpose.msra.mxu0 0.0
        %4166 = vmatprep.subr.mxu0 0.0
        %4167 = vmatpush2.xpose.msra.mxu0 0.0
        %4168 = vmatprep.subr.mxu0 0.0
        %4169 = vmatpush2.xpose.msra.mxu0 0.0
        %4170 = vmatprep.subr.mxu0 0.0
        %4171 = vmatpush2.xpose.msra.mxu0 0.0
        %4172 = vmatprep.subr.mxu0 0.0
        %4173 = vmatpush2.xpose.msra.mxu0 0.0
        %4174 = vmatprep.subr.mxu0 0.0
        %4175 = vmatpush2.xpose.msra.mxu0 0.0
        %4176 = vmatprep.subr.mxu0 0.0
        %4177 = vmatpush2.xpose.msra.mxu0 0.0
        %4178 = vmatprep.mubr.f32.mxu0 0.0
        %4179 = vmatmul.mubr.f32.gmra.mxu0 %v4082
        %v4180 = vpop.f32.mrf.mxu0
        %v4181 = vadd.f32 0.0, %v4180
        %v4182 = vpop.f32.mrf.mxu0
        %4183 = vmatprep.mubr.f32.mxu0 0.0
        %4184 = vmatmul.mubr.f32.gmra.mxu0 %v4084
        %v4185 = vpop.f32.mrf.mxu0
        %v4186 = vadd.f32 0.0, %v4185
        %v4187 = vpop.f32.mrf.mxu0
        %4188 = vmatprep.mubr.f32.mxu0 0.0
        %4189 = vmatmul.mubr.f32.gmra.mxu0 %v4086
        %v4190 = vpop.f32.mrf.mxu0
        %v4191 = vadd.f32 0.0, %v4190
        %v4192 = vpop.f32.mrf.mxu0
        %4193 = vmatprep.mubr.f32.mxu0 0.0
        %4194 = vmatmul.mubr.f32.gmra.mxu0 %v4088
        %v4195 = vpop.f32.mrf.mxu0
        %v4196 = vadd.f32 0.0, %v4195
        %v4197 = vpop.f32.mrf.mxu0
        %4198 = vmatprep.mubr.f32.mxu0 0.0
        %4199 = vmatmul.mubr.f32.gmra.mxu0 %v4090
        %v4200 = vpop.f32.mrf.mxu0
        %v4201 = vadd.f32 0.0, %v4200
        %v4202 = vpop.f32.mrf.mxu0
        %4203 = vmatprep.mubr.f32.mxu0 0.0
        %4204 = vmatmul.mubr.f32.gmra.mxu0 %v4092
        %v4205 = vpop.f32.mrf.mxu0
        %v4206 = vadd.f32 0.0, %v4205
        %v4207 = vpop.f32.mrf.mxu0
        %4208 = vmatprep.mubr.f32.mxu0 0.0
        %4209 = vmatmul.mubr.f32.gmra.mxu0 %v4094
        %v4210 = vpop.f32.mrf.mxu0
        %v4211 = vadd.f32 0.0, %v4210
        %v4212 = vpop.f32.mrf.mxu0
        %4213 = vmatprep.mubr.f32.mxu0 0.0
        %4214 = vmatmul.mubr.f32.gmra.mxu0 %v4096
        %v4215 = vpop.f32.mrf.mxu0
        %v4216 = vadd.f32 0.0, %v4215
        %v4217 = vpop.f32.mrf.mxu0
        %4218 = vdwg.mxu0
        %v4219 = vmul.f32 %v4181, 0.5
        %v4220 = vmul.f32 %v4186, 0.5
        %v4221 = vmul.f32 %v4191, 0.5
        %v4222 = vmul.f32 %v4196, 0.5
        %v4223 = vmul.f32 %v4201, 0.5
        %v4224 = vmul.f32 %v4206, 0.5
        %v4225 = vmul.f32 %v4211, 0.5
        %v4226 = vmul.f32 %v4216, 0.5
        %v4227 = vsel %vm3077, %v4219, -inf
        %4228 = vmax.xlane.f32.xlu0 %v4227
        %v4229 = vpop.xlane.xlu0 %4228
        %v4230 = vsel %vm3077, %v4220, -inf
        %4231 = vmax.xlane.f32.xlu0 %v4230
        %v4232 = vpop.xlane.xlu0 %4231
        %v4233 = vsel %vm3077, %v4221, -inf
        %4234 = vmax.xlane.f32.xlu0 %v4233
        %v4235 = vpop.xlane.xlu0 %4234
        %v4236 = vsel %vm3077, %v4222, -inf
        %4237 = vmax.xlane.f32.xlu0 %v4236
        %v4238 = vpop.xlane.xlu0 %4237
        %v4239 = vsel %vm3077, %v4223, -inf
        %4240 = vmax.xlane.f32.xlu0 %v4239
        %v4241 = vpop.xlane.xlu0 %4240
        %v4242 = vsel %vm3077, %v4224, -inf
        %4243 = vmax.xlane.f32.xlu0 %v4242
        %v4244 = vpop.xlane.xlu0 %4243
        %v4245 = vsel %vm3077, %v4225, -inf
        %4246 = vmax.xlane.f32.xlu0 %v4245
        %v4247 = vpop.xlane.xlu0 %4246
        %v4248 = vsel %vm3077, %v4226, -inf
        %4249 = vmax.xlane.f32.xlu0 %v4248
        %v4250 = vpop.xlane.xlu0 %4249
        %v4251 = vsub.f32 %v4219, %v4229
        %v4252 = vsub.f32 %v4220, %v4232
        %v4253 = vsub.f32 %v4221, %v4235
        %v4254 = vsub.f32 %v4222, %v4238
        %v4255 = vsub.f32 %v4223, %v4241
        %v4256 = vsub.f32 %v4224, %v4244
        %v4257 = vsub.f32 %v4225, %v4247
        %v4258 = vsub.f32 %v4226, %v4250
        %v4259 = vmul.f32 %v4251, 1.442695
        %v4260 = vpow.pop %v4259
        %v4261 = vmul.f32 %v4252, 1.442695
        %v4262 = vpow.pop %v4261
        %v4263 = vmul.f32 %v4253, 1.442695
        %v4264 = vpow.pop %v4263
        %v4265 = vmul.f32 %v4254, 1.442695
        %v4266 = vpow.pop %v4265
        %v4267 = vmul.f32 %v4255, 1.442695
        %v4268 = vpow.pop %v4267
        %v4269 = vmul.f32 %v4256, 1.442695
        %v4270 = vpow.pop %v4269
        %v4271 = vmul.f32 %v4257, 1.442695
        %v4272 = vpow.pop %v4271
        %v4273 = vmul.f32 %v4258, 1.442695
        %v4274 = vpow.pop %v4273
        %v4275 = vsel %vm3077, %v4260, 0.0
        %4276 = vadd.xlane.f32.xlu0 %v4275
        %v4277 = vpop.xlane.xlu0 %4276
        %v4278 = vsel %vm3077, %v4262, 0.0
        %4279 = vadd.xlane.f32.xlu0 %v4278
        %v4280 = vpop.xlane.xlu0 %4279
        %v4281 = vsel %vm3077, %v4264, 0.0
        %4282 = vadd.xlane.f32.xlu0 %v4281
        %v4283 = vpop.xlane.xlu0 %4282
        %v4284 = vsel %vm3077, %v4266, 0.0
        %4285 = vadd.xlane.f32.xlu0 %v4284
        %v4286 = vpop.xlane.xlu0 %4285
        %v4287 = vsel %vm3077, %v4268, 0.0
        %4288 = vadd.xlane.f32.xlu0 %v4287
        %v4289 = vpop.xlane.xlu0 %4288
        %v4290 = vsel %vm3077, %v4270, 0.0
        %4291 = vadd.xlane.f32.xlu0 %v4290
        %v4292 = vpop.xlane.xlu0 %4291
        %v4293 = vsel %vm3077, %v4272, 0.0
        %4294 = vadd.xlane.f32.xlu0 %v4293
        %v4295 = vpop.xlane.xlu0 %4294
        %v4296 = vsel %vm3077, %v4274, 0.0
        %4297 = vadd.xlane.f32.xlu0 %v4296
        %v4298 = vpop.xlane.xlu0 %4297
        %v4299 = vrcp.pop %v4277
        %v4300 = vrcp.pop %v4280
        %v4301 = vrcp.pop %v4283
        %v4302 = vrcp.pop %v4286
        %v4303 = vrcp.pop %v4289
        %v4304 = vrcp.pop %v4292
        %v4305 = vrcp.pop %v4295
        %v4306 = vrcp.pop %v4298
        %v4307 = vmul.f32 %v4277, %v4299
        %v4308 = vmul.f32 %v4280, %v4300
        %v4309 = vmul.f32 %v4283, %v4301
        %v4310 = vmul.f32 %v4286, %v4302
        %v4311 = vmul.f32 %v4289, %v4303
        %v4312 = vmul.f32 %v4292, %v4304
        %v4313 = vmul.f32 %v4295, %v4305
        %v4314 = vmul.f32 %v4298, %v4306
        %v4315 = vsub.f32 2.0, %v4307
        %v4316 = vsub.f32 2.0, %v4308
        %v4317 = vsub.f32 2.0, %v4309
        %v4318 = vsub.f32 2.0, %v4310
        %v4319 = vsub.f32 2.0, %v4311
        %v4320 = vsub.f32 2.0, %v4312
        %v4321 = vsub.f32 2.0, %v4313
        %v4322 = vsub.f32 2.0, %v4314
        %v4323 = vmul.f32 %v4299, %v4315
        %v4324 = vmul.f32 %v4300, %v4316
        %v4325 = vmul.f32 %v4301, %v4317
        %v4326 = vmul.f32 %v4302, %v4318
        %v4327 = vmul.f32 %v4303, %v4319
        %v4328 = vmul.f32 %v4304, %v4320
        %v4329 = vmul.f32 %v4305, %v4321
        %v4330 = vmul.f32 %v4306, %v4322
        %v4331 = vmul.f32 %v4260, %v4323
        %v4332 = vmul.f32 %v4262, %v4324
        %v4333 = vmul.f32 %v4264, %v4325
        %v4334 = vmul.f32 %v4266, %v4326
        %v4335 = vmul.f32 %v4268, %v4327
        %v4336 = vmul.f32 %v4270, %v4328
        %v4337 = vmul.f32 %v4272, %v4329
        %v4338 = vmul.f32 %v4274, %v4330
        %4339 = vrot.lane.b32.xlu0 %v2895, 56
        %v4340 = vpop.permute.xlu0 %4339
        %4341 = vrot.lane.b32.xlu0 %v2896, 56
        %v4342 = vpop.permute.xlu0 %4341
        %4343 = vrot.lane.b32.xlu0 %v2897, 56
        %v4344 = vpop.permute.xlu0 %4343
        %4345 = vrot.lane.b32.xlu0 %v2898, 56
        %v4346 = vpop.permute.xlu0 %4345
        %4347 = vrot.lane.b32.xlu0 %v2899, 56
        %v4348 = vpop.permute.xlu0 %4347
        %4349 = vrot.lane.b32.xlu0 %v2900, 56
        %v4350 = vpop.permute.xlu0 %4349
        %4351 = vrot.lane.b32.xlu0 %v2901, 56
        %v4352 = vpop.permute.xlu0 %4351
        %4353 = vrot.lane.b32.xlu0 %v2902, 56
        %v4354 = vpop.permute.xlu0 %4353
        %v4364 = vsel %vm3077, %v4331, 0
        %v4367 = vsel %vm3077, %v4332, 0
        %v4370 = vsel %vm3077, %v4333, 0
        %v4373 = vsel %vm3077, %v4334, 0
        %v4376 = vsel %vm3077, %v4335, 0
        %v4379 = vsel %vm3077, %v4336, 0
        %v4382 = vsel %vm3077, %v4337, 0
        %v4385 = vsel %vm3077, %v4338, 0
        %4387 = vmatprep.subr.mxu0 0.0
        %4388 = vmatpush1.msra.mxu0 0.0
        %4389 = vmatprep.subr.mxu0 0.0
        %4390 = vmatpush1.msra.mxu0 0.0
        %4391 = vmatprep.subr.mxu0 0.0
        %4392 = vmatpush1.msra.mxu0 0.0
        %4393 = vmatprep.subr.mxu0 0.0
        %4394 = vmatpush1.msra.mxu0 0.0
        %4395 = vmatprep.subr.mxu0 0.0
        %4396 = vmatpush1.msra.mxu0 0.0
        %4397 = vmatprep.subr.mxu0 0.0
        %4398 = vmatpush1.msra.mxu0 0.0
        %4399 = vmatprep.subr.mxu0 0.0
        %4400 = vmatpush1.msra.mxu0 0.0
        %4401 = vmatprep.subr.mxu0 0.0
        %4402 = vmatpush1.msra.mxu0 0.0
        %4403 = vmatprep.subr.mxu0 0.0
        %4404 = vmatpush1.msra.mxu0 %v4354
        %4405 = vmatprep.subr.mxu0 0.0
        %4406 = vmatpush1.msra.mxu0 %v4352
        %4407 = vmatprep.subr.mxu0 0.0
        %4408 = vmatpush1.msra.mxu0 %v4350
        %4409 = vmatprep.subr.mxu0 0.0
        %4410 = vmatpush1.msra.mxu0 %v4348
        %4411 = vmatprep.subr.mxu0 0.0
        %4412 = vmatpush1.msra.mxu0 %v4346
        %4413 = vmatprep.subr.mxu0 0.0
        %4414 = vmatpush1.msra.mxu0 %v4344
        %4415 = vmatprep.subr.mxu0 0.0
        %4416 = vmatpush1.msra.mxu0 %v4342
        %4417 = vmatprep.subr.mxu0 0.0
        %4418 = vmatpush1.msra.mxu0 %v4340
        %4419 = vmatprep.subr.mxu0 0.0
        %4420 = vmatpush2.msra.mxu0 0.0
        %4421 = vmatprep.subr.mxu0 0.0
        %4422 = vmatpush2.msra.mxu0 0.0
        %4423 = vmatprep.subr.mxu0 0.0
        %4424 = vmatpush2.msra.mxu0 0.0
        %4425 = vmatprep.subr.mxu0 0.0
        %4426 = vmatpush2.msra.mxu0 0.0
        %4427 = vmatprep.subr.mxu0 0.0
        %4428 = vmatpush2.msra.mxu0 0.0
        %4429 = vmatprep.subr.mxu0 0.0
        %4430 = vmatpush2.msra.mxu0 0.0
        %4431 = vmatprep.subr.mxu0 0.0
        %4432 = vmatpush2.msra.mxu0 0.0
        %4433 = vmatprep.subr.mxu0 0.0
        %4434 = vmatpush2.msra.mxu0 0.0
        %4435 = vmatprep.subr.mxu0 0.0
        %4436 = vmatpush2.msra.mxu0 0.0
        %4437 = vmatprep.subr.mxu0 0.0
        %4438 = vmatpush2.msra.mxu0 0.0
        %4439 = vmatprep.subr.mxu0 0.0
        %4440 = vmatpush2.msra.mxu0 0.0
        %4441 = vmatprep.subr.mxu0 0.0
        %4442 = vmatpush2.msra.mxu0 0.0
        %4443 = vmatprep.subr.mxu0 0.0
        %4444 = vmatpush2.msra.mxu0 0.0
        %4445 = vmatprep.subr.mxu0 0.0
        %4446 = vmatpush2.msra.mxu0 0.0
        %4447 = vmatprep.subr.mxu0 0.0
        %4448 = vmatpush2.msra.mxu0 0.0
        %4449 = vmatprep.subr.mxu0 0.0
        %4450 = vmatpush2.msra.mxu0 0.0
        %4451 = vmatprep.mubr.f32.mxu0 0.0
        %4452 = vmatmul.mubr.f32.gmra.mxu0 %v4364
        %v4453 = vpop.f32.mrf.mxu0
        %v4454 = vadd.f32 0.0, %v4453
        %v4455 = vpop.f32.mrf.mxu0
        %4456 = vmatprep.mubr.f32.mxu0 0.0
        %4457 = vmatmul.mubr.f32.gmra.mxu0 %v4367
        %v4458 = vpop.f32.mrf.mxu0
        %v4459 = vadd.f32 0.0, %v4458
        %v4460 = vpop.f32.mrf.mxu0
        %4461 = vmatprep.mubr.f32.mxu0 0.0
        %4462 = vmatmul.mubr.f32.gmra.mxu0 %v4370
        %v4463 = vpop.f32.mrf.mxu0
        %v4464 = vadd.f32 0.0, %v4463
        %v4465 = vpop.f32.mrf.mxu0
        %4466 = vmatprep.mubr.f32.mxu0 0.0
        %4467 = vmatmul.mubr.f32.gmra.mxu0 %v4373
        %v4468 = vpop.f32.mrf.mxu0
        %v4469 = vadd.f32 0.0, %v4468
        %v4470 = vpop.f32.mrf.mxu0
        %4471 = vmatprep.mubr.f32.mxu0 0.0
        %4472 = vmatmul.mubr.f32.gmra.mxu0 %v4376
        %v4473 = vpop.f32.mrf.mxu0
        %v4474 = vadd.f32 0.0, %v4473
        %v4475 = vpop.f32.mrf.mxu0
        %4476 = vmatprep.mubr.f32.mxu0 0.0
        %4477 = vmatmul.mubr.f32.gmra.mxu0 %v4379
        %v4478 = vpop.f32.mrf.mxu0
        %v4479 = vadd.f32 0.0, %v4478
        %v4480 = vpop.f32.mrf.mxu0
        %4481 = vmatprep.mubr.f32.mxu0 0.0
        %4482 = vmatmul.mubr.f32.gmra.mxu0 %v4382
        %v4483 = vpop.f32.mrf.mxu0
        %v4484 = vadd.f32 0.0, %v4483
        %v4485 = vpop.f32.mrf.mxu0
        %4486 = vmatprep.mubr.f32.mxu0 0.0
        %4487 = vmatmul.mubr.f32.gmra.mxu0 %v4385
        %v4488 = vpop.f32.mrf.mxu0
        %v4489 = vadd.f32 0.0, %v4488
        %v4490 = vpop.f32.mrf.mxu0
        %4491 = vdwg.mxu0
        %v4493 = vsel %vm2931, %v4454, 0
        %v4496 = vsel %vm2931, %v4459, 0
        %v4499 = vsel %vm2931, %v4464, 0
        %v4502 = vsel %vm2931, %v4469, 0
        %v4505 = vsel %vm2931, %v4474, 0
        %v4508 = vsel %vm2931, %v4479, 0
        %v4511 = vsel %vm2931, %v4484, 0
        %v4514 = vsel %vm2931, %v4489, 0
        %v4517 = vsel %vm3811, %v2904, 0
        %4519 = vmatprep.subr.mxu0 0.0
        %4520 = vmatpush1.msra.mxu0 0.0
        %4521 = vmatprep.subr.mxu0 0.0
        %4522 = vmatpush1.msra.mxu0 0.0
        %4523 = vmatprep.subr.mxu0 0.0
        %4524 = vmatpush1.msra.mxu0 0.0
        %4525 = vmatprep.subr.mxu0 0.0
        %4526 = vmatpush1.msra.mxu0 0.0
        %4527 = vmatprep.subr.mxu0 0.0
        %4528 = vmatpush1.msra.mxu0 0.0
        %4529 = vmatprep.subr.mxu0 0.0
        %4530 = vmatpush1.msra.mxu0 0.0
        %4531 = vmatprep.subr.mxu0 0.0
        %4532 = vmatpush1.msra.mxu0 0.0
        %4533 = vmatprep.subr.mxu0 0.0
        %4534 = vmatpush1.msra.mxu0 0.0
        %4535 = vmatprep.subr.mxu0 0.0
        %4536 = vmatpush1.msra.mxu0 0.0
        %4537 = vmatprep.subr.mxu0 0.0
        %4538 = vmatpush1.msra.mxu0 0.0
        %4539 = vmatprep.subr.mxu0 0.0
        %4540 = vmatpush1.msra.mxu0 0.0
        %4541 = vmatprep.subr.mxu0 0.0
        %4542 = vmatpush1.msra.mxu0 0.0
        %4543 = vmatprep.subr.mxu0 0.0
        %4544 = vmatpush1.msra.mxu0 0.0
        %4545 = vmatprep.subr.mxu0 0.0
        %4546 = vmatpush1.msra.mxu0 0.0
        %4547 = vmatprep.subr.mxu0 0.0
        %4548 = vmatpush1.msra.mxu0 0.0
        %4549 = vmatprep.subr.mxu0 0.0
        %4550 = vmatpush1.msra.mxu0 %v4517
        %4551 = vmatprep.subr.mxu0 0.0
        %4552 = vmatpush2.msra.mxu0 0.0
        %4553 = vmatprep.subr.mxu0 0.0
        %4554 = vmatpush2.msra.mxu0 0.0
        %4555 = vmatprep.subr.mxu0 0.0
        %4556 = vmatpush2.msra.mxu0 0.0
        %4557 = vmatprep.subr.mxu0 0.0
        %4558 = vmatpush2.msra.mxu0 0.0
        %4559 = vmatprep.subr.mxu0 0.0
        %4560 = vmatpush2.msra.mxu0 0.0
        %4561 = vmatprep.subr.mxu0 0.0
        %4562 = vmatpush2.msra.mxu0 0.0
        %4563 = vmatprep.subr.mxu0 0.0
        %4564 = vmatpush2.msra.mxu0 0.0
        %4565 = vmatprep.subr.mxu0 0.0
        %4566 = vmatpush2.msra.mxu0 0.0
        %4567 = vmatprep.subr.mxu0 0.0
        %4568 = vmatpush2.msra.mxu0 0.0
        %4569 = vmatprep.subr.mxu0 0.0
        %4570 = vmatpush2.msra.mxu0 0.0
        %4571 = vmatprep.subr.mxu0 0.0
        %4572 = vmatpush2.msra.mxu0 0.0
        %4573 = vmatprep.subr.mxu0 0.0
        %4574 = vmatpush2.msra.mxu0 0.0
        %4575 = vmatprep.subr.mxu0 0.0
        %4576 = vmatpush2.msra.mxu0 0.0
        %4577 = vmatprep.subr.mxu0 0.0
        %4578 = vmatpush2.msra.mxu0 0.0
        %4579 = vmatprep.subr.mxu0 0.0
        %4580 = vmatpush2.msra.mxu0 0.0
        %4581 = vmatprep.subr.mxu0 0.0
        %4582 = vmatpush2.msra.mxu0 0.0
        %4583 = vmatprep.mubr.f32.mxu0 0.0
        %4584 = vmatmul.mubr.f32.gmra.mxu0 %v4493
        %v4585 = vpop.f32.mrf.mxu0
        %v4586 = vadd.f32 0.0, %v4585
        %v4587 = vpop.f32.mrf.mxu0
        %4588 = vmatprep.mubr.f32.mxu0 0.0
        %4589 = vmatmul.mubr.f32.gmra.mxu0 %v4496
        %v4590 = vpop.f32.mrf.mxu0
        %v4591 = vadd.f32 0.0, %v4590
        %v4592 = vpop.f32.mrf.mxu0
        %4593 = vmatprep.mubr.f32.mxu0 0.0
        %4594 = vmatmul.mubr.f32.gmra.mxu0 %v4499
        %v4595 = vpop.f32.mrf.mxu0
        %v4596 = vadd.f32 0.0, %v4595
        %v4597 = vpop.f32.mrf.mxu0
        %4598 = vmatprep.mubr.f32.mxu0 0.0
        %4599 = vmatmul.mubr.f32.gmra.mxu0 %v4502
        %v4600 = vpop.f32.mrf.mxu0
        %v4601 = vadd.f32 0.0, %v4600
        %v4602 = vpop.f32.mrf.mxu0
        %4603 = vmatprep.mubr.f32.mxu0 0.0
        %4604 = vmatmul.mubr.f32.gmra.mxu0 %v4505
        %v4605 = vpop.f32.mrf.mxu0
        %v4606 = vadd.f32 0.0, %v4605
        %v4607 = vpop.f32.mrf.mxu0
        %4608 = vmatprep.mubr.f32.mxu0 0.0
        %4609 = vmatmul.mubr.f32.gmra.mxu0 %v4508
        %v4610 = vpop.f32.mrf.mxu0
        %v4611 = vadd.f32 0.0, %v4610
        %v4612 = vpop.f32.mrf.mxu0
        %4613 = vmatprep.mubr.f32.mxu0 0.0
        %4614 = vmatmul.mubr.f32.gmra.mxu0 %v4511
        %v4615 = vpop.f32.mrf.mxu0
        %v4616 = vadd.f32 0.0, %v4615
        %v4617 = vpop.f32.mrf.mxu0
        %4618 = vmatprep.mubr.f32.mxu0 0.0
        %4619 = vmatmul.mubr.f32.gmra.mxu0 %v4514
        %v4620 = vpop.f32.mrf.mxu0
        %v4621 = vadd.f32 0.0, %v4620
        %v4622 = vpop.f32.mrf.mxu0
        %4623 = vdwg.mxu0
        %v4624 = vadd.f32 %v4012, %v4586
        %v4625 = vadd.f32 %v4017, %v4591
        %v4626 = vadd.f32 %v4022, %v4596
        %v4627 = vadd.f32 %v4027, %v4601
        %v4628 = vadd.f32 %v4032, %v4606
        %v4629 = vadd.f32 %v4037, %v4611
        %v4630 = vadd.f32 %v4042, %v4616
        %v4631 = vadd.f32 %v4047, %v4621
        %4632 = vrot.lane.b32.xlu0 %v2895, 116
        %v4633 = vpop.permute.xlu0 %4632
        %4634 = vrot.lane.b32.xlu0 %v2896, 116
        %v4635 = vpop.permute.xlu0 %4634
        %4636 = vrot.lane.b32.xlu0 %v2897, 116
        %v4637 = vpop.permute.xlu0 %4636
        %4638 = vrot.lane.b32.xlu0 %v2898, 116
        %v4639 = vpop.permute.xlu0 %4638
        %4640 = vrot.lane.b32.xlu0 %v2899, 116
        %v4641 = vpop.permute.xlu0 %4640
        %4642 = vrot.lane.b32.xlu0 %v2900, 116
        %v4643 = vpop.permute.xlu0 %4642
        %4644 = vrot.lane.b32.xlu0 %v2901, 116
        %v4645 = vpop.permute.xlu0 %4644
        %4646 = vrot.lane.b32.xlu0 %v2902, 116
        %v4647 = vpop.permute.xlu0 %4646
        %4648 = vrot.lane.b32.xlu0 %v2895, 84
        %v4649 = vpop.permute.xlu0 %4648
        %4650 = vrot.lane.b32.xlu0 %v2896, 84
        %v4651 = vpop.permute.xlu0 %4650
        %4652 = vrot.lane.b32.xlu0 %v2897, 84
        %v4653 = vpop.permute.xlu0 %4652
        %4654 = vrot.lane.b32.xlu0 %v2898, 84
        %v4655 = vpop.permute.xlu0 %4654
        %4656 = vrot.lane.b32.xlu0 %v2899, 84
        %v4657 = vpop.permute.xlu0 %4656
        %4658 = vrot.lane.b32.xlu0 %v2900, 84
        %v4659 = vpop.permute.xlu0 %4658
        %4660 = vrot.lane.b32.xlu0 %v2901, 84
        %v4661 = vpop.permute.xlu0 %4660
        %4662 = vrot.lane.b32.xlu0 %v2902, 84
        %v4663 = vpop.permute.xlu0 %4662
        %v4664 = vsel %vm2931, %v4633, 0
        %v4666 = vsel %vm2931, %v4635, 0
        %v4668 = vsel %vm2931, %v4637, 0
        %v4670 = vsel %vm2931, %v4639, 0
        %v4672 = vsel %vm2931, %v4641, 0
        %v4674 = vsel %vm2931, %v4643, 0
        %v4676 = vsel %vm2931, %v4645, 0
        %v4678 = vsel %vm2931, %v4647, 0
        %v4680 = vsel %vm2931, %v4649, 0
        %v4682 = vsel %vm2931, %v4651, 0
        %v4684 = vsel %vm2931, %v4653, 0
        %v4686 = vsel %vm2931, %v4655, 0
        %v4688 = vsel %vm2931, %v4657, 0
        %v4690 = vsel %vm2931, %v4659, 0
        %v4692 = vsel %vm2931, %v4661, 0
        %v4694 = vsel %vm2931, %v4663, 0
        %4696 = vmatprep.subr.mxu0 0.0
        %4697 = vmatpush1.xpose.msra.mxu0 0.0
        %4698 = vmatprep.subr.mxu0 0.0
        %4699 = vmatpush1.xpose.msra.mxu0 0.0
        %4700 = vmatprep.subr.mxu0 0.0
        %4701 = vmatpush1.xpose.msra.mxu0 0.0
        %4702 = vmatprep.subr.mxu0 0.0
        %4703 = vmatpush1.xpose.msra.mxu0 0.0
        %4704 = vmatprep.subr.mxu0 0.0
        %4705 = vmatpush1.xpose.msra.mxu0 0.0
        %4706 = vmatprep.subr.mxu0 0.0
        %4707 = vmatpush1.xpose.msra.mxu0 0.0
        %4708 = vmatprep.subr.mxu0 0.0
        %4709 = vmatpush1.xpose.msra.mxu0 0.0
        %4710 = vmatprep.subr.mxu0 0.0
        %4711 = vmatpush1.xpose.msra.mxu0 0.0
        %4712 = vmatprep.subr.mxu0 0.0
        %4713 = vmatpush1.xpose.msra.mxu0 %v4694
        %4714 = vmatprep.subr.mxu0 0.0
        %4715 = vmatpush1.xpose.msra.mxu0 %v4692
        %4716 = vmatprep.subr.mxu0 0.0
        %4717 = vmatpush1.xpose.msra.mxu0 %v4690
        %4718 = vmatprep.subr.mxu0 0.0
        %4719 = vmatpush1.xpose.msra.mxu0 %v4688
        %4720 = vmatprep.subr.mxu0 0.0
        %4721 = vmatpush1.xpose.msra.mxu0 %v4686
        %4722 = vmatprep.subr.mxu0 0.0
        %4723 = vmatpush1.xpose.msra.mxu0 %v4684
        %4724 = vmatprep.subr.mxu0 0.0
        %4725 = vmatpush1.xpose.msra.mxu0 %v4682
        %4726 = vmatprep.subr.mxu0 0.0
        %4727 = vmatpush1.xpose.msra.mxu0 %v4680
        %4728 = vmatprep.subr.mxu0 0.0
        %4729 = vmatpush2.xpose.msra.mxu0 0.0
        %4730 = vmatprep.subr.mxu0 0.0
        %4731 = vmatpush2.xpose.msra.mxu0 0.0
        %4732 = vmatprep.subr.mxu0 0.0
        %4733 = vmatpush2.xpose.msra.mxu0 0.0
        %4734 = vmatprep.subr.mxu0 0.0
        %4735 = vmatpush2.xpose.msra.mxu0 0.0
        %4736 = vmatprep.subr.mxu0 0.0
        %4737 = vmatpush2.xpose.msra.mxu0 0.0
        %4738 = vmatprep.subr.mxu0 0.0
        %4739 = vmatpush2.xpose.msra.mxu0 0.0
        %4740 = vmatprep.subr.mxu0 0.0
        %4741 = vmatpush2.xpose.msra.mxu0 0.0
        %4742 = vmatprep.subr.mxu0 0.0
        %4743 = vmatpush2.xpose.msra.mxu0 0.0
        %4744 = vmatprep.subr.mxu0 0.0
        %4745 = vmatpush2.xpose.msra.mxu0 0.0
        %4746 = vmatprep.subr.mxu0 0.0
        %4747 = vmatpush2.xpose.msra.mxu0 0.0
        %4748 = vmatprep.subr.mxu0 0.0
        %4749 = vmatpush2.xpose.msra.mxu0 0.0
        %4750 = vmatprep.subr.mxu0 0.0
        %4751 = vmatpush2.xpose.msra.mxu0 0.0
        %4752 = vmatprep.subr.mxu0 0.0
        %4753 = vmatpush2.xpose.msra.mxu0 0.0
        %4754 = vmatprep.subr.mxu0 0.0
        %4755 = vmatpush2.xpose.msra.mxu0 0.0
        %4756 = vmatprep.subr.mxu0 0.0
        %4757 = vmatpush2.xpose.msra.mxu0 0.0
        %4758 = vmatprep.subr.mxu0 0.0
        %4759 = vmatpush2.xpose.msra.mxu0 0.0
        %4760 = vmatprep.mubr.f32.mxu0 0.0
        %4761 = vmatmul.mubr.f32.gmra.mxu0 %v4664
        %v4762 = vpop.f32.mrf.mxu0
        %v4763 = vadd.f32 0.0, %v4762
        %v4764 = vpop.f32.mrf.mxu0
        %4765 = vmatprep.mubr.f32.mxu0 0.0
        %4766 = vmatmul.mubr.f32.gmra.mxu0 %v4666
        %v4767 = vpop.f32.mrf.mxu0
        %v4768 = vadd.f32 0.0, %v4767
        %v4769 = vpop.f32.mrf.mxu0
        %4770 = vmatprep.mubr.f32.mxu0 0.0
        %4771 = vmatmul.mubr.f32.gmra.mxu0 %v4668
        %v4772 = vpop.f32.mrf.mxu0
        %v4773 = vadd.f32 0.0, %v4772
        %v4774 = vpop.f32.mrf.mxu0
        %4775 = vmatprep.mubr.f32.mxu0 0.0
        %4776 = vmatmul.mubr.f32.gmra.mxu0 %v4670
        %v4777 = vpop.f32.mrf.mxu0
        %v4778 = vadd.f32 0.0, %v4777
        %v4779 = vpop.f32.mrf.mxu0
        %4780 = vmatprep.mubr.f32.mxu0 0.0
        %4781 = vmatmul.mubr.f32.gmra.mxu0 %v4672
        %v4782 = vpop.f32.mrf.mxu0
        %v4783 = vadd.f32 0.0, %v4782
        %v4784 = vpop.f32.mrf.mxu0
        %4785 = vmatprep.mubr.f32.mxu0 0.0
        %4786 = vmatmul.mubr.f32.gmra.mxu0 %v4674
        %v4787 = vpop.f32.mrf.mxu0
        %v4788 = vadd.f32 0.0, %v4787
        %v4789 = vpop.f32.mrf.mxu0
        %4790 = vmatprep.mubr.f32.mxu0 0.0
        %4791 = vmatmul.mubr.f32.gmra.mxu0 %v4676
        %v4792 = vpop.f32.mrf.mxu0
        %v4793 = vadd.f32 0.0, %v4792
        %v4794 = vpop.f32.mrf.mxu0
        %4795 = vmatprep.mubr.f32.mxu0 0.0
        %4796 = vmatmul.mubr.f32.gmra.mxu0 %v4678
        %v4797 = vpop.f32.mrf.mxu0
        %v4798 = vadd.f32 0.0, %v4797
        %v4799 = vpop.f32.mrf.mxu0
        %4800 = vdwg.mxu0
        %v4801 = vmul.f32 %v4763, 0.5
        %v4802 = vmul.f32 %v4768, 0.5
        %v4803 = vmul.f32 %v4773, 0.5
        %v4804 = vmul.f32 %v4778, 0.5
        %v4805 = vmul.f32 %v4783, 0.5
        %v4806 = vmul.f32 %v4788, 0.5
        %v4807 = vmul.f32 %v4793, 0.5
        %v4808 = vmul.f32 %v4798, 0.5
        %v4809 = vsel %vm3077, %v4801, -inf
        %4810 = vmax.xlane.f32.xlu0 %v4809
        %v4811 = vpop.xlane.xlu0 %4810
        %v4812 = vsel %vm3077, %v4802, -inf
        %4813 = vmax.xlane.f32.xlu0 %v4812
        %v4814 = vpop.xlane.xlu0 %4813
        %v4815 = vsel %vm3077, %v4803, -inf
        %4816 = vmax.xlane.f32.xlu0 %v4815
        %v4817 = vpop.xlane.xlu0 %4816
        %v4818 = vsel %vm3077, %v4804, -inf
        %4819 = vmax.xlane.f32.xlu0 %v4818
        %v4820 = vpop.xlane.xlu0 %4819
        %v4821 = vsel %vm3077, %v4805, -inf
        %4822 = vmax.xlane.f32.xlu0 %v4821
        %v4823 = vpop.xlane.xlu0 %4822
        %v4824 = vsel %vm3077, %v4806, -inf
        %4825 = vmax.xlane.f32.xlu0 %v4824
        %v4826 = vpop.xlane.xlu0 %4825
        %v4827 = vsel %vm3077, %v4807, -inf
        %4828 = vmax.xlane.f32.xlu0 %v4827
        %v4829 = vpop.xlane.xlu0 %4828
        %v4830 = vsel %vm3077, %v4808, -inf
        %4831 = vmax.xlane.f32.xlu0 %v4830
        %v4832 = vpop.xlane.xlu0 %4831
        %v4833 = vsub.f32 %v4801, %v4811
        %v4834 = vsub.f32 %v4802, %v4814
        %v4835 = vsub.f32 %v4803, %v4817
        %v4836 = vsub.f32 %v4804, %v4820
        %v4837 = vsub.f32 %v4805, %v4823
        %v4838 = vsub.f32 %v4806, %v4826
        %v4839 = vsub.f32 %v4807, %v4829
        %v4840 = vsub.f32 %v4808, %v4832
        %v4841 = vmul.f32 %v4833, 1.442695
        %v4842 = vpow.pop %v4841
        %v4843 = vmul.f32 %v4834, 1.442695
        %v4844 = vpow.pop %v4843
        %v4845 = vmul.f32 %v4835, 1.442695
        %v4846 = vpow.pop %v4845
        %v4847 = vmul.f32 %v4836, 1.442695
        %v4848 = vpow.pop %v4847
        %v4849 = vmul.f32 %v4837, 1.442695
        %v4850 = vpow.pop %v4849
        %v4851 = vmul.f32 %v4838, 1.442695
        %v4852 = vpow.pop %v4851
        %v4853 = vmul.f32 %v4839, 1.442695
        %v4854 = vpow.pop %v4853
        %v4855 = vmul.f32 %v4840, 1.442695
        %v4856 = vpow.pop %v4855
        %v4857 = vsel %vm3077, %v4842, 0.0
        %4858 = vadd.xlane.f32.xlu0 %v4857
        %v4859 = vpop.xlane.xlu0 %4858
        %v4860 = vsel %vm3077, %v4844, 0.0
        %4861 = vadd.xlane.f32.xlu0 %v4860
        %v4862 = vpop.xlane.xlu0 %4861
        %v4863 = vsel %vm3077, %v4846, 0.0
        %4864 = vadd.xlane.f32.xlu0 %v4863
        %v4865 = vpop.xlane.xlu0 %4864
        %v4866 = vsel %vm3077, %v4848, 0.0
        %4867 = vadd.xlane.f32.xlu0 %v4866
        %v4868 = vpop.xlane.xlu0 %4867
        %v4869 = vsel %vm3077, %v4850, 0.0
        %4870 = vadd.xlane.f32.xlu0 %v4869
        %v4871 = vpop.xlane.xlu0 %4870
        %v4872 = vsel %vm3077, %v4852, 0.0
        %4873 = vadd.xlane.f32.xlu0 %v4872
        %v4874 = vpop.xlane.xlu0 %4873
        %v4875 = vsel %vm3077, %v4854, 0.0
        %4876 = vadd.xlane.f32.xlu0 %v4875
        %v4877 = vpop.xlane.xlu0 %4876
        %v4878 = vsel %vm3077, %v4856, 0.0
        %4879 = vadd.xlane.f32.xlu0 %v4878
        %v4880 = vpop.xlane.xlu0 %4879
        %v4881 = vrcp.pop %v4859
        %v4882 = vrcp.pop %v4862
        %v4883 = vrcp.pop %v4865
        %v4884 = vrcp.pop %v4868
        %v4885 = vrcp.pop %v4871
        %v4886 = vrcp.pop %v4874
        %v4887 = vrcp.pop %v4877
        %v4888 = vrcp.pop %v4880
        %v4889 = vmul.f32 %v4859, %v4881
        %v4890 = vmul.f32 %v4862, %v4882
        %v4891 = vmul.f32 %v4865, %v4883
        %v4892 = vmul.f32 %v4868, %v4884
        %v4893 = vmul.f32 %v4871, %v4885
        %v4894 = vmul.f32 %v4874, %v4886
        %v4895 = vmul.f32 %v4877, %v4887
        %v4896 = vmul.f32 %v4880, %v4888
        %v4897 = vsub.f32 2.0, %v4889
        %v4898 = vsub.f32 2.0, %v4890
        %v4899 = vsub.f32 2.0, %v4891
        %v4900 = vsub.f32 2.0, %v4892
        %v4901 = vsub.f32 2.0, %v4893
        %v4902 = vsub.f32 2.0, %v4894
        %v4903 = vsub.f32 2.0, %v4895
        %v4904 = vsub.f32 2.0, %v4896
        %v4905 = vmul.f32 %v4881, %v4897
        %v4906 = vmul.f32 %v4882, %v4898
        %v4907 = vmul.f32 %v4883, %v4899
        %v4908 = vmul.f32 %v4884, %v4900
        %v4909 = vmul.f32 %v4885, %v4901
        %v4910 = vmul.f32 %v4886, %v4902
        %v4911 = vmul.f32 %v4887, %v4903
        %v4912 = vmul.f32 %v4888, %v4904
        %v4913 = vmul.f32 %v4842, %v4905
        %v4914 = vmul.f32 %v4844, %v4906
        %v4915 = vmul.f32 %v4846, %v4907
        %v4916 = vmul.f32 %v4848, %v4908
        %v4917 = vmul.f32 %v4850, %v4909
        %v4918 = vmul.f32 %v4852, %v4910
        %v4919 = vmul.f32 %v4854, %v4911
        %v4920 = vmul.f32 %v4856, %v4912
        %4921 = vrot.lane.b32.xlu0 %v2895, 52
        %v4922 = vpop.permute.xlu0 %4921
        %4923 = vrot.lane.b32.xlu0 %v2896, 52
        %v4924 = vpop.permute.xlu0 %4923
        %4925 = vrot.lane.b32.xlu0 %v2897, 52
        %v4926 = vpop.permute.xlu0 %4925
        %4927 = vrot.lane.b32.xlu0 %v2898, 52
        %v4928 = vpop.permute.xlu0 %4927
        %4929 = vrot.lane.b32.xlu0 %v2899, 52
        %v4930 = vpop.permute.xlu0 %4929
        %4931 = vrot.lane.b32.xlu0 %v2900, 52
        %v4932 = vpop.permute.xlu0 %4931
        %4933 = vrot.lane.b32.xlu0 %v2901, 52
        %v4934 = vpop.permute.xlu0 %4933
        %4935 = vrot.lane.b32.xlu0 %v2902, 52
        %v4936 = vpop.permute.xlu0 %4935
        %v4946 = vsel %vm3077, %v4913, 0
        %v4949 = vsel %vm3077, %v4914, 0
        %v4952 = vsel %vm3077, %v4915, 0
        %v4955 = vsel %vm3077, %v4916, 0
        %v4958 = vsel %vm3077, %v4917, 0
        %v4961 = vsel %vm3077, %v4918, 0
        %v4964 = vsel %vm3077, %v4919, 0
        %v4967 = vsel %vm3077, %v4920, 0
        %4969 = vmatprep.subr.mxu0 0.0
        %4970 = vmatpush1.msra.mxu0 0.0
        %4971 = vmatprep.subr.mxu0 0.0
        %4972 = vmatpush1.msra.mxu0 0.0
        %4973 = vmatprep.subr.mxu0 0.0
        %4974 = vmatpush1.msra.mxu0 0.0
        %4975 = vmatprep.subr.mxu0 0.0
        %4976 = vmatpush1.msra.mxu0 0.0
        %4977 = vmatprep.subr.mxu0 0.0
        %4978 = vmatpush1.msra.mxu0 0.0
        %4979 = vmatprep.subr.mxu0 0.0
        %4980 = vmatpush1.msra.mxu0 0.0
        %4981 = vmatprep.subr.mxu0 0.0
        %4982 = vmatpush1.msra.mxu0 0.0
        %4983 = vmatprep.subr.mxu0 0.0
        %4984 = vmatpush1.msra.mxu0 0.0
        %4985 = vmatprep.subr.mxu0 0.0
        %4986 = vmatpush1.msra.mxu0 %v4936
        %4987 = vmatprep.subr.mxu0 0.0
        %4988 = vmatpush1.msra.mxu0 %v4934
        %4989 = vmatprep.subr.mxu0 0.0
        %4990 = vmatpush1.msra.mxu0 %v4932
        %4991 = vmatprep.subr.mxu0 0.0
        %4992 = vmatpush1.msra.mxu0 %v4930
        %4993 = vmatprep.subr.mxu0 0.0
        %4994 = vmatpush1.msra.mxu0 %v4928
        %4995 = vmatprep.subr.mxu0 0.0
        %4996 = vmatpush1.msra.mxu0 %v4926
        %4997 = vmatprep.subr.mxu0 0.0
        %4998 = vmatpush1.msra.mxu0 %v4924
        %4999 = vmatprep.subr.mxu0 0.0
        %5000 = vmatpush1.msra.mxu0 %v4922
        %5001 = vmatprep.subr.mxu0 0.0
        %5002 = vmatpush2.msra.mxu0 0.0
        %5003 = vmatprep.subr.mxu0 0.0
        %5004 = vmatpush2.msra.mxu0 0.0
        %5005 = vmatprep.subr.mxu0 0.0
        %5006 = vmatpush2.msra.mxu0 0.0
        %5007 = vmatprep.subr.mxu0 0.0
        %5008 = vmatpush2.msra.mxu0 0.0
        %5009 = vmatprep.subr.mxu0 0.0
        %5010 = vmatpush2.msra.mxu0 0.0
        %5011 = vmatprep.subr.mxu0 0.0
        %5012 = vmatpush2.msra.mxu0 0.0
        %5013 = vmatprep.subr.mxu0 0.0
        %5014 = vmatpush2.msra.mxu0 0.0
        %5015 = vmatprep.subr.mxu0 0.0
        %5016 = vmatpush2.msra.mxu0 0.0
        %5017 = vmatprep.subr.mxu0 0.0
        %5018 = vmatpush2.msra.mxu0 0.0
        %5019 = vmatprep.subr.mxu0 0.0
        %5020 = vmatpush2.msra.mxu0 0.0
        %5021 = vmatprep.subr.mxu0 0.0
        %5022 = vmatpush2.msra.mxu0 0.0
        %5023 = vmatprep.subr.mxu0 0.0
        %5024 = vmatpush2.msra.mxu0 0.0
        %5025 = vmatprep.subr.mxu0 0.0
        %5026 = vmatpush2.msra.mxu0 0.0
        %5027 = vmatprep.subr.mxu0 0.0
        %5028 = vmatpush2.msra.mxu0 0.0
        %5029 = vmatprep.subr.mxu0 0.0
        %5030 = vmatpush2.msra.mxu0 0.0
        %5031 = vmatprep.subr.mxu0 0.0
        %5032 = vmatpush2.msra.mxu0 0.0
        %5033 = vmatprep.mubr.f32.mxu0 0.0
        %5034 = vmatmul.mubr.f32.gmra.mxu0 %v4946
        %v5035 = vpop.f32.mrf.mxu0
        %v5036 = vadd.f32 0.0, %v5035
        %v5037 = vpop.f32.mrf.mxu0
        %5038 = vmatprep.mubr.f32.mxu0 0.0
        %5039 = vmatmul.mubr.f32.gmra.mxu0 %v4949
        %v5040 = vpop.f32.mrf.mxu0
        %v5041 = vadd.f32 0.0, %v5040
        %v5042 = vpop.f32.mrf.mxu0
        %5043 = vmatprep.mubr.f32.mxu0 0.0
        %5044 = vmatmul.mubr.f32.gmra.mxu0 %v4952
        %v5045 = vpop.f32.mrf.mxu0
        %v5046 = vadd.f32 0.0, %v5045
        %v5047 = vpop.f32.mrf.mxu0
        %5048 = vmatprep.mubr.f32.mxu0 0.0
        %5049 = vmatmul.mubr.f32.gmra.mxu0 %v4955
        %v5050 = vpop.f32.mrf.mxu0
        %v5051 = vadd.f32 0.0, %v5050
        %v5052 = vpop.f32.mrf.mxu0
        %5053 = vmatprep.mubr.f32.mxu0 0.0
        %5054 = vmatmul.mubr.f32.gmra.mxu0 %v4958
        %v5055 = vpop.f32.mrf.mxu0
        %v5056 = vadd.f32 0.0, %v5055
        %v5057 = vpop.f32.mrf.mxu0
        %5058 = vmatprep.mubr.f32.mxu0 0.0
        %5059 = vmatmul.mubr.f32.gmra.mxu0 %v4961
        %v5060 = vpop.f32.mrf.mxu0
        %v5061 = vadd.f32 0.0, %v5060
        %v5062 = vpop.f32.mrf.mxu0
        %5063 = vmatprep.mubr.f32.mxu0 0.0
        %5064 = vmatmul.mubr.f32.gmra.mxu0 %v4964
        %v5065 = vpop.f32.mrf.mxu0
        %v5066 = vadd.f32 0.0, %v5065
        %v5067 = vpop.f32.mrf.mxu0
        %5068 = vmatprep.mubr.f32.mxu0 0.0
        %5069 = vmatmul.mubr.f32.gmra.mxu0 %v4967
        %v5070 = vpop.f32.mrf.mxu0
        %v5071 = vadd.f32 0.0, %v5070
        %v5072 = vpop.f32.mrf.mxu0
        %5073 = vdwg.mxu0
        %v5074 = vrot.slane %v2904, 4
        %v5076 = vsel %vm2931, %v5036, 0
        %v5079 = vsel %vm2931, %v5041, 0
        %v5082 = vsel %vm2931, %v5046, 0
        %v5085 = vsel %vm2931, %v5051, 0
        %v5088 = vsel %vm2931, %v5056, 0
        %v5091 = vsel %vm2931, %v5061, 0
        %v5094 = vsel %vm2931, %v5066, 0
        %v5097 = vsel %vm2931, %v5071, 0
        %v5099 = vsel %vm3811, %v5074, 0
        %5101 = vmatprep.subr.mxu0 0.0
        %5102 = vmatpush1.msra.mxu0 0.0
        %5103 = vmatprep.subr.mxu0 0.0
        %5104 = vmatpush1.msra.mxu0 0.0
        %5105 = vmatprep.subr.mxu0 0.0
        %5106 = vmatpush1.msra.mxu0 0.0
        %5107 = vmatprep.subr.mxu0 0.0
        %5108 = vmatpush1.msra.mxu0 0.0
        %5109 = vmatprep.subr.mxu0 0.0
        %5110 = vmatpush1.msra.mxu0 0.0
        %5111 = vmatprep.subr.mxu0 0.0
        %5112 = vmatpush1.msra.mxu0 0.0
        %5113 = vmatprep.subr.mxu0 0.0
        %5114 = vmatpush1.msra.mxu0 0.0
        %5115 = vmatprep.subr.mxu0 0.0
        %5116 = vmatpush1.msra.mxu0 0.0
        %5117 = vmatprep.subr.mxu0 0.0
        %5118 = vmatpush1.msra.mxu0 0.0
        %5119 = vmatprep.subr.mxu0 0.0
        %5120 = vmatpush1.msra.mxu0 0.0
        %5121 = vmatprep.subr.mxu0 0.0
        %5122 = vmatpush1.msra.mxu0 0.0
        %5123 = vmatprep.subr.mxu0 0.0
        %5124 = vmatpush1.msra.mxu0 0.0
        %5125 = vmatprep.subr.mxu0 0.0
        %5126 = vmatpush1.msra.mxu0 0.0
        %5127 = vmatprep.subr.mxu0 0.0
        %5128 = vmatpush1.msra.mxu0 0.0
        %5129 = vmatprep.subr.mxu0 0.0
        %5130 = vmatpush1.msra.mxu0 0.0
        %5131 = vmatprep.subr.mxu0 0.0
        %5132 = vmatpush1.msra.mxu0 %v5099
        %5133 = vmatprep.subr.mxu0 0.0
        %5134 = vmatpush2.msra.mxu0 0.0
        %5135 = vmatprep.subr.mxu0 0.0
        %5136 = vmatpush2.msra.mxu0 0.0
        %5137 = vmatprep.subr.mxu0 0.0
        %5138 = vmatpush2.msra.mxu0 0.0
        %5139 = vmatprep.subr.mxu0 0.0
        %5140 = vmatpush2.msra.mxu0 0.0
        %5141 = vmatprep.subr.mxu0 0.0
        %5142 = vmatpush2.msra.mxu0 0.0
        %5143 = vmatprep.subr.mxu0 0.0
        %5144 = vmatpush2.msra.mxu0 0.0
        %5145 = vmatprep.subr.mxu0 0.0
        %5146 = vmatpush2.msra.mxu0 0.0
        %5147 = vmatprep.subr.mxu0 0.0
        %5148 = vmatpush2.msra.mxu0 0.0
        %5149 = vmatprep.subr.mxu0 0.0
        %5150 = vmatpush2.msra.mxu0 0.0
        %5151 = vmatprep.subr.mxu0 0.0
        %5152 = vmatpush2.msra.mxu0 0.0
        %5153 = vmatprep.subr.mxu0 0.0
        %5154 = vmatpush2.msra.mxu0 0.0
        %5155 = vmatprep.subr.mxu0 0.0
        %5156 = vmatpush2.msra.mxu0 0.0
        %5157 = vmatprep.subr.mxu0 0.0
        %5158 = vmatpush2.msra.mxu0 0.0
        %5159 = vmatprep.subr.mxu0 0.0
        %5160 = vmatpush2.msra.mxu0 0.0
        %5161 = vmatprep.subr.mxu0 0.0
        %5162 = vmatpush2.msra.mxu0 0.0
        %5163 = vmatprep.subr.mxu0 0.0
        %5164 = vmatpush2.msra.mxu0 0.0
        %5165 = vmatprep.mubr.f32.mxu0 0.0
        %5166 = vmatmul.mubr.f32.gmra.mxu0 %v5076
        %v5167 = vpop.f32.mrf.mxu0
        %v5168 = vadd.f32 0.0, %v5167
        %v5169 = vpop.f32.mrf.mxu0
        %5170 = vmatprep.mubr.f32.mxu0 0.0
        %5171 = vmatmul.mubr.f32.gmra.mxu0 %v5079
        %v5172 = vpop.f32.mrf.mxu0
        %v5173 = vadd.f32 0.0, %v5172
        %v5174 = vpop.f32.mrf.mxu0
        %5175 = vmatprep.mubr.f32.mxu0 0.0
        %5176 = vmatmul.mubr.f32.gmra.mxu0 %v5082
        %v5177 = vpop.f32.mrf.mxu0
        %v5178 = vadd.f32 0.0, %v5177
        %v5179 = vpop.f32.mrf.mxu0
        %5180 = vmatprep.mubr.f32.mxu0 0.0
        %5181 = vmatmul.mubr.f32.gmra.mxu0 %v5085
        %v5182 = vpop.f32.mrf.mxu0
        %v5183 = vadd.f32 0.0, %v5182
        %v5184 = vpop.f32.mrf.mxu0
        %5185 = vmatprep.mubr.f32.mxu0 0.0
        %5186 = vmatmul.mubr.f32.gmra.mxu0 %v5088
        %v5187 = vpop.f32.mrf.mxu0
        %v5188 = vadd.f32 0.0, %v5187
        %v5189 = vpop.f32.mrf.mxu0
        %5190 = vmatprep.mubr.f32.mxu0 0.0
        %5191 = vmatmul.mubr.f32.gmra.mxu0 %v5091
        %v5192 = vpop.f32.mrf.mxu0
        %v5193 = vadd.f32 0.0, %v5192
        %v5194 = vpop.f32.mrf.mxu0
        %5195 = vmatprep.mubr.f32.mxu0 0.0
        %5196 = vmatmul.mubr.f32.gmra.mxu0 %v5094
        %v5197 = vpop.f32.mrf.mxu0
        %v5198 = vadd.f32 0.0, %v5197
        %v5199 = vpop.f32.mrf.mxu0
        %5200 = vmatprep.mubr.f32.mxu0 0.0
        %5201 = vmatmul.mubr.f32.gmra.mxu0 %v5097
        %v5202 = vpop.f32.mrf.mxu0
        %v5203 = vadd.f32 0.0, %v5202
        %v5204 = vpop.f32.mrf.mxu0
        %5205 = vdwg.mxu0
        %v5206 = vadd.f32 %v4624, %v5168
        %v5207 = vadd.f32 %v4625, %v5173
        %v5208 = vadd.f32 %v4626, %v5178
        %v5209 = vadd.f32 %v4627, %v5183
        %v5210 = vadd.f32 %v4628, %v5188
        %v5211 = vadd.f32 %v4629, %v5193
        %v5212 = vadd.f32 %v4630, %v5198
        %v5213 = vadd.f32 %v4631, %v5203
        %5214 = vrot.lane.b32.xlu0 %v2895, 112
        %v5215 = vpop.permute.xlu0 %5214
        %5216 = vrot.lane.b32.xlu0 %v2896, 112
        %v5217 = vpop.permute.xlu0 %5216
        %5218 = vrot.lane.b32.xlu0 %v2897, 112
        %v5219 = vpop.permute.xlu0 %5218
        %5220 = vrot.lane.b32.xlu0 %v2898, 112
        %v5221 = vpop.permute.xlu0 %5220
        %5222 = vrot.lane.b32.xlu0 %v2899, 112
        %v5223 = vpop.permute.xlu0 %5222
        %5224 = vrot.lane.b32.xlu0 %v2900, 112
        %v5225 = vpop.permute.xlu0 %5224
        %5226 = vrot.lane.b32.xlu0 %v2901, 112
        %v5227 = vpop.permute.xlu0 %5226
        %5228 = vrot.lane.b32.xlu0 %v2902, 112
        %v5229 = vpop.permute.xlu0 %5228
        %5230 = vrot.lane.b32.xlu0 %v2895, 80
        %v5231 = vpop.permute.xlu0 %5230
        %5232 = vrot.lane.b32.xlu0 %v2896, 80
        %v5233 = vpop.permute.xlu0 %5232
        %5234 = vrot.lane.b32.xlu0 %v2897, 80
        %v5235 = vpop.permute.xlu0 %5234
        %5236 = vrot.lane.b32.xlu0 %v2898, 80
        %v5237 = vpop.permute.xlu0 %5236
        %5238 = vrot.lane.b32.xlu0 %v2899, 80
        %v5239 = vpop.permute.xlu0 %5238
        %5240 = vrot.lane.b32.xlu0 %v2900, 80
        %v5241 = vpop.permute.xlu0 %5240
        %5242 = vrot.lane.b32.xlu0 %v2901, 80
        %v5243 = vpop.permute.xlu0 %5242
        %5244 = vrot.lane.b32.xlu0 %v2902, 80
        %v5245 = vpop.permute.xlu0 %5244
        %v5246 = vsel %vm2931, %v5215, 0
        %v5248 = vsel %vm2931, %v5217, 0
        %v5250 = vsel %vm2931, %v5219, 0
        %v5252 = vsel %vm2931, %v5221, 0
        %v5254 = vsel %vm2931, %v5223, 0
        %v5256 = vsel %vm2931, %v5225, 0
        %v5258 = vsel %vm2931, %v5227, 0
        %v5260 = vsel %vm2931, %v5229, 0
        %v5262 = vsel %vm2931, %v5231, 0
        %v5264 = vsel %vm2931, %v5233, 0
        %v5266 = vsel %vm2931, %v5235, 0
        %v5268 = vsel %vm2931, %v5237, 0
        %v5270 = vsel %vm2931, %v5239, 0
        %v5272 = vsel %vm2931, %v5241, 0
        %v5274 = vsel %vm2931, %v5243, 0
        %v5276 = vsel %vm2931, %v5245, 0
        %5278 = vmatprep.subr.mxu0 0.0
        %5279 = vmatpush1.xpose.msra.mxu0 0.0
        %5280 = vmatprep.subr.mxu0 0.0
        %5281 = vmatpush1.xpose.msra.mxu0 0.0
        %5282 = vmatprep.subr.mxu0 0.0
        %5283 = vmatpush1.xpose.msra.mxu0 0.0
        %5284 = vmatprep.subr.mxu0 0.0
        %5285 = vmatpush1.xpose.msra.mxu0 0.0
        %5286 = vmatprep.subr.mxu0 0.0
        %5287 = vmatpush1.xpose.msra.mxu0 0.0
        %5288 = vmatprep.subr.mxu0 0.0
        %5289 = vmatpush1.xpose.msra.mxu0 0.0
        %5290 = vmatprep.subr.mxu0 0.0
        %5291 = vmatpush1.xpose.msra.mxu0 0.0
        %5292 = vmatprep.subr.mxu0 0.0
        %5293 = vmatpush1.xpose.msra.mxu0 0.0
        %5294 = vmatprep.subr.mxu0 0.0
        %5295 = vmatpush1.xpose.msra.mxu0 %v5276
        %5296 = vmatprep.subr.mxu0 0.0
        %5297 = vmatpush1.xpose.msra.mxu0 %v5274
        %5298 = vmatprep.subr.mxu0 0.0
        %5299 = vmatpush1.xpose.msra.mxu0 %v5272
        %5300 = vmatprep.subr.mxu0 0.0
        %5301 = vmatpush1.xpose.msra.mxu0 %v5270
        %5302 = vmatprep.subr.mxu0 0.0
        %5303 = vmatpush1.xpose.msra.mxu0 %v5268
        %5304 = vmatprep.subr.mxu0 0.0
        %5305 = vmatpush1.xpose.msra.mxu0 %v5266
        %5306 = vmatprep.subr.mxu0 0.0
        %5307 = vmatpush1.xpose.msra.mxu0 %v5264
        %5308 = vmatprep.subr.mxu0 0.0
        %5309 = vmatpush1.xpose.msra.mxu0 %v5262
        %5310 = vmatprep.subr.mxu0 0.0
        %5311 = vmatpush2.xpose.msra.mxu0 0.0
        %5312 = vmatprep.subr.mxu0 0.0
        %5313 = vmatpush2.xpose.msra.mxu0 0.0
        %5314 = vmatprep.subr.mxu0 0.0
        %5315 = vmatpush2.xpose.msra.mxu0 0.0
        %5316 = vmatprep.subr.mxu0 0.0
        %5317 = vmatpush2.xpose.msra.mxu0 0.0
        %5318 = vmatprep.subr.mxu0 0.0
        %5319 = vmatpush2.xpose.msra.mxu0 0.0
        %5320 = vmatprep.subr.mxu0 0.0
        %5321 = vmatpush2.xpose.msra.mxu0 0.0
        %5322 = vmatprep.subr.mxu0 0.0
        %5323 = vmatpush2.xpose.msra.mxu0 0.0
        %5324 = vmatprep.subr.mxu0 0.0
        %5325 = vmatpush2.xpose.msra.mxu0 0.0
        %5326 = vmatprep.subr.mxu0 0.0
        %5327 = vmatpush2.xpose.msra.mxu0 0.0
        %5328 = vmatprep.subr.mxu0 0.0
        %5329 = vmatpush2.xpose.msra.mxu0 0.0
        %5330 = vmatprep.subr.mxu0 0.0
        %5331 = vmatpush2.xpose.msra.mxu0 0.0
        %5332 = vmatprep.subr.mxu0 0.0
        %5333 = vmatpush2.xpose.msra.mxu0 0.0
        %5334 = vmatprep.subr.mxu0 0.0
        %5335 = vmatpush2.xpose.msra.mxu0 0.0
        %5336 = vmatprep.subr.mxu0 0.0
        %5337 = vmatpush2.xpose.msra.mxu0 0.0
        %5338 = vmatprep.subr.mxu0 0.0
        %5339 = vmatpush2.xpose.msra.mxu0 0.0
        %5340 = vmatprep.subr.mxu0 0.0
        %5341 = vmatpush2.xpose.msra.mxu0 0.0
        %5342 = vmatprep.mubr.f32.mxu0 0.0
        %5343 = vmatmul.mubr.f32.gmra.mxu0 %v5246
        %v5344 = vpop.f32.mrf.mxu0
        %v5345 = vadd.f32 0.0, %v5344
        %v5346 = vpop.f32.mrf.mxu0
        %5347 = vmatprep.mubr.f32.mxu0 0.0
        %5348 = vmatmul.mubr.f32.gmra.mxu0 %v5248
        %v5349 = vpop.f32.mrf.mxu0
        %v5350 = vadd.f32 0.0, %v5349
        %v5351 = vpop.f32.mrf.mxu0
        %5352 = vmatprep.mubr.f32.mxu0 0.0
        %5353 = vmatmul.mubr.f32.gmra.mxu0 %v5250
        %v5354 = vpop.f32.mrf.mxu0
        %v5355 = vadd.f32 0.0, %v5354
        %v5356 = vpop.f32.mrf.mxu0
        %5357 = vmatprep.mubr.f32.mxu0 0.0
        %5358 = vmatmul.mubr.f32.gmra.mxu0 %v5252
        %v5359 = vpop.f32.mrf.mxu0
        %v5360 = vadd.f32 0.0, %v5359
        %v5361 = vpop.f32.mrf.mxu0
        %5362 = vmatprep.mubr.f32.mxu0 0.0
        %5363 = vmatmul.mubr.f32.gmra.mxu0 %v5254
        %v5364 = vpop.f32.mrf.mxu0
        %v5365 = vadd.f32 0.0, %v5364
        %v5366 = vpop.f32.mrf.mxu0
        %5367 = vmatprep.mubr.f32.mxu0 0.0
        %5368 = vmatmul.mubr.f32.gmra.mxu0 %v5256
        %v5369 = vpop.f32.mrf.mxu0
        %v5370 = vadd.f32 0.0, %v5369
        %v5371 = vpop.f32.mrf.mxu0
        %5372 = vmatprep.mubr.f32.mxu0 0.0
        %5373 = vmatmul.mubr.f32.gmra.mxu0 %v5258
        %v5374 = vpop.f32.mrf.mxu0
        %v5375 = vadd.f32 0.0, %v5374
        %v5376 = vpop.f32.mrf.mxu0
        %5377 = vmatprep.mubr.f32.mxu0 0.0
        %5378 = vmatmul.mubr.f32.gmra.mxu0 %v5260
        %v5379 = vpop.f32.mrf.mxu0
        %v5380 = vadd.f32 0.0, %v5379
        %v5381 = vpop.f32.mrf.mxu0
        %5382 = vdwg.mxu0
        %v5383 = vmul.f32 %v5345, 0.5
        %v5384 = vmul.f32 %v5350, 0.5
        %v5385 = vmul.f32 %v5355, 0.5
        %v5386 = vmul.f32 %v5360, 0.5
        %v5387 = vmul.f32 %v5365, 0.5
        %v5388 = vmul.f32 %v5370, 0.5
        %v5389 = vmul.f32 %v5375, 0.5
        %v5390 = vmul.f32 %v5380, 0.5
        %v5391 = vsel %vm3077, %v5383, -inf
        %5392 = vmax.xlane.f32.xlu0 %v5391
        %v5393 = vpop.xlane.xlu0 %5392
        %v5394 = vsel %vm3077, %v5384, -inf
        %5395 = vmax.xlane.f32.xlu0 %v5394
        %v5396 = vpop.xlane.xlu0 %5395
        %v5397 = vsel %vm3077, %v5385, -inf
        %5398 = vmax.xlane.f32.xlu0 %v5397
        %v5399 = vpop.xlane.xlu0 %5398
        %v5400 = vsel %vm3077, %v5386, -inf
        %5401 = vmax.xlane.f32.xlu0 %v5400
        %v5402 = vpop.xlane.xlu0 %5401
        %v5403 = vsel %vm3077, %v5387, -inf
        %5404 = vmax.xlane.f32.xlu0 %v5403
        %v5405 = vpop.xlane.xlu0 %5404
        %v5406 = vsel %vm3077, %v5388, -inf
        %5407 = vmax.xlane.f32.xlu0 %v5406
        %v5408 = vpop.xlane.xlu0 %5407
        %v5409 = vsel %vm3077, %v5389, -inf
        %5410 = vmax.xlane.f32.xlu0 %v5409
        %v5411 = vpop.xlane.xlu0 %5410
        %v5412 = vsel %vm3077, %v5390, -inf
        %5413 = vmax.xlane.f32.xlu0 %v5412
        %v5414 = vpop.xlane.xlu0 %5413
        %v5415 = vsub.f32 %v5383, %v5393
        %v5416 = vsub.f32 %v5384, %v5396
        %v5417 = vsub.f32 %v5385, %v5399
        %v5418 = vsub.f32 %v5386, %v5402
        %v5419 = vsub.f32 %v5387, %v5405
        %v5420 = vsub.f32 %v5388, %v5408
        %v5421 = vsub.f32 %v5389, %v5411
        %v5422 = vsub.f32 %v5390, %v5414
        %v5423 = vmul.f32 %v5415, 1.442695
        %v5424 = vpow.pop %v5423
        %v5425 = vmul.f32 %v5416, 1.442695
        %v5426 = vpow.pop %v5425
        %v5427 = vmul.f32 %v5417, 1.442695
        %v5428 = vpow.pop %v5427
        %v5429 = vmul.f32 %v5418, 1.442695
        %v5430 = vpow.pop %v5429
        %v5431 = vmul.f32 %v5419, 1.442695
        %v5432 = vpow.pop %v5431
        %v5433 = vmul.f32 %v5420, 1.442695
        %v5434 = vpow.pop %v5433
        %v5435 = vmul.f32 %v5421, 1.442695
        %v5436 = vpow.pop %v5435
        %v5437 = vmul.f32 %v5422, 1.442695
        %v5438 = vpow.pop %v5437
        %v5439 = vsel %vm3077, %v5424, 0.0
        %5440 = vadd.xlane.f32.xlu0 %v5439
        %v5441 = vpop.xlane.xlu0 %5440
        %v5442 = vsel %vm3077, %v5426, 0.0
        %5443 = vadd.xlane.f32.xlu0 %v5442
        %v5444 = vpop.xlane.xlu0 %5443
        %v5445 = vsel %vm3077, %v5428, 0.0
        %5446 = vadd.xlane.f32.xlu0 %v5445
        %v5447 = vpop.xlane.xlu0 %5446
        %v5448 = vsel %vm3077, %v5430, 0.0
        %5449 = vadd.xlane.f32.xlu0 %v5448
        %v5450 = vpop.xlane.xlu0 %5449
        %v5451 = vsel %vm3077, %v5432, 0.0
        %5452 = vadd.xlane.f32.xlu0 %v5451
        %v5453 = vpop.xlane.xlu0 %5452
        %v5454 = vsel %vm3077, %v5434, 0.0
        %5455 = vadd.xlane.f32.xlu0 %v5454
        %v5456 = vpop.xlane.xlu0 %5455
        %v5457 = vsel %vm3077, %v5436, 0.0
        %5458 = vadd.xlane.f32.xlu0 %v5457
        %v5459 = vpop.xlane.xlu0 %5458
        %v5460 = vsel %vm3077, %v5438, 0.0
        %5461 = vadd.xlane.f32.xlu0 %v5460
        %v5462 = vpop.xlane.xlu0 %5461
        %v5463 = vrcp.pop %v5441
        %v5464 = vrcp.pop %v5444
        %v5465 = vrcp.pop %v5447
        %v5466 = vrcp.pop %v5450
        %v5467 = vrcp.pop %v5453
        %v5468 = vrcp.pop %v5456
        %v5469 = vrcp.pop %v5459
        %v5470 = vrcp.pop %v5462
        %v5471 = vmul.f32 %v5441, %v5463
        %v5472 = vmul.f32 %v5444, %v5464
        %v5473 = vmul.f32 %v5447, %v5465
        %v5474 = vmul.f32 %v5450, %v5466
        %v5475 = vmul.f32 %v5453, %v5467
        %v5476 = vmul.f32 %v5456, %v5468
        %v5477 = vmul.f32 %v5459, %v5469
        %v5478 = vmul.f32 %v5462, %v5470
        %v5479 = vsub.f32 2.0, %v5471
        %v5480 = vsub.f32 2.0, %v5472
        %v5481 = vsub.f32 2.0, %v5473
        %v5482 = vsub.f32 2.0, %v5474
        %v5483 = vsub.f32 2.0, %v5475
        %v5484 = vsub.f32 2.0, %v5476
        %v5485 = vsub.f32 2.0, %v5477
        %v5486 = vsub.f32 2.0, %v5478
        %v5487 = vmul.f32 %v5463, %v5479
        %v5488 = vmul.f32 %v5464, %v5480
        %v5489 = vmul.f32 %v5465, %v5481
        %v5490 = vmul.f32 %v5466, %v5482
        %v5491 = vmul.f32 %v5467, %v5483
        %v5492 = vmul.f32 %v5468, %v5484
        %v5493 = vmul.f32 %v5469, %v5485
        %v5494 = vmul.f32 %v5470, %v5486
        %v5495 = vmul.f32 %v5424, %v5487
        %v5496 = vmul.f32 %v5426, %v5488
        %v5497 = vmul.f32 %v5428, %v5489
        %v5498 = vmul.f32 %v5430, %v5490
        %v5499 = vmul.f32 %v5432, %v5491
        %v5500 = vmul.f32 %v5434, %v5492
        %v5501 = vmul.f32 %v5436, %v5493
        %v5502 = vmul.f32 %v5438, %v5494
        %5503 = vrot.lane.b32.xlu0 %v2895, 48
        %v5504 = vpop.permute.xlu0 %5503
        %5505 = vrot.lane.b32.xlu0 %v2896, 48
        %v5506 = vpop.permute.xlu0 %5505
        %5507 = vrot.lane.b32.xlu0 %v2897, 48
        %v5508 = vpop.permute.xlu0 %5507
        %5509 = vrot.lane.b32.xlu0 %v2898, 48
        %v5510 = vpop.permute.xlu0 %5509
        %5511 = vrot.lane.b32.xlu0 %v2899, 48
        %v5512 = vpop.permute.xlu0 %5511
        %5513 = vrot.lane.b32.xlu0 %v2900, 48
        %v5514 = vpop.permute.xlu0 %5513
        %5515 = vrot.lane.b32.xlu0 %v2901, 48
        %v5516 = vpop.permute.xlu0 %5515
        %5517 = vrot.lane.b32.xlu0 %v2902, 48
        %v5518 = vpop.permute.xlu0 %5517
        %v5528 = vsel %vm3077, %v5495, 0
        %v5531 = vsel %vm3077, %v5496, 0
        %v5534 = vsel %vm3077, %v5497, 0
        %v5537 = vsel %vm3077, %v5498, 0
        %v5540 = vsel %vm3077, %v5499, 0
        %v5543 = vsel %vm3077, %v5500, 0
        %v5546 = vsel %vm3077, %v5501, 0
        %v5549 = vsel %vm3077, %v5502, 0
        %5551 = vmatprep.subr.mxu0 0.0
        %5552 = vmatpush1.msra.mxu0 0.0
        %5553 = vmatprep.subr.mxu0 0.0
        %5554 = vmatpush1.msra.mxu0 0.0
        %5555 = vmatprep.subr.mxu0 0.0
        %5556 = vmatpush1.msra.mxu0 0.0
        %5557 = vmatprep.subr.mxu0 0.0
        %5558 = vmatpush1.msra.mxu0 0.0
        %5559 = vmatprep.subr.mxu0 0.0
        %5560 = vmatpush1.msra.mxu0 0.0
        %5561 = vmatprep.subr.mxu0 0.0
        %5562 = vmatpush1.msra.mxu0 0.0
        %5563 = vmatprep.subr.mxu0 0.0
        %5564 = vmatpush1.msra.mxu0 0.0
        %5565 = vmatprep.subr.mxu0 0.0
        %5566 = vmatpush1.msra.mxu0 0.0
        %5567 = vmatprep.subr.mxu0 0.0
        %5568 = vmatpush1.msra.mxu0 %v5518
        %5569 = vmatprep.subr.mxu0 0.0
        %5570 = vmatpush1.msra.mxu0 %v5516
        %5571 = vmatprep.subr.mxu0 0.0
        %5572 = vmatpush1.msra.mxu0 %v5514
        %5573 = vmatprep.subr.mxu0 0.0
        %5574 = vmatpush1.msra.mxu0 %v5512
        %5575 = vmatprep.subr.mxu0 0.0
        %5576 = vmatpush1.msra.mxu0 %v5510
        %5577 = vmatprep.subr.mxu0 0.0
        %5578 = vmatpush1.msra.mxu0 %v5508
        %5579 = vmatprep.subr.mxu0 0.0
        %5580 = vmatpush1.msra.mxu0 %v5506
        %5581 = vmatprep.subr.mxu0 0.0
        %5582 = vmatpush1.msra.mxu0 %v5504
        %5583 = vmatprep.subr.mxu0 0.0
        %5584 = vmatpush2.msra.mxu0 0.0
        %5585 = vmatprep.subr.mxu0 0.0
        %5586 = vmatpush2.msra.mxu0 0.0
        %5587 = vmatprep.subr.mxu0 0.0
        %5588 = vmatpush2.msra.mxu0 0.0
        %5589 = vmatprep.subr.mxu0 0.0
        %5590 = vmatpush2.msra.mxu0 0.0
        %5591 = vmatprep.subr.mxu0 0.0
        %5592 = vmatpush2.msra.mxu0 0.0
        %5593 = vmatprep.subr.mxu0 0.0
        %5594 = vmatpush2.msra.mxu0 0.0
        %5595 = vmatprep.subr.mxu0 0.0
        %5596 = vmatpush2.msra.mxu0 0.0
        %5597 = vmatprep.subr.mxu0 0.0
        %5598 = vmatpush2.msra.mxu0 0.0
        %5599 = vmatprep.subr.mxu0 0.0
        %5600 = vmatpush2.msra.mxu0 0.0
        %5601 = vmatprep.subr.mxu0 0.0
        %5602 = vmatpush2.msra.mxu0 0.0
        %5603 = vmatprep.subr.mxu0 0.0
        %5604 = vmatpush2.msra.mxu0 0.0
        %5605 = vmatprep.subr.mxu0 0.0
        %5606 = vmatpush2.msra.mxu0 0.0
        %5607 = vmatprep.subr.mxu0 0.0
        %5608 = vmatpush2.msra.mxu0 0.0
        %5609 = vmatprep.subr.mxu0 0.0
        %5610 = vmatpush2.msra.mxu0 0.0
        %5611 = vmatprep.subr.mxu0 0.0
        %5612 = vmatpush2.msra.mxu0 0.0
        %5613 = vmatprep.subr.mxu0 0.0
        %5614 = vmatpush2.msra.mxu0 0.0
        %5615 = vmatprep.mubr.f32.mxu0 0.0
        %5616 = vmatmul.mubr.f32.gmra.mxu0 %v5528
        %v5617 = vpop.f32.mrf.mxu0
        %v5618 = vadd.f32 0.0, %v5617
        %v5619 = vpop.f32.mrf.mxu0
        %5620 = vmatprep.mubr.f32.mxu0 0.0
        %5621 = vmatmul.mubr.f32.gmra.mxu0 %v5531
        %v5622 = vpop.f32.mrf.mxu0
        %v5623 = vadd.f32 0.0, %v5622
        %v5624 = vpop.f32.mrf.mxu0
        %5625 = vmatprep.mubr.f32.mxu0 0.0
        %5626 = vmatmul.mubr.f32.gmra.mxu0 %v5534
        %v5627 = vpop.f32.mrf.mxu0
        %v5628 = vadd.f32 0.0, %v5627
        %v5629 = vpop.f32.mrf.mxu0
        %5630 = vmatprep.mubr.f32.mxu0 0.0
        %5631 = vmatmul.mubr.f32.gmra.mxu0 %v5537
        %v5632 = vpop.f32.mrf.mxu0
        %v5633 = vadd.f32 0.0, %v5632
        %v5634 = vpop.f32.mrf.mxu0
        %5635 = vmatprep.mubr.f32.mxu0 0.0
        %5636 = vmatmul.mubr.f32.gmra.mxu0 %v5540
        %v5637 = vpop.f32.mrf.mxu0
        %v5638 = vadd.f32 0.0, %v5637
        %v5639 = vpop.f32.mrf.mxu0
        %5640 = vmatprep.mubr.f32.mxu0 0.0
        %5641 = vmatmul.mubr.f32.gmra.mxu0 %v5543
        %v5642 = vpop.f32.mrf.mxu0
        %v5643 = vadd.f32 0.0, %v5642
        %v5644 = vpop.f32.mrf.mxu0
        %5645 = vmatprep.mubr.f32.mxu0 0.0
        %5646 = vmatmul.mubr.f32.gmra.mxu0 %v5546
        %v5647 = vpop.f32.mrf.mxu0
        %v5648 = vadd.f32 0.0, %v5647
        %v5649 = vpop.f32.mrf.mxu0
        %5650 = vmatprep.mubr.f32.mxu0 0.0
        %5651 = vmatmul.mubr.f32.gmra.mxu0 %v5549
        %v5652 = vpop.f32.mrf.mxu0
        %v5653 = vadd.f32 0.0, %v5652
        %v5654 = vpop.f32.mrf.mxu0
        %5655 = vdwg.mxu0
        %v5657 = vsel %vm2931, %v5618, 0
        %v5660 = vsel %vm2931, %v5623, 0
        %v5663 = vsel %vm2931, %v5628, 0
        %v5666 = vsel %vm2931, %v5633, 0
        %v5669 = vsel %vm2931, %v5638, 0
        %v5672 = vsel %vm2931, %v5643, 0
        %v5675 = vsel %vm2931, %v5648, 0
        %v5678 = vsel %vm2931, %v5653, 0
        %v5681 = vsel %vm3811, %v2905, 0
        %5683 = vmatprep.subr.mxu0 0.0
        %5684 = vmatpush1.msra.mxu0 0.0
        %5685 = vmatprep.subr.mxu0 0.0
        %5686 = vmatpush1.msra.mxu0 0.0
        %5687 = vmatprep.subr.mxu0 0.0
        %5688 = vmatpush1.msra.mxu0 0.0
        %5689 = vmatprep.subr.mxu0 0.0
        %5690 = vmatpush1.msra.mxu0 0.0
        %5691 = vmatprep.subr.mxu0 0.0
        %5692 = vmatpush1.msra.mxu0 0.0
        %5693 = vmatprep.subr.mxu0 0.0
        %5694 = vmatpush1.msra.mxu0 0.0
        %5695 = vmatprep.subr.mxu0 0.0
        %5696 = vmatpush1.msra.mxu0 0.0
        %5697 = vmatprep.subr.mxu0 0.0
        %5698 = vmatpush1.msra.mxu0 0.0
        %5699 = vmatprep.subr.mxu0 0.0
        %5700 = vmatpush1.msra.mxu0 0.0
        %5701 = vmatprep.subr.mxu0 0.0
        %5702 = vmatpush1.msra.mxu0 0.0
        %5703 = vmatprep.subr.mxu0 0.0
        %5704 = vmatpush1.msra.mxu0 0.0
        %5705 = vmatprep.subr.mxu0 0.0
        %5706 = vmatpush1.msra.mxu0 0.0
        %5707 = vmatprep.subr.mxu0 0.0
        %5708 = vmatpush1.msra.mxu0 0.0
        %5709 = vmatprep.subr.mxu0 0.0
        %5710 = vmatpush1.msra.mxu0 0.0
        %5711 = vmatprep.subr.mxu0 0.0
        %5712 = vmatpush1.msra.mxu0 0.0
        %5713 = vmatprep.subr.mxu0 0.0
        %5714 = vmatpush1.msra.mxu0 %v5681
        %5715 = vmatprep.subr.mxu0 0.0
        %5716 = vmatpush2.msra.mxu0 0.0
        %5717 = vmatprep.subr.mxu0 0.0
        %5718 = vmatpush2.msra.mxu0 0.0
        %5719 = vmatprep.subr.mxu0 0.0
        %5720 = vmatpush2.msra.mxu0 0.0
        %5721 = vmatprep.subr.mxu0 0.0
        %5722 = vmatpush2.msra.mxu0 0.0
        %5723 = vmatprep.subr.mxu0 0.0
        %5724 = vmatpush2.msra.mxu0 0.0
        %5725 = vmatprep.subr.mxu0 0.0
        %5726 = vmatpush2.msra.mxu0 0.0
        %5727 = vmatprep.subr.mxu0 0.0
        %5728 = vmatpush2.msra.mxu0 0.0
        %5729 = vmatprep.subr.mxu0 0.0
        %5730 = vmatpush2.msra.mxu0 0.0
        %5731 = vmatprep.subr.mxu0 0.0
        %5732 = vmatpush2.msra.mxu0 0.0
        %5733 = vmatprep.subr.mxu0 0.0
        %5734 = vmatpush2.msra.mxu0 0.0
        %5735 = vmatprep.subr.mxu0 0.0
        %5736 = vmatpush2.msra.mxu0 0.0
        %5737 = vmatprep.subr.mxu0 0.0
        %5738 = vmatpush2.msra.mxu0 0.0
        %5739 = vmatprep.subr.mxu0 0.0
        %5740 = vmatpush2.msra.mxu0 0.0
        %5741 = vmatprep.subr.mxu0 0.0
        %5742 = vmatpush2.msra.mxu0 0.0
        %5743 = vmatprep.subr.mxu0 0.0
        %5744 = vmatpush2.msra.mxu0 0.0
        %5745 = vmatprep.subr.mxu0 0.0
        %5746 = vmatpush2.msra.mxu0 0.0
        %5747 = vmatprep.mubr.f32.mxu0 0.0
        %5748 = vmatmul.mubr.f32.gmra.mxu0 %v5657
        %v5749 = vpop.f32.mrf.mxu0
        %v5750 = vadd.f32 0.0, %v5749
        %v5751 = vpop.f32.mrf.mxu0
        %5752 = vmatprep.mubr.f32.mxu0 0.0
        %5753 = vmatmul.mubr.f32.gmra.mxu0 %v5660
        %v5754 = vpop.f32.mrf.mxu0
        %v5755 = vadd.f32 0.0, %v5754
        %v5756 = vpop.f32.mrf.mxu0
        %5757 = vmatprep.mubr.f32.mxu0 0.0
        %5758 = vmatmul.mubr.f32.gmra.mxu0 %v5663
        %v5759 = vpop.f32.mrf.mxu0
        %v5760 = vadd.f32 0.0, %v5759
        %v5761 = vpop.f32.mrf.mxu0
        %5762 = vmatprep.mubr.f32.mxu0 0.0
        %5763 = vmatmul.mubr.f32.gmra.mxu0 %v5666
        %v5764 = vpop.f32.mrf.mxu0
        %v5765 = vadd.f32 0.0, %v5764
        %v5766 = vpop.f32.mrf.mxu0
        %5767 = vmatprep.mubr.f32.mxu0 0.0
        %5768 = vmatmul.mubr.f32.gmra.mxu0 %v5669
        %v5769 = vpop.f32.mrf.mxu0
        %v5770 = vadd.f32 0.0, %v5769
        %v5771 = vpop.f32.mrf.mxu0
        %5772 = vmatprep.mubr.f32.mxu0 0.0
        %5773 = vmatmul.mubr.f32.gmra.mxu0 %v5672
        %v5774 = vpop.f32.mrf.mxu0
        %v5775 = vadd.f32 0.0, %v5774
        %v5776 = vpop.f32.mrf.mxu0
        %5777 = vmatprep.mubr.f32.mxu0 0.0
        %5778 = vmatmul.mubr.f32.gmra.mxu0 %v5675
        %v5779 = vpop.f32.mrf.mxu0
        %v5780 = vadd.f32 0.0, %v5779
        %v5781 = vpop.f32.mrf.mxu0
        %5782 = vmatprep.mubr.f32.mxu0 0.0
        %5783 = vmatmul.mubr.f32.gmra.mxu0 %v5678
        %v5784 = vpop.f32.mrf.mxu0
        %v5785 = vadd.f32 0.0, %v5784
        %v5786 = vpop.f32.mrf.mxu0
        %5787 = vdwg.mxu0
        %v5788 = vadd.f32 %v5206, %v5750
        %v5789 = vadd.f32 %v5207, %v5755
        %v5790 = vadd.f32 %v5208, %v5760
        %v5791 = vadd.f32 %v5209, %v5765
        %v5792 = vadd.f32 %v5210, %v5770
        %v5793 = vadd.f32 %v5211, %v5775
        %v5794 = vadd.f32 %v5212, %v5780
        %v5795 = vadd.f32 %v5213, %v5785
        %5796 = vrot.lane.b32.xlu0 %v2895, 108
        %v5797 = vpop.permute.xlu0 %5796
        %5798 = vrot.lane.b32.xlu0 %v2896, 108
        %v5799 = vpop.permute.xlu0 %5798
        %5800 = vrot.lane.b32.xlu0 %v2897, 108
        %v5801 = vpop.permute.xlu0 %5800
        %5802 = vrot.lane.b32.xlu0 %v2898, 108
        %v5803 = vpop.permute.xlu0 %5802
        %5804 = vrot.lane.b32.xlu0 %v2899, 108
        %v5805 = vpop.permute.xlu0 %5804
        %5806 = vrot.lane.b32.xlu0 %v2900, 108
        %v5807 = vpop.permute.xlu0 %5806
        %5808 = vrot.lane.b32.xlu0 %v2901, 108
        %v5809 = vpop.permute.xlu0 %5808
        %5810 = vrot.lane.b32.xlu0 %v2902, 108
        %v5811 = vpop.permute.xlu0 %5810
        %5812 = vrot.lane.b32.xlu0 %v2895, 76
        %v5813 = vpop.permute.xlu0 %5812
        %5814 = vrot.lane.b32.xlu0 %v2896, 76
        %v5815 = vpop.permute.xlu0 %5814
        %5816 = vrot.lane.b32.xlu0 %v2897, 76
        %v5817 = vpop.permute.xlu0 %5816
        %5818 = vrot.lane.b32.xlu0 %v2898, 76
        %v5819 = vpop.permute.xlu0 %5818
        %5820 = vrot.lane.b32.xlu0 %v2899, 76
        %v5821 = vpop.permute.xlu0 %5820
        %5822 = vrot.lane.b32.xlu0 %v2900, 76
        %v5823 = vpop.permute.xlu0 %5822
        %5824 = vrot.lane.b32.xlu0 %v2901, 76
        %v5825 = vpop.permute.xlu0 %5824
        %5826 = vrot.lane.b32.xlu0 %v2902, 76
        %v5827 = vpop.permute.xlu0 %5826
        %v5828 = vsel %vm2931, %v5797, 0
        %v5830 = vsel %vm2931, %v5799, 0
        %v5832 = vsel %vm2931, %v5801, 0
        %v5834 = vsel %vm2931, %v5803, 0
        %v5836 = vsel %vm2931, %v5805, 0
        %v5838 = vsel %vm2931, %v5807, 0
        %v5840 = vsel %vm2931, %v5809, 0
        %v5842 = vsel %vm2931, %v5811, 0
        %v5844 = vsel %vm2931, %v5813, 0
        %v5846 = vsel %vm2931, %v5815, 0
        %v5848 = vsel %vm2931, %v5817, 0
        %v5850 = vsel %vm2931, %v5819, 0
        %v5852 = vsel %vm2931, %v5821, 0
        %v5854 = vsel %vm2931, %v5823, 0
        %v5856 = vsel %vm2931, %v5825, 0
        %v5858 = vsel %vm2931, %v5827, 0
        %5860 = vmatprep.subr.mxu0 0.0
        %5861 = vmatpush1.xpose.msra.mxu0 0.0
        %5862 = vmatprep.subr.mxu0 0.0
        %5863 = vmatpush1.xpose.msra.mxu0 0.0
        %5864 = vmatprep.subr.mxu0 0.0
        %5865 = vmatpush1.xpose.msra.mxu0 0.0
        %5866 = vmatprep.subr.mxu0 0.0
        %5867 = vmatpush1.xpose.msra.mxu0 0.0
        %5868 = vmatprep.subr.mxu0 0.0
        %5869 = vmatpush1.xpose.msra.mxu0 0.0
        %5870 = vmatprep.subr.mxu0 0.0
        %5871 = vmatpush1.xpose.msra.mxu0 0.0
        %5872 = vmatprep.subr.mxu0 0.0
        %5873 = vmatpush1.xpose.msra.mxu0 0.0
        %5874 = vmatprep.subr.mxu0 0.0
        %5875 = vmatpush1.xpose.msra.mxu0 0.0
        %5876 = vmatprep.subr.mxu0 0.0
        %5877 = vmatpush1.xpose.msra.mxu0 %v5858
        %5878 = vmatprep.subr.mxu0 0.0
        %5879 = vmatpush1.xpose.msra.mxu0 %v5856
        %5880 = vmatprep.subr.mxu0 0.0
        %5881 = vmatpush1.xpose.msra.mxu0 %v5854
        %5882 = vmatprep.subr.mxu0 0.0
        %5883 = vmatpush1.xpose.msra.mxu0 %v5852
        %5884 = vmatprep.subr.mxu0 0.0
        %5885 = vmatpush1.xpose.msra.mxu0 %v5850
        %5886 = vmatprep.subr.mxu0 0.0
        %5887 = vmatpush1.xpose.msra.mxu0 %v5848
        %5888 = vmatprep.subr.mxu0 0.0
        %5889 = vmatpush1.xpose.msra.mxu0 %v5846
        %5890 = vmatprep.subr.mxu0 0.0
        %5891 = vmatpush1.xpose.msra.mxu0 %v5844
        %5892 = vmatprep.subr.mxu0 0.0
        %5893 = vmatpush2.xpose.msra.mxu0 0.0
        %5894 = vmatprep.subr.mxu0 0.0
        %5895 = vmatpush2.xpose.msra.mxu0 0.0
        %5896 = vmatprep.subr.mxu0 0.0
        %5897 = vmatpush2.xpose.msra.mxu0 0.0
        %5898 = vmatprep.subr.mxu0 0.0
        %5899 = vmatpush2.xpose.msra.mxu0 0.0
        %5900 = vmatprep.subr.mxu0 0.0
        %5901 = vmatpush2.xpose.msra.mxu0 0.0
        %5902 = vmatprep.subr.mxu0 0.0
        %5903 = vmatpush2.xpose.msra.mxu0 0.0
        %5904 = vmatprep.subr.mxu0 0.0
        %5905 = vmatpush2.xpose.msra.mxu0 0.0
        %5906 = vmatprep.subr.mxu0 0.0
        %5907 = vmatpush2.xpose.msra.mxu0 0.0
        %5908 = vmatprep.subr.mxu0 0.0
        %5909 = vmatpush2.xpose.msra.mxu0 0.0
        %5910 = vmatprep.subr.mxu0 0.0
        %5911 = vmatpush2.xpose.msra.mxu0 0.0
        %5912 = vmatprep.subr.mxu0 0.0
        %5913 = vmatpush2.xpose.msra.mxu0 0.0
        %5914 = vmatprep.subr.mxu0 0.0
        %5915 = vmatpush2.xpose.msra.mxu0 0.0
        %5916 = vmatprep.subr.mxu0 0.0
        %5917 = vmatpush2.xpose.msra.mxu0 0.0
        %5918 = vmatprep.subr.mxu0 0.0
        %5919 = vmatpush2.xpose.msra.mxu0 0.0
        %5920 = vmatprep.subr.mxu0 0.0
        %5921 = vmatpush2.xpose.msra.mxu0 0.0
        %5922 = vmatprep.subr.mxu0 0.0
        %5923 = vmatpush2.xpose.msra.mxu0 0.0
        %5924 = vmatprep.mubr.f32.mxu0 0.0
        %5925 = vmatmul.mubr.f32.gmra.mxu0 %v5828
        %v5926 = vpop.f32.mrf.mxu0
        %v5927 = vadd.f32 0.0, %v5926
        %v5928 = vpop.f32.mrf.mxu0
        %5929 = vmatprep.mubr.f32.mxu0 0.0
        %5930 = vmatmul.mubr.f32.gmra.mxu0 %v5830
        %v5931 = vpop.f32.mrf.mxu0
        %v5932 = vadd.f32 0.0, %v5931
        %v5933 = vpop.f32.mrf.mxu0
        %5934 = vmatprep.mubr.f32.mxu0 0.0
        %5935 = vmatmul.mubr.f32.gmra.mxu0 %v5832
        %v5936 = vpop.f32.mrf.mxu0
        %v5937 = vadd.f32 0.0, %v5936
        %v5938 = vpop.f32.mrf.mxu0
        %5939 = vmatprep.mubr.f32.mxu0 0.0
        %5940 = vmatmul.mubr.f32.gmra.mxu0 %v5834
        %v5941 = vpop.f32.mrf.mxu0
        %v5942 = vadd.f32 0.0, %v5941
        %v5943 = vpop.f32.mrf.mxu0
        %5944 = vmatprep.mubr.f32.mxu0 0.0
        %5945 = vmatmul.mubr.f32.gmra.mxu0 %v5836
        %v5946 = vpop.f32.mrf.mxu0
        %v5947 = vadd.f32 0.0, %v5946
        %v5948 = vpop.f32.mrf.mxu0
        %5949 = vmatprep.mubr.f32.mxu0 0.0
        %5950 = vmatmul.mubr.f32.gmra.mxu0 %v5838
        %v5951 = vpop.f32.mrf.mxu0
        %v5952 = vadd.f32 0.0, %v5951
        %v5953 = vpop.f32.mrf.mxu0
        %5954 = vmatprep.mubr.f32.mxu0 0.0
        %5955 = vmatmul.mubr.f32.gmra.mxu0 %v5840
        %v5956 = vpop.f32.mrf.mxu0
        %v5957 = vadd.f32 0.0, %v5956
        %v5958 = vpop.f32.mrf.mxu0
        %5959 = vmatprep.mubr.f32.mxu0 0.0
        %5960 = vmatmul.mubr.f32.gmra.mxu0 %v5842
        %v5961 = vpop.f32.mrf.mxu0
        %v5962 = vadd.f32 0.0, %v5961
        %v5963 = vpop.f32.mrf.mxu0
        %5964 = vdwg.mxu0
        %v5965 = vmul.f32 %v5927, 0.5
        %v5966 = vmul.f32 %v5932, 0.5
        %v5967 = vmul.f32 %v5937, 0.5
        %v5968 = vmul.f32 %v5942, 0.5
        %v5969 = vmul.f32 %v5947, 0.5
        %v5970 = vmul.f32 %v5952, 0.5
        %v5971 = vmul.f32 %v5957, 0.5
        %v5972 = vmul.f32 %v5962, 0.5
        %v5973 = vsel %vm3077, %v5965, -inf
        %5974 = vmax.xlane.f32.xlu0 %v5973
        %v5975 = vpop.xlane.xlu0 %5974
        %v5976 = vsel %vm3077, %v5966, -inf
        %5977 = vmax.xlane.f32.xlu0 %v5976
        %v5978 = vpop.xlane.xlu0 %5977
        %v5979 = vsel %vm3077, %v5967, -inf
        %5980 = vmax.xlane.f32.xlu0 %v5979
        %v5981 = vpop.xlane.xlu0 %5980
        %v5982 = vsel %vm3077, %v5968, -inf
        %5983 = vmax.xlane.f32.xlu0 %v5982
        %v5984 = vpop.xlane.xlu0 %5983
        %v5985 = vsel %vm3077, %v5969, -inf
        %5986 = vmax.xlane.f32.xlu0 %v5985
        %v5987 = vpop.xlane.xlu0 %5986
        %v5988 = vsel %vm3077, %v5970, -inf
        %5989 = vmax.xlane.f32.xlu0 %v5988
        %v5990 = vpop.xlane.xlu0 %5989
        %v5991 = vsel %vm3077, %v5971, -inf
        %5992 = vmax.xlane.f32.xlu0 %v5991
        %v5993 = vpop.xlane.xlu0 %5992
        %v5994 = vsel %vm3077, %v5972, -inf
        %5995 = vmax.xlane.f32.xlu0 %v5994
        %v5996 = vpop.xlane.xlu0 %5995
        %v5997 = vsub.f32 %v5965, %v5975
        %v5998 = vsub.f32 %v5966, %v5978
        %v5999 = vsub.f32 %v5967, %v5981
        %v6000 = vsub.f32 %v5968, %v5984
        %v6001 = vsub.f32 %v5969, %v5987
        %v6002 = vsub.f32 %v5970, %v5990
        %v6003 = vsub.f32 %v5971, %v5993
        %v6004 = vsub.f32 %v5972, %v5996
        %v6005 = vmul.f32 %v5997, 1.442695
        %v6006 = vpow.pop %v6005
        %v6007 = vmul.f32 %v5998, 1.442695
        %v6008 = vpow.pop %v6007
        %v6009 = vmul.f32 %v5999, 1.442695
        %v6010 = vpow.pop %v6009
        %v6011 = vmul.f32 %v6000, 1.442695
        %v6012 = vpow.pop %v6011
        %v6013 = vmul.f32 %v6001, 1.442695
        %v6014 = vpow.pop %v6013
        %v6015 = vmul.f32 %v6002, 1.442695
        %v6016 = vpow.pop %v6015
        %v6017 = vmul.f32 %v6003, 1.442695
        %v6018 = vpow.pop %v6017
        %v6019 = vmul.f32 %v6004, 1.442695
        %v6020 = vpow.pop %v6019
        %v6021 = vsel %vm3077, %v6006, 0.0
        %6022 = vadd.xlane.f32.xlu0 %v6021
        %v6023 = vpop.xlane.xlu0 %6022
        %v6024 = vsel %vm3077, %v6008, 0.0
        %6025 = vadd.xlane.f32.xlu0 %v6024
        %v6026 = vpop.xlane.xlu0 %6025
        %v6027 = vsel %vm3077, %v6010, 0.0
        %6028 = vadd.xlane.f32.xlu0 %v6027
        %v6029 = vpop.xlane.xlu0 %6028
        %v6030 = vsel %vm3077, %v6012, 0.0
        %6031 = vadd.xlane.f32.xlu0 %v6030
        %v6032 = vpop.xlane.xlu0 %6031
        %v6033 = vsel %vm3077, %v6014, 0.0
        %6034 = vadd.xlane.f32.xlu0 %v6033
        %v6035 = vpop.xlane.xlu0 %6034
        %v6036 = vsel %vm3077, %v6016, 0.0
        %6037 = vadd.xlane.f32.xlu0 %v6036
        %v6038 = vpop.xlane.xlu0 %6037
        %v6039 = vsel %vm3077, %v6018, 0.0
        %6040 = vadd.xlane.f32.xlu0 %v6039
        %v6041 = vpop.xlane.xlu0 %6040
        %v6042 = vsel %vm3077, %v6020, 0.0
        %6043 = vadd.xlane.f32.xlu0 %v6042
        %v6044 = vpop.xlane.xlu0 %6043
        %v6045 = vrcp.pop %v6023
        %v6046 = vrcp.pop %v6026
        %v6047 = vrcp.pop %v6029
        %v6048 = vrcp.pop %v6032
        %v6049 = vrcp.pop %v6035
        %v6050 = vrcp.pop %v6038
        %v6051 = vrcp.pop %v6041
        %v6052 = vrcp.pop %v6044
        %v6053 = vmul.f32 %v6023, %v6045
        %v6054 = vmul.f32 %v6026, %v6046
        %v6055 = vmul.f32 %v6029, %v6047
        %v6056 = vmul.f32 %v6032, %v6048
        %v6057 = vmul.f32 %v6035, %v6049
        %v6058 = vmul.f32 %v6038, %v6050
        %v6059 = vmul.f32 %v6041, %v6051
        %v6060 = vmul.f32 %v6044, %v6052
        %v6061 = vsub.f32 2.0, %v6053
        %v6062 = vsub.f32 2.0, %v6054
        %v6063 = vsub.f32 2.0, %v6055
        %v6064 = vsub.f32 2.0, %v6056
        %v6065 = vsub.f32 2.0, %v6057
        %v6066 = vsub.f32 2.0, %v6058
        %v6067 = vsub.f32 2.0, %v6059
        %v6068 = vsub.f32 2.0, %v6060
        %v6069 = vmul.f32 %v6045, %v6061
        %v6070 = vmul.f32 %v6046, %v6062
        %v6071 = vmul.f32 %v6047, %v6063
        %v6072 = vmul.f32 %v6048, %v6064
        %v6073 = vmul.f32 %v6049, %v6065
        %v6074 = vmul.f32 %v6050, %v6066
        %v6075 = vmul.f32 %v6051, %v6067
        %v6076 = vmul.f32 %v6052, %v6068
        %v6077 = vmul.f32 %v6006, %v6069
        %v6078 = vmul.f32 %v6008, %v6070
        %v6079 = vmul.f32 %v6010, %v6071
        %v6080 = vmul.f32 %v6012, %v6072
        %v6081 = vmul.f32 %v6014, %v6073
        %v6082 = vmul.f32 %v6016, %v6074
        %v6083 = vmul.f32 %v6018, %v6075
        %v6084 = vmul.f32 %v6020, %v6076
        %6085 = vrot.lane.b32.xlu0 %v2895, 44
        %v6086 = vpop.permute.xlu0 %6085
        %6087 = vrot.lane.b32.xlu0 %v2896, 44
        %v6088 = vpop.permute.xlu0 %6087
        %6089 = vrot.lane.b32.xlu0 %v2897, 44
        %v6090 = vpop.permute.xlu0 %6089
        %6091 = vrot.lane.b32.xlu0 %v2898, 44
        %v6092 = vpop.permute.xlu0 %6091
        %6093 = vrot.lane.b32.xlu0 %v2899, 44
        %v6094 = vpop.permute.xlu0 %6093
        %6095 = vrot.lane.b32.xlu0 %v2900, 44
        %v6096 = vpop.permute.xlu0 %6095
        %6097 = vrot.lane.b32.xlu0 %v2901, 44
        %v6098 = vpop.permute.xlu0 %6097
        %6099 = vrot.lane.b32.xlu0 %v2902, 44
        %v6100 = vpop.permute.xlu0 %6099
        %v6110 = vsel %vm3077, %v6077, 0
        %v6113 = vsel %vm3077, %v6078, 0
        %v6116 = vsel %vm3077, %v6079, 0
        %v6119 = vsel %vm3077, %v6080, 0
        %v6122 = vsel %vm3077, %v6081, 0
        %v6125 = vsel %vm3077, %v6082, 0
        %v6128 = vsel %vm3077, %v6083, 0
        %v6131 = vsel %vm3077, %v6084, 0
        %6133 = vmatprep.subr.mxu0 0.0
        %6134 = vmatpush1.msra.mxu0 0.0
        %6135 = vmatprep.subr.mxu0 0.0
        %6136 = vmatpush1.msra.mxu0 0.0
        %6137 = vmatprep.subr.mxu0 0.0
        %6138 = vmatpush1.msra.mxu0 0.0
        %6139 = vmatprep.subr.mxu0 0.0
        %6140 = vmatpush1.msra.mxu0 0.0
        %6141 = vmatprep.subr.mxu0 0.0
        %6142 = vmatpush1.msra.mxu0 0.0
        %6143 = vmatprep.subr.mxu0 0.0
        %6144 = vmatpush1.msra.mxu0 0.0
        %6145 = vmatprep.subr.mxu0 0.0
        %6146 = vmatpush1.msra.mxu0 0.0
        %6147 = vmatprep.subr.mxu0 0.0
        %6148 = vmatpush1.msra.mxu0 0.0
        %6149 = vmatprep.subr.mxu0 0.0
        %6150 = vmatpush1.msra.mxu0 %v6100
        %6151 = vmatprep.subr.mxu0 0.0
        %6152 = vmatpush1.msra.mxu0 %v6098
        %6153 = vmatprep.subr.mxu0 0.0
        %6154 = vmatpush1.msra.mxu0 %v6096
        %6155 = vmatprep.subr.mxu0 0.0
        %6156 = vmatpush1.msra.mxu0 %v6094
        %6157 = vmatprep.subr.mxu0 0.0
        %6158 = vmatpush1.msra.mxu0 %v6092
        %6159 = vmatprep.subr.mxu0 0.0
        %6160 = vmatpush1.msra.mxu0 %v6090
        %6161 = vmatprep.subr.mxu0 0.0
        %6162 = vmatpush1.msra.mxu0 %v6088
        %6163 = vmatprep.subr.mxu0 0.0
        %6164 = vmatpush1.msra.mxu0 %v6086
        %6165 = vmatprep.subr.mxu0 0.0
        %6166 = vmatpush2.msra.mxu0 0.0
        %6167 = vmatprep.subr.mxu0 0.0
        %6168 = vmatpush2.msra.mxu0 0.0
        %6169 = vmatprep.subr.mxu0 0.0
        %6170 = vmatpush2.msra.mxu0 0.0
        %6171 = vmatprep.subr.mxu0 0.0
        %6172 = vmatpush2.msra.mxu0 0.0
        %6173 = vmatprep.subr.mxu0 0.0
        %6174 = vmatpush2.msra.mxu0 0.0
        %6175 = vmatprep.subr.mxu0 0.0
        %6176 = vmatpush2.msra.mxu0 0.0
        %6177 = vmatprep.subr.mxu0 0.0
        %6178 = vmatpush2.msra.mxu0 0.0
        %6179 = vmatprep.subr.mxu0 0.0
        %6180 = vmatpush2.msra.mxu0 0.0
        %6181 = vmatprep.subr.mxu0 0.0
        %6182 = vmatpush2.msra.mxu0 0.0
        %6183 = vmatprep.subr.mxu0 0.0
        %6184 = vmatpush2.msra.mxu0 0.0
        %6185 = vmatprep.subr.mxu0 0.0
        %6186 = vmatpush2.msra.mxu0 0.0
        %6187 = vmatprep.subr.mxu0 0.0
        %6188 = vmatpush2.msra.mxu0 0.0
        %6189 = vmatprep.subr.mxu0 0.0
        %6190 = vmatpush2.msra.mxu0 0.0
        %6191 = vmatprep.subr.mxu0 0.0
        %6192 = vmatpush2.msra.mxu0 0.0
        %6193 = vmatprep.subr.mxu0 0.0
        %6194 = vmatpush2.msra.mxu0 0.0
        %6195 = vmatprep.subr.mxu0 0.0
        %6196 = vmatpush2.msra.mxu0 0.0
        %6197 = vmatprep.mubr.f32.mxu0 0.0
        %6198 = vmatmul.mubr.f32.gmra.mxu0 %v6110
        %v6199 = vpop.f32.mrf.mxu0
        %v6200 = vadd.f32 0.0, %v6199
        %v6201 = vpop.f32.mrf.mxu0
        %6202 = vmatprep.mubr.f32.mxu0 0.0
        %6203 = vmatmul.mubr.f32.gmra.mxu0 %v6113
        %v6204 = vpop.f32.mrf.mxu0
        %v6205 = vadd.f32 0.0, %v6204
        %v6206 = vpop.f32.mrf.mxu0
        %6207 = vmatprep.mubr.f32.mxu0 0.0
        %6208 = vmatmul.mubr.f32.gmra.mxu0 %v6116
        %v6209 = vpop.f32.mrf.mxu0
        %v6210 = vadd.f32 0.0, %v6209
        %v6211 = vpop.f32.mrf.mxu0
        %6212 = vmatprep.mubr.f32.mxu0 0.0
        %6213 = vmatmul.mubr.f32.gmra.mxu0 %v6119
        %v6214 = vpop.f32.mrf.mxu0
        %v6215 = vadd.f32 0.0, %v6214
        %v6216 = vpop.f32.mrf.mxu0
        %6217 = vmatprep.mubr.f32.mxu0 0.0
        %6218 = vmatmul.mubr.f32.gmra.mxu0 %v6122
        %v6219 = vpop.f32.mrf.mxu0
        %v6220 = vadd.f32 0.0, %v6219
        %v6221 = vpop.f32.mrf.mxu0
        %6222 = vmatprep.mubr.f32.mxu0 0.0
        %6223 = vmatmul.mubr.f32.gmra.mxu0 %v6125
        %v6224 = vpop.f32.mrf.mxu0
        %v6225 = vadd.f32 0.0, %v6224
        %v6226 = vpop.f32.mrf.mxu0
        %6227 = vmatprep.mubr.f32.mxu0 0.0
        %6228 = vmatmul.mubr.f32.gmra.mxu0 %v6128
        %v6229 = vpop.f32.mrf.mxu0
        %v6230 = vadd.f32 0.0, %v6229
        %v6231 = vpop.f32.mrf.mxu0
        %6232 = vmatprep.mubr.f32.mxu0 0.0
        %6233 = vmatmul.mubr.f32.gmra.mxu0 %v6131
        %v6234 = vpop.f32.mrf.mxu0
        %v6235 = vadd.f32 0.0, %v6234
        %v6236 = vpop.f32.mrf.mxu0
        %6237 = vdwg.mxu0
        %v6238 = vrot.slane %v2905, 4
        %v6240 = vsel %vm2931, %v6200, 0
        %v6243 = vsel %vm2931, %v6205, 0
        %v6246 = vsel %vm2931, %v6210, 0
        %v6249 = vsel %vm2931, %v6215, 0
        %v6252 = vsel %vm2931, %v6220, 0
        %v6255 = vsel %vm2931, %v6225, 0
        %v6258 = vsel %vm2931, %v6230, 0
        %v6261 = vsel %vm2931, %v6235, 0
        %v6263 = vsel %vm3811, %v6238, 0
        %6265 = vmatprep.subr.mxu0 0.0
        %6266 = vmatpush1.msra.mxu0 0.0
        %6267 = vmatprep.subr.mxu0 0.0
        %6268 = vmatpush1.msra.mxu0 0.0
        %6269 = vmatprep.subr.mxu0 0.0
        %6270 = vmatpush1.msra.mxu0 0.0
        %6271 = vmatprep.subr.mxu0 0.0
        %6272 = vmatpush1.msra.mxu0 0.0
        %6273 = vmatprep.subr.mxu0 0.0
        %6274 = vmatpush1.msra.mxu0 0.0
        %6275 = vmatprep.subr.mxu0 0.0
        %6276 = vmatpush1.msra.mxu0 0.0
        %6277 = vmatprep.subr.mxu0 0.0
        %6278 = vmatpush1.msra.mxu0 0.0
        %6279 = vmatprep.subr.mxu0 0.0
        %6280 = vmatpush1.msra.mxu0 0.0
        %6281 = vmatprep.subr.mxu0 0.0
        %6282 = vmatpush1.msra.mxu0 0.0
        %6283 = vmatprep.subr.mxu0 0.0
        %6284 = vmatpush1.msra.mxu0 0.0
        %6285 = vmatprep.subr.mxu0 0.0
        %6286 = vmatpush1.msra.mxu0 0.0
        %6287 = vmatprep.subr.mxu0 0.0
        %6288 = vmatpush1.msra.mxu0 0.0
        %6289 = vmatprep.subr.mxu0 0.0
        %6290 = vmatpush1.msra.mxu0 0.0
        %6291 = vmatprep.subr.mxu0 0.0
        %6292 = vmatpush1.msra.mxu0 0.0
        %6293 = vmatprep.subr.mxu0 0.0
        %6294 = vmatpush1.msra.mxu0 0.0
        %6295 = vmatprep.subr.mxu0 0.0
        %6296 = vmatpush1.msra.mxu0 %v6263
        %6297 = vmatprep.subr.mxu0 0.0
        %6298 = vmatpush2.msra.mxu0 0.0
        %6299 = vmatprep.subr.mxu0 0.0
        %6300 = vmatpush2.msra.mxu0 0.0
        %6301 = vmatprep.subr.mxu0 0.0
        %6302 = vmatpush2.msra.mxu0 0.0
        %6303 = vmatprep.subr.mxu0 0.0
        %6304 = vmatpush2.msra.mxu0 0.0
        %6305 = vmatprep.subr.mxu0 0.0
        %6306 = vmatpush2.msra.mxu0 0.0
        %6307 = vmatprep.subr.mxu0 0.0
        %6308 = vmatpush2.msra.mxu0 0.0
        %6309 = vmatprep.subr.mxu0 0.0
        %6310 = vmatpush2.msra.mxu0 0.0
        %6311 = vmatprep.subr.mxu0 0.0
        %6312 = vmatpush2.msra.mxu0 0.0
        %6313 = vmatprep.subr.mxu0 0.0
        %6314 = vmatpush2.msra.mxu0 0.0
        %6315 = vmatprep.subr.mxu0 0.0
        %6316 = vmatpush2.msra.mxu0 0.0
        %6317 = vmatprep.subr.mxu0 0.0
        %6318 = vmatpush2.msra.mxu0 0.0
        %6319 = vmatprep.subr.mxu0 0.0
        %6320 = vmatpush2.msra.mxu0 0.0
        %6321 = vmatprep.subr.mxu0 0.0
        %6322 = vmatpush2.msra.mxu0 0.0
        %6323 = vmatprep.subr.mxu0 0.0
        %6324 = vmatpush2.msra.mxu0 0.0
        %6325 = vmatprep.subr.mxu0 0.0
        %6326 = vmatpush2.msra.mxu0 0.0
        %6327 = vmatprep.subr.mxu0 0.0
        %6328 = vmatpush2.msra.mxu0 0.0
        %6329 = vmatprep.mubr.f32.mxu0 0.0
        %6330 = vmatmul.mubr.f32.gmra.mxu0 %v6240
        %v6331 = vpop.f32.mrf.mxu0
        %v6332 = vadd.f32 0.0, %v6331
        %v6333 = vpop.f32.mrf.mxu0
        %6334 = vmatprep.mubr.f32.mxu0 0.0
        %6335 = vmatmul.mubr.f32.gmra.mxu0 %v6243
        %v6336 = vpop.f32.mrf.mxu0
        %v6337 = vadd.f32 0.0, %v6336
        %v6338 = vpop.f32.mrf.mxu0
        %6339 = vmatprep.mubr.f32.mxu0 0.0
        %6340 = vmatmul.mubr.f32.gmra.mxu0 %v6246
        %v6341 = vpop.f32.mrf.mxu0
        %v6342 = vadd.f32 0.0, %v6341
        %v6343 = vpop.f32.mrf.mxu0
        %6344 = vmatprep.mubr.f32.mxu0 0.0
        %6345 = vmatmul.mubr.f32.gmra.mxu0 %v6249
        %v6346 = vpop.f32.mrf.mxu0
        %v6347 = vadd.f32 0.0, %v6346
        %v6348 = vpop.f32.mrf.mxu0
        %6349 = vmatprep.mubr.f32.mxu0 0.0
        %6350 = vmatmul.mubr.f32.gmra.mxu0 %v6252
        %v6351 = vpop.f32.mrf.mxu0
        %v6352 = vadd.f32 0.0, %v6351
        %v6353 = vpop.f32.mrf.mxu0
        %6354 = vmatprep.mubr.f32.mxu0 0.0
        %6355 = vmatmul.mubr.f32.gmra.mxu0 %v6255
        %v6356 = vpop.f32.mrf.mxu0
        %v6357 = vadd.f32 0.0, %v6356
        %v6358 = vpop.f32.mrf.mxu0
        %6359 = vmatprep.mubr.f32.mxu0 0.0
        %6360 = vmatmul.mubr.f32.gmra.mxu0 %v6258
        %v6361 = vpop.f32.mrf.mxu0
        %v6362 = vadd.f32 0.0, %v6361
        %v6363 = vpop.f32.mrf.mxu0
        %6364 = vmatprep.mubr.f32.mxu0 0.0
        %6365 = vmatmul.mubr.f32.gmra.mxu0 %v6261
        %v6366 = vpop.f32.mrf.mxu0
        %v6367 = vadd.f32 0.0, %v6366
        %v6368 = vpop.f32.mrf.mxu0
        %6369 = vdwg.mxu0
        %v6370 = vadd.f32 %v5788, %v6332
        %v6371 = vadd.f32 %v5789, %v6337
        %v6372 = vadd.f32 %v5790, %v6342
        %v6373 = vadd.f32 %v5791, %v6347
        %v6374 = vadd.f32 %v5792, %v6352
        %v6375 = vadd.f32 %v5793, %v6357
        %v6376 = vadd.f32 %v5794, %v6362
        %v6377 = vadd.f32 %v5795, %v6367
        %6378 = vrot.lane.b32.xlu0 %v2895, 104
        %v6379 = vpop.permute.xlu0 %6378
        %6380 = vrot.lane.b32.xlu0 %v2896, 104
        %v6381 = vpop.permute.xlu0 %6380
        %6382 = vrot.lane.b32.xlu0 %v2897, 104
        %v6383 = vpop.permute.xlu0 %6382
        %6384 = vrot.lane.b32.xlu0 %v2898, 104
        %v6385 = vpop.permute.xlu0 %6384
        %6386 = vrot.lane.b32.xlu0 %v2899, 104
        %v6387 = vpop.permute.xlu0 %6386
        %6388 = vrot.lane.b32.xlu0 %v2900, 104
        %v6389 = vpop.permute.xlu0 %6388
        %6390 = vrot.lane.b32.xlu0 %v2901, 104
        %v6391 = vpop.permute.xlu0 %6390
        %6392 = vrot.lane.b32.xlu0 %v2902, 104
        %v6393 = vpop.permute.xlu0 %6392
        %6394 = vrot.lane.b32.xlu0 %v2895, 72
        %v6395 = vpop.permute.xlu0 %6394
        %6396 = vrot.lane.b32.xlu0 %v2896, 72
        %v6397 = vpop.permute.xlu0 %6396
        %6398 = vrot.lane.b32.xlu0 %v2897, 72
        %v6399 = vpop.permute.xlu0 %6398
        %6400 = vrot.lane.b32.xlu0 %v2898, 72
        %v6401 = vpop.permute.xlu0 %6400
        %6402 = vrot.lane.b32.xlu0 %v2899, 72
        %v6403 = vpop.permute.xlu0 %6402
        %6404 = vrot.lane.b32.xlu0 %v2900, 72
        %v6405 = vpop.permute.xlu0 %6404
        %6406 = vrot.lane.b32.xlu0 %v2901, 72
        %v6407 = vpop.permute.xlu0 %6406
        %6408 = vrot.lane.b32.xlu0 %v2902, 72
        %v6409 = vpop.permute.xlu0 %6408
        %v6410 = vsel %vm2931, %v6379, 0
        %v6412 = vsel %vm2931, %v6381, 0
        %v6414 = vsel %vm2931, %v6383, 0
        %v6416 = vsel %vm2931, %v6385, 0
        %v6418 = vsel %vm2931, %v6387, 0
        %v6420 = vsel %vm2931, %v6389, 0
        %v6422 = vsel %vm2931, %v6391, 0
        %v6424 = vsel %vm2931, %v6393, 0
        %v6426 = vsel %vm2931, %v6395, 0
        %v6428 = vsel %vm2931, %v6397, 0
        %v6430 = vsel %vm2931, %v6399, 0
        %v6432 = vsel %vm2931, %v6401, 0
        %v6434 = vsel %vm2931, %v6403, 0
        %v6436 = vsel %vm2931, %v6405, 0
        %v6438 = vsel %vm2931, %v6407, 0
        %v6440 = vsel %vm2931, %v6409, 0
        %6442 = vmatprep.subr.mxu0 0.0
        %6443 = vmatpush1.xpose.msra.mxu0 0.0
        %6444 = vmatprep.subr.mxu0 0.0
        %6445 = vmatpush1.xpose.msra.mxu0 0.0
        %6446 = vmatprep.subr.mxu0 0.0
        %6447 = vmatpush1.xpose.msra.mxu0 0.0
        %6448 = vmatprep.subr.mxu0 0.0
        %6449 = vmatpush1.xpose.msra.mxu0 0.0
        %6450 = vmatprep.subr.mxu0 0.0
        %6451 = vmatpush1.xpose.msra.mxu0 0.0
        %6452 = vmatprep.subr.mxu0 0.0
        %6453 = vmatpush1.xpose.msra.mxu0 0.0
        %6454 = vmatprep.subr.mxu0 0.0
        %6455 = vmatpush1.xpose.msra.mxu0 0.0
        %6456 = vmatprep.subr.mxu0 0.0
        %6457 = vmatpush1.xpose.msra.mxu0 0.0
        %6458 = vmatprep.subr.mxu0 0.0
        %6459 = vmatpush1.xpose.msra.mxu0 %v6440
        %6460 = vmatprep.subr.mxu0 0.0
        %6461 = vmatpush1.xpose.msra.mxu0 %v6438
        %6462 = vmatprep.subr.mxu0 0.0
        %6463 = vmatpush1.xpose.msra.mxu0 %v6436
        %6464 = vmatprep.subr.mxu0 0.0
        %6465 = vmatpush1.xpose.msra.mxu0 %v6434
        %6466 = vmatprep.subr.mxu0 0.0
        %6467 = vmatpush1.xpose.msra.mxu0 %v6432
        %6468 = vmatprep.subr.mxu0 0.0
        %6469 = vmatpush1.xpose.msra.mxu0 %v6430
        %6470 = vmatprep.subr.mxu0 0.0
        %6471 = vmatpush1.xpose.msra.mxu0 %v6428
        %6472 = vmatprep.subr.mxu0 0.0
        %6473 = vmatpush1.xpose.msra.mxu0 %v6426
        %6474 = vmatprep.subr.mxu0 0.0
        %6475 = vmatpush2.xpose.msra.mxu0 0.0
        %6476 = vmatprep.subr.mxu0 0.0
        %6477 = vmatpush2.xpose.msra.mxu0 0.0
        %6478 = vmatprep.subr.mxu0 0.0
        %6479 = vmatpush2.xpose.msra.mxu0 0.0
        %6480 = vmatprep.subr.mxu0 0.0
        %6481 = vmatpush2.xpose.msra.mxu0 0.0
        %6482 = vmatprep.subr.mxu0 0.0
        %6483 = vmatpush2.xpose.msra.mxu0 0.0
        %6484 = vmatprep.subr.mxu0 0.0
        %6485 = vmatpush2.xpose.msra.mxu0 0.0
        %6486 = vmatprep.subr.mxu0 0.0
        %6487 = vmatpush2.xpose.msra.mxu0 0.0
        %6488 = vmatprep.subr.mxu0 0.0
        %6489 = vmatpush2.xpose.msra.mxu0 0.0
        %6490 = vmatprep.subr.mxu0 0.0
        %6491 = vmatpush2.xpose.msra.mxu0 0.0
        %6492 = vmatprep.subr.mxu0 0.0
        %6493 = vmatpush2.xpose.msra.mxu0 0.0
        %6494 = vmatprep.subr.mxu0 0.0
        %6495 = vmatpush2.xpose.msra.mxu0 0.0
        %6496 = vmatprep.subr.mxu0 0.0
        %6497 = vmatpush2.xpose.msra.mxu0 0.0
        %6498 = vmatprep.subr.mxu0 0.0
        %6499 = vmatpush2.xpose.msra.mxu0 0.0
        %6500 = vmatprep.subr.mxu0 0.0
        %6501 = vmatpush2.xpose.msra.mxu0 0.0
        %6502 = vmatprep.subr.mxu0 0.0
        %6503 = vmatpush2.xpose.msra.mxu0 0.0
        %6504 = vmatprep.subr.mxu0 0.0
        %6505 = vmatpush2.xpose.msra.mxu0 0.0
        %6506 = vmatprep.mubr.f32.mxu0 0.0
        %6507 = vmatmul.mubr.f32.gmra.mxu0 %v6410
        %v6508 = vpop.f32.mrf.mxu0
        %v6509 = vadd.f32 0.0, %v6508
        %v6510 = vpop.f32.mrf.mxu0
        %6511 = vmatprep.mubr.f32.mxu0 0.0
        %6512 = vmatmul.mubr.f32.gmra.mxu0 %v6412
        %v6513 = vpop.f32.mrf.mxu0
        %v6514 = vadd.f32 0.0, %v6513
        %v6515 = vpop.f32.mrf.mxu0
        %6516 = vmatprep.mubr.f32.mxu0 0.0
        %6517 = vmatmul.mubr.f32.gmra.mxu0 %v6414
        %v6518 = vpop.f32.mrf.mxu0
        %v6519 = vadd.f32 0.0, %v6518
        %v6520 = vpop.f32.mrf.mxu0
        %6521 = vmatprep.mubr.f32.mxu0 0.0
        %6522 = vmatmul.mubr.f32.gmra.mxu0 %v6416
        %v6523 = vpop.f32.mrf.mxu0
        %v6524 = vadd.f32 0.0, %v6523
        %v6525 = vpop.f32.mrf.mxu0
        %6526 = vmatprep.mubr.f32.mxu0 0.0
        %6527 = vmatmul.mubr.f32.gmra.mxu0 %v6418
        %v6528 = vpop.f32.mrf.mxu0
        %v6529 = vadd.f32 0.0, %v6528
        %v6530 = vpop.f32.mrf.mxu0
        %6531 = vmatprep.mubr.f32.mxu0 0.0
        %6532 = vmatmul.mubr.f32.gmra.mxu0 %v6420
        %v6533 = vpop.f32.mrf.mxu0
        %v6534 = vadd.f32 0.0, %v6533
        %v6535 = vpop.f32.mrf.mxu0
        %6536 = vmatprep.mubr.f32.mxu0 0.0
        %6537 = vmatmul.mubr.f32.gmra.mxu0 %v6422
        %v6538 = vpop.f32.mrf.mxu0
        %v6539 = vadd.f32 0.0, %v6538
        %v6540 = vpop.f32.mrf.mxu0
        %6541 = vmatprep.mubr.f32.mxu0 0.0
        %6542 = vmatmul.mubr.f32.gmra.mxu0 %v6424
        %v6543 = vpop.f32.mrf.mxu0
        %v6544 = vadd.f32 0.0, %v6543
        %v6545 = vpop.f32.mrf.mxu0
        %6546 = vdwg.mxu0
        %v6547 = vmul.f32 %v6509, 0.5
        %v6548 = vmul.f32 %v6514, 0.5
        %v6549 = vmul.f32 %v6519, 0.5
        %v6550 = vmul.f32 %v6524, 0.5
        %v6551 = vmul.f32 %v6529, 0.5
        %v6552 = vmul.f32 %v6534, 0.5
        %v6553 = vmul.f32 %v6539, 0.5
        %v6554 = vmul.f32 %v6544, 0.5
        %v6555 = vsel %vm3077, %v6547, -inf
        %6556 = vmax.xlane.f32.xlu0 %v6555
        %v6557 = vpop.xlane.xlu0 %6556
        %v6558 = vsel %vm3077, %v6548, -inf
        %6559 = vmax.xlane.f32.xlu0 %v6558
        %v6560 = vpop.xlane.xlu0 %6559
        %v6561 = vsel %vm3077, %v6549, -inf
        %6562 = vmax.xlane.f32.xlu0 %v6561
        %v6563 = vpop.xlane.xlu0 %6562
        %v6564 = vsel %vm3077, %v6550, -inf
        %6565 = vmax.xlane.f32.xlu0 %v6564
        %v6566 = vpop.xlane.xlu0 %6565
        %v6567 = vsel %vm3077, %v6551, -inf
        %6568 = vmax.xlane.f32.xlu0 %v6567
        %v6569 = vpop.xlane.xlu0 %6568
        %v6570 = vsel %vm3077, %v6552, -inf
        %6571 = vmax.xlane.f32.xlu0 %v6570
        %v6572 = vpop.xlane.xlu0 %6571
        %v6573 = vsel %vm3077, %v6553, -inf
        %6574 = vmax.xlane.f32.xlu0 %v6573
        %v6575 = vpop.xlane.xlu0 %6574
        %v6576 = vsel %vm3077, %v6554, -inf
        %6577 = vmax.xlane.f32.xlu0 %v6576
        %v6578 = vpop.xlane.xlu0 %6577
        %v6579 = vsub.f32 %v6547, %v6557
        %v6580 = vsub.f32 %v6548, %v6560
        %v6581 = vsub.f32 %v6549, %v6563
        %v6582 = vsub.f32 %v6550, %v6566
        %v6583 = vsub.f32 %v6551, %v6569
        %v6584 = vsub.f32 %v6552, %v6572
        %v6585 = vsub.f32 %v6553, %v6575
        %v6586 = vsub.f32 %v6554, %v6578
        %v6587 = vmul.f32 %v6579, 1.442695
        %v6588 = vpow.pop %v6587
        %v6589 = vmul.f32 %v6580, 1.442695
        %v6590 = vpow.pop %v6589
        %v6591 = vmul.f32 %v6581, 1.442695
        %v6592 = vpow.pop %v6591
        %v6593 = vmul.f32 %v6582, 1.442695
        %v6594 = vpow.pop %v6593
        %v6595 = vmul.f32 %v6583, 1.442695
        %v6596 = vpow.pop %v6595
        %v6597 = vmul.f32 %v6584, 1.442695
        %v6598 = vpow.pop %v6597
        %v6599 = vmul.f32 %v6585, 1.442695
        %v6600 = vpow.pop %v6599
        %v6601 = vmul.f32 %v6586, 1.442695
        %v6602 = vpow.pop %v6601
        %v6603 = vsel %vm3077, %v6588, 0.0
        %6604 = vadd.xlane.f32.xlu0 %v6603
        %v6605 = vpop.xlane.xlu0 %6604
        %v6606 = vsel %vm3077, %v6590, 0.0
        %6607 = vadd.xlane.f32.xlu0 %v6606
        %v6608 = vpop.xlane.xlu0 %6607
        %v6609 = vsel %vm3077, %v6592, 0.0
        %6610 = vadd.xlane.f32.xlu0 %v6609
        %v6611 = vpop.xlane.xlu0 %6610
        %v6612 = vsel %vm3077, %v6594, 0.0
        %6613 = vadd.xlane.f32.xlu0 %v6612
        %v6614 = vpop.xlane.xlu0 %6613
        %v6615 = vsel %vm3077, %v6596, 0.0
        %6616 = vadd.xlane.f32.xlu0 %v6615
        %v6617 = vpop.xlane.xlu0 %6616
        %v6618 = vsel %vm3077, %v6598, 0.0
        %6619 = vadd.xlane.f32.xlu0 %v6618
        %v6620 = vpop.xlane.xlu0 %6619
        %v6621 = vsel %vm3077, %v6600, 0.0
        %6622 = vadd.xlane.f32.xlu0 %v6621
        %v6623 = vpop.xlane.xlu0 %6622
        %v6624 = vsel %vm3077, %v6602, 0.0
        %6625 = vadd.xlane.f32.xlu0 %v6624
        %v6626 = vpop.xlane.xlu0 %6625
        %v6627 = vrcp.pop %v6605
        %v6628 = vrcp.pop %v6608
        %v6629 = vrcp.pop %v6611
        %v6630 = vrcp.pop %v6614
        %v6631 = vrcp.pop %v6617
        %v6632 = vrcp.pop %v6620
        %v6633 = vrcp.pop %v6623
        %v6634 = vrcp.pop %v6626
        %v6635 = vmul.f32 %v6605, %v6627
        %v6636 = vmul.f32 %v6608, %v6628
        %v6637 = vmul.f32 %v6611, %v6629
        %v6638 = vmul.f32 %v6614, %v6630
        %v6639 = vmul.f32 %v6617, %v6631
        %v6640 = vmul.f32 %v6620, %v6632
        %v6641 = vmul.f32 %v6623, %v6633
        %v6642 = vmul.f32 %v6626, %v6634
        %v6643 = vsub.f32 2.0, %v6635
        %v6644 = vsub.f32 2.0, %v6636
        %v6645 = vsub.f32 2.0, %v6637
        %v6646 = vsub.f32 2.0, %v6638
        %v6647 = vsub.f32 2.0, %v6639
        %v6648 = vsub.f32 2.0, %v6640
        %v6649 = vsub.f32 2.0, %v6641
        %v6650 = vsub.f32 2.0, %v6642
        %v6651 = vmul.f32 %v6627, %v6643
        %v6652 = vmul.f32 %v6628, %v6644
        %v6653 = vmul.f32 %v6629, %v6645
        %v6654 = vmul.f32 %v6630, %v6646
        %v6655 = vmul.f32 %v6631, %v6647
        %v6656 = vmul.f32 %v6632, %v6648
        %v6657 = vmul.f32 %v6633, %v6649
        %v6658 = vmul.f32 %v6634, %v6650
        %v6659 = vmul.f32 %v6588, %v6651
        %v6660 = vmul.f32 %v6590, %v6652
        %v6661 = vmul.f32 %v6592, %v6653
        %v6662 = vmul.f32 %v6594, %v6654
        %v6663 = vmul.f32 %v6596, %v6655
        %v6664 = vmul.f32 %v6598, %v6656
        %v6665 = vmul.f32 %v6600, %v6657
        %v6666 = vmul.f32 %v6602, %v6658
        %6667 = vrot.lane.b32.xlu0 %v2895, 40
        %v6668 = vpop.permute.xlu0 %6667
        %6669 = vrot.lane.b32.xlu0 %v2896, 40
        %v6670 = vpop.permute.xlu0 %6669
        %6671 = vrot.lane.b32.xlu0 %v2897, 40
        %v6672 = vpop.permute.xlu0 %6671
        %6673 = vrot.lane.b32.xlu0 %v2898, 40
        %v6674 = vpop.permute.xlu0 %6673
        %6675 = vrot.lane.b32.xlu0 %v2899, 40
        %v6676 = vpop.permute.xlu0 %6675
        %6677 = vrot.lane.b32.xlu0 %v2900, 40
        %v6678 = vpop.permute.xlu0 %6677
        %6679 = vrot.lane.b32.xlu0 %v2901, 40
        %v6680 = vpop.permute.xlu0 %6679
        %6681 = vrot.lane.b32.xlu0 %v2902, 40
        %v6682 = vpop.permute.xlu0 %6681
        %v6692 = vsel %vm3077, %v6659, 0
        %v6695 = vsel %vm3077, %v6660, 0
        %v6698 = vsel %vm3077, %v6661, 0
        %v6701 = vsel %vm3077, %v6662, 0
        %v6704 = vsel %vm3077, %v6663, 0
        %v6707 = vsel %vm3077, %v6664, 0
        %v6710 = vsel %vm3077, %v6665, 0
        %v6713 = vsel %vm3077, %v6666, 0
        %6715 = vmatprep.subr.mxu0 0.0
        %6716 = vmatpush1.msra.mxu0 0.0
        %6717 = vmatprep.subr.mxu0 0.0
        %6718 = vmatpush1.msra.mxu0 0.0
        %6719 = vmatprep.subr.mxu0 0.0
        %6720 = vmatpush1.msra.mxu0 0.0
        %6721 = vmatprep.subr.mxu0 0.0
        %6722 = vmatpush1.msra.mxu0 0.0
        %6723 = vmatprep.subr.mxu0 0.0
        %6724 = vmatpush1.msra.mxu0 0.0
        %6725 = vmatprep.subr.mxu0 0.0
        %6726 = vmatpush1.msra.mxu0 0.0
        %6727 = vmatprep.subr.mxu0 0.0
        %6728 = vmatpush1.msra.mxu0 0.0
        %6729 = vmatprep.subr.mxu0 0.0
        %6730 = vmatpush1.msra.mxu0 0.0
        %6731 = vmatprep.subr.mxu0 0.0
        %6732 = vmatpush1.msra.mxu0 %v6682
        %6733 = vmatprep.subr.mxu0 0.0
        %6734 = vmatpush1.msra.mxu0 %v6680
        %6735 = vmatprep.subr.mxu0 0.0
        %6736 = vmatpush1.msra.mxu0 %v6678
        %6737 = vmatprep.subr.mxu0 0.0
        %6738 = vmatpush1.msra.mxu0 %v6676
        %6739 = vmatprep.subr.mxu0 0.0
        %6740 = vmatpush1.msra.mxu0 %v6674
        %6741 = vmatprep.subr.mxu0 0.0
        %6742 = vmatpush1.msra.mxu0 %v6672
        %6743 = vmatprep.subr.mxu0 0.0
        %6744 = vmatpush1.msra.mxu0 %v6670
        %6745 = vmatprep.subr.mxu0 0.0
        %6746 = vmatpush1.msra.mxu0 %v6668
        %6747 = vmatprep.subr.mxu0 0.0
        %6748 = vmatpush2.msra.mxu0 0.0
        %6749 = vmatprep.subr.mxu0 0.0
        %6750 = vmatpush2.msra.mxu0 0.0
        %6751 = vmatprep.subr.mxu0 0.0
        %6752 = vmatpush2.msra.mxu0 0.0
        %6753 = vmatprep.subr.mxu0 0.0
        %6754 = vmatpush2.msra.mxu0 0.0
        %6755 = vmatprep.subr.mxu0 0.0
        %6756 = vmatpush2.msra.mxu0 0.0
        %6757 = vmatprep.subr.mxu0 0.0
        %6758 = vmatpush2.msra.mxu0 0.0
        %6759 = vmatprep.subr.mxu0 0.0
        %6760 = vmatpush2.msra.mxu0 0.0
        %6761 = vmatprep.subr.mxu0 0.0
        %6762 = vmatpush2.msra.mxu0 0.0
        %6763 = vmatprep.subr.mxu0 0.0
        %6764 = vmatpush2.msra.mxu0 0.0
        %6765 = vmatprep.subr.mxu0 0.0
        %6766 = vmatpush2.msra.mxu0 0.0
        %6767 = vmatprep.subr.mxu0 0.0
        %6768 = vmatpush2.msra.mxu0 0.0
        %6769 = vmatprep.subr.mxu0 0.0
        %6770 = vmatpush2.msra.mxu0 0.0
        %6771 = vmatprep.subr.mxu0 0.0
        %6772 = vmatpush2.msra.mxu0 0.0
        %6773 = vmatprep.subr.mxu0 0.0
        %6774 = vmatpush2.msra.mxu0 0.0
        %6775 = vmatprep.subr.mxu0 0.0
        %6776 = vmatpush2.msra.mxu0 0.0
        %6777 = vmatprep.subr.mxu0 0.0
        %6778 = vmatpush2.msra.mxu0 0.0
        %6779 = vmatprep.mubr.f32.mxu0 0.0
        %6780 = vmatmul.mubr.f32.gmra.mxu0 %v6692
        %v6781 = vpop.f32.mrf.mxu0
        %v6782 = vadd.f32 0.0, %v6781
        %v6783 = vpop.f32.mrf.mxu0
        %6784 = vmatprep.mubr.f32.mxu0 0.0
        %6785 = vmatmul.mubr.f32.gmra.mxu0 %v6695
        %v6786 = vpop.f32.mrf.mxu0
        %v6787 = vadd.f32 0.0, %v6786
        %v6788 = vpop.f32.mrf.mxu0
        %6789 = vmatprep.mubr.f32.mxu0 0.0
        %6790 = vmatmul.mubr.f32.gmra.mxu0 %v6698
        %v6791 = vpop.f32.mrf.mxu0
        %v6792 = vadd.f32 0.0, %v6791
        %v6793 = vpop.f32.mrf.mxu0
        %6794 = vmatprep.mubr.f32.mxu0 0.0
        %6795 = vmatmul.mubr.f32.gmra.mxu0 %v6701
        %v6796 = vpop.f32.mrf.mxu0
        %v6797 = vadd.f32 0.0, %v6796
        %v6798 = vpop.f32.mrf.mxu0
        %6799 = vmatprep.mubr.f32.mxu0 0.0
        %6800 = vmatmul.mubr.f32.gmra.mxu0 %v6704
        %v6801 = vpop.f32.mrf.mxu0
        %v6802 = vadd.f32 0.0, %v6801
        %v6803 = vpop.f32.mrf.mxu0
        %6804 = vmatprep.mubr.f32.mxu0 0.0
        %6805 = vmatmul.mubr.f32.gmra.mxu0 %v6707
        %v6806 = vpop.f32.mrf.mxu0
        %v6807 = vadd.f32 0.0, %v6806
        %v6808 = vpop.f32.mrf.mxu0
        %6809 = vmatprep.mubr.f32.mxu0 0.0
        %6810 = vmatmul.mubr.f32.gmra.mxu0 %v6710
        %v6811 = vpop.f32.mrf.mxu0
        %v6812 = vadd.f32 0.0, %v6811
        %v6813 = vpop.f32.mrf.mxu0
        %6814 = vmatprep.mubr.f32.mxu0 0.0
        %6815 = vmatmul.mubr.f32.gmra.mxu0 %v6713
        %v6816 = vpop.f32.mrf.mxu0
        %v6817 = vadd.f32 0.0, %v6816
        %v6818 = vpop.f32.mrf.mxu0
        %6819 = vdwg.mxu0
        %v6821 = vsel %vm2931, %v6782, 0
        %v6824 = vsel %vm2931, %v6787, 0
        %v6827 = vsel %vm2931, %v6792, 0
        %v6830 = vsel %vm2931, %v6797, 0
        %v6833 = vsel %vm2931, %v6802, 0
        %v6836 = vsel %vm2931, %v6807, 0
        %v6839 = vsel %vm2931, %v6812, 0
        %v6842 = vsel %vm2931, %v6817, 0
        %v6845 = vsel %vm3811, %v2906, 0
        %6847 = vmatprep.subr.mxu0 0.0
        %6848 = vmatpush1.msra.mxu0 0.0
        %6849 = vmatprep.subr.mxu0 0.0
        %6850 = vmatpush1.msra.mxu0 0.0
        %6851 = vmatprep.subr.mxu0 0.0
        %6852 = vmatpush1.msra.mxu0 0.0
        %6853 = vmatprep.subr.mxu0 0.0
        %6854 = vmatpush1.msra.mxu0 0.0
        %6855 = vmatprep.subr.mxu0 0.0
        %6856 = vmatpush1.msra.mxu0 0.0
        %6857 = vmatprep.subr.mxu0 0.0
        %6858 = vmatpush1.msra.mxu0 0.0
        %6859 = vmatprep.subr.mxu0 0.0
        %6860 = vmatpush1.msra.mxu0 0.0
        %6861 = vmatprep.subr.mxu0 0.0
        %6862 = vmatpush1.msra.mxu0 0.0
        %6863 = vmatprep.subr.mxu0 0.0
        %6864 = vmatpush1.msra.mxu0 0.0
        %6865 = vmatprep.subr.mxu0 0.0
        %6866 = vmatpush1.msra.mxu0 0.0
        %6867 = vmatprep.subr.mxu0 0.0
        %6868 = vmatpush1.msra.mxu0 0.0
        %6869 = vmatprep.subr.mxu0 0.0
        %6870 = vmatpush1.msra.mxu0 0.0
        %6871 = vmatprep.subr.mxu0 0.0
        %6872 = vmatpush1.msra.mxu0 0.0
        %6873 = vmatprep.subr.mxu0 0.0
        %6874 = vmatpush1.msra.mxu0 0.0
        %6875 = vmatprep.subr.mxu0 0.0
        %6876 = vmatpush1.msra.mxu0 0.0
        %6877 = vmatprep.subr.mxu0 0.0
        %6878 = vmatpush1.msra.mxu0 %v6845
        %6879 = vmatprep.subr.mxu0 0.0
        %6880 = vmatpush2.msra.mxu0 0.0
        %6881 = vmatprep.subr.mxu0 0.0
        %6882 = vmatpush2.msra.mxu0 0.0
        %6883 = vmatprep.subr.mxu0 0.0
        %6884 = vmatpush2.msra.mxu0 0.0
        %6885 = vmatprep.subr.mxu0 0.0
        %6886 = vmatpush2.msra.mxu0 0.0
        %6887 = vmatprep.subr.mxu0 0.0
        %6888 = vmatpush2.msra.mxu0 0.0
        %6889 = vmatprep.subr.mxu0 0.0
        %6890 = vmatpush2.msra.mxu0 0.0
        %6891 = vmatprep.subr.mxu0 0.0
        %6892 = vmatpush2.msra.mxu0 0.0
        %6893 = vmatprep.subr.mxu0 0.0
        %6894 = vmatpush2.msra.mxu0 0.0
        %6895 = vmatprep.subr.mxu0 0.0
        %6896 = vmatpush2.msra.mxu0 0.0
        %6897 = vmatprep.subr.mxu0 0.0
        %6898 = vmatpush2.msra.mxu0 0.0
        %6899 = vmatprep.subr.mxu0 0.0
        %6900 = vmatpush2.msra.mxu0 0.0
        %6901 = vmatprep.subr.mxu0 0.0
        %6902 = vmatpush2.msra.mxu0 0.0
        %6903 = vmatprep.subr.mxu0 0.0
        %6904 = vmatpush2.msra.mxu0 0.0
        %6905 = vmatprep.subr.mxu0 0.0
        %6906 = vmatpush2.msra.mxu0 0.0
        %6907 = vmatprep.subr.mxu0 0.0
        %6908 = vmatpush2.msra.mxu0 0.0
        %6909 = vmatprep.subr.mxu0 0.0
        %6910 = vmatpush2.msra.mxu0 0.0
        %6911 = vmatprep.mubr.f32.mxu0 0.0
        %6912 = vmatmul.mubr.f32.gmra.mxu0 %v6821
        %v6913 = vpop.f32.mrf.mxu0
        %v6914 = vadd.f32 0.0, %v6913
        %v6915 = vpop.f32.mrf.mxu0
        %6916 = vmatprep.mubr.f32.mxu0 0.0
        %6917 = vmatmul.mubr.f32.gmra.mxu0 %v6824
        %v6918 = vpop.f32.mrf.mxu0
        %v6919 = vadd.f32 0.0, %v6918
        %v6920 = vpop.f32.mrf.mxu0
        %6921 = vmatprep.mubr.f32.mxu0 0.0
        %6922 = vmatmul.mubr.f32.gmra.mxu0 %v6827
        %v6923 = vpop.f32.mrf.mxu0
        %v6924 = vadd.f32 0.0, %v6923
        %v6925 = vpop.f32.mrf.mxu0
        %6926 = vmatprep.mubr.f32.mxu0 0.0
        %6927 = vmatmul.mubr.f32.gmra.mxu0 %v6830
        %v6928 = vpop.f32.mrf.mxu0
        %v6929 = vadd.f32 0.0, %v6928
        %v6930 = vpop.f32.mrf.mxu0
        %6931 = vmatprep.mubr.f32.mxu0 0.0
        %6932 = vmatmul.mubr.f32.gmra.mxu0 %v6833
        %v6933 = vpop.f32.mrf.mxu0
        %v6934 = vadd.f32 0.0, %v6933
        %v6935 = vpop.f32.mrf.mxu0
        %6936 = vmatprep.mubr.f32.mxu0 0.0
        %6937 = vmatmul.mubr.f32.gmra.mxu0 %v6836
        %v6938 = vpop.f32.mrf.mxu0
        %v6939 = vadd.f32 0.0, %v6938
        %v6940 = vpop.f32.mrf.mxu0
        %6941 = vmatprep.mubr.f32.mxu0 0.0
        %6942 = vmatmul.mubr.f32.gmra.mxu0 %v6839
        %v6943 = vpop.f32.mrf.mxu0
        %v6944 = vadd.f32 0.0, %v6943
        %v6945 = vpop.f32.mrf.mxu0
        %6946 = vmatprep.mubr.f32.mxu0 0.0
        %6947 = vmatmul.mubr.f32.gmra.mxu0 %v6842
        %v6948 = vpop.f32.mrf.mxu0
        %v6949 = vadd.f32 0.0, %v6948
        %v6950 = vpop.f32.mrf.mxu0
        %6951 = vdwg.mxu0
        %v6952 = vadd.f32 %v6370, %v6914
        %v6953 = vadd.f32 %v6371, %v6919
        %v6954 = vadd.f32 %v6372, %v6924
        %v6955 = vadd.f32 %v6373, %v6929
        %v6956 = vadd.f32 %v6374, %v6934
        %v6957 = vadd.f32 %v6375, %v6939
        %v6958 = vadd.f32 %v6376, %v6944
        %v6959 = vadd.f32 %v6377, %v6949
        %6960 = vrot.lane.b32.xlu0 %v2895, 100
        %v6961 = vpop.permute.xlu0 %6960
        %6962 = vrot.lane.b32.xlu0 %v2896, 100
        %v6963 = vpop.permute.xlu0 %6962
        %6964 = vrot.lane.b32.xlu0 %v2897, 100
        %v6965 = vpop.permute.xlu0 %6964
        %6966 = vrot.lane.b32.xlu0 %v2898, 100
        %v6967 = vpop.permute.xlu0 %6966
        %6968 = vrot.lane.b32.xlu0 %v2899, 100
        %v6969 = vpop.permute.xlu0 %6968
        %6970 = vrot.lane.b32.xlu0 %v2900, 100
        %v6971 = vpop.permute.xlu0 %6970
        %6972 = vrot.lane.b32.xlu0 %v2901, 100
        %v6973 = vpop.permute.xlu0 %6972
        %6974 = vrot.lane.b32.xlu0 %v2902, 100
        %v6975 = vpop.permute.xlu0 %6974
        %6976 = vrot.lane.b32.xlu0 %v2895, 68
        %v6977 = vpop.permute.xlu0 %6976
        %6978 = vrot.lane.b32.xlu0 %v2896, 68
        %v6979 = vpop.permute.xlu0 %6978
        %6980 = vrot.lane.b32.xlu0 %v2897, 68
        %v6981 = vpop.permute.xlu0 %6980
        %6982 = vrot.lane.b32.xlu0 %v2898, 68
        %v6983 = vpop.permute.xlu0 %6982
        %6984 = vrot.lane.b32.xlu0 %v2899, 68
        %v6985 = vpop.permute.xlu0 %6984
        %6986 = vrot.lane.b32.xlu0 %v2900, 68
        %v6987 = vpop.permute.xlu0 %6986
        %6988 = vrot.lane.b32.xlu0 %v2901, 68
        %v6989 = vpop.permute.xlu0 %6988
        %6990 = vrot.lane.b32.xlu0 %v2902, 68
        %v6991 = vpop.permute.xlu0 %6990
        %v6992 = vsel %vm2931, %v6961, 0
        %v6994 = vsel %vm2931, %v6963, 0
        %v6996 = vsel %vm2931, %v6965, 0
        %v6998 = vsel %vm2931, %v6967, 0
        %v7000 = vsel %vm2931, %v6969, 0
        %v7002 = vsel %vm2931, %v6971, 0
        %v7004 = vsel %vm2931, %v6973, 0
        %v7006 = vsel %vm2931, %v6975, 0
        %v7008 = vsel %vm2931, %v6977, 0
        %v7010 = vsel %vm2931, %v6979, 0
        %v7012 = vsel %vm2931, %v6981, 0
        %v7014 = vsel %vm2931, %v6983, 0
        %v7016 = vsel %vm2931, %v6985, 0
        %v7018 = vsel %vm2931, %v6987, 0
        %v7020 = vsel %vm2931, %v6989, 0
        %v7022 = vsel %vm2931, %v6991, 0
        %7024 = vmatprep.subr.mxu0 0.0
        %7025 = vmatpush1.xpose.msra.mxu0 0.0
        %7026 = vmatprep.subr.mxu0 0.0
        %7027 = vmatpush1.xpose.msra.mxu0 0.0
        %7028 = vmatprep.subr.mxu0 0.0
        %7029 = vmatpush1.xpose.msra.mxu0 0.0
        %7030 = vmatprep.subr.mxu0 0.0
        %7031 = vmatpush1.xpose.msra.mxu0 0.0
        %7032 = vmatprep.subr.mxu0 0.0
        %7033 = vmatpush1.xpose.msra.mxu0 0.0
        %7034 = vmatprep.subr.mxu0 0.0
        %7035 = vmatpush1.xpose.msra.mxu0 0.0
        %7036 = vmatprep.subr.mxu0 0.0
        %7037 = vmatpush1.xpose.msra.mxu0 0.0
        %7038 = vmatprep.subr.mxu0 0.0
        %7039 = vmatpush1.xpose.msra.mxu0 0.0
        %7040 = vmatprep.subr.mxu0 0.0
        %7041 = vmatpush1.xpose.msra.mxu0 %v7022
        %7042 = vmatprep.subr.mxu0 0.0
        %7043 = vmatpush1.xpose.msra.mxu0 %v7020
        %7044 = vmatprep.subr.mxu0 0.0
        %7045 = vmatpush1.xpose.msra.mxu0 %v7018
        %7046 = vmatprep.subr.mxu0 0.0
        %7047 = vmatpush1.xpose.msra.mxu0 %v7016
        %7048 = vmatprep.subr.mxu0 0.0
        %7049 = vmatpush1.xpose.msra.mxu0 %v7014
        %7050 = vmatprep.subr.mxu0 0.0
        %7051 = vmatpush1.xpose.msra.mxu0 %v7012
        %7052 = vmatprep.subr.mxu0 0.0
        %7053 = vmatpush1.xpose.msra.mxu0 %v7010
        %7054 = vmatprep.subr.mxu0 0.0
        %7055 = vmatpush1.xpose.msra.mxu0 %v7008
        %7056 = vmatprep.subr.mxu0 0.0
        %7057 = vmatpush2.xpose.msra.mxu0 0.0
        %7058 = vmatprep.subr.mxu0 0.0
        %7059 = vmatpush2.xpose.msra.mxu0 0.0
        %7060 = vmatprep.subr.mxu0 0.0
        %7061 = vmatpush2.xpose.msra.mxu0 0.0
        %7062 = vmatprep.subr.mxu0 0.0
        %7063 = vmatpush2.xpose.msra.mxu0 0.0
        %7064 = vmatprep.subr.mxu0 0.0
        %7065 = vmatpush2.xpose.msra.mxu0 0.0
        %7066 = vmatprep.subr.mxu0 0.0
        %7067 = vmatpush2.xpose.msra.mxu0 0.0
        %7068 = vmatprep.subr.mxu0 0.0
        %7069 = vmatpush2.xpose.msra.mxu0 0.0
        %7070 = vmatprep.subr.mxu0 0.0
        %7071 = vmatpush2.xpose.msra.mxu0 0.0
        %7072 = vmatprep.subr.mxu0 0.0
        %7073 = vmatpush2.xpose.msra.mxu0 0.0
        %7074 = vmatprep.subr.mxu0 0.0
        %7075 = vmatpush2.xpose.msra.mxu0 0.0
        %7076 = vmatprep.subr.mxu0 0.0
        %7077 = vmatpush2.xpose.msra.mxu0 0.0
        %7078 = vmatprep.subr.mxu0 0.0
        %7079 = vmatpush2.xpose.msra.mxu0 0.0
        %7080 = vmatprep.subr.mxu0 0.0
        %7081 = vmatpush2.xpose.msra.mxu0 0.0
        %7082 = vmatprep.subr.mxu0 0.0
        %7083 = vmatpush2.xpose.msra.mxu0 0.0
        %7084 = vmatprep.subr.mxu0 0.0
        %7085 = vmatpush2.xpose.msra.mxu0 0.0
        %7086 = vmatprep.subr.mxu0 0.0
        %7087 = vmatpush2.xpose.msra.mxu0 0.0
        %7088 = vmatprep.mubr.f32.mxu0 0.0
        %7089 = vmatmul.mubr.f32.gmra.mxu0 %v6992
        %v7090 = vpop.f32.mrf.mxu0
        %v7091 = vadd.f32 0.0, %v7090
        %v7092 = vpop.f32.mrf.mxu0
        %7093 = vmatprep.mubr.f32.mxu0 0.0
        %7094 = vmatmul.mubr.f32.gmra.mxu0 %v6994
        %v7095 = vpop.f32.mrf.mxu0
        %v7096 = vadd.f32 0.0, %v7095
        %v7097 = vpop.f32.mrf.mxu0
        %7098 = vmatprep.mubr.f32.mxu0 0.0
        %7099 = vmatmul.mubr.f32.gmra.mxu0 %v6996
        %v7100 = vpop.f32.mrf.mxu0
        %v7101 = vadd.f32 0.0, %v7100
        %v7102 = vpop.f32.mrf.mxu0
        %7103 = vmatprep.mubr.f32.mxu0 0.0
        %7104 = vmatmul.mubr.f32.gmra.mxu0 %v6998
        %v7105 = vpop.f32.mrf.mxu0
        %v7106 = vadd.f32 0.0, %v7105
        %v7107 = vpop.f32.mrf.mxu0
        %7108 = vmatprep.mubr.f32.mxu0 0.0
        %7109 = vmatmul.mubr.f32.gmra.mxu0 %v7000
        %v7110 = vpop.f32.mrf.mxu0
        %v7111 = vadd.f32 0.0, %v7110
        %v7112 = vpop.f32.mrf.mxu0
        %7113 = vmatprep.mubr.f32.mxu0 0.0
        %7114 = vmatmul.mubr.f32.gmra.mxu0 %v7002
        %v7115 = vpop.f32.mrf.mxu0
        %v7116 = vadd.f32 0.0, %v7115
        %v7117 = vpop.f32.mrf.mxu0
        %7118 = vmatprep.mubr.f32.mxu0 0.0
        %7119 = vmatmul.mubr.f32.gmra.mxu0 %v7004
        %v7120 = vpop.f32.mrf.mxu0
        %v7121 = vadd.f32 0.0, %v7120
        %v7122 = vpop.f32.mrf.mxu0
        %7123 = vmatprep.mubr.f32.mxu0 0.0
        %7124 = vmatmul.mubr.f32.gmra.mxu0 %v7006
        %v7125 = vpop.f32.mrf.mxu0
        %v7126 = vadd.f32 0.0, %v7125
        %v7127 = vpop.f32.mrf.mxu0
        %7128 = vdwg.mxu0
        %v7129 = vmul.f32 %v7091, 0.5
        %v7130 = vmul.f32 %v7096, 0.5
        %v7131 = vmul.f32 %v7101, 0.5
        %v7132 = vmul.f32 %v7106, 0.5
        %v7133 = vmul.f32 %v7111, 0.5
        %v7134 = vmul.f32 %v7116, 0.5
        %v7135 = vmul.f32 %v7121, 0.5
        %v7136 = vmul.f32 %v7126, 0.5
        %v7137 = vsel %vm3077, %v7129, -inf
        %7138 = vmax.xlane.f32.xlu0 %v7137
        %v7139 = vpop.xlane.xlu0 %7138
        %v7140 = vsel %vm3077, %v7130, -inf
        %7141 = vmax.xlane.f32.xlu0 %v7140
        %v7142 = vpop.xlane.xlu0 %7141
        %v7143 = vsel %vm3077, %v7131, -inf
        %7144 = vmax.xlane.f32.xlu0 %v7143
        %v7145 = vpop.xlane.xlu0 %7144
        %v7146 = vsel %vm3077, %v7132, -inf
        %7147 = vmax.xlane.f32.xlu0 %v7146
        %v7148 = vpop.xlane.xlu0 %7147
        %v7149 = vsel %vm3077, %v7133, -inf
        %7150 = vmax.xlane.f32.xlu0 %v7149
        %v7151 = vpop.xlane.xlu0 %7150
        %v7152 = vsel %vm3077, %v7134, -inf
        %7153 = vmax.xlane.f32.xlu0 %v7152
        %v7154 = vpop.xlane.xlu0 %7153
        %v7155 = vsel %vm3077, %v7135, -inf
        %7156 = vmax.xlane.f32.xlu0 %v7155
        %v7157 = vpop.xlane.xlu0 %7156
        %v7158 = vsel %vm3077, %v7136, -inf
        %7159 = vmax.xlane.f32.xlu0 %v7158
        %v7160 = vpop.xlane.xlu0 %7159
        %v7161 = vsub.f32 %v7129, %v7139
        %v7162 = vsub.f32 %v7130, %v7142
        %v7163 = vsub.f32 %v7131, %v7145
        %v7164 = vsub.f32 %v7132, %v7148
        %v7165 = vsub.f32 %v7133, %v7151
        %v7166 = vsub.f32 %v7134, %v7154
        %v7167 = vsub.f32 %v7135, %v7157
        %v7168 = vsub.f32 %v7136, %v7160
        %v7169 = vmul.f32 %v7161, 1.442695
        %v7170 = vpow.pop %v7169
        %v7171 = vmul.f32 %v7162, 1.442695
        %v7172 = vpow.pop %v7171
        %v7173 = vmul.f32 %v7163, 1.442695
        %v7174 = vpow.pop %v7173
        %v7175 = vmul.f32 %v7164, 1.442695
        %v7176 = vpow.pop %v7175
        %v7177 = vmul.f32 %v7165, 1.442695
        %v7178 = vpow.pop %v7177
        %v7179 = vmul.f32 %v7166, 1.442695
        %v7180 = vpow.pop %v7179
        %v7181 = vmul.f32 %v7167, 1.442695
        %v7182 = vpow.pop %v7181
        %v7183 = vmul.f32 %v7168, 1.442695
        %v7184 = vpow.pop %v7183
        %v7185 = vsel %vm3077, %v7170, 0.0
        %7186 = vadd.xlane.f32.xlu0 %v7185
        %v7187 = vpop.xlane.xlu0 %7186
        %v7188 = vsel %vm3077, %v7172, 0.0
        %7189 = vadd.xlane.f32.xlu0 %v7188
        %v7190 = vpop.xlane.xlu0 %7189
        %v7191 = vsel %vm3077, %v7174, 0.0
        %7192 = vadd.xlane.f32.xlu0 %v7191
        %v7193 = vpop.xlane.xlu0 %7192
        %v7194 = vsel %vm3077, %v7176, 0.0
        %7195 = vadd.xlane.f32.xlu0 %v7194
        %v7196 = vpop.xlane.xlu0 %7195
        %v7197 = vsel %vm3077, %v7178, 0.0
        %7198 = vadd.xlane.f32.xlu0 %v7197
        %v7199 = vpop.xlane.xlu0 %7198
        %v7200 = vsel %vm3077, %v7180, 0.0
        %7201 = vadd.xlane.f32.xlu0 %v7200
        %v7202 = vpop.xlane.xlu0 %7201
        %v7203 = vsel %vm3077, %v7182, 0.0
        %7204 = vadd.xlane.f32.xlu0 %v7203
        %v7205 = vpop.xlane.xlu0 %7204
        %v7206 = vsel %vm3077, %v7184, 0.0
        %7207 = vadd.xlane.f32.xlu0 %v7206
        %v7208 = vpop.xlane.xlu0 %7207
        %v7209 = vrcp.pop %v7187
        %v7210 = vrcp.pop %v7190
        %v7211 = vrcp.pop %v7193
        %v7212 = vrcp.pop %v7196
        %v7213 = vrcp.pop %v7199
        %v7214 = vrcp.pop %v7202
        %v7215 = vrcp.pop %v7205
        %v7216 = vrcp.pop %v7208
        %v7217 = vmul.f32 %v7187, %v7209
        %v7218 = vmul.f32 %v7190, %v7210
        %v7219 = vmul.f32 %v7193, %v7211
        %v7220 = vmul.f32 %v7196, %v7212
        %v7221 = vmul.f32 %v7199, %v7213
        %v7222 = vmul.f32 %v7202, %v7214
        %v7223 = vmul.f32 %v7205, %v7215
        %v7224 = vmul.f32 %v7208, %v7216
        %v7225 = vsub.f32 2.0, %v7217
        %v7226 = vsub.f32 2.0, %v7218
        %v7227 = vsub.f32 2.0, %v7219
        %v7228 = vsub.f32 2.0, %v7220
        %v7229 = vsub.f32 2.0, %v7221
        %v7230 = vsub.f32 2.0, %v7222
        %v7231 = vsub.f32 2.0, %v7223
        %v7232 = vsub.f32 2.0, %v7224
        %v7233 = vmul.f32 %v7209, %v7225
        %v7234 = vmul.f32 %v7210, %v7226
        %v7235 = vmul.f32 %v7211, %v7227
        %v7236 = vmul.f32 %v7212, %v7228
        %v7237 = vmul.f32 %v7213, %v7229
        %v7238 = vmul.f32 %v7214, %v7230
        %v7239 = vmul.f32 %v7215, %v7231
        %v7240 = vmul.f32 %v7216, %v7232
        %v7241 = vmul.f32 %v7170, %v7233
        %v7242 = vmul.f32 %v7172, %v7234
        %v7243 = vmul.f32 %v7174, %v7235
        %v7244 = vmul.f32 %v7176, %v7236
        %v7245 = vmul.f32 %v7178, %v7237
        %v7246 = vmul.f32 %v7180, %v7238
        %v7247 = vmul.f32 %v7182, %v7239
        %v7248 = vmul.f32 %v7184, %v7240
        %7249 = vrot.lane.b32.xlu0 %v2895, 36
        %v7250 = vpop.permute.xlu0 %7249
        %7251 = vrot.lane.b32.xlu0 %v2896, 36
        %v7252 = vpop.permute.xlu0 %7251
        %7253 = vrot.lane.b32.xlu0 %v2897, 36
        %v7254 = vpop.permute.xlu0 %7253
        %7255 = vrot.lane.b32.xlu0 %v2898, 36
        %v7256 = vpop.permute.xlu0 %7255
        %7257 = vrot.lane.b32.xlu0 %v2899, 36
        %v7258 = vpop.permute.xlu0 %7257
        %7259 = vrot.lane.b32.xlu0 %v2900, 36
        %v7260 = vpop.permute.xlu0 %7259
        %7261 = vrot.lane.b32.xlu0 %v2901, 36
        %v7262 = vpop.permute.xlu0 %7261
        %7263 = vrot.lane.b32.xlu0 %v2902, 36
        %v7264 = vpop.permute.xlu0 %7263
        %v7274 = vsel %vm3077, %v7241, 0
        %v7277 = vsel %vm3077, %v7242, 0
        %v7280 = vsel %vm3077, %v7243, 0
        %v7283 = vsel %vm3077, %v7244, 0
        %v7286 = vsel %vm3077, %v7245, 0
        %v7289 = vsel %vm3077, %v7246, 0
        %v7292 = vsel %vm3077, %v7247, 0
        %v7295 = vsel %vm3077, %v7248, 0
        %7297 = vmatprep.subr.mxu0 0.0
        %7298 = vmatpush1.msra.mxu0 0.0
        %7299 = vmatprep.subr.mxu0 0.0
        %7300 = vmatpush1.msra.mxu0 0.0
        %7301 = vmatprep.subr.mxu0 0.0
        %7302 = vmatpush1.msra.mxu0 0.0
        %7303 = vmatprep.subr.mxu0 0.0
        %7304 = vmatpush1.msra.mxu0 0.0
        %7305 = vmatprep.subr.mxu0 0.0
        %7306 = vmatpush1.msra.mxu0 0.0
        %7307 = vmatprep.subr.mxu0 0.0
        %7308 = vmatpush1.msra.mxu0 0.0
        %7309 = vmatprep.subr.mxu0 0.0
        %7310 = vmatpush1.msra.mxu0 0.0
        %7311 = vmatprep.subr.mxu0 0.0
        %7312 = vmatpush1.msra.mxu0 0.0
        %7313 = vmatprep.subr.mxu0 0.0
        %7314 = vmatpush1.msra.mxu0 %v7264
        %7315 = vmatprep.subr.mxu0 0.0
        %7316 = vmatpush1.msra.mxu0 %v7262
        %7317 = vmatprep.subr.mxu0 0.0
        %7318 = vmatpush1.msra.mxu0 %v7260
        %7319 = vmatprep.subr.mxu0 0.0
        %7320 = vmatpush1.msra.mxu0 %v7258
        %7321 = vmatprep.subr.mxu0 0.0
        %7322 = vmatpush1.msra.mxu0 %v7256
        %7323 = vmatprep.subr.mxu0 0.0
        %7324 = vmatpush1.msra.mxu0 %v7254
        %7325 = vmatprep.subr.mxu0 0.0
        %7326 = vmatpush1.msra.mxu0 %v7252
        %7327 = vmatprep.subr.mxu0 0.0
        %7328 = vmatpush1.msra.mxu0 %v7250
        %7329 = vmatprep.subr.mxu0 0.0
        %7330 = vmatpush2.msra.mxu0 0.0
        %7331 = vmatprep.subr.mxu0 0.0
        %7332 = vmatpush2.msra.mxu0 0.0
        %7333 = vmatprep.subr.mxu0 0.0
        %7334 = vmatpush2.msra.mxu0 0.0
        %7335 = vmatprep.subr.mxu0 0.0
        %7336 = vmatpush2.msra.mxu0 0.0
        %7337 = vmatprep.subr.mxu0 0.0
        %7338 = vmatpush2.msra.mxu0 0.0
        %7339 = vmatprep.subr.mxu0 0.0
        %7340 = vmatpush2.msra.mxu0 0.0
        %7341 = vmatprep.subr.mxu0 0.0
        %7342 = vmatpush2.msra.mxu0 0.0
        %7343 = vmatprep.subr.mxu0 0.0
        %7344 = vmatpush2.msra.mxu0 0.0
        %7345 = vmatprep.subr.mxu0 0.0
        %7346 = vmatpush2.msra.mxu0 0.0
        %7347 = vmatprep.subr.mxu0 0.0
        %7348 = vmatpush2.msra.mxu0 0.0
        %7349 = vmatprep.subr.mxu0 0.0
        %7350 = vmatpush2.msra.mxu0 0.0
        %7351 = vmatprep.subr.mxu0 0.0
        %7352 = vmatpush2.msra.mxu0 0.0
        %7353 = vmatprep.subr.mxu0 0.0
        %7354 = vmatpush2.msra.mxu0 0.0
        %7355 = vmatprep.subr.mxu0 0.0
        %7356 = vmatpush2.msra.mxu0 0.0
        %7357 = vmatprep.subr.mxu0 0.0
        %7358 = vmatpush2.msra.mxu0 0.0
        %7359 = vmatprep.subr.mxu0 0.0
        %7360 = vmatpush2.msra.mxu0 0.0
        %7361 = vmatprep.mubr.f32.mxu0 0.0
        %7362 = vmatmul.mubr.f32.gmra.mxu0 %v7274
        %v7363 = vpop.f32.mrf.mxu0
        %v7364 = vadd.f32 0.0, %v7363
        %v7365 = vpop.f32.mrf.mxu0
        %7366 = vmatprep.mubr.f32.mxu0 0.0
        %7367 = vmatmul.mubr.f32.gmra.mxu0 %v7277
        %v7368 = vpop.f32.mrf.mxu0
        %v7369 = vadd.f32 0.0, %v7368
        %v7370 = vpop.f32.mrf.mxu0
        %7371 = vmatprep.mubr.f32.mxu0 0.0
        %7372 = vmatmul.mubr.f32.gmra.mxu0 %v7280
        %v7373 = vpop.f32.mrf.mxu0
        %v7374 = vadd.f32 0.0, %v7373
        %v7375 = vpop.f32.mrf.mxu0
        %7376 = vmatprep.mubr.f32.mxu0 0.0
        %7377 = vmatmul.mubr.f32.gmra.mxu0 %v7283
        %v7378 = vpop.f32.mrf.mxu0
        %v7379 = vadd.f32 0.0, %v7378
        %v7380 = vpop.f32.mrf.mxu0
        %7381 = vmatprep.mubr.f32.mxu0 0.0
        %7382 = vmatmul.mubr.f32.gmra.mxu0 %v7286
        %v7383 = vpop.f32.mrf.mxu0
        %v7384 = vadd.f32 0.0, %v7383
        %v7385 = vpop.f32.mrf.mxu0
        %7386 = vmatprep.mubr.f32.mxu0 0.0
        %7387 = vmatmul.mubr.f32.gmra.mxu0 %v7289
        %v7388 = vpop.f32.mrf.mxu0
        %v7389 = vadd.f32 0.0, %v7388
        %v7390 = vpop.f32.mrf.mxu0
        %7391 = vmatprep.mubr.f32.mxu0 0.0
        %7392 = vmatmul.mubr.f32.gmra.mxu0 %v7292
        %v7393 = vpop.f32.mrf.mxu0
        %v7394 = vadd.f32 0.0, %v7393
        %v7395 = vpop.f32.mrf.mxu0
        %7396 = vmatprep.mubr.f32.mxu0 0.0
        %7397 = vmatmul.mubr.f32.gmra.mxu0 %v7295
        %v7398 = vpop.f32.mrf.mxu0
        %v7399 = vadd.f32 0.0, %v7398
        %v7400 = vpop.f32.mrf.mxu0
        %7401 = vdwg.mxu0
        %v7402 = vrot.slane %v2906, 4
        %v7404 = vsel %vm2931, %v7364, 0
        %v7407 = vsel %vm2931, %v7369, 0
        %v7410 = vsel %vm2931, %v7374, 0
        %v7413 = vsel %vm2931, %v7379, 0
        %v7416 = vsel %vm2931, %v7384, 0
        %v7419 = vsel %vm2931, %v7389, 0
        %v7422 = vsel %vm2931, %v7394, 0
        %v7425 = vsel %vm2931, %v7399, 0
        %v7427 = vsel %vm3811, %v7402, 0
        %7429 = vmatprep.subr.mxu0 0.0
        %7430 = vmatpush1.msra.mxu0 0.0
        %7431 = vmatprep.subr.mxu0 0.0
        %7432 = vmatpush1.msra.mxu0 0.0
        %7433 = vmatprep.subr.mxu0 0.0
        %7434 = vmatpush1.msra.mxu0 0.0
        %7435 = vmatprep.subr.mxu0 0.0
        %7436 = vmatpush1.msra.mxu0 0.0
        %7437 = vmatprep.subr.mxu0 0.0
        %7438 = vmatpush1.msra.mxu0 0.0
        %7439 = vmatprep.subr.mxu0 0.0
        %7440 = vmatpush1.msra.mxu0 0.0
        %7441 = vmatprep.subr.mxu0 0.0
        %7442 = vmatpush1.msra.mxu0 0.0
        %7443 = vmatprep.subr.mxu0 0.0
        %7444 = vmatpush1.msra.mxu0 0.0
        %7445 = vmatprep.subr.mxu0 0.0
        %7446 = vmatpush1.msra.mxu0 0.0
        %7447 = vmatprep.subr.mxu0 0.0
        %7448 = vmatpush1.msra.mxu0 0.0
        %7449 = vmatprep.subr.mxu0 0.0
        %7450 = vmatpush1.msra.mxu0 0.0
        %7451 = vmatprep.subr.mxu0 0.0
        %7452 = vmatpush1.msra.mxu0 0.0
        %7453 = vmatprep.subr.mxu0 0.0
        %7454 = vmatpush1.msra.mxu0 0.0
        %7455 = vmatprep.subr.mxu0 0.0
        %7456 = vmatpush1.msra.mxu0 0.0
        %7457 = vmatprep.subr.mxu0 0.0
        %7458 = vmatpush1.msra.mxu0 0.0
        %7459 = vmatprep.subr.mxu0 0.0
        %7460 = vmatpush1.msra.mxu0 %v7427
        %7461 = vmatprep.subr.mxu0 0.0
        %7462 = vmatpush2.msra.mxu0 0.0
        %7463 = vmatprep.subr.mxu0 0.0
        %7464 = vmatpush2.msra.mxu0 0.0
        %7465 = vmatprep.subr.mxu0 0.0
        %7466 = vmatpush2.msra.mxu0 0.0
        %7467 = vmatprep.subr.mxu0 0.0
        %7468 = vmatpush2.msra.mxu0 0.0
        %7469 = vmatprep.subr.mxu0 0.0
        %7470 = vmatpush2.msra.mxu0 0.0
        %7471 = vmatprep.subr.mxu0 0.0
        %7472 = vmatpush2.msra.mxu0 0.0
        %7473 = vmatprep.subr.mxu0 0.0
        %7474 = vmatpush2.msra.mxu0 0.0
        %7475 = vmatprep.subr.mxu0 0.0
        %7476 = vmatpush2.msra.mxu0 0.0
        %7477 = vmatprep.subr.mxu0 0.0
        %7478 = vmatpush2.msra.mxu0 0.0
        %7479 = vmatprep.subr.mxu0 0.0
        %7480 = vmatpush2.msra.mxu0 0.0
        %7481 = vmatprep.subr.mxu0 0.0
        %7482 = vmatpush2.msra.mxu0 0.0
        %7483 = vmatprep.subr.mxu0 0.0
        %7484 = vmatpush2.msra.mxu0 0.0
        %7485 = vmatprep.subr.mxu0 0.0
        %7486 = vmatpush2.msra.mxu0 0.0
        %7487 = vmatprep.subr.mxu0 0.0
        %7488 = vmatpush2.msra.mxu0 0.0
        %7489 = vmatprep.subr.mxu0 0.0
        %7490 = vmatpush2.msra.mxu0 0.0
        %7491 = vmatprep.subr.mxu0 0.0
        %7492 = vmatpush2.msra.mxu0 0.0
        %7493 = vmatprep.mubr.f32.mxu0 0.0
        %7494 = vmatmul.mubr.f32.gmra.mxu0 %v7404
        %v7495 = vpop.f32.mrf.mxu0
        %v7496 = vadd.f32 0.0, %v7495
        %v7497 = vpop.f32.mrf.mxu0
        %7498 = vmatprep.mubr.f32.mxu0 0.0
        %7499 = vmatmul.mubr.f32.gmra.mxu0 %v7407
        %v7500 = vpop.f32.mrf.mxu0
        %v7501 = vadd.f32 0.0, %v7500
        %v7502 = vpop.f32.mrf.mxu0
        %7503 = vmatprep.mubr.f32.mxu0 0.0
        %7504 = vmatmul.mubr.f32.gmra.mxu0 %v7410
        %v7505 = vpop.f32.mrf.mxu0
        %v7506 = vadd.f32 0.0, %v7505
        %v7507 = vpop.f32.mrf.mxu0
        %7508 = vmatprep.mubr.f32.mxu0 0.0
        %7509 = vmatmul.mubr.f32.gmra.mxu0 %v7413
        %v7510 = vpop.f32.mrf.mxu0
        %v7511 = vadd.f32 0.0, %v7510
        %v7512 = vpop.f32.mrf.mxu0
        %7513 = vmatprep.mubr.f32.mxu0 0.0
        %7514 = vmatmul.mubr.f32.gmra.mxu0 %v7416
        %v7515 = vpop.f32.mrf.mxu0
        %v7516 = vadd.f32 0.0, %v7515
        %v7517 = vpop.f32.mrf.mxu0
        %7518 = vmatprep.mubr.f32.mxu0 0.0
        %7519 = vmatmul.mubr.f32.gmra.mxu0 %v7419
        %v7520 = vpop.f32.mrf.mxu0
        %v7521 = vadd.f32 0.0, %v7520
        %v7522 = vpop.f32.mrf.mxu0
        %7523 = vmatprep.mubr.f32.mxu0 0.0
        %7524 = vmatmul.mubr.f32.gmra.mxu0 %v7422
        %v7525 = vpop.f32.mrf.mxu0
        %v7526 = vadd.f32 0.0, %v7525
        %v7527 = vpop.f32.mrf.mxu0
        %7528 = vmatprep.mubr.f32.mxu0 0.0
        %7529 = vmatmul.mubr.f32.gmra.mxu0 %v7425
        %v7530 = vpop.f32.mrf.mxu0
        %v7531 = vadd.f32 0.0, %v7530
        %v7532 = vpop.f32.mrf.mxu0
        %7533 = vdwg.mxu0
        %v7534 = vadd.f32 %v6952, %v7496
        %v7535 = vadd.f32 %v6953, %v7501
        %v7536 = vadd.f32 %v6954, %v7506
        %v7537 = vadd.f32 %v6955, %v7511
        %v7538 = vadd.f32 %v6956, %v7516
        %v7539 = vadd.f32 %v6957, %v7521
        %v7540 = vadd.f32 %v6958, %v7526
        %v7541 = vadd.f32 %v6959, %v7531
        %v7542 = vld [vmem:[%s6] sm:$0x1]
        %v7544 = vlaneseq
        %v7545 = vshrl.u32 %v7544, 7
        %v7546 = vsub.s32 0, %v7545
        %v7547 = vrot.slane %v7542, %v7546
        %v7549 = vadd.f32 %v7534, %v7547
        %v7550 = vadd.f32 %v7535, %v7547
        %v7551 = vadd.f32 %v7536, %v7547
        %v7552 = vadd.f32 %v7537, %v7547
        %v7553 = vadd.f32 %v7538, %v7547
        %v7554 = vadd.f32 %v7539, %v7547
        %v7555 = vadd.f32 %v7540, %v7547
        %v7556 = vadd.f32 %v7541, %v7547
        %v7557 = vmax.f32 %v7549, 0.0
        %v7558 = vmax.f32 %v7550, 0.0
        %v7559 = vmax.f32 %v7551, 0.0
        %v7560 = vmax.f32 %v7552, 0.0
        %v7561 = vmax.f32 %v7553, 0.0
        %v7562 = vmax.f32 %v7554, 0.0
        %v7563 = vmax.f32 %v7555, 0.0
        %v7564 = vmax.f32 %v7556, 0.0
        %v7565 = vadd.f32 %v7557, %v277
        %v7566 = vadd.f32 %v7558, %v278
        %v7567 = vadd.f32 %v7559, %v279
        %v7568 = vadd.f32 %v7560, %v280
        %v7569 = vadd.f32 %v7561, %v281
        %v7570 = vadd.f32 %v7562, %v282
        %v7571 = vadd.f32 %v7563, %v283
        %v7572 = vadd.f32 %v7564, %v284
        %7573 = vst.msk [vmem:[%s271] sm:$0xff] %vm296, %v7565
        %7574 = vst.msk [vmem:[%s271 + $0x8] sm:$0xff] %vm296, %v7566
        %7575 = vst.msk [vmem:[%s271 + $0x10] sm:$0xff] %vm296, %v7567
        %7576 = vst.msk [vmem:[%s271 + $0x18] sm:$0xff] %vm296, %v7568
        %7577 = vst.msk [vmem:[%s271 + $0x20] sm:$0xff] %vm296, %v7569
        %7578 = vst.msk [vmem:[%s271 + $0x28] sm:$0xff] %vm296, %v7570
        %7579 = vst.msk [vmem:[%s271 + $0x30] sm:$0xff] %vm296, %v7571
        %7580 = vst.msk [vmem:[%s271 + $0x38] sm:$0xff] %vm296, %v7572
        %s7581 = sand.u32 %s181, 1
        %s7582 = scalar_lea.sflag [#allocation5], %s7581
        %s7583 = sand.u32 %s181, 1
        %s7584 = smul.addr %s7583, 64
        %s7585 = scalar_lea.vmem [#allocation4], %s7584
        // Predicated region
        $region49: #{attention_forward.1} parent=47 // pred_check
          %p7586 = pneg %p191
        $region50: #{attention_forward.1} parent=47 // pred_check_branch
          %7588 = sbr.rel (%p7586) target = $region52
        $region51: #{attention_forward.1} parent=47 // pred_region
          %s7590 = ssub.s32 1024, 1024
          %7591 = vsyncadd %s7582, %s7590
          %s7592 = smul.addr %s21, 8
          %s7593 = smul.addr %s7592, 128
          %s7594 = scalar_lea.hbm %s7, %s7593
          %s7595 = sshll.u32 %s7585, 4
          %s7596 = int_to_ptr.vmem [resolvable:$true] %s7595
          %7601 = dma.vmem_to_hbm [thread:$0]  %s7596, 1024, %s7594, %s7582, 128, 128, 8
        $region52: #{attention_forward.1} parent=47 // pred_fallthru
          _
      $region48: #{attention_forward.1} parent=5 // pred_fallthru
        _
      %p7602 = scmp.le.s32.totalorder 2, %s16
      // Predicated region
      $region53: #{attention_forward.1} parent=5 // pred_check
        %p7603 = pneg %p7602
      $region54: #{attention_forward.1} parent=5 // pred_check_branch
        %7605 = sbr.rel (%p7603) target = $region56
      $region55: #{attention_forward.1} parent=5 // pred_region
        %s7606 = ssub.s32 %s16, 2
        // Predicated region
        $region57: #{attention_forward.1} parent=55 // pred_check
          %p7607 = pneg %p197
        $region58: #{attention_forward.1} parent=55 // pred_check_branch
          %7609 = sbr.rel (%p7607) target = $region60
        $region59: #{attention_forward.1} parent=55 // pred_region
          %s7610 = sand.u32 %s182, 1
          %s7611 = scalar_lea.sflag [#allocation5], %s7610
          %s7612 = sand.u32 %s182, 1
          %s7613 = smul.addr %s7612, 64
          %s7614 = scalar_lea.vmem [#allocation4], %s7613
          %7615 = dma.done %s7611, 1024
        $region60: #{attention_forward.1} parent=55 // pred_fallthru
          _
      $region56: #{attention_forward.1} parent=5 // pred_fallthru
        _
    $region6: #{attention_forward.1} parent=1 // loop_footer
      %s20 = sadd.s32 1, %s16
    $region7: #{attention_forward.1} parent=1 // loop_footer_branch
      %15 = sbr.rel target = $region3
    $region8: #{attention_forward.1} parent=1 // loop_exit
      _
    %7616 = vsyncpa [#allocation5], 1
    %s7617 = scalar_lea.sflag [#allocation5], 1
    %7618 = vsyncpa %s7617, 1

</llo_original>
